<compile_context>
chip_gen: v7x
topology: tpu7x:2x2x1
jax: 0.10.0
libtpu: 0.0.40
codegen_flags: <defaults>
</compile_context>

<pallas_src>
import jax
import jax.numpy as jnp
from jax import lax
from jax.experimental import pallas as pl
from jax.experimental.pallas import tpu as pltpu


HIDDEN = 128        # LSTM hidden size (module hard-codes 128)
N_ACT = 6           # policy_lin out_features
C1_OUT = 16         # conv1 kernels
C2_OUT = 32         # conv2 kernels
N_POS = 81          # 9*9 conv2 output positions
PC = 27             # conv2 positions handled per fused-head grid step
N_CHUNK = N_POS // PC
FEAT = 256          # lin out_features
OUT_W = 3 * HIDDEN  # 384 = [h | c | (policy, value, zero-pad)] -> lane-dense (3x128)
K1 = 64             # conv1 im2col K (8*8*1)
K2 = 256            # conv2 im2col K (4*4*16)

assert N_POS % PC == 0


# --------------------------------------------------------------- XLA-side im2col glue
def _im2col_conv1(x):
    """(B,1,84,84) NCHW -> (B*400, 64) patches; k=8, s=4; K order (kh, kw).

    Stride-group trick: a few reshape/slice/concat ops, zero FLOPs."""
    B = x.shape[0]
    x = x.reshape(B, 84, 84)
    xr = x.reshape(B, 21, 4, 84)
    th = jnp.concatenate([xr[:, :20], xr[:, 1:21]], axis=2)             # (B,20,8,84)
    tw = th.reshape(B, 20, 8, 21, 4)
    t = jnp.concatenate([tw[:, :, :, :20], tw[:, :, :, 1:21]], axis=4)  # (B,20,8,20,8)
    t = t.transpose(0, 1, 3, 2, 4)                                      # (B,20,20,8,8)
    return t.reshape(B * 400, K1)


def _im2col_conv2(c1):
    """(B,20,20,16) NHWC -> (81, B, 256) patches; k=4, s=2; K order (kh, kw, c).

    Leading axis is the conv2 output position p = h*9 + w so the fused head
    kernel can stream position chunks via BlockSpec without in-kernel reshapes."""
    B = c1.shape[0]
    cr = c1.reshape(B, 10, 2, 20, C1_OUT)
    th = jnp.concatenate([cr[:, :9], cr[:, 1:10]], axis=2)              # (B,9,4,20,16)
    tw = th.reshape(B, 9, 4, 10, 2, C1_OUT)
    t = jnp.concatenate([tw[:, :, :, :9], tw[:, :, :, 1:10]], axis=4)   # (B,9,4,9,4,16)
    t = t.transpose(1, 3, 0, 2, 4, 5)                                   # (9,9,B,4,4,16)
    return t.reshape(N_POS, B, K2)


# --------------------------------------------------------------- Pallas kernels
def _conv1_kernel(p_ref, w_ref, b_ref, o_ref):
    # bf16 x bf16 -> f32 accumulate on the MXU; bias + ReLU on the VPU; bf16 store.
    acc = jnp.dot(p_ref[...], w_ref[...], preferred_element_type=jnp.float32)
    o_ref[...] = jnp.maximum(acc + b_ref[...], 0.0).astype(o_ref.dtype)


def _fused_head_kernel(p2_ref, w2_ref, b2_ref, wl_ref, blin_ref,
                       h_ref, c_ref, wx_ref, wh_ref, blstm_ref,
                       wpv_ref, bpv_ref, out_ref, feat_ref):
    """Fused conv2 (im2col matmul + ReLU) + Linear(2592->256) accumulation over a
    chunk of 27 positions; on the last chunk: LSTM cell + value/policy heads."""
    g = pl.program_id(1)                     # position-chunk index (reduction axis)

    @pl.when(g == 0)
    def _():
        feat_ref[...] = jnp.zeros_like(feat_ref)

    w2 = w2_ref[...]                         # (256, 32) bf16
    b2 = b2_ref[...]                         # (1, 32)   f32
    acc = feat_ref[...]                      # (BT, 256) f32 running feature sum
    for p in range(PC):                      # static unroll: LLO sees the whole chunk
        zp = jnp.maximum(
            jnp.dot(p2_ref[p], w2, preferred_element_type=jnp.float32) + b2, 0.0)
        acc = acc + jnp.dot(zp.astype(jnp.bfloat16), wl_ref[p],
                            preferred_element_type=jnp.float32)
    feat_ref[...] = acc

    @pl.when(g == pl.num_programs(1) - 1)
    def _():
        H = HIDDEN
        feat = feat_ref[...] + blin_ref[...]
        # LSTM cell — gate order follows the reference module:
        # (forget, input, output, candidate).
        state = (jnp.dot(feat.astype(jnp.bfloat16), wx_ref[...],
                         preferred_element_type=jnp.float32)
                 + jnp.dot(h_ref[...].astype(jnp.bfloat16), wh_ref[...],
                           preferred_element_type=jnp.float32)
                 + blstm_ref[...])
        f = jax.nn.sigmoid(state[:, 0 * H:1 * H])
        i = jax.nn.sigmoid(state[:, 1 * H:2 * H])
        o = jax.nn.sigmoid(state[:, 2 * H:3 * H])
        gt = jnp.tanh(state[:, 3 * H:4 * H])
        c_new = f * c_ref[...] + i * gt
        h_new = o * jnp.tanh(c_new)

        # Combined policy(6)+value(1) head -> one lane-dense 128-wide block.
        pv = jnp.dot(h_new, wpv_ref[...], preferred_element_type=jnp.float32) + bpv_ref[...]
        lane = lax.broadcasted_iota(jnp.int32, pv.shape, 1)
        is_pol = lane < N_ACT
        masked = jnp.where(is_pol, pv, jnp.float32(-1e30))
        m = jnp.max(masked, axis=-1, keepdims=True)
        e = jnp.exp(masked - m)
        soft = e / jnp.sum(e, axis=-1, keepdims=True)     # exact softmax denominator
        pv_out = jnp.where(is_pol, soft, jnp.where(lane == N_ACT, pv, 0.0))

        out_ref[:, 0 * H:1 * H] = h_new
        out_ref[:, 1 * H:2 * H] = c_new
        out_ref[:, 2 * H:3 * H] = pv_out


# --------------------------------------------------------------- forward wrapper
def actor_critic_forward(params, x, hidden_state=None, cell_state=None):
    """x: (B, 1, 84, 84) float32 NCHW — same interface as the PyTorch module."""
    B = x.shape[0]
    assert x.shape[1:] == (1, 84, 84), "architecture requires 1x84x84 frames"
    if hidden_state is None:
        hidden_state = jnp.zeros((B, HIDDEN), jnp.float32)
    if cell_state is None:
        cell_state = jnp.zeros((B, HIDDEN), jnp.float32)

    # ---- conv1 (1->16, k=8, s=4) + ReLU : Pallas matmul over bf16 im2col patches ----
    CB = min(B, 16)                                        # batch elems per grid step
    nb = pl.cdiv(B, CB)
    Bp1 = nb * CB
    p1 = _im2col_conv1(x).astype(jnp.bfloat16)             # (B*400, 64) bf16
    if Bp1 != B:
        p1 = jnp.pad(p1, ((0, (Bp1 - B) * 400), (0, 0)))
    c1 = pl.pallas_call(
        _conv1_kernel,
        out_shape=jax.ShapeDtypeStruct((Bp1 * 400, C1_OUT), jnp.bfloat16),
        grid=(nb,),
        in_specs=[pl.BlockSpec((CB * 400, K1), lambda b: (b, 0)),
                  pl.BlockSpec((K1, C1_OUT), lambda b: (0, 0)),
                  pl.BlockSpec((1, C1_OUT), lambda b: (0, 0))],
        out_specs=pl.BlockSpec((CB * 400, C1_OUT), lambda b: (b, 0)),
        compiler_params=pltpu.CompilerParams(dimension_semantics=("parallel",)),
    )(p1, params["w1"], params["b1"])
    c1 = c1[:B * 400].reshape(B, 20, 20, C1_OUT)           # NHWC bf16, metadata reshape

    # ---- fused conv2 + Linear + LSTM + heads ----
    # Batch rows padded so they tile cleanly; batch-tile axis shards over cores.
    if B <= 128:
        bp = max(16, ((B + 15) // 16) * 16)
        BT = bp
    else:
        bp = ((B + 127) // 128) * 128
        BT = 128
    n_bt = bp // BT

    p2 = _im2col_conv2(c1)                                 # (81, B, 256) bf16
    p2 = jnp.pad(p2, ((0, 0), (0, bp - B), (0, 0)))        # (81, bp, 256)
    h0 = jnp.pad(hidden_state.astype(jnp.float32), ((0, bp - B), (0, 0)))
    c0 = jnp.pad(cell_state.astype(jnp.float32), ((0, bp - B), (0, 0)))

    out = pl.pallas_call(
        _fused_head_kernel,
        out_shape=jax.ShapeDtypeStruct((bp, OUT_W), jnp.float32),
        grid=(n_bt, N_CHUNK),
        in_specs=[
            pl.BlockSpec((PC, BT, K2), lambda bt, g: (g, bt, 0)),        # p2 chunk
            pl.BlockSpec((K2, C2_OUT), lambda bt, g: (0, 0)),            # w2
            pl.BlockSpec((1, C2_OUT), lambda bt, g: (0, 0)),             # b2
            pl.BlockSpec((PC, C2_OUT, FEAT), lambda bt, g: (g, 0, 0)),   # wl3 chunk
            pl.BlockSpec((1, FEAT), lambda bt, g: (0, 0)),               # b_lin
            pl.BlockSpec((BT, HIDDEN), lambda bt, g: (bt, 0)),           # h0
            pl.BlockSpec((BT, HIDDEN), lambda bt, g: (bt, 0)),           # c0
            pl.BlockSpec((FEAT, 4 * HIDDEN), lambda bt, g: (0, 0)),      # wx
            pl.BlockSpec((HIDDEN, 4 * HIDDEN), lambda bt, g: (0, 0)),    # wh
            pl.BlockSpec((1, 4 * HIDDEN), lambda bt, g: (0, 0)),         # b_lstm
            pl.BlockSpec((HIDDEN, HIDDEN), lambda bt, g: (0, 0)),        # w_pv
            pl.BlockSpec((1, HIDDEN), lambda bt, g: (0, 0)),             # b_pv
        ],
        out_specs=pl.BlockSpec((BT, OUT_W), lambda bt, g: (bt, 0)),
        scratch_shapes=[pltpu.VMEM((BT, FEAT), jnp.float32)],
        compiler_params=pltpu.CompilerParams(
            dimension_semantics=("parallel", "arbitrary")),
    )(p2, params["w2"], params["b2"], params["wl3"], params["b_lin"],
      h0, c0, params["wx"], params["wh"], params["b_lstm"],
      params["w_pv"], params["b_pv"])

    new_hidden = out[:B, 0 * HIDDEN:1 * HIDDEN]
    new_cell = out[:B, 1 * HIDDEN:2 * HIDDEN]
    policy = out[:B, 2 * HIDDEN:2 * HIDDEN + N_ACT]
    value = out[:B, 2 * HIDDEN + N_ACT:2 * HIDDEN + N_ACT + 1]
    return value, policy, new_hidden, new_cell


# --------------------------------------------------------------- params
def _round_bf16(a):
    return a.astype(jnp.bfloat16).astype(jnp.float32)


def init_params(key):
    """Deterministic synthetic weights.

    Weights are first drawn in the exact PyTorch layouts (so the permutations
    below are the real torch->kernel conversions), then converted to the
    kernel-friendly NHWC / (in, out) layouts.  Weights that the kernel stores in
    bf16 are rounded to bf16 up front so the f32 reference uses identical values."""
    ks = jax.random.split(key, 12)
    n = lambda k, shape, s=0.05: jax.random.normal(k, shape, jnp.float32) * s

    tp = dict(
        w1=_round_bf16(n(ks[0], (C1_OUT, 1, 8, 8))),                 # conv1 (O,I,KH,KW)
        b1=n(ks[1], (C1_OUT,)),
        w2=_round_bf16(n(ks[2], (C2_OUT, C1_OUT, 4, 4))),            # conv2
        b2=n(ks[3], (C2_OUT,)),
        w_lin=_round_bf16(n(ks[4], (FEAT, C2_OUT * N_POS))),         # (256, 2592), NCHW flatten
        b_lin=n(ks[5], (FEAT,)),
        w_lstm=_round_bf16(n(ks[6], (4 * HIDDEN, FEAT + HIDDEN))),   # (512, 384), cat(x, h)
        b_lstm=n(ks[7], (4 * HIDDEN,)),
        w_value=n(ks[8], (1, HIDDEN)),
        b_value=n(ks[9], (1,)),
        w_policy=n(ks[10], (N_ACT, HIDDEN)),
        b_policy=n(ks[11], (N_ACT,)),
    )

    # conv1: K order (kh, kw) since cin == 1
    w1 = tp["w1"].reshape(C1_OUT, K1).T.astype(jnp.bfloat16)             # (64, 16)
    b1 = tp["b1"].reshape(1, C1_OUT)
    # conv2: K order (kh, kw, cin) to match the NHWC im2col
    w2 = jnp.transpose(tp["w2"], (2, 3, 1, 0)).reshape(K2, C2_OUT).astype(jnp.bfloat16)
    b2 = tp["b2"].reshape(1, C2_OUT)
    # lin: torch flat index = c*81 + p  ->  wl3[p, c, n] = W[n, c*81 + p]
    wl3 = jnp.transpose(tp["w_lin"].reshape(FEAT, C2_OUT, N_POS), (2, 1, 0))
    wl3 = wl3.astype(jnp.bfloat16)                                       # (81, 32, 256)
    b_lin = tp["b_lin"].reshape(1, FEAT)
    # LSTM: cat order is (x, hidden) -> split the (384, 512) transposed weight
    w_lstm_t = tp["w_lstm"].T                                            # (384, 512)
    wx = w_lstm_t[:FEAT, :].astype(jnp.bfloat16)                         # (256, 512)
    wh = w_lstm_t[FEAT:, :].astype(jnp.bfloat16)                         # (128, 512)
    b_lstm = tp["b_lstm"].reshape(1, 4 * HIDDEN)
    # combined policy(6) + value(1) head, zero-padded to a 128-lane block
    w_pv = jnp.zeros((HIDDEN, HIDDEN), jnp.float32)
    w_pv = w_pv.at[:, 0:N_ACT].set(tp["w_policy"].T).at[:, N_ACT:N_ACT + 1].set(tp["w_value"].T)
    b_pv = jnp.zeros((1, HIDDEN), jnp.float32)
    b_pv = b_pv.at[0, 0:N_ACT].set(tp["b_policy"]).at[0, N_ACT].set(tp["b_value"][0])

    params = dict(w1=w1, b1=b1, w2=w2, b2=b2, wl3=wl3, b_lin=b_lin,
                  wx=wx, wh=wh, b_lstm=b_lstm, w_pv=w_pv, b_pv=b_pv)
    return params, tp


# --------------------------------------------------------------- pure-JAX reference
def reference_forward(tp, x, hidden_state, cell_state):
    """Pure-JAX (XLA, f32) replica of the PyTorch ActorCritic forward, NCHW layout."""
    def conv(x, w, b, s):
        y = lax.conv_general_dilated(x, w, (s, s), "VALID",
                                     dimension_numbers=("NCHW", "OIHW", "NCHW"))
        return y + b.reshape(1, -1, 1, 1)

    c1 = jax.nn.relu(conv(x, tp["w1"], tp["b1"], 4))
    c2 = jax.nn.relu(conv(c1, tp["w2"], tp["b2"], 2))
    flat = c2.reshape(x.shape[0], -1)
    feat = flat @ tp["w_lin"].T + tp["b_lin"]
    state = jnp.concatenate([feat, hidden_state], axis=-1) @ tp["w_lstm"].T + tp["b_lstm"]
    f, i, o, g = jnp.split(state, 4, axis=-1)
    c_new = jax.nn.sigmoid(f) * cell_state + jax.nn.sigmoid(i) * jnp.tanh(g)
    h_new = jax.nn.sigmoid(o) * jnp.tanh(c_new)
    value = h_new @ tp["w_value"].T + tp["b_value"]
    policy = jax.nn.softmax(h_new @ tp["w_policy"].T + tp["b_policy"], axis=-1)
    return value, policy, h_new, c_new


# --------------------------------------------------------------- main
if __name__ == "__main__":
    key = jax.random.PRNGKey(0)
    k_param, k_x = jax.random.split(key)

    params, torch_params = init_params(k_param)
    # ActorCritic(kernels=16, kernel_dim=8, stride=4) on 84x84 single-channel frames
    x = jax.random.normal(k_x, (2, 1, 84, 84), jnp.float32)

    fwd = jax.jit(actor_critic_forward)
    value, policy, new_hidden, new_cell = jax.block_until_ready(fwd(params, x))

    assert value.shape == (2, 1)
    assert policy.shape == (2, 6)
    assert new_hidden.shape == (2, 128)
    assert new_cell.shape == (2, 128)
    assert bool(jnp.all(jnp.isfinite(policy)))
    # exact softmax denominator -> rows sum to 1 in f32
    assert bool(jnp.allclose(jnp.sum(policy, axis=-1), 1.0, atol=1e-3))

    # cross-check against a pure-JAX replica of the PyTorch module
    h0 = jnp.zeros((2, HIDDEN), jnp.float32)
    c0 = jnp.zeros((2, HIDDEN), jnp.float32)
    rv, rp, rh, rc = jax.jit(reference_forward)(torch_params, x, h0, c0)
    for got, want in ((value, rv), (policy, rp), (new_hidden, rh), (new_cell, rc)):
        assert bool(jnp.allclose(got, want, rtol=2e-2, atol=2e-2))

    print("KERNEL_OK")
</pallas_src>

<mosaic_0001>
module attributes {stable_mosaic.version = 11 : i64} {
  func.func @_conv1_kernel(%arg0: i32, %arg1: memref<800x64xbf16, #tpu.memory_space<vmem>>, %arg2: memref<64x16xbf16, #tpu.memory_space<vmem>>, %arg3: memref<1x16xf32, #tpu.memory_space<vmem>>, %arg4: memref<800x16xbf16, #tpu.memory_space<vmem>>) attributes {dimension_semantics = [#tpu.dimension_semantics<parallel>], iteration_bounds = array<i64: 1>, scalar_prefetch = 0 : i64, scratch_operands = 0 : i64, tpu.core_type = #tpu.core_type<tc>, window_params = [{transform_indices = @transform_0, window_bounds = array<i64: 800, 64>}, {pipeline_mode = #tpu.pipeline_mode<synchronous>, transform_indices = @transform_1, window_bounds = array<i64: 64, 16>}, {pipeline_mode = #tpu.pipeline_mode<synchronous>, transform_indices = @transform_2, window_bounds = array<i64: 1, 16>}, {transform_indices = @transform_3, window_bounds = array<i64: 800, 16>}]} {
    %c0 = arith.constant 0 : index
    %c0_0 = arith.constant 0 : index
    %0 = vector.load %arg1[%c0, %c0_0] : memref<800x64xbf16, #tpu.memory_space<vmem>>, vector<800x64xbf16>
    %c0_1 = arith.constant 0 : index
    %c0_2 = arith.constant 0 : index
    %1 = vector.load %arg2[%c0_1, %c0_2] : memref<64x16xbf16, #tpu.memory_space<vmem>>, vector<64x16xbf16>
    %cst = arith.constant dense<0.000000e+00> : vector<800x16xf32>
    %2 = tpu.matmul %0, %1, %cst {dimension_numbers = #tpu.dot_dimension_numbers<[1], [0], [0], [1], [0, 0, 1, 1], [], []>} : vector<800x64xbf16>, vector<64x16xbf16>, vector<800x16xf32> -> vector<800x16xf32>
    %c0_3 = arith.constant 0 : index
    %c0_4 = arith.constant 0 : index
    %3 = vector.load %arg3[%c0_3, %c0_4] : memref<1x16xf32, #tpu.memory_space<vmem>>, vector<1x16xf32>
    %4 = vector.broadcast %3 : vector<1x16xf32> to vector<800x16xf32>
    %5 = arith.addf %2, %4 : vector<800x16xf32>
    %cst_5 = arith.constant 0.000000e+00 : f32
    %6 = vector.broadcast %cst_5 : f32 to vector<800x16xf32>
    %7 = arith.maximumf %5, %6 : vector<800x16xf32>
    %8 = arith.truncf %7 : vector<800x16xf32> to vector<800x16xbf16>
    %c0_6 = arith.constant 0 : index
    %c0_7 = arith.constant 0 : index
    %9 = vector.load %arg4[%c0_6, %c0_7] : memref<800x16xbf16, #tpu.memory_space<vmem>>, vector<800x16xbf16>
    tpu.vector_store %arg4[%c0_6, %c0_7], %8 {strides = array<i32>} : memref<800x16xbf16, #tpu.memory_space<vmem>>, vector<800x16xbf16>,
    return
  }
  func.func @transform_0(%arg0: i32) -> (i32, i32) {
    %c0_i32 = arith.constant 0 : i32
    %c0_i32_0 = arith.constant 0 : i32
    return %arg0, %c0_i32 : i32, i32
  }
  func.func @transform_1(%arg0: i32) -> (i32, i32) {
    %c0_i32 = arith.constant 0 : i32
    %c0_i32_0 = arith.constant 0 : i32
    %c0_i32_1 = arith.constant 0 : i32
    return %c0_i32, %c0_i32_0 : i32, i32
  }
  func.func @transform_2(%arg0: i32) -> (i32, i32) {
    %c0_i32 = arith.constant 0 : i32
    %c0_i32_0 = arith.constant 0 : i32
    %c0_i32_1 = arith.constant 0 : i32
    return %c0_i32, %c0_i32_0 : i32, i32
  }
  func.func @transform_3(%arg0: i32) -> (i32, i32) {
    %c0_i32 = arith.constant 0 : i32
    %c0_i32_0 = arith.constant 0 : i32
    return %arg0, %c0_i32 : i32, i32
  }
}

module attributes {stable_mosaic.version = 11 : i64} {
  func.func @_fused_head_kernel(%arg0: i32, %arg1: i32, %arg2: memref<27x16x256xbf16, #tpu.memory_space<vmem>>, %arg3: memref<256x32xbf16, #tpu.memory_space<vmem>>, %arg4: memref<1x32xf32, #tpu.memory_space<vmem>>, %arg5: memref<27x32x256xbf16, #tpu.memory_space<vmem>>, %arg6: memref<1x256xf32, #tpu.memory_space<vmem>>, %arg7: memref<16x128xf32, #tpu.memory_space<vmem>>, %arg8: memref<16x128xf32, #tpu.memory_space<vmem>>, %arg9: memref<256x512xbf16, #tpu.memory_space<vmem>>, %arg10: memref<128x512xbf16, #tpu.memory_space<vmem>>, %arg11: memref<1x512xf32, #tpu.memory_space<vmem>>, %arg12: memref<128x128xf32, #tpu.memory_space<vmem>>, %arg13: memref<1x128xf32, #tpu.memory_space<vmem>>, %arg14: memref<16x384xf32, #tpu.memory_space<vmem>>, %arg15: memref<16x256xf32, #tpu.memory_space<vmem>>) attributes {dimension_semantics = [#tpu.dimension_semantics<parallel>, #tpu.dimension_semantics<arbitrary>], iteration_bounds = array<i64: 1, 3>, scalar_prefetch = 0 : i64, scratch_operands = 1 : i64, tpu.core_type = #tpu.core_type<tc>, window_params = [{transform_indices = @transform_0, window_bounds = array<i64: 27, 16, 256>}, {pipeline_mode = #tpu.pipeline_mode<synchronous>, transform_indices = @transform_1, window_bounds = array<i64: 256, 32>}, {pipeline_mode = #tpu.pipeline_mode<synchronous>, transform_indices = @transform_2, window_bounds = array<i64: 1, 32>}, {transform_indices = @transform_3, window_bounds = array<i64: 27, 32, 256>}, {pipeline_mode = #tpu.pipeline_mode<synchronous>, transform_indices = @transform_4, window_bounds = array<i64: 1, 256>}, {transform_indices = @transform_5, window_bounds = array<i64: 16, 128>}, {transform_indices = @transform_6, window_bounds = array<i64: 16, 128>}, {pipeline_mode = #tpu.pipeline_mode<synchronous>, transform_indices = @transform_7, window_bounds = array<i64: 256, 512>}, {pipeline_mode = #tpu.pipeline_mode<synchronous>, transform_indices = @transform_8, window_bounds = array<i64: 128, 512>}, {pipeline_mode = #tpu.pipeline_mode<synchronous>, transform_indices = @transform_9, window_bounds = array<i64: 1, 512>}, {pipeline_mode = #tpu.pipeline_mode<synchronous>, transform_indices = @transform_10, window_bounds = array<i64: 128, 128>}, {pipeline_mode = #tpu.pipeline_mode<synchronous>, transform_indices = @transform_11, window_bounds = array<i64: 1, 128>}, {transform_indices = @transform_12, window_bounds = array<i64: 16, 384>}]} {
    %c0_i32 = arith.constant 0 : i32
    %0 = arith.cmpi eq, %arg1, %c0_i32 : i32
    %1 = arith.extui %0 : i1 to i32
    %c0_i32_0 = arith.constant 0 : i32
    %2 = arith.cmpi ne, %1, %c0_i32_0 : i32
    scf.if %2 {
      %cst_225 = arith.constant 0.000000e+00 : f32
      %334 = vector.broadcast %cst_225 : f32 to vector<16x256xf32>
      %c0_226 = arith.constant 0 : index
      %c0_227 = arith.constant 0 : index
      %335 = vector.load %arg15[%c0_226, %c0_227] : memref<16x256xf32, #tpu.memory_space<vmem>>, vector<16x256xf32>
      tpu.vector_store %arg15[%c0_226, %c0_227], %334 {strides = array<i32>} : memref<16x256xf32, #tpu.memory_space<vmem>>, vector<16x256xf32>,
    } else {
    }
    %c0 = arith.constant 0 : index
    %c0_1 = arith.constant 0 : index
    %3 = vector.load %arg3[%c0, %c0_1] : memref<256x32xbf16, #tpu.memory_space<vmem>>, vector<256x32xbf16>
    %c0_2 = arith.constant 0 : index
    %c0_3 = arith.constant 0 : index
    %4 = vector.load %arg4[%c0_2, %c0_3] : memref<1x32xf32, #tpu.memory_space<vmem>>, vector<1x32xf32>
    %c0_4 = arith.constant 0 : index
    %c0_5 = arith.constant 0 : index
    %5 = vector.load %arg15[%c0_4, %c0_5] : memref<16x256xf32, #tpu.memory_space<vmem>>, vector<16x256xf32>
    %c0_6 = arith.constant 0 : index
    %c0_7 = arith.constant 0 : index
    %c0_8 = arith.constant 0 : index
    %6 = vector.load %arg2[%c0_6, %c0_7, %c0_8] : memref<27x16x256xbf16, #tpu.memory_space<vmem>>, vector<1x16x256xbf16>
    %7 = vector.shape_cast %6 : vector<1x16x256xbf16> to vector<16x256xbf16>
    %cst = arith.constant dense<0.000000e+00> : vector<16x32xf32>
    %8 = tpu.matmul %7, %3, %cst {dimension_numbers = #tpu.dot_dimension_numbers<[1], [0], [0], [1], [0, 0, 1, 1], [], []>} : vector<16x256xbf16>, vector<256x32xbf16>, vector<16x32xf32> -> vector<16x32xf32>
    %9 = vector.broadcast %4 : vector<1x32xf32> to vector<16x32xf32>
    %10 = arith.addf %8, %9 : vector<16x32xf32>
    %cst_9 = arith.constant 0.000000e+00 : f32
    %11 = vector.broadcast %cst_9 : f32 to vector<16x32xf32>
    %12 = arith.maximumf %10, %11 : vector<16x32xf32>
    %13 = arith.truncf %12 : vector<16x32xf32> to vector<16x32xbf16>
    %c0_10 = arith.constant 0 : index
    %c0_11 = arith.constant 0 : index
    %c0_12 = arith.constant 0 : index
    %14 = vector.load %arg5[%c0_10, %c0_11, %c0_12] : memref<27x32x256xbf16, #tpu.memory_space<vmem>>, vector<1x32x256xbf16>
    %15 = vector.shape_cast %14 : vector<1x32x256xbf16> to vector<32x256xbf16>
    %cst_13 = arith.constant dense<0.000000e+00> : vector<16x256xf32>
    %16 = tpu.matmul %13, %15, %cst_13 {dimension_numbers = #tpu.dot_dimension_numbers<[1], [0], [0], [1], [0, 0, 1, 1], [], []>} : vector<16x32xbf16>, vector<32x256xbf16>, vector<16x256xf32> -> vector<16x256xf32>
    %17 = arith.addf %5, %16 : vector<16x256xf32>
    %c1 = arith.constant 1 : index
    %c0_14 = arith.constant 0 : index
    %c0_15 = arith.constant 0 : index
    %18 = vector.load %arg2[%c1, %c0_14, %c0_15] : memref<27x16x256xbf16, #tpu.memory_space<vmem>>, vector<1x16x256xbf16>
    %19 = vector.shape_cast %18 : vector<1x16x256xbf16> to vector<16x256xbf16>
    %cst_16 = arith.constant dense<0.000000e+00> : vector<16x32xf32>
    %20 = tpu.matmul %19, %3, %cst_16 {dimension_numbers = #tpu.dot_dimension_numbers<[1], [0], [0], [1], [0, 0, 1, 1], [], []>} : vector<16x256xbf16>, vector<256x32xbf16>, vector<16x32xf32> -> vector<16x32xf32>
    %21 = vector.broadcast %4 : vector<1x32xf32> to vector<16x32xf32>
    %22 = arith.addf %20, %21 : vector<16x32xf32>
    %cst_17 = arith.constant 0.000000e+00 : f32
    %23 = vector.broadcast %cst_17 : f32 to vector<16x32xf32>
    %24 = arith.maximumf %22, %23 : vector<16x32xf32>
    %25 = arith.truncf %24 : vector<16x32xf32> to vector<16x32xbf16>
    %c1_18 = arith.constant 1 : index
    %c0_19 = arith.constant 0 : index
    %c0_20 = arith.constant 0 : index
    %26 = vector.load %arg5[%c1_18, %c0_19, %c0_20] : memref<27x32x256xbf16, #tpu.memory_space<vmem>>, vector<1x32x256xbf16>
    %27 = vector.shape_cast %26 : vector<1x32x256xbf16> to vector<32x256xbf16>
    %cst_21 = arith.constant dense<0.000000e+00> : vector<16x256xf32>
    %28 = tpu.matmul %25, %27, %cst_21 {dimension_numbers = #tpu.dot_dimension_numbers<[1], [0], [0], [1], [0, 0, 1, 1], [], []>} : vector<16x32xbf16>, vector<32x256xbf16>, vector<16x256xf32> -> vector<16x256xf32>
    %29 = arith.addf %17, %28 : vector<16x256xf32>
    %c2 = arith.constant 2 : index
    %c0_22 = arith.constant 0 : index
    %c0_23 = arith.constant 0 : index
    %30 = vector.load %arg2[%c2, %c0_22, %c0_23] : memref<27x16x256xbf16, #tpu.memory_space<vmem>>, vector<1x16x256xbf16>
    %31 = vector.shape_cast %30 : vector<1x16x256xbf16> to vector<16x256xbf16>
    %cst_24 = arith.constant dense<0.000000e+00> : vector<16x32xf32>
    %32 = tpu.matmul %31, %3, %cst_24 {dimension_numbers = #tpu.dot_dimension_numbers<[1], [0], [0], [1], [0, 0, 1, 1], [], []>} : vector<16x256xbf16>, vector<256x32xbf16>, vector<16x32xf32> -> vector<16x32xf32>
    %33 = vector.broadcast %4 : vector<1x32xf32> to vector<16x32xf32>
    %34 = arith.addf %32, %33 : vector<16x32xf32>
    %cst_25 = arith.constant 0.000000e+00 : f32
    %35 = vector.broadcast %cst_25 : f32 to vector<16x32xf32>
    %36 = arith.maximumf %34, %35 : vector<16x32xf32>
    %37 = arith.truncf %36 : vector<16x32xf32> to vector<16x32xbf16>
    %c2_26 = arith.constant 2 : index
    %c0_27 = arith.constant 0 : index
    %c0_28 = arith.constant 0 : index
    %38 = vector.load %arg5[%c2_26, %c0_27, %c0_28] : memref<27x32x256xbf16, #tpu.memory_space<vmem>>, vector<1x32x256xbf16>
    %39 = vector.shape_cast %38 : vector<1x32x256xbf16> to vector<32x256xbf16>
    %cst_29 = arith.constant dense<0.000000e+00> : vector<16x256xf32>
    %40 = tpu.matmul %37, %39, %cst_29 {dimension_numbers = #tpu.dot_dimension_numbers<[1], [0], [0], [1], [0, 0, 1, 1], [], []>} : vector<16x32xbf16>, vector<32x256xbf16>, vector<16x256xf32> -> vector<16x256xf32>
    %41 = arith.addf %29, %40 : vector<16x256xf32>
    %c3 = arith.constant 3 : index
    %c0_30 = arith.constant 0 : index
    %c0_31 = arith.constant 0 : index
    %42 = vector.load %arg2[%c3, %c0_30, %c0_31] : memref<27x16x256xbf16, #tpu.memory_space<vmem>>, vector<1x16x256xbf16>
    %43 = vector.shape_cast %42 : vector<1x16x256xbf16> to vector<16x256xbf16>
    %cst_32 = arith.constant dense<0.000000e+00> : vector<16x32xf32>
    %44 = tpu.matmul %43, %3, %cst_32 {dimension_numbers = #tpu.dot_dimension_numbers<[1], [0], [0], [1], [0, 0, 1, 1], [], []>} : vector<16x256xbf16>, vector<256x32xbf16>, vector<16x32xf32> -> vector<16x32xf32>
    %45 = vector.broadcast %4 : vector<1x32xf32> to vector<16x32xf32>
    %46 = arith.addf %44, %45 : vector<16x32xf32>
    %cst_33 = arith.constant 0.000000e+00 : f32
    %47 = vector.broadcast %cst_33 : f32 to vector<16x32xf32>
    %48 = arith.maximumf %46, %47 : vector<16x32xf32>
    %49 = arith.truncf %48 : vector<16x32xf32> to vector<16x32xbf16>
    %c3_34 = arith.constant 3 : index
    %c0_35 = arith.constant 0 : index
    %c0_36 = arith.constant 0 : index
    %50 = vector.load %arg5[%c3_34, %c0_35, %c0_36] : memref<27x32x256xbf16, #tpu.memory_space<vmem>>, vector<1x32x256xbf16>
    %51 = vector.shape_cast %50 : vector<1x32x256xbf16> to vector<32x256xbf16>
    %cst_37 = arith.constant dense<0.000000e+00> : vector<16x256xf32>
    %52 = tpu.matmul %49, %51, %cst_37 {dimension_numbers = #tpu.dot_dimension_numbers<[1], [0], [0], [1], [0, 0, 1, 1], [], []>} : vector<16x32xbf16>, vector<32x256xbf16>, vector<16x256xf32> -> vector<16x256xf32>
    %53 = arith.addf %41, %52 : vector<16x256xf32>
    %c4 = arith.constant 4 : index
    %c0_38 = arith.constant 0 : index
    %c0_39 = arith.constant 0 : index
    %54 = vector.load %arg2[%c4, %c0_38, %c0_39] : memref<27x16x256xbf16, #tpu.memory_space<vmem>>, vector<1x16x256xbf16>
    %55 = vector.shape_cast %54 : vector<1x16x256xbf16> to vector<16x256xbf16>
    %cst_40 = arith.constant dense<0.000000e+00> : vector<16x32xf32>
    %56 = tpu.matmul %55, %3, %cst_40 {dimension_numbers = #tpu.dot_dimension_numbers<[1], [0], [0], [1], [0, 0, 1, 1], [], []>} : vector<16x256xbf16>, vector<256x32xbf16>, vector<16x32xf32> -> vector<16x32xf32>
    %57 = vector.broadcast %4 : vector<1x32xf32> to vector<16x32xf32>
    %58 = arith.addf %56, %57 : vector<16x32xf32>
    %cst_41 = arith.constant 0.000000e+00 : f32
    %59 = vector.broadcast %cst_41 : f32 to vector<16x32xf32>
    %60 = arith.maximumf %58, %59 : vector<16x32xf32>
    %61 = arith.truncf %60 : vector<16x32xf32> to vector<16x32xbf16>
    %c4_42 = arith.constant 4 : index
    %c0_43 = arith.constant 0 : index
    %c0_44 = arith.constant 0 : index
    %62 = vector.load %arg5[%c4_42, %c0_43, %c0_44] : memref<27x32x256xbf16, #tpu.memory_space<vmem>>, vector<1x32x256xbf16>
    %63 = vector.shape_cast %62 : vector<1x32x256xbf16> to vector<32x256xbf16>
    %cst_45 = arith.constant dense<0.000000e+00> : vector<16x256xf32>
    %64 = tpu.matmul %61, %63, %cst_45 {dimension_numbers = #tpu.dot_dimension_numbers<[1], [0], [0], [1], [0, 0, 1, 1], [], []>} : vector<16x32xbf16>, vector<32x256xbf16>, vector<16x256xf32> -> vector<16x256xf32>
    %65 = arith.addf %53, %64 : vector<16x256xf32>
    %c5 = arith.constant 5 : index
    %c0_46 = arith.constant 0 : index
    %c0_47 = arith.constant 0 : index
    %66 = vector.load %arg2[%c5, %c0_46, %c0_47] : memref<27x16x256xbf16, #tpu.memory_space<vmem>>, vector<1x16x256xbf16>
    %67 = vector.shape_cast %66 : vector<1x16x256xbf16> to vector<16x256xbf16>
    %cst_48 = arith.constant dense<0.000000e+00> : vector<16x32xf32>
    %68 = tpu.matmul %67, %3, %cst_48 {dimension_numbers = #tpu.dot_dimension_numbers<[1], [0], [0], [1], [0, 0, 1, 1], [], []>} : vector<16x256xbf16>, vector<256x32xbf16>, vector<16x32xf32> -> vector<16x32xf32>
    %69 = vector.broadcast %4 : vector<1x32xf32> to vector<16x32xf32>
    %70 = arith.addf %68, %69 : vector<16x32xf32>
    %cst_49 = arith.constant 0.000000e+00 : f32
    %71 = vector.broadcast %cst_49 : f32 to vector<16x32xf32>
    %72 = arith.maximumf %70, %71 : vector<16x32xf32>
    %73 = arith.truncf %72 : vector<16x32xf32> to vector<16x32xbf16>
    %c5_50 = arith.constant 5 : index
    %c0_51 = arith.constant 0 : index
    %c0_52 = arith.constant 0 : index
    %74 = vector.load %arg5[%c5_50, %c0_51, %c0_52] : memref<27x32x256xbf16, #tpu.memory_space<vmem>>, vector<1x32x256xbf16>
    %75 = vector.shape_cast %74 : vector<1x32x256xbf16> to vector<32x256xbf16>
    %cst_53 = arith.constant dense<0.000000e+00> : vector<16x256xf32>
    %76 = tpu.matmul %73, %75, %cst_53 {dimension_numbers = #tpu.dot_dimension_numbers<[1], [0], [0], [1], [0, 0, 1, 1], [], []>} : vector<16x32xbf16>, vector<32x256xbf16>, vector<16x256xf32> -> vector<16x256xf32>
    %77 = arith.addf %65, %76 : vector<16x256xf32>
    %c6 = arith.constant 6 : index
    %c0_54 = arith.constant 0 : index
    %c0_55 = arith.constant 0 : index
    %78 = vector.load %arg2[%c6, %c0_54, %c0_55] : memref<27x16x256xbf16, #tpu.memory_space<vmem>>, vector<1x16x256xbf16>
    %79 = vector.shape_cast %78 : vector<1x16x256xbf16> to vector<16x256xbf16>
    %cst_56 = arith.constant dense<0.000000e+00> : vector<16x32xf32>
    %80 = tpu.matmul %79, %3, %cst_56 {dimension_numbers = #tpu.dot_dimension_numbers<[1], [0], [0], [1], [0, 0, 1, 1], [], []>} : vector<16x256xbf16>, vector<256x32xbf16>, vector<16x32xf32> -> vector<16x32xf32>
    %81 = vector.broadcast %4 : vector<1x32xf32> to vector<16x32xf32>
    %82 = arith.addf %80, %81 : vector<16x32xf32>
    %cst_57 = arith.constant 0.000000e+00 : f32
    %83 = vector.broadcast %cst_57 : f32 to vector<16x32xf32>
    %84 = arith.maximumf %82, %83 : vector<16x32xf32>
    %85 = arith.truncf %84 : vector<16x32xf32> to vector<16x32xbf16>
    %c6_58 = arith.constant 6 : index
    %c0_59 = arith.constant 0 : index
    %c0_60 = arith.constant 0 : index
    %86 = vector.load %arg5[%c6_58, %c0_59, %c0_60] : memref<27x32x256xbf16, #tpu.memory_space<vmem>>, vector<1x32x256xbf16>
    %87 = vector.shape_cast %86 : vector<1x32x256xbf16> to vector<32x256xbf16>
    %cst_61 = arith.constant dense<0.000000e+00> : vector<16x256xf32>
    %88 = tpu.matmul %85, %87, %cst_61 {dimension_numbers = #tpu.dot_dimension_numbers<[1], [0], [0], [1], [0, 0, 1, 1], [], []>} : vector<16x32xbf16>, vector<32x256xbf16>, vector<16x256xf32> -> vector<16x256xf32>
    %89 = arith.addf %77, %88 : vector<16x256xf32>
    %c7 = arith.constant 7 : index
    %c0_62 = arith.constant 0 : index
    %c0_63 = arith.constant 0 : index
    %90 = vector.load %arg2[%c7, %c0_62, %c0_63] : memref<27x16x256xbf16, #tpu.memory_space<vmem>>, vector<1x16x256xbf16>
    %91 = vector.shape_cast %90 : vector<1x16x256xbf16> to vector<16x256xbf16>
    %cst_64 = arith.constant dense<0.000000e+00> : vector<16x32xf32>
    %92 = tpu.matmul %91, %3, %cst_64 {dimension_numbers = #tpu.dot_dimension_numbers<[1], [0], [0], [1], [0, 0, 1, 1], [], []>} : vector<16x256xbf16>, vector<256x32xbf16>, vector<16x32xf32> -> vector<16x32xf32>
    %93 = vector.broadcast %4 : vector<1x32xf32> to vector<16x32xf32>
    %94 = arith.addf %92, %93 : vector<16x32xf32>
    %cst_65 = arith.constant 0.000000e+00 : f32
    %95 = vector.broadcast %cst_65 : f32 to vector<16x32xf32>
    %96 = arith.maximumf %94, %95 : vector<16x32xf32>
    %97 = arith.truncf %96 : vector<16x32xf32> to vector<16x32xbf16>
    %c7_66 = arith.constant 7 : index
    %c0_67 = arith.constant 0 : index
    %c0_68 = arith.constant 0 : index
    %98 = vector.load %arg5[%c7_66, %c0_67, %c0_68] : memref<27x32x256xbf16, #tpu.memory_space<vmem>>, vector<1x32x256xbf16>
    %99 = vector.shape_cast %98 : vector<1x32x256xbf16> to vector<32x256xbf16>
    %cst_69 = arith.constant dense<0.000000e+00> : vector<16x256xf32>
    %100 = tpu.matmul %97, %99, %cst_69 {dimension_numbers = #tpu.dot_dimension_numbers<[1], [0], [0], [1], [0, 0, 1, 1], [], []>} : vector<16x32xbf16>, vector<32x256xbf16>, vector<16x256xf32> -> vector<16x256xf32>
    %101 = arith.addf %89, %100 : vector<16x256xf32>
    %c8 = arith.constant 8 : index
    %c0_70 = arith.constant 0 : index
    %c0_71 = arith.constant 0 : index
    %102 = vector.load %arg2[%c8, %c0_70, %c0_71] : memref<27x16x256xbf16, #tpu.memory_space<vmem>>, vector<1x16x256xbf16>
    %103 = vector.shape_cast %102 : vector<1x16x256xbf16> to vector<16x256xbf16>
    %cst_72 = arith.constant dense<0.000000e+00> : vector<16x32xf32>
    %104 = tpu.matmul %103, %3, %cst_72 {dimension_numbers = #tpu.dot_dimension_numbers<[1], [0], [0], [1], [0, 0, 1, 1], [], []>} : vector<16x256xbf16>, vector<256x32xbf16>, vector<16x32xf32> -> vector<16x32xf32>
    %105 = vector.broadcast %4 : vector<1x32xf32> to vector<16x32xf32>
    %106 = arith.addf %104, %105 : vector<16x32xf32>
    %cst_73 = arith.constant 0.000000e+00 : f32
    %107 = vector.broadcast %cst_73 : f32 to vector<16x32xf32>
    %108 = arith.maximumf %106, %107 : vector<16x32xf32>
    %109 = arith.truncf %108 : vector<16x32xf32> to vector<16x32xbf16>
    %c8_74 = arith.constant 8 : index
    %c0_75 = arith.constant 0 : index
    %c0_76 = arith.constant 0 : index
    %110 = vector.load %arg5[%c8_74, %c0_75, %c0_76] : memref<27x32x256xbf16, #tpu.memory_space<vmem>>, vector<1x32x256xbf16>
    %111 = vector.shape_cast %110 : vector<1x32x256xbf16> to vector<32x256xbf16>
    %cst_77 = arith.constant dense<0.000000e+00> : vector<16x256xf32>
    %112 = tpu.matmul %109, %111, %cst_77 {dimension_numbers = #tpu.dot_dimension_numbers<[1], [0], [0], [1], [0, 0, 1, 1], [], []>} : vector<16x32xbf16>, vector<32x256xbf16>, vector<16x256xf32> -> vector<16x256xf32>
    %113 = arith.addf %101, %112 : vector<16x256xf32>
    %c9 = arith.constant 9 : index
    %c0_78 = arith.constant 0 : index
    %c0_79 = arith.constant 0 : index
    %114 = vector.load %arg2[%c9, %c0_78, %c0_79] : memref<27x16x256xbf16, #tpu.memory_space<vmem>>, vector<1x16x256xbf16>
    %115 = vector.shape_cast %114 : vector<1x16x256xbf16> to vector<16x256xbf16>
    %cst_80 = arith.constant dense<0.000000e+00> : vector<16x32xf32>
    %116 = tpu.matmul %115, %3, %cst_80 {dimension_numbers = #tpu.dot_dimension_numbers<[1], [0], [0], [1], [0, 0, 1, 1], [], []>} : vector<16x256xbf16>, vector<256x32xbf16>, vector<16x32xf32> -> vector<16x32xf32>
    %117 = vector.broadcast %4 : vector<1x32xf32> to vector<16x32xf32>
    %118 = arith.addf %116, %117 : vector<16x32xf32>
    %cst_81 = arith.constant 0.000000e+00 : f32
    %119 = vector.broadcast %cst_81 : f32 to vector<16x32xf32>
    %120 = arith.maximumf %118, %119 : vector<16x32xf32>
    %121 = arith.truncf %120 : vector<16x32xf32> to vector<16x32xbf16>
    %c9_82 = arith.constant 9 : index
    %c0_83 = arith.constant 0 : index
    %c0_84 = arith.constant 0 : index
    %122 = vector.load %arg5[%c9_82, %c0_83, %c0_84] : memref<27x32x256xbf16, #tpu.memory_space<vmem>>, vector<1x32x256xbf16>
    %123 = vector.shape_cast %122 : vector<1x32x256xbf16> to vector<32x256xbf16>
    %cst_85 = arith.constant dense<0.000000e+00> : vector<16x256xf32>
    %124 = tpu.matmul %121, %123, %cst_85 {dimension_numbers = #tpu.dot_dimension_numbers<[1], [0], [0], [1], [0, 0, 1, 1], [], []>} : vector<16x32xbf16>, vector<32x256xbf16>, vector<16x256xf32> -> vector<16x256xf32>
    %125 = arith.addf %113, %124 : vector<16x256xf32>
    %c10 = arith.constant 10 : index
    %c0_86 = arith.constant 0 : index
    %c0_87 = arith.constant 0 : index
    %126 = vector.load %arg2[%c10, %c0_86, %c0_87] : memref<27x16x256xbf16, #tpu.memory_space<vmem>>, vector<1x16x256xbf16>
    %127 = vector.shape_cast %126 : vector<1x16x256xbf16> to vector<16x256xbf16>
    %cst_88 = arith.constant dense<0.000000e+00> : vector<16x32xf32>
    %128 = tpu.matmul %127, %3, %cst_88 {dimension_numbers = #tpu.dot_dimension_numbers<[1], [0], [0], [1], [0, 0, 1, 1], [], []>} : vector<16x256xbf16>, vector<256x32xbf16>, vector<16x32xf32> -> vector<16x32xf32>
    %129 = vector.broadcast %4 : vector<1x32xf32> to vector<16x32xf32>
    %130 = arith.addf %128, %129 : vector<16x32xf32>
    %cst_89 = arith.constant 0.000000e+00 : f32
    %131 = vector.broadcast %cst_89 : f32 to vector<16x32xf32>
    %132 = arith.maximumf %130, %131 : vector<16x32xf32>
    %133 = arith.truncf %132 : vector<16x32xf32> to vector<16x32xbf16>
    %c10_90 = arith.constant 10 : index
    %c0_91 = arith.constant 0 : index
    %c0_92 = arith.constant 0 : index
    %134 = vector.load %arg5[%c10_90, %c0_91, %c0_92] : memref<27x32x256xbf16, #tpu.memory_space<vmem>>, vector<1x32x256xbf16>
    %135 = vector.shape_cast %134 : vector<1x32x256xbf16> to vector<32x256xbf16>
    %cst_93 = arith.constant dense<0.000000e+00> : vector<16x256xf32>
    %136 = tpu.matmul %133, %135, %cst_93 {dimension_numbers = #tpu.dot_dimension_numbers<[1], [0], [0], [1], [0, 0, 1, 1], [], []>} : vector<16x32xbf16>, vector<32x256xbf16>, vector<16x256xf32> -> vector<16x256xf32>
    %137 = arith.addf %125, %136 : vector<16x256xf32>
    %c11 = arith.constant 11 : index
    %c0_94 = arith.constant 0 : index
    %c0_95 = arith.constant 0 : index
    %138 = vector.load %arg2[%c11, %c0_94, %c0_95] : memref<27x16x256xbf16, #tpu.memory_space<vmem>>, vector<1x16x256xbf16>
    %139 = vector.shape_cast %138 : vector<1x16x256xbf16> to vector<16x256xbf16>
    %cst_96 = arith.constant dense<0.000000e+00> : vector<16x32xf32>
    %140 = tpu.matmul %139, %3, %cst_96 {dimension_numbers = #tpu.dot_dimension_numbers<[1], [0], [0], [1], [0, 0, 1, 1], [], []>} : vector<16x256xbf16>, vector<256x32xbf16>, vector<16x32xf32> -> vector<16x32xf32>
    %141 = vector.broadcast %4 : vector<1x32xf32> to vector<16x32xf32>
    %142 = arith.addf %140, %141 : vector<16x32xf32>
    %cst_97 = arith.constant 0.000000e+00 : f32
    %143 = vector.broadcast %cst_97 : f32 to vector<16x32xf32>
    %144 = arith.maximumf %142, %143 : vector<16x32xf32>
    %145 = arith.truncf %144 : vector<16x32xf32> to vector<16x32xbf16>
    %c11_98 = arith.constant 11 : index
    %c0_99 = arith.constant 0 : index
    %c0_100 = arith.constant 0 : index
    %146 = vector.load %arg5[%c11_98, %c0_99, %c0_100] : memref<27x32x256xbf16, #tpu.memory_space<vmem>>, vector<1x32x256xbf16>
    %147 = vector.shape_cast %146 : vector<1x32x256xbf16> to vector<32x256xbf16>
    %cst_101 = arith.constant dense<0.000000e+00> : vector<16x256xf32>
    %148 = tpu.matmul %145, %147, %cst_101 {dimension_numbers = #tpu.dot_dimension_numbers<[1], [0], [0], [1], [0, 0, 1, 1], [], []>} : vector<16x32xbf16>, vector<32x256xbf16>, vector<16x256xf32> -> vector<16x256xf32>
    %149 = arith.addf %137, %148 : vector<16x256xf32>
    %c12 = arith.constant 12 : index
    %c0_102 = arith.constant 0 : index
    %c0_103 = arith.constant 0 : index
    %150 = vector.load %arg2[%c12, %c0_102, %c0_103] : memref<27x16x256xbf16, #tpu.memory_space<vmem>>, vector<1x16x256xbf16>
    %151 = vector.shape_cast %150 : vector<1x16x256xbf16> to vector<16x256xbf16>
    %cst_104 = arith.constant dense<0.000000e+00> : vector<16x32xf32>
    %152 = tpu.matmul %151, %3, %cst_104 {dimension_numbers = #tpu.dot_dimension_numbers<[1], [0], [0], [1], [0, 0, 1, 1], [], []>} : vector<16x256xbf16>, vector<256x32xbf16>, vector<16x32xf32> -> vector<16x32xf32>
    %153 = vector.broadcast %4 : vector<1x32xf32> to vector<16x32xf32>
    %154 = arith.addf %152, %153 : vector<16x32xf32>
    %cst_105 = arith.constant 0.000000e+00 : f32
    %155 = vector.broadcast %cst_105 : f32 to vector<16x32xf32>
    %156 = arith.maximumf %154, %155 : vector<16x32xf32>
    %157 = arith.truncf %156 : vector<16x32xf32> to vector<16x32xbf16>
    %c12_106 = arith.constant 12 : index
    %c0_107 = arith.constant 0 : index
    %c0_108 = arith.constant 0 : index
    %158 = vector.load %arg5[%c12_106, %c0_107, %c0_108] : memref<27x32x256xbf16, #tpu.memory_space<vmem>>, vector<1x32x256xbf16>
    %159 = vector.shape_cast %158 : vector<1x32x256xbf16> to vector<32x256xbf16>
    %cst_109 = arith.constant dense<0.000000e+00> : vector<16x256xf32>
    %160 = tpu.matmul %157, %159, %cst_109 {dimension_numbers = #tpu.dot_dimension_numbers<[1], [0], [0], [1], [0, 0, 1, 1], [], []>} : vector<16x32xbf16>, vector<32x256xbf16>, vector<16x256xf32> -> vector<16x256xf32>
    %161 = arith.addf %149, %160 : vector<16x256xf32>
    %c13 = arith.constant 13 : index
    %c0_110 = arith.constant 0 : index
    %c0_111 = arith.constant 0 : index
    %162 = vector.load %arg2[%c13, %c0_110, %c0_111] : memref<27x16x256xbf16, #tpu.memory_space<vmem>>, vector<1x16x256xbf16>
    %163 = vector.shape_cast %162 : vector<1x16x256xbf16> to vector<16x256xbf16>
    %cst_112 = arith.constant dense<0.000000e+00> : vector<16x32xf32>
    %164 = tpu.matmul %163, %3, %cst_112 {dimension_numbers = #tpu.dot_dimension_numbers<[1], [0], [0], [1], [0, 0, 1, 1], [], []>} : vector<16x256xbf16>, vector<256x32xbf16>, vector<16x32xf32> -> vector<16x32xf32>
    %165 = vector.broadcast %4 : vector<1x32xf32> to vector<16x32xf32>
    %166 = arith.addf %164, %165 : vector<16x32xf32>
    %cst_113 = arith.constant 0.000000e+00 : f32
    %167 = vector.broadcast %cst_113 : f32 to vector<16x32xf32>
    %168 = arith.maximumf %166, %167 : vector<16x32xf32>
    %169 = arith.truncf %168 : vector<16x32xf32> to vector<16x32xbf16>
    %c13_114 = arith.constant 13 : index
    %c0_115 = arith.constant 0 : index
    %c0_116 = arith.constant 0 : index
    %170 = vector.load %arg5[%c13_114, %c0_115, %c0_116] : memref<27x32x256xbf16, #tpu.memory_space<vmem>>, vector<1x32x256xbf16>
    %171 = vector.shape_cast %170 : vector<1x32x256xbf16> to vector<32x256xbf16>
    %cst_117 = arith.constant dense<0.000000e+00> : vector<16x256xf32>
    %172 = tpu.matmul %169, %171, %cst_117 {dimension_numbers = #tpu.dot_dimension_numbers<[1], [0], [0], [1], [0, 0, 1, 1], [], []>} : vector<16x32xbf16>, vector<32x256xbf16>, vector<16x256xf32> -> vector<16x256xf32>
    %173 = arith.addf %161, %172 : vector<16x256xf32>
    %c14 = arith.constant 14 : index
    %c0_118 = arith.constant 0 : index
    %c0_119 = arith.constant 0 : index
    %174 = vector.load %arg2[%c14, %c0_118, %c0_119] : memref<27x16x256xbf16, #tpu.memory_space<vmem>>, vector<1x16x256xbf16>
    %175 = vector.shape_cast %174 : vector<1x16x256xbf16> to vector<16x256xbf16>
    %cst_120 = arith.constant dense<0.000000e+00> : vector<16x32xf32>
    %176 = tpu.matmul %175, %3, %cst_120 {dimension_numbers = #tpu.dot_dimension_numbers<[1], [0], [0], [1], [0, 0, 1, 1], [], []>} : vector<16x256xbf16>, vector<256x32xbf16>, vector<16x32xf32> -> vector<16x32xf32>
    %177 = vector.broadcast %4 : vector<1x32xf32> to vector<16x32xf32>
    %178 = arith.addf %176, %177 : vector<16x32xf32>
    %cst_121 = arith.constant 0.000000e+00 : f32
    %179 = vector.broadcast %cst_121 : f32 to vector<16x32xf32>
    %180 = arith.maximumf %178, %179 : vector<16x32xf32>
    %181 = arith.truncf %180 : vector<16x32xf32> to vector<16x32xbf16>
    %c14_122 = arith.constant 14 : index
    %c0_123 = arith.constant 0 : index
    %c0_124 = arith.constant 0 : index
    %182 = vector.load %arg5[%c14_122, %c0_123, %c0_124] : memref<27x32x256xbf16, #tpu.memory_space<vmem>>, vector<1x32x256xbf16>
    %183 = vector.shape_cast %182 : vector<1x32x256xbf16> to vector<32x256xbf16>
    %cst_125 = arith.constant dense<0.000000e+00> : vector<16x256xf32>
    %184 = tpu.matmul %181, %183, %cst_125 {dimension_numbers = #tpu.dot_dimension_numbers<[1], [0], [0], [1], [0, 0, 1, 1], [], []>} : vector<16x32xbf16>, vector<32x256xbf16>, vector<16x256xf32> -> vector<16x256xf32>
    %185 = arith.addf %173, %184 : vector<16x256xf32>
    %c15 = arith.constant 15 : index
    %c0_126 = arith.constant 0 : index
    %c0_127 = arith.constant 0 : index
    %186 = vector.load %arg2[%c15, %c0_126, %c0_127] : memref<27x16x256xbf16, #tpu.memory_space<vmem>>, vector<1x16x256xbf16>
    %187 = vector.shape_cast %186 : vector<1x16x256xbf16> to vector<16x256xbf16>
    %cst_128 = arith.constant dense<0.000000e+00> : vector<16x32xf32>
    %188 = tpu.matmul %187, %3, %cst_128 {dimension_numbers = #tpu.dot_dimension_numbers<[1], [0], [0], [1], [0, 0, 1, 1], [], []>} : vector<16x256xbf16>, vector<256x32xbf16>, vector<16x32xf32> -> vector<16x32xf32>
    %189 = vector.broadcast %4 : vector<1x32xf32> to vector<16x32xf32>
    %190 = arith.addf %188, %189 : vector<16x32xf32>
    %cst_129 = arith.constant 0.000000e+00 : f32
    %191 = vector.broadcast %cst_129 : f32 to vector<16x32xf32>
    %192 = arith.maximumf %190, %191 : vector<16x32xf32>
    %193 = arith.truncf %192 : vector<16x32xf32> to vector<16x32xbf16>
    %c15_130 = arith.constant 15 : index
    %c0_131 = arith.constant 0 : index
    %c0_132 = arith.constant 0 : index
    %194 = vector.load %arg5[%c15_130, %c0_131, %c0_132] : memref<27x32x256xbf16, #tpu.memory_space<vmem>>, vector<1x32x256xbf16>
    %195 = vector.shape_cast %194 : vector<1x32x256xbf16> to vector<32x256xbf16>
    %cst_133 = arith.constant dense<0.000000e+00> : vector<16x256xf32>
    %196 = tpu.matmul %193, %195, %cst_133 {dimension_numbers = #tpu.dot_dimension_numbers<[1], [0], [0], [1], [0, 0, 1, 1], [], []>} : vector<16x32xbf16>, vector<32x256xbf16>, vector<16x256xf32> -> vector<16x256xf32>
    %197 = arith.addf %185, %196 : vector<16x256xf32>
    %c16 = arith.constant 16 : index
    %c0_134 = arith.constant 0 : index
    %c0_135 = arith.constant 0 : index
    %198 = vector.load %arg2[%c16, %c0_134, %c0_135] : memref<27x16x256xbf16, #tpu.memory_space<vmem>>, vector<1x16x256xbf16>
    %199 = vector.shape_cast %198 : vector<1x16x256xbf16> to vector<16x256xbf16>
    %cst_136 = arith.constant dense<0.000000e+00> : vector<16x32xf32>
    %200 = tpu.matmul %199, %3, %cst_136 {dimension_numbers = #tpu.dot_dimension_numbers<[1], [0], [0], [1], [0, 0, 1, 1], [], []>} : vector<16x256xbf16>, vector<256x32xbf16>, vector<16x32xf32> -> vector<16x32xf32>
    %201 = vector.broadcast %4 : vector<1x32xf32> to vector<16x32xf32>
    %202 = arith.addf %200, %201 : vector<16x32xf32>
    %cst_137 = arith.constant 0.000000e+00 : f32
    %203 = vector.broadcast %cst_137 : f32 to vector<16x32xf32>
    %204 = arith.maximumf %202, %203 : vector<16x32xf32>
    %205 = arith.truncf %204 : vector<16x32xf32> to vector<16x32xbf16>
    %c16_138 = arith.constant 16 : index
    %c0_139 = arith.constant 0 : index
    %c0_140 = arith.constant 0 : index
    %206 = vector.load %arg5[%c16_138, %c0_139, %c0_140] : memref<27x32x256xbf16, #tpu.memory_space<vmem>>, vector<1x32x256xbf16>
    %207 = vector.shape_cast %206 : vector<1x32x256xbf16> to vector<32x256xbf16>
    %cst_141 = arith.constant dense<0.000000e+00> : vector<16x256xf32>
    %208 = tpu.matmul %205, %207, %cst_141 {dimension_numbers = #tpu.dot_dimension_numbers<[1], [0], [0], [1], [0, 0, 1, 1], [], []>} : vector<16x32xbf16>, vector<32x256xbf16>, vector<16x256xf32> -> vector<16x256xf32>
    %209 = arith.addf %197, %208 : vector<16x256xf32>
    %c17 = arith.constant 17 : index
    %c0_142 = arith.constant 0 : index
    %c0_143 = arith.constant 0 : index
    %210 = vector.load %arg2[%c17, %c0_142, %c0_143] : memref<27x16x256xbf16, #tpu.memory_space<vmem>>, vector<1x16x256xbf16>
    %211 = vector.shape_cast %210 : vector<1x16x256xbf16> to vector<16x256xbf16>
    %cst_144 = arith.constant dense<0.000000e+00> : vector<16x32xf32>
    %212 = tpu.matmul %211, %3, %cst_144 {dimension_numbers = #tpu.dot_dimension_numbers<[1], [0], [0], [1], [0, 0, 1, 1], [], []>} : vector<16x256xbf16>, vector<256x32xbf16>, vector<16x32xf32> -> vector<16x32xf32>
    %213 = vector.broadcast %4 : vector<1x32xf32> to vector<16x32xf32>
    %214 = arith.addf %212, %213 : vector<16x32xf32>
    %cst_145 = arith.constant 0.000000e+00 : f32
    %215 = vector.broadcast %cst_145 : f32 to vector<16x32xf32>
    %216 = arith.maximumf %214, %215 : vector<16x32xf32>
    %217 = arith.truncf %216 : vector<16x32xf32> to vector<16x32xbf16>
    %c17_146 = arith.constant 17 : index
    %c0_147 = arith.constant 0 : index
    %c0_148 = arith.constant 0 : index
    %218 = vector.load %arg5[%c17_146, %c0_147, %c0_148] : memref<27x32x256xbf16, #tpu.memory_space<vmem>>, vector<1x32x256xbf16>
    %219 = vector.shape_cast %218 : vector<1x32x256xbf16> to vector<32x256xbf16>
    %cst_149 = arith.constant dense<0.000000e+00> : vector<16x256xf32>
    %220 = tpu.matmul %217, %219, %cst_149 {dimension_numbers = #tpu.dot_dimension_numbers<[1], [0], [0], [1], [0, 0, 1, 1], [], []>} : vector<16x32xbf16>, vector<32x256xbf16>, vector<16x256xf32> -> vector<16x256xf32>
    %221 = arith.addf %209, %220 : vector<16x256xf32>
    %c18 = arith.constant 18 : index
    %c0_150 = arith.constant 0 : index
    %c0_151 = arith.constant 0 : index
    %222 = vector.load %arg2[%c18, %c0_150, %c0_151] : memref<27x16x256xbf16, #tpu.memory_space<vmem>>, vector<1x16x256xbf16>
    %223 = vector.shape_cast %222 : vector<1x16x256xbf16> to vector<16x256xbf16>
    %cst_152 = arith.constant dense<0.000000e+00> : vector<16x32xf32>
    %224 = tpu.matmul %223, %3, %cst_152 {dimension_numbers = #tpu.dot_dimension_numbers<[1], [0], [0], [1], [0, 0, 1, 1], [], []>} : vector<16x256xbf16>, vector<256x32xbf16>, vector<16x32xf32> -> vector<16x32xf32>
    %225 = vector.broadcast %4 : vector<1x32xf32> to vector<16x32xf32>
    %226 = arith.addf %224, %225 : vector<16x32xf32>
    %cst_153 = arith.constant 0.000000e+00 : f32
    %227 = vector.broadcast %cst_153 : f32 to vector<16x32xf32>
    %228 = arith.maximumf %226, %227 : vector<16x32xf32>
    %229 = arith.truncf %228 : vector<16x32xf32> to vector<16x32xbf16>
    %c18_154 = arith.constant 18 : index
    %c0_155 = arith.constant 0 : index
    %c0_156 = arith.constant 0 : index
    %230 = vector.load %arg5[%c18_154, %c0_155, %c0_156] : memref<27x32x256xbf16, #tpu.memory_space<vmem>>, vector<1x32x256xbf16>
    %231 = vector.shape_cast %230 : vector<1x32x256xbf16> to vector<32x256xbf16>
    %cst_157 = arith.constant dense<0.000000e+00> : vector<16x256xf32>
    %232 = tpu.matmul %229, %231, %cst_157 {dimension_numbers = #tpu.dot_dimension_numbers<[1], [0], [0], [1], [0, 0, 1, 1], [], []>} : vector<16x32xbf16>, vector<32x256xbf16>, vector<16x256xf32> -> vector<16x256xf32>
    %233 = arith.addf %221, %232 : vector<16x256xf32>
    %c19 = arith.constant 19 : index
    %c0_158 = arith.constant 0 : index
    %c0_159 = arith.constant 0 : index
    %234 = vector.load %arg2[%c19, %c0_158, %c0_159] : memref<27x16x256xbf16, #tpu.memory_space<vmem>>, vector<1x16x256xbf16>
    %235 = vector.shape_cast %234 : vector<1x16x256xbf16> to vector<16x256xbf16>
    %cst_160 = arith.constant dense<0.000000e+00> : vector<16x32xf32>
    %236 = tpu.matmul %235, %3, %cst_160 {dimension_numbers = #tpu.dot_dimension_numbers<[1], [0], [0], [1], [0, 0, 1, 1], [], []>} : vector<16x256xbf16>, vector<256x32xbf16>, vector<16x32xf32> -> vector<16x32xf32>
    %237 = vector.broadcast %4 : vector<1x32xf32> to vector<16x32xf32>
    %238 = arith.addf %236, %237 : vector<16x32xf32>
    %cst_161 = arith.constant 0.000000e+00 : f32
    %239 = vector.broadcast %cst_161 : f32 to vector<16x32xf32>
    %240 = arith.maximumf %238, %239 : vector<16x32xf32>
    %241 = arith.truncf %240 : vector<16x32xf32> to vector<16x32xbf16>
    %c19_162 = arith.constant 19 : index
    %c0_163 = arith.constant 0 : index
    %c0_164 = arith.constant 0 : index
    %242 = vector.load %arg5[%c19_162, %c0_163, %c0_164] : memref<27x32x256xbf16, #tpu.memory_space<vmem>>, vector<1x32x256xbf16>
    %243 = vector.shape_cast %242 : vector<1x32x256xbf16> to vector<32x256xbf16>
    %cst_165 = arith.constant dense<0.000000e+00> : vector<16x256xf32>
    %244 = tpu.matmul %241, %243, %cst_165 {dimension_numbers = #tpu.dot_dimension_numbers<[1], [0], [0], [1], [0, 0, 1, 1], [], []>} : vector<16x32xbf16>, vector<32x256xbf16>, vector<16x256xf32> -> vector<16x256xf32>
    %245 = arith.addf %233, %244 : vector<16x256xf32>
    %c20 = arith.constant 20 : index
    %c0_166 = arith.constant 0 : index
    %c0_167 = arith.constant 0 : index
    %246 = vector.load %arg2[%c20, %c0_166, %c0_167] : memref<27x16x256xbf16, #tpu.memory_space<vmem>>, vector<1x16x256xbf16>
    %247 = vector.shape_cast %246 : vector<1x16x256xbf16> to vector<16x256xbf16>
    %cst_168 = arith.constant dense<0.000000e+00> : vector<16x32xf32>
    %248 = tpu.matmul %247, %3, %cst_168 {dimension_numbers = #tpu.dot_dimension_numbers<[1], [0], [0], [1], [0, 0, 1, 1], [], []>} : vector<16x256xbf16>, vector<256x32xbf16>, vector<16x32xf32> -> vector<16x32xf32>
    %249 = vector.broadcast %4 : vector<1x32xf32> to vector<16x32xf32>
    %250 = arith.addf %248, %249 : vector<16x32xf32>
    %cst_169 = arith.constant 0.000000e+00 : f32
    %251 = vector.broadcast %cst_169 : f32 to vector<16x32xf32>
    %252 = arith.maximumf %250, %251 : vector<16x32xf32>
    %253 = arith.truncf %252 : vector<16x32xf32> to vector<16x32xbf16>
    %c20_170 = arith.constant 20 : index
    %c0_171 = arith.constant 0 : index
    %c0_172 = arith.constant 0 : index
    %254 = vector.load %arg5[%c20_170, %c0_171, %c0_172] : memref<27x32x256xbf16, #tpu.memory_space<vmem>>, vector<1x32x256xbf16>
    %255 = vector.shape_cast %254 : vector<1x32x256xbf16> to vector<32x256xbf16>
    %cst_173 = arith.constant dense<0.000000e+00> : vector<16x256xf32>
    %256 = tpu.matmul %253, %255, %cst_173 {dimension_numbers = #tpu.dot_dimension_numbers<[1], [0], [0], [1], [0, 0, 1, 1], [], []>} : vector<16x32xbf16>, vector<32x256xbf16>, vector<16x256xf32> -> vector<16x256xf32>
    %257 = arith.addf %245, %256 : vector<16x256xf32>
    %c21 = arith.constant 21 : index
    %c0_174 = arith.constant 0 : index
    %c0_175 = arith.constant 0 : index
    %258 = vector.load %arg2[%c21, %c0_174, %c0_175] : memref<27x16x256xbf16, #tpu.memory_space<vmem>>, vector<1x16x256xbf16>
    %259 = vector.shape_cast %258 : vector<1x16x256xbf16> to vector<16x256xbf16>
    %cst_176 = arith.constant dense<0.000000e+00> : vector<16x32xf32>
    %260 = tpu.matmul %259, %3, %cst_176 {dimension_numbers = #tpu.dot_dimension_numbers<[1], [0], [0], [1], [0, 0, 1, 1], [], []>} : vector<16x256xbf16>, vector<256x32xbf16>, vector<16x32xf32> -> vector<16x32xf32>
    %261 = vector.broadcast %4 : vector<1x32xf32> to vector<16x32xf32>
    %262 = arith.addf %260, %261 : vector<16x32xf32>
    %cst_177 = arith.constant 0.000000e+00 : f32
    %263 = vector.broadcast %cst_177 : f32 to vector<16x32xf32>
    %264 = arith.maximumf %262, %263 : vector<16x32xf32>
    %265 = arith.truncf %264 : vector<16x32xf32> to vector<16x32xbf16>
    %c21_178 = arith.constant 21 : index
    %c0_179 = arith.constant 0 : index
    %c0_180 = arith.constant 0 : index
    %266 = vector.load %arg5[%c21_178, %c0_179, %c0_180] : memref<27x32x256xbf16, #tpu.memory_space<vmem>>, vector<1x32x256xbf16>
    %267 = vector.shape_cast %266 : vector<1x32x256xbf16> to vector<32x256xbf16>
    %cst_181 = arith.constant dense<0.000000e+00> : vector<16x256xf32>
    %268 = tpu.matmul %265, %267, %cst_181 {dimension_numbers = #tpu.dot_dimension_numbers<[1], [0], [0], [1], [0, 0, 1, 1], [], []>} : vector<16x32xbf16>, vector<32x256xbf16>, vector<16x256xf32> -> vector<16x256xf32>
    %269 = arith.addf %257, %268 : vector<16x256xf32>
    %c22 = arith.constant 22 : index
    %c0_182 = arith.constant 0 : index
    %c0_183 = arith.constant 0 : index
    %270 = vector.load %arg2[%c22, %c0_182, %c0_183] : memref<27x16x256xbf16, #tpu.memory_space<vmem>>, vector<1x16x256xbf16>
    %271 = vector.shape_cast %270 : vector<1x16x256xbf16> to vector<16x256xbf16>
    %cst_184 = arith.constant dense<0.000000e+00> : vector<16x32xf32>
    %272 = tpu.matmul %271, %3, %cst_184 {dimension_numbers = #tpu.dot_dimension_numbers<[1], [0], [0], [1], [0, 0, 1, 1], [], []>} : vector<16x256xbf16>, vector<256x32xbf16>, vector<16x32xf32> -> vector<16x32xf32>
    %273 = vector.broadcast %4 : vector<1x32xf32> to vector<16x32xf32>
    %274 = arith.addf %272, %273 : vector<16x32xf32>
    %cst_185 = arith.constant 0.000000e+00 : f32
    %275 = vector.broadcast %cst_185 : f32 to vector<16x32xf32>
    %276 = arith.maximumf %274, %275 : vector<16x32xf32>
    %277 = arith.truncf %276 : vector<16x32xf32> to vector<16x32xbf16>
    %c22_186 = arith.constant 22 : index
    %c0_187 = arith.constant 0 : index
    %c0_188 = arith.constant 0 : index
    %278 = vector.load %arg5[%c22_186, %c0_187, %c0_188] : memref<27x32x256xbf16, #tpu.memory_space<vmem>>, vector<1x32x256xbf16>
    %279 = vector.shape_cast %278 : vector<1x32x256xbf16> to vector<32x256xbf16>
    %cst_189 = arith.constant dense<0.000000e+00> : vector<16x256xf32>
    %280 = tpu.matmul %277, %279, %cst_189 {dimension_numbers = #tpu.dot_dimension_numbers<[1], [0], [0], [1], [0, 0, 1, 1], [], []>} : vector<16x32xbf16>, vector<32x256xbf16>, vector<16x256xf32> -> vector<16x256xf32>
    %281 = arith.addf %269, %280 : vector<16x256xf32>
    %c23 = arith.constant 23 : index
    %c0_190 = arith.constant 0 : index
    %c0_191 = arith.constant 0 : index
    %282 = vector.load %arg2[%c23, %c0_190, %c0_191] : memref<27x16x256xbf16, #tpu.memory_space<vmem>>, vector<1x16x256xbf16>
    %283 = vector.shape_cast %282 : vector<1x16x256xbf16> to vector<16x256xbf16>
    %cst_192 = arith.constant dense<0.000000e+00> : vector<16x32xf32>
    %284 = tpu.matmul %283, %3, %cst_192 {dimension_numbers = #tpu.dot_dimension_numbers<[1], [0], [0], [1], [0, 0, 1, 1], [], []>} : vector<16x256xbf16>, vector<256x32xbf16>, vector<16x32xf32> -> vector<16x32xf32>
    %285 = vector.broadcast %4 : vector<1x32xf32> to vector<16x32xf32>
    %286 = arith.addf %284, %285 : vector<16x32xf32>
    %cst_193 = arith.constant 0.000000e+00 : f32
    %287 = vector.broadcast %cst_193 : f32 to vector<16x32xf32>
    %288 = arith.maximumf %286, %287 : vector<16x32xf32>
    %289 = arith.truncf %288 : vector<16x32xf32> to vector<16x32xbf16>
    %c23_194 = arith.constant 23 : index
    %c0_195 = arith.constant 0 : index
    %c0_196 = arith.constant 0 : index
    %290 = vector.load %arg5[%c23_194, %c0_195, %c0_196] : memref<27x32x256xbf16, #tpu.memory_space<vmem>>, vector<1x32x256xbf16>
    %291 = vector.shape_cast %290 : vector<1x32x256xbf16> to vector<32x256xbf16>
    %cst_197 = arith.constant dense<0.000000e+00> : vector<16x256xf32>
    %292 = tpu.matmul %289, %291, %cst_197 {dimension_numbers = #tpu.dot_dimension_numbers<[1], [0], [0], [1], [0, 0, 1, 1], [], []>} : vector<16x32xbf16>, vector<32x256xbf16>, vector<16x256xf32> -> vector<16x256xf32>
    %293 = arith.addf %281, %292 : vector<16x256xf32>
    %c24 = arith.constant 24 : index
    %c0_198 = arith.constant 0 : index
    %c0_199 = arith.constant 0 : index
    %294 = vector.load %arg2[%c24, %c0_198, %c0_199] : memref<27x16x256xbf16, #tpu.memory_space<vmem>>, vector<1x16x256xbf16>
    %295 = vector.shape_cast %294 : vector<1x16x256xbf16> to vector<16x256xbf16>
    %cst_200 = arith.constant dense<0.000000e+00> : vector<16x32xf32>
    %296 = tpu.matmul %295, %3, %cst_200 {dimension_numbers = #tpu.dot_dimension_numbers<[1], [0], [0], [1], [0, 0, 1, 1], [], []>} : vector<16x256xbf16>, vector<256x32xbf16>, vector<16x32xf32> -> vector<16x32xf32>
    %297 = vector.broadcast %4 : vector<1x32xf32> to vector<16x32xf32>
    %298 = arith.addf %296, %297 : vector<16x32xf32>
    %cst_201 = arith.constant 0.000000e+00 : f32
    %299 = vector.broadcast %cst_201 : f32 to vector<16x32xf32>
    %300 = arith.maximumf %298, %299 : vector<16x32xf32>
    %301 = arith.truncf %300 : vector<16x32xf32> to vector<16x32xbf16>
    %c24_202 = arith.constant 24 : index
    %c0_203 = arith.constant 0 : index
    %c0_204 = arith.constant 0 : index
    %302 = vector.load %arg5[%c24_202, %c0_203, %c0_204] : memref<27x32x256xbf16, #tpu.memory_space<vmem>>, vector<1x32x256xbf16>
    %303 = vector.shape_cast %302 : vector<1x32x256xbf16> to vector<32x256xbf16>
    %cst_205 = arith.constant dense<0.000000e+00> : vector<16x256xf32>
    %304 = tpu.matmul %301, %303, %cst_205 {dimension_numbers = #tpu.dot_dimension_numbers<[1], [0], [0], [1], [0, 0, 1, 1], [], []>} : vector<16x32xbf16>, vector<32x256xbf16>, vector<16x256xf32> -> vector<16x256xf32>
    %305 = arith.addf %293, %304 : vector<16x256xf32>
    %c25 = arith.constant 25 : index
    %c0_206 = arith.constant 0 : index
    %c0_207 = arith.constant 0 : index
    %306 = vector.load %arg2[%c25, %c0_206, %c0_207] : memref<27x16x256xbf16, #tpu.memory_space<vmem>>, vector<1x16x256xbf16>
    %307 = vector.shape_cast %306 : vector<1x16x256xbf16> to vector<16x256xbf16>
    %cst_208 = arith.constant dense<0.000000e+00> : vector<16x32xf32>
    %308 = tpu.matmul %307, %3, %cst_208 {dimension_numbers = #tpu.dot_dimension_numbers<[1], [0], [0], [1], [0, 0, 1, 1], [], []>} : vector<16x256xbf16>, vector<256x32xbf16>, vector<16x32xf32> -> vector<16x32xf32>
    %309 = vector.broadcast %4 : vector<1x32xf32> to vector<16x32xf32>
    %310 = arith.addf %308, %309 : vector<16x32xf32>
    %cst_209 = arith.constant 0.000000e+00 : f32
    %311 = vector.broadcast %cst_209 : f32 to vector<16x32xf32>
    %312 = arith.maximumf %310, %311 : vector<16x32xf32>
    %313 = arith.truncf %312 : vector<16x32xf32> to vector<16x32xbf16>
    %c25_210 = arith.constant 25 : index
    %c0_211 = arith.constant 0 : index
    %c0_212 = arith.constant 0 : index
    %314 = vector.load %arg5[%c25_210, %c0_211, %c0_212] : memref<27x32x256xbf16, #tpu.memory_space<vmem>>, vector<1x32x256xbf16>
    %315 = vector.shape_cast %314 : vector<1x32x256xbf16> to vector<32x256xbf16>
    %cst_213 = arith.constant dense<0.000000e+00> : vector<16x256xf32>
    %316 = tpu.matmul %313, %315, %cst_213 {dimension_numbers = #tpu.dot_dimension_numbers<[1], [0], [0], [1], [0, 0, 1, 1], [], []>} : vector<16x32xbf16>, vector<32x256xbf16>, vector<16x256xf32> -> vector<16x256xf32>
    %317 = arith.addf %305, %316 : vector<16x256xf32>
    %c26 = arith.constant 26 : index
    %c0_214 = arith.constant 0 : index
    %c0_215 = arith.constant 0 : index
    %318 = vector.load %arg2[%c26, %c0_214, %c0_215] : memref<27x16x256xbf16, #tpu.memory_space<vmem>>, vector<1x16x256xbf16>
    %319 = vector.shape_cast %318 : vector<1x16x256xbf16> to vector<16x256xbf16>
    %cst_216 = arith.constant dense<0.000000e+00> : vector<16x32xf32>
    %320 = tpu.matmul %319, %3, %cst_216 {dimension_numbers = #tpu.dot_dimension_numbers<[1], [0], [0], [1], [0, 0, 1, 1], [], []>} : vector<16x256xbf16>, vector<256x32xbf16>, vector<16x32xf32> -> vector<16x32xf32>
    %321 = vector.broadcast %4 : vector<1x32xf32> to vector<16x32xf32>
    %322 = arith.addf %320, %321 : vector<16x32xf32>
    %cst_217 = arith.constant 0.000000e+00 : f32
    %323 = vector.broadcast %cst_217 : f32 to vector<16x32xf32>
    %324 = arith.maximumf %322, %323 : vector<16x32xf32>
    %325 = arith.truncf %324 : vector<16x32xf32> to vector<16x32xbf16>
    %c26_218 = arith.constant 26 : index
    %c0_219 = arith.constant 0 : index
    %c0_220 = arith.constant 0 : index
    %326 = vector.load %arg5[%c26_218, %c0_219, %c0_220] : memref<27x32x256xbf16, #tpu.memory_space<vmem>>, vector<1x32x256xbf16>
    %327 = vector.shape_cast %326 : vector<1x32x256xbf16> to vector<32x256xbf16>
    %cst_221 = arith.constant dense<0.000000e+00> : vector<16x256xf32>
    %328 = tpu.matmul %325, %327, %cst_221 {dimension_numbers = #tpu.dot_dimension_numbers<[1], [0], [0], [1], [0, 0, 1, 1], [], []>} : vector<16x32xbf16>, vector<32x256xbf16>, vector<16x256xf32> -> vector<16x256xf32>
    %329 = arith.addf %317, %328 : vector<16x256xf32>
    %c0_222 = arith.constant 0 : index
    %c0_223 = arith.constant 0 : index
    %330 = vector.load %arg15[%c0_222, %c0_223] : memref<16x256xf32, #tpu.memory_space<vmem>>, vector<16x256xf32>
    tpu.vector_store %arg15[%c0_222, %c0_223], %329 {strides = array<i32>} : memref<16x256xf32, #tpu.memory_space<vmem>>, vector<16x256xf32>,
    %c2_i32 = arith.constant 2 : i32
    %331 = arith.cmpi eq, %arg1, %c2_i32 : i32
    %332 = arith.extui %331 : i1 to i32
    %c0_i32_224 = arith.constant 0 : i32
    %333 = arith.cmpi ne, %332, %c0_i32_224 : i32
    scf.if %333 {
      %c0_225 = arith.constant 0 : index
      %c0_226 = arith.constant 0 : index
      %334 = vector.load %arg15[%c0_225, %c0_226] : memref<16x256xf32, #tpu.memory_space<vmem>>, vector<16x256xf32>
      %c0_227 = arith.constant 0 : index
      %c0_228 = arith.constant 0 : index
      %335 = vector.load %arg6[%c0_227, %c0_228] : memref<1x256xf32, #tpu.memory_space<vmem>>, vector<1x256xf32>
      %336 = vector.broadcast %335 : vector<1x256xf32> to vector<16x256xf32>
      %337 = arith.addf %334, %336 : vector<16x256xf32>
      %338 = arith.truncf %337 : vector<16x256xf32> to vector<16x256xbf16>
      %c0_229 = arith.constant 0 : index
      %c0_230 = arith.constant 0 : index
      %339 = vector.load %arg9[%c0_229, %c0_230] : memref<256x512xbf16, #tpu.memory_space<vmem>>, vector<256x512xbf16>
      %cst_231 = arith.constant dense<0.000000e+00> : vector<16x512xf32>
      %340 = tpu.matmul %338, %339, %cst_231 {dimension_numbers = #tpu.dot_dimension_numbers<[1], [0], [0], [1], [0, 0, 1, 1], [], []>} : vector<16x256xbf16>, vector<256x512xbf16>, vector<16x512xf32> -> vector<16x512xf32>
      %c0_232 = arith.constant 0 : index
      %c0_233 = arith.constant 0 : index
      %341 = vector.load %arg7[%c0_232, %c0_233] : memref<16x128xf32, #tpu.memory_space<vmem>>, vector<16x128xf32>
      %342 = arith.truncf %341 : vector<16x128xf32> to vector<16x128xbf16>
      %c0_234 = arith.constant 0 : index
      %c0_235 = arith.constant 0 : index
      %343 = vector.load %arg10[%c0_234, %c0_235] : memref<128x512xbf16, #tpu.memory_space<vmem>>, vector<128x512xbf16>
      %cst_236 = arith.constant dense<0.000000e+00> : vector<16x512xf32>
      %344 = tpu.matmul %342, %343, %cst_236 {dimension_numbers = #tpu.dot_dimension_numbers<[1], [0], [0], [1], [0, 0, 1, 1], [], []>} : vector<16x128xbf16>, vector<128x512xbf16>, vector<16x512xf32> -> vector<16x512xf32>
      %345 = arith.addf %340, %344 : vector<16x512xf32>
      %c0_237 = arith.constant 0 : index
      %c0_238 = arith.constant 0 : index
      %346 = vector.load %arg11[%c0_237, %c0_238] : memref<1x512xf32, #tpu.memory_space<vmem>>, vector<1x512xf32>
      %347 = vector.broadcast %346 : vector<1x512xf32> to vector<16x512xf32>
      %348 = arith.addf %345, %347 : vector<16x512xf32>
      %349 = vector.extract_strided_slice %348 {offsets = [0, 0], sizes = [16, 128], strides = [1, 1]} : vector<16x512xf32> to vector<16x128xf32>
      %350 = arith.negf %349 : vector<16x128xf32>
      %351 = math.exp %350 : vector<16x128xf32>
      %cst_239 = arith.constant 1.000000e+00 : f32
      %352 = vector.broadcast %cst_239 : f32 to vector<16x128xf32>
      %353 = arith.addf %352, %351 : vector<16x128xf32>
      %354 = arith.divf %352, %353 : vector<16x128xf32>
      %355 = vector.extract_strided_slice %348 {offsets = [0, 128], sizes = [16, 128], strides = [1, 1]} : vector<16x512xf32> to vector<16x128xf32>
      %356 = arith.negf %355 : vector<16x128xf32>
      %357 = math.exp %356 : vector<16x128xf32>
      %cst_240 = arith.constant 1.000000e+00 : f32
      %358 = vector.broadcast %cst_240 : f32 to vector<16x128xf32>
      %359 = arith.addf %358, %357 : vector<16x128xf32>
      %360 = arith.divf %358, %359 : vector<16x128xf32>
      %361 = vector.extract_strided_slice %348 {offsets = [0, 256], sizes = [16, 128], strides = [1, 1]} : vector<16x512xf32> to vector<16x128xf32>
      %362 = arith.negf %361 : vector<16x128xf32>
      %363 = math.exp %362 : vector<16x128xf32>
      %cst_241 = arith.constant 1.000000e+00 : f32
      %364 = vector.broadcast %cst_241 : f32 to vector<16x128xf32>
      %365 = arith.addf %364, %363 : vector<16x128xf32>
      %366 = arith.divf %364, %365 : vector<16x128xf32>
      %367 = vector.extract_strided_slice %348 {offsets = [0, 384], sizes = [16, 128], strides = [1, 1]} : vector<16x512xf32> to vector<16x128xf32>
      %368 = math.tanh %367 : vector<16x128xf32>
      %c0_242 = arith.constant 0 : index
      %c0_243 = arith.constant 0 : index
      %369 = vector.load %arg8[%c0_242, %c0_243] : memref<16x128xf32, #tpu.memory_space<vmem>>, vector<16x128xf32>
      %370 = arith.mulf %354, %369 : vector<16x128xf32>
      %371 = arith.mulf %360, %368 : vector<16x128xf32>
      %372 = arith.addf %370, %371 : vector<16x128xf32>
      %373 = math.tanh %372 : vector<16x128xf32>
      %374 = arith.mulf %366, %373 : vector<16x128xf32>
      %c0_244 = arith.constant 0 : index
      %c0_245 = arith.constant 0 : index
      %375 = vector.load %arg12[%c0_244, %c0_245] : memref<128x128xf32, #tpu.memory_space<vmem>>, vector<128x128xf32>
      %cst_246 = arith.constant dense<0.000000e+00> : vector<16x128xf32>
      %376 = tpu.matmul %374, %375, %cst_246 {dimension_numbers = #tpu.dot_dimension_numbers<[1], [0], [0], [1], [0, 0, 1, 1], [], []>} : vector<16x128xf32>, vector<128x128xf32>, vector<16x128xf32> -> vector<16x128xf32>
      %c0_247 = arith.constant 0 : index
      %c0_248 = arith.constant 0 : index
      %377 = vector.load %arg13[%c0_247, %c0_248] : memref<1x128xf32, #tpu.memory_space<vmem>>, vector<1x128xf32>
      %378 = vector.broadcast %377 : vector<1x128xf32> to vector<16x128xf32>
      %379 = arith.addf %376, %378 : vector<16x128xf32>
      %380 = tpu.iota {dimensions = array<i32: 1>} : vector<16x128xi32>
      %c6_i32 = arith.constant 6 : i32
      %381 = vector.broadcast %c6_i32 : i32 to vector<16x128xi32>
      %382 = arith.cmpi slt, %380, %381 : vector<16x128xi32>
      %cst_249 = arith.constant -1.000000e+30 : f32
      %383 = vector.broadcast %cst_249 : f32 to vector<16x128xf32>
      %384 = arith.select %382, %379, %383 : vector<16x128xi1>, vector<16x128xf32>
      %cst_250 = arith.constant dense<0xFF800000> : vector<16xf32>
      %385 = vector.multi_reduction <maximumf>, %384, %cst_250 [1] : vector<16x128xf32> to vector<16xf32>
      %386 = vector.shape_cast %385 : vector<16xf32> to vector<16x1xf32>
      %387 = vector.broadcast %386 : vector<16x1xf32> to vector<16x128xf32>
      %388 = arith.subf %384, %387 : vector<16x128xf32>
      %389 = math.exp %388 : vector<16x128xf32>
      %cst_251 = arith.constant dense<0.000000e+00> : vector<16xf32>
      %390 = vector.multi_reduction <add>, %389, %cst_251 [1] : vector<16x128xf32> to vector<16xf32>
      %391 = vector.shape_cast %390 : vector<16xf32> to vector<16x1xf32>
      %392 = vector.broadcast %391 : vector<16x1xf32> to vector<16x128xf32>
      %393 = arith.divf %389, %392 : vector<16x128xf32>
      %c6_i32_252 = arith.constant 6 : i32
      %394 = vector.broadcast %c6_i32_252 : i32 to vector<16x128xi32>
      %395 = arith.cmpi eq, %380, %394 : vector<16x128xi32>
      %cst_253 = arith.constant 0.000000e+00 : f32
      %396 = vector.broadcast %cst_253 : f32 to vector<16x128xf32>
      %397 = arith.select %395, %379, %396 : vector<16x128xi1>, vector<16x128xf32>
      %398 = arith.select %382, %393, %397 : vector<16x128xi1>, vector<16x128xf32>
      %c0_254 = arith.constant 0 : index
      %c0_255 = arith.constant 0 : index
      %399 = vector.load %arg14[%c0_254, %c0_255] : memref<16x384xf32, #tpu.memory_space<vmem>>, vector<16x128xf32>
      tpu.vector_store %arg14[%c0_254, %c0_255], %374 {strides = array<i32>} : memref<16x384xf32, #tpu.memory_space<vmem>>, vector<16x128xf32>,
      %c0_256 = arith.constant 0 : index
      %c128 = arith.constant 128 : index
      %400 = vector.load %arg14[%c0_256, %c128] : memref<16x384xf32, #tpu.memory_space<vmem>>, vector<16x128xf32>
      tpu.vector_store %arg14[%c0_256, %c128], %372 {strides = array<i32>} : memref<16x384xf32, #tpu.memory_space<vmem>>, vector<16x128xf32>,
      %c0_257 = arith.constant 0 : index
      %c256 = arith.constant 256 : index
      %401 = vector.load %arg14[%c0_257, %c256] : memref<16x384xf32, #tpu.memory_space<vmem>>, vector<16x128xf32>
      tpu.vector_store %arg14[%c0_257, %c256], %398 {strides = array<i32>} : memref<16x384xf32, #tpu.memory_space<vmem>>, vector<16x128xf32>,
    } else {
    }
    return
  }
  func.func @transform_0(%arg0: i32, %arg1: i32) -> (i32, i32, i32) {
    %c0_i32 = arith.constant 0 : i32
    %c0_i32_0 = arith.constant 0 : i32
    return %arg1, %arg0, %c0_i32 : i32, i32, i32
  }
  func.func @transform_1(%arg0: i32, %arg1: i32) -> (i32, i32) {
    %c0_i32 = arith.constant 0 : i32
    %c0_i32_0 = arith.constant 0 : i32
    %c0_i32_1 = arith.constant 0 : i32
    return %c0_i32, %c0_i32_0 : i32, i32
  }
  func.func @transform_2(%arg0: i32, %arg1: i32) -> (i32, i32) {
    %c0_i32 = arith.constant 0 : i32
    %c0_i32_0 = arith.constant 0 : i32
    %c0_i32_1 = arith.constant 0 : i32
    return %c0_i32, %c0_i32_0 : i32, i32
  }
  func.func @transform_3(%arg0: i32, %arg1: i32) -> (i32, i32, i32) {
    %c0_i32 = arith.constant 0 : i32
    %c0_i32_0 = arith.constant 0 : i32
    %c0_i32_1 = arith.constant 0 : i32
    return %arg1, %c0_i32, %c0_i32_0 : i32, i32, i32
  }
  func.func @transform_4(%arg0: i32, %arg1: i32) -> (i32, i32) {
    %c0_i32 = arith.constant 0 : i32
    %c0_i32_0 = arith.constant 0 : i32
    %c0_i32_1 = arith.constant 0 : i32
    return %c0_i32, %c0_i32_0 : i32, i32
  }
  func.func @transform_5(%arg0: i32, %arg1: i32) -> (i32, i32) {
    %c0_i32 = arith.constant 0 : i32
    %c0_i32_0 = arith.constant 0 : i32
    return %arg0, %c0_i32 : i32, i32
  }
  func.func @transform_6(%arg0: i32, %arg1: i32) -> (i32, i32) {
    %c0_i32 = arith.constant 0 : i32
    %c0_i32_0 = arith.constant 0 : i32
    return %arg0, %c0_i32 : i32, i32
  }
  func.func @transform_7(%arg0: i32, %arg1: i32) -> (i32, i32) {
    %c0_i32 = arith.constant 0 : i32
    %c0_i32_0 = arith.constant 0 : i32
    %c0_i32_1 = arith.constant 0 : i32
    return %c0_i32, %c0_i32_0 : i32, i32
  }
  func.func @transform_8(%arg0: i32, %arg1: i32) -> (i32, i32) {
    %c0_i32 = arith.constant 0 : i32
    %c0_i32_0 = arith.constant 0 : i32
    %c0_i32_1 = arith.constant 0 : i32
    return %c0_i32, %c0_i32_0 : i32, i32
  }
  func.func @transform_9(%arg0: i32, %arg1: i32) -> (i32, i32) {
    %c0_i32 = arith.constant 0 : i32
    %c0_i32_0 = arith.constant 0 : i32
    %c0_i32_1 = arith.constant 0 : i32
    return %c0_i32, %c0_i32_0 : i32, i32
  }
  func.func @transform_10(%arg0: i32, %arg1: i32) -> (i32, i32) {
    %c0_i32 = arith.constant 0 : i32
    %c0_i32_0 = arith.constant 0 : i32
    %c0_i32_1 = arith.constant 0 : i32
    return %c0_i32, %c0_i32_0 : i32, i32
  }
  func.func @transform_11(%arg0: i32, %arg1: i32) -> (i32, i32) {
    %c0_i32 = arith.constant 0 : i32
    %c0_i32_0 = arith.constant 0 : i32
    %c0_i32_1 = arith.constant 0 : i32
    return %c0_i32, %c0_i32_0 : i32, i32
  }
  func.func @transform_12(%arg0: i32, %arg1: i32) -> (i32, i32) {
    %c0_i32 = arith.constant 0 : i32
    %c0_i32_0 = arith.constant 0 : i32
    return %arg0, %c0_i32 : i32, i32
  }
}

</mosaic_0001>

<llo_original>
// kernel: actor_critic_forward.2
$region0: #{actor_critic_forward.2}
  #allocation0 [shape = 'u32[]', space=smem, size = 0x4, offset = 0x4, fixed_abs, tag = 'smem constant byte address 0x4 - core index']
  #allocation1 [shape = 'u32[144,128]{1,0:T(1,128)}', space=vmem, size = 0x12000, scoped, tag = 'internal scratch']
  %s0 = inlined_call_operand.vmem [shape: bf16[800,64], index: 0, kind: input, shape index: {}]
  %s1 = inlined_call_operand.vmem [shape: bf16[64,16], index: 1, kind: input, shape index: {}]
  %s2 = inlined_call_operand.vmem [shape: f32[1,16], index: 2, kind: input, shape index: {}]
  %s3 = inlined_call_operand.vmem [shape: bf16[800,16], index: 3, kind: output, shape index: {}]
  %s4 = sld [smem:[#allocation0]]
  $region22: #{actor_critic_forward.2} parent=0
    _
  %s6 = ssub.s32 1, %s4
  %s7 = scalar_select 0, %s6, %s4
  // Predicated region
  $region2: #{actor_critic_forward.2} parent=0 // pred_check
    _
  $region3: #{actor_critic_forward.2} parent=0 // pred_check_branch
    %9 = sbr.rel (0) target = $region5
  $region4: #{actor_critic_forward.2} parent=0 // pred_region
    _
  $region5: #{actor_critic_forward.2} parent=0 // pred_fallthru
    _
  // Predicated region
  $region6: #{actor_critic_forward.2} parent=0 // pred_check
    _
  $region7: #{actor_critic_forward.2} parent=0 // pred_check_branch
    %11 = sbr.rel (0) target = $region9
  $region8: #{actor_critic_forward.2} parent=0 // pred_region
    _
  $region9: #{actor_critic_forward.2} parent=0 // pred_fallthru
    _
  // Predicated region
  $region10: #{actor_critic_forward.2} parent=0 // pred_check
    _
  $region11: #{actor_critic_forward.2} parent=0 // pred_check_branch
    %13 = sbr.rel (0) target = $region13
  $region12: #{actor_critic_forward.2} parent=0 // pred_region
    _
  $region13: #{actor_critic_forward.2} parent=0 // pred_fallthru
    _
  %v15 = vld [vmem:[%s0] sm:$0xf]
  %v16 = vld [vmem:[%s0 + $0x4] sm:$0xf]
  %v17 = vld [vmem:[%s0 + $0x8] sm:$0xf]
  %v18 = vld [vmem:[%s0 + $0xc] sm:$0xf]
  %v19 = vld [vmem:[%s0 + $0x10] sm:$0xf]
  %v20 = vld [vmem:[%s0 + $0x14] sm:$0xf]
  %v21 = vld [vmem:[%s0 + $0x18] sm:$0xf]
  %v22 = vld [vmem:[%s0 + $0x1c] sm:$0xf]
  %v23 = vld [vmem:[%s0 + $0x20] sm:$0xf]
  %v24 = vld [vmem:[%s0 + $0x24] sm:$0xf]
  %v25 = vld [vmem:[%s0 + $0x28] sm:$0xf]
  %v26 = vld [vmem:[%s0 + $0x2c] sm:$0xf]
  %v27 = vld [vmem:[%s0 + $0x30] sm:$0xf]
  %v28 = vld [vmem:[%s0 + $0x34] sm:$0xf]
  %v29 = vld [vmem:[%s0 + $0x38] sm:$0xf]
  %v30 = vld [vmem:[%s0 + $0x3c] sm:$0xf]
  %v31 = vld [vmem:[%s0 + $0x40] sm:$0xf]
  %v32 = vld [vmem:[%s0 + $0x44] sm:$0xf]
  %v33 = vld [vmem:[%s0 + $0x48] sm:$0xf]
  %v34 = vld [vmem:[%s0 + $0x4c] sm:$0xf]
  %v35 = vld [vmem:[%s0 + $0x50] sm:$0xf]
  %v36 = vld [vmem:[%s0 + $0x54] sm:$0xf]
  %v37 = vld [vmem:[%s0 + $0x58] sm:$0xf]
  %v38 = vld [vmem:[%s0 + $0x5c] sm:$0xf]
  %v39 = vld [vmem:[%s0 + $0x60] sm:$0xf]
  %v40 = vld [vmem:[%s0 + $0x64] sm:$0xf]
  %v41 = vld [vmem:[%s0 + $0x68] sm:$0xf]
  %v42 = vld [vmem:[%s0 + $0x6c] sm:$0xf]
  %v43 = vld [vmem:[%s0 + $0x70] sm:$0xf]
  %v44 = vld [vmem:[%s0 + $0x74] sm:$0xf]
  %v45 = vld [vmem:[%s0 + $0x78] sm:$0xf]
  %v46 = vld [vmem:[%s0 + $0x7c] sm:$0xf]
  %v47 = vld [vmem:[%s0 + $0x80] sm:$0xf]
  %v48 = vld [vmem:[%s0 + $0x84] sm:$0xf]
  %v49 = vld [vmem:[%s0 + $0x88] sm:$0xf]
  %v50 = vld [vmem:[%s0 + $0x8c] sm:$0xf]
  %v51 = vld [vmem:[%s0 + $0x90] sm:$0xf]
  %v52 = vld [vmem:[%s0 + $0x94] sm:$0xf]
  %v53 = vld [vmem:[%s0 + $0x98] sm:$0xf]
  %v54 = vld [vmem:[%s0 + $0x9c] sm:$0xf]
  %v55 = vld [vmem:[%s0 + $0xa0] sm:$0xf]
  %v56 = vld [vmem:[%s0 + $0xa4] sm:$0xf]
  %v57 = vld [vmem:[%s0 + $0xa8] sm:$0xf]
  %v58 = vld [vmem:[%s0 + $0xac] sm:$0xf]
  %v59 = vld [vmem:[%s0 + $0xb0] sm:$0xf]
  %v60 = vld [vmem:[%s0 + $0xb4] sm:$0xf]
  %v61 = vld [vmem:[%s0 + $0xb8] sm:$0xf]
  %v62 = vld [vmem:[%s0 + $0xbc] sm:$0xf]
  %v63 = vld [vmem:[%s0 + $0xc0] sm:$0xf]
  %v64 = vld [vmem:[%s0 + $0xc4] sm:$0xf]
  %v65 = vld [vmem:[%s0 + $0xc8] sm:$0xf]
  %v66 = vld [vmem:[%s0 + $0xcc] sm:$0xf]
  %v67 = vld [vmem:[%s0 + $0xd0] sm:$0xf]
  %v68 = vld [vmem:[%s0 + $0xd4] sm:$0xf]
  %v69 = vld [vmem:[%s0 + $0xd8] sm:$0xf]
  %v70 = vld [vmem:[%s0 + $0xdc] sm:$0xf]
  %v71 = vld [vmem:[%s0 + $0xe0] sm:$0xf]
  %v72 = vld [vmem:[%s0 + $0xe4] sm:$0xf]
  %v73 = vld [vmem:[%s0 + $0xe8] sm:$0xf]
  %v74 = vld [vmem:[%s0 + $0xec] sm:$0xf]
  %v75 = vld [vmem:[%s0 + $0xf0] sm:$0xf]
  %v76 = vld [vmem:[%s0 + $0xf4] sm:$0xf]
  %v77 = vld [vmem:[%s0 + $0xf8] sm:$0xf]
  %v78 = vld [vmem:[%s0 + $0xfc] sm:$0xf]
  %v79 = vld [vmem:[%s0 + $0x100] sm:$0xf]
  %v80 = vld [vmem:[%s0 + $0x104] sm:$0xf]
  %v81 = vld [vmem:[%s0 + $0x108] sm:$0xf]
  %v82 = vld [vmem:[%s0 + $0x10c] sm:$0xf]
  %v83 = vld [vmem:[%s0 + $0x110] sm:$0xf]
  %v84 = vld [vmem:[%s0 + $0x114] sm:$0xf]
  %v85 = vld [vmem:[%s0 + $0x118] sm:$0xf]
  %v86 = vld [vmem:[%s0 + $0x11c] sm:$0xf]
  %v87 = vld [vmem:[%s0 + $0x120] sm:$0xf]
  %v88 = vld [vmem:[%s0 + $0x124] sm:$0xf]
  %v89 = vld [vmem:[%s0 + $0x128] sm:$0xf]
  %v90 = vld [vmem:[%s0 + $0x12c] sm:$0xf]
  %v91 = vld [vmem:[%s0 + $0x130] sm:$0xf]
  %v92 = vld [vmem:[%s0 + $0x134] sm:$0xf]
  %v93 = vld [vmem:[%s0 + $0x138] sm:$0xf]
  %v94 = vld [vmem:[%s0 + $0x13c] sm:$0xf]
  %v95 = vld [vmem:[%s0 + $0x140] sm:$0xf]
  %v96 = vld [vmem:[%s0 + $0x144] sm:$0xf]
  %v97 = vld [vmem:[%s0 + $0x148] sm:$0xf]
  %v98 = vld [vmem:[%s0 + $0x14c] sm:$0xf]
  %v99 = vld [vmem:[%s0 + $0x150] sm:$0xf]
  %v100 = vld [vmem:[%s0 + $0x154] sm:$0xf]
  %v101 = vld [vmem:[%s0 + $0x158] sm:$0xf]
  %v102 = vld [vmem:[%s0 + $0x15c] sm:$0xf]
  %v103 = vld [vmem:[%s0 + $0x160] sm:$0xf]
  %v104 = vld [vmem:[%s0 + $0x164] sm:$0xf]
  %v105 = vld [vmem:[%s0 + $0x168] sm:$0xf]
  %v106 = vld [vmem:[%s0 + $0x16c] sm:$0xf]
  %v107 = vld [vmem:[%s0 + $0x170] sm:$0xf]
  %v108 = vld [vmem:[%s0 + $0x174] sm:$0xf]
  %v109 = vld [vmem:[%s0 + $0x178] sm:$0xf]
  %v110 = vld [vmem:[%s0 + $0x17c] sm:$0xf]
  %v111 = vld [vmem:[%s0 + $0x180] sm:$0xf]
  %v112 = vld [vmem:[%s0 + $0x184] sm:$0xf]
  %v113 = vld [vmem:[%s0 + $0x188] sm:$0xf]
  %v114 = vld [vmem:[%s0 + $0x18c] sm:$0xf]
  %v115 = vld [vmem:[%s1] sm:$0xf]
  %v116 = vld [vmem:[%s1 + $0x4] sm:$0xf]
  %v117 = vld [vmem:[%s1 + $0x8] sm:$0xf]
  %v118 = vld [vmem:[%s1 + $0xc] sm:$0xf]
  %v119 = vld [vmem:[%s1 + $0x10] sm:$0xf]
  %v120 = vld [vmem:[%s1 + $0x14] sm:$0xf]
  %v121 = vld [vmem:[%s1 + $0x18] sm:$0xf]
  %v122 = vld [vmem:[%s1 + $0x1c] sm:$0xf]
  %v123 = vld [vmem:[%s2] sm:$0x1]
  %v125 = vlaneseq
  %v126 = vshrl.u32 %v125, 7
  %v127 = vsub.s32 0, %v126
  %v128 = vrot.slane %v123, %v127
  %v230 = vunpack.c.l.b16 %v15
  %v231 = vunpack.c.l.b16 %v16
  %v232 = vunpack.c.l.b16 %v17
  %v233 = vunpack.c.l.b16 %v18
  %v234 = vunpack.c.l.b16 %v19
  %v235 = vunpack.c.l.b16 %v20
  %v236 = vunpack.c.l.b16 %v21
  %v237 = vunpack.c.l.b16 %v22
  %v238 = vunpack.c.l.b16 %v23
  %v239 = vunpack.c.l.b16 %v24
  %v240 = vunpack.c.l.b16 %v25
  %v241 = vunpack.c.l.b16 %v26
  %v242 = vunpack.c.l.b16 %v27
  %v243 = vunpack.c.l.b16 %v28
  %v244 = vunpack.c.l.b16 %v29
  %v245 = vunpack.c.l.b16 %v30
  %v246 = vunpack.c.l.b16 %v31
  %v247 = vunpack.c.l.b16 %v32
  %v248 = vunpack.c.l.b16 %v33
  %v249 = vunpack.c.l.b16 %v34
  %v250 = vunpack.c.l.b16 %v35
  %v251 = vunpack.c.l.b16 %v36
  %v252 = vunpack.c.l.b16 %v37
  %v253 = vunpack.c.l.b16 %v38
  %v254 = vunpack.c.l.b16 %v39
  %v255 = vunpack.c.l.b16 %v40
  %v256 = vunpack.c.l.b16 %v41
  %v257 = vunpack.c.l.b16 %v42
  %v258 = vunpack.c.l.b16 %v43
  %v259 = vunpack.c.l.b16 %v44
  %v260 = vunpack.c.l.b16 %v45
  %v261 = vunpack.c.l.b16 %v46
  %v262 = vunpack.c.l.b16 %v47
  %v263 = vunpack.c.l.b16 %v48
  %v264 = vunpack.c.l.b16 %v49
  %v265 = vunpack.c.l.b16 %v50
  %v266 = vunpack.c.l.b16 %v51
  %v267 = vunpack.c.l.b16 %v52
  %v268 = vunpack.c.l.b16 %v53
  %v269 = vunpack.c.l.b16 %v54
  %v270 = vunpack.c.l.b16 %v55
  %v271 = vunpack.c.l.b16 %v56
  %v272 = vunpack.c.l.b16 %v57
  %v273 = vunpack.c.l.b16 %v58
  %v274 = vunpack.c.l.b16 %v59
  %v275 = vunpack.c.l.b16 %v60
  %v276 = vunpack.c.l.b16 %v61
  %v277 = vunpack.c.l.b16 %v62
  %v278 = vunpack.c.l.b16 %v63
  %v279 = vunpack.c.l.b16 %v64
  %v280 = vunpack.c.l.b16 %v65
  %v281 = vunpack.c.l.b16 %v66
  %v282 = vunpack.c.l.b16 %v67
  %v283 = vunpack.c.l.b16 %v68
  %v284 = vunpack.c.l.b16 %v69
  %v285 = vunpack.c.l.b16 %v70
  %v286 = vunpack.c.l.b16 %v71
  %v287 = vunpack.c.l.b16 %v72
  %v288 = vunpack.c.l.b16 %v73
  %v289 = vunpack.c.l.b16 %v74
  %v290 = vunpack.c.l.b16 %v75
  %v291 = vunpack.c.l.b16 %v76
  %v292 = vunpack.c.l.b16 %v77
  %v293 = vunpack.c.l.b16 %v78
  %v294 = vunpack.c.l.b16 %v79
  %v295 = vunpack.c.l.b16 %v80
  %v296 = vunpack.c.l.b16 %v81
  %v297 = vunpack.c.l.b16 %v82
  %v298 = vunpack.c.l.b16 %v83
  %v299 = vunpack.c.l.b16 %v84
  %v300 = vunpack.c.l.b16 %v85
  %v301 = vunpack.c.l.b16 %v86
  %v302 = vunpack.c.l.b16 %v87
  %v303 = vunpack.c.l.b16 %v88
  %v304 = vunpack.c.l.b16 %v89
  %v305 = vunpack.c.l.b16 %v90
  %v306 = vunpack.c.l.b16 %v91
  %v307 = vunpack.c.l.b16 %v92
  %v308 = vunpack.c.l.b16 %v93
  %v309 = vunpack.c.l.b16 %v94
  %v310 = vunpack.c.l.b16 %v95
  %v311 = vunpack.c.l.b16 %v96
  %v312 = vunpack.c.l.b16 %v97
  %v313 = vunpack.c.l.b16 %v98
  %v314 = vunpack.c.l.b16 %v99
  %v315 = vunpack.c.l.b16 %v100
  %v316 = vunpack.c.l.b16 %v101
  %v317 = vunpack.c.l.b16 %v102
  %v318 = vunpack.c.l.b16 %v103
  %v319 = vunpack.c.l.b16 %v104
  %v320 = vunpack.c.l.b16 %v105
  %v321 = vunpack.c.l.b16 %v106
  %v322 = vunpack.c.l.b16 %v107
  %v323 = vunpack.c.l.b16 %v108
  %v324 = vunpack.c.l.b16 %v109
  %v325 = vunpack.c.l.b16 %v110
  %v326 = vunpack.c.l.b16 %v111
  %v327 = vunpack.c.l.b16 %v112
  %v328 = vunpack.c.l.b16 %v113
  %v329 = vunpack.c.l.b16 %v114
  %v330 = vpack.c.b16 %v231, %v230
  %v331 = vpack.c.b16 %v233, %v232
  %v332 = vpack.c.b16 %v235, %v234
  %v333 = vpack.c.b16 %v237, %v236
  %v334 = vpack.c.b16 %v239, %v238
  %v335 = vpack.c.b16 %v241, %v240
  %v336 = vpack.c.b16 %v243, %v242
  %v337 = vpack.c.b16 %v245, %v244
  %v338 = vpack.c.b16 %v247, %v246
  %v339 = vpack.c.b16 %v249, %v248
  %v340 = vpack.c.b16 %v251, %v250
  %v341 = vpack.c.b16 %v253, %v252
  %v342 = vpack.c.b16 %v255, %v254
  %v343 = vpack.c.b16 %v257, %v256
  %v344 = vpack.c.b16 %v259, %v258
  %v345 = vpack.c.b16 %v261, %v260
  %v346 = vpack.c.b16 %v263, %v262
  %v347 = vpack.c.b16 %v265, %v264
  %v348 = vpack.c.b16 %v267, %v266
  %v349 = vpack.c.b16 %v269, %v268
  %v350 = vpack.c.b16 %v271, %v270
  %v351 = vpack.c.b16 %v273, %v272
  %v352 = vpack.c.b16 %v275, %v274
  %v353 = vpack.c.b16 %v277, %v276
  %v354 = vpack.c.b16 %v279, %v278
  %v355 = vpack.c.b16 %v281, %v280
  %v356 = vpack.c.b16 %v283, %v282
  %v357 = vpack.c.b16 %v285, %v284
  %v358 = vpack.c.b16 %v287, %v286
  %v359 = vpack.c.b16 %v289, %v288
  %v360 = vpack.c.b16 %v291, %v290
  %v361 = vpack.c.b16 %v293, %v292
  %v362 = vpack.c.b16 %v295, %v294
  %v363 = vpack.c.b16 %v297, %v296
  %v364 = vpack.c.b16 %v299, %v298
  %v365 = vpack.c.b16 %v301, %v300
  %v366 = vpack.c.b16 %v303, %v302
  %v367 = vpack.c.b16 %v305, %v304
  %v368 = vpack.c.b16 %v307, %v306
  %v369 = vpack.c.b16 %v309, %v308
  %v370 = vpack.c.b16 %v311, %v310
  %v371 = vpack.c.b16 %v313, %v312
  %v372 = vpack.c.b16 %v315, %v314
  %v373 = vpack.c.b16 %v317, %v316
  %v374 = vpack.c.b16 %v319, %v318
  %v375 = vpack.c.b16 %v321, %v320
  %v376 = vpack.c.b16 %v323, %v322
  %v377 = vpack.c.b16 %v325, %v324
  %v378 = vpack.c.b16 %v327, %v326
  %v379 = vpack.c.b16 %v329, %v328
  %v388 = vunpack.c.l.b16 %v115
  %v389 = vunpack.c.l.b16 %v116
  %v390 = vunpack.c.l.b16 %v117
  %v391 = vunpack.c.l.b16 %v118
  %v392 = vunpack.c.l.b16 %v119
  %v393 = vunpack.c.l.b16 %v120
  %v394 = vunpack.c.l.b16 %v121
  %v395 = vunpack.c.l.b16 %v122
  %v396 = vpack.c.b16 %v389, %v388
  %v397 = vpack.c.b16 %v391, %v390
  %v398 = vpack.c.b16 %v393, %v392
  %v399 = vpack.c.b16 %v395, %v394
  %vm404 = vcmask 523264
  %v406 = vsel %vm404, %v330, 0
  %v409 = vsel %vm404, %v331, 0
  %v412 = vsel %vm404, %v332, 0
  %v415 = vsel %vm404, %v333, 0
  %v418 = vsel %vm404, %v334, 0
  %v421 = vsel %vm404, %v335, 0
  %v424 = vsel %vm404, %v336, 0
  %v427 = vsel %vm404, %v337, 0
  %v430 = vsel %vm404, %v338, 0
  %v433 = vsel %vm404, %v339, 0
  %v436 = vsel %vm404, %v340, 0
  %v439 = vsel %vm404, %v341, 0
  %v442 = vsel %vm404, %v342, 0
  %v445 = vsel %vm404, %v343, 0
  %v448 = vsel %vm404, %v344, 0
  %v451 = vsel %vm404, %v345, 0
  %v454 = vsel %vm404, %v346, 0
  %v457 = vsel %vm404, %v347, 0
  %v460 = vsel %vm404, %v348, 0
  %v463 = vsel %vm404, %v349, 0
  %v466 = vsel %vm404, %v350, 0
  %v469 = vsel %vm404, %v351, 0
  %v472 = vsel %vm404, %v352, 0
  %v475 = vsel %vm404, %v353, 0
  %v478 = vsel %vm404, %v354, 0
  %v481 = vsel %vm404, %v355, 0
  %v484 = vsel %vm404, %v356, 0
  %v487 = vsel %vm404, %v357, 0
  %v490 = vsel %vm404, %v358, 0
  %v493 = vsel %vm404, %v359, 0
  %v496 = vsel %vm404, %v360, 0
  %v499 = vsel %vm404, %v361, 0
  %v502 = vsel %vm404, %v362, 0
  %v505 = vsel %vm404, %v363, 0
  %v508 = vsel %vm404, %v364, 0
  %v511 = vsel %vm404, %v365, 0
  %v514 = vsel %vm404, %v366, 0
  %v517 = vsel %vm404, %v367, 0
  %v520 = vsel %vm404, %v368, 0
  %v523 = vsel %vm404, %v369, 0
  %v526 = vsel %vm404, %v370, 0
  %v529 = vsel %vm404, %v371, 0
  %v532 = vsel %vm404, %v372, 0
  %v535 = vsel %vm404, %v373, 0
  %v538 = vsel %vm404, %v374, 0
  %v541 = vsel %vm404, %v375, 0
  %v544 = vsel %vm404, %v376, 0
  %v547 = vsel %vm404, %v377, 0
  %v550 = vsel %vm404, %v378, 0
  %v553 = vsel %vm404, %v379, 0
  %555 = vmatprep.subr.bf16.mxu0 0
  %556 = vmatpush1.bf16.msra.mxu0 %v396
  %557 = vmatprep.subr.bf16.mxu0 0
  %558 = vmatpush1.bf16.msra.mxu0 %v397
  %559 = vmatprep.subr.bf16.mxu0 0
  %560 = vmatpush1.bf16.msra.mxu0 %v398
  %561 = vmatprep.subr.bf16.mxu0 0
  %562 = vmatpush1.bf16.msra.mxu0 %v399
  %563 = vmatprep.subr.bf16.mxu0 0
  %564 = vmatpush1.bf16.msra.mxu0 0
  %565 = vmatprep.subr.bf16.mxu0 0
  %566 = vmatpush1.bf16.msra.mxu0 0
  %567 = vmatprep.subr.bf16.mxu0 0
  %568 = vmatpush1.bf16.msra.mxu0 0
  %569 = vmatprep.subr.bf16.mxu0 0
  %570 = vmatpush1.bf16.msra.mxu0 0
  %571 = vmatprep.subr.bf16.mxu0 0
  %572 = vmatpush1.bf16.msra.mxu0 0
  %573 = vmatprep.subr.bf16.mxu0 0
  %574 = vmatpush1.bf16.msra.mxu0 0
  %575 = vmatprep.subr.bf16.mxu0 0
  %576 = vmatpush1.bf16.msra.mxu0 0
  %577 = vmatprep.subr.bf16.mxu0 0
  %578 = vmatpush1.bf16.msra.mxu0 0
  %579 = vmatprep.subr.bf16.mxu0 0
  %580 = vmatpush1.bf16.msra.mxu0 0
  %581 = vmatprep.subr.bf16.mxu0 0
  %582 = vmatpush1.bf16.msra.mxu0 0
  %583 = vmatprep.subr.bf16.mxu0 0
  %584 = vmatpush1.bf16.msra.mxu0 0
  %585 = vmatprep.subr.bf16.mxu0 0
  %586 = vmatpush1.bf16.msra.mxu0 0
  %587 = vmatprep.mubr.bf16.mxu0 0
  %588 = vmatmul.mubr.bf16.gmra.mrb[0].mxu0 %v406
  %v589 = vpop.f32.mrb[0].mxu0
  %v590 = vadd.f32 %v128, %v589
  %v591 = vpop.f32.mrb[0].mxu0
  %v592 = vpop.f32.mrb[0].mxu0
  %v593 = vadd.f32 %v128, %v592
  %v594 = vpop.f32.mrb[0].mxu0
  %595 = vmatprep.mubr.bf16.mxu0 0
  %596 = vmatmul.mubr.bf16.gmra.mrb[0].mxu0 %v409
  %v597 = vpop.f32.mrb[0].mxu0
  %v598 = vadd.f32 %v128, %v597
  %v599 = vpop.f32.mrb[0].mxu0
  %v600 = vpop.f32.mrb[0].mxu0
  %v601 = vadd.f32 %v128, %v600
  %v602 = vpop.f32.mrb[0].mxu0
  %603 = vmatprep.mubr.bf16.mxu0 0
  %604 = vmatmul.mubr.bf16.gmra.mrb[0].mxu0 %v412
  %v605 = vpop.f32.mrb[0].mxu0
  %v606 = vadd.f32 %v128, %v605
  %v607 = vpop.f32.mrb[0].mxu0
  %v608 = vpop.f32.mrb[0].mxu0
  %v609 = vadd.f32 %v128, %v608
  %v610 = vpop.f32.mrb[0].mxu0
  %611 = vmatprep.mubr.bf16.mxu0 0
  %612 = vmatmul.mubr.bf16.gmra.mrb[0].mxu0 %v415
  %v613 = vpop.f32.mrb[0].mxu0
  %v614 = vadd.f32 %v128, %v613
  %v615 = vpop.f32.mrb[0].mxu0
  %v616 = vpop.f32.mrb[0].mxu0
  %v617 = vadd.f32 %v128, %v616
  %v618 = vpop.f32.mrb[0].mxu0
  %619 = vmatprep.mubr.bf16.mxu0 0
  %620 = vmatmul.mubr.bf16.gmra.mrb[0].mxu0 %v418
  %v621 = vpop.f32.mrb[0].mxu0
  %v622 = vadd.f32 %v128, %v621
  %v623 = vpop.f32.mrb[0].mxu0
  %v624 = vpop.f32.mrb[0].mxu0
  %v625 = vadd.f32 %v128, %v624
  %v626 = vpop.f32.mrb[0].mxu0
  %627 = vmatprep.mubr.bf16.mxu0 0
  %628 = vmatmul.mubr.bf16.gmra.mrb[0].mxu0 %v421
  %v629 = vpop.f32.mrb[0].mxu0
  %v630 = vadd.f32 %v128, %v629
  %v631 = vpop.f32.mrb[0].mxu0
  %v632 = vpop.f32.mrb[0].mxu0
  %v633 = vadd.f32 %v128, %v632
  %v634 = vpop.f32.mrb[0].mxu0
  %635 = vmatprep.mubr.bf16.mxu0 0
  %636 = vmatmul.mubr.bf16.gmra.mrb[0].mxu0 %v424
  %v637 = vpop.f32.mrb[0].mxu0
  %v638 = vadd.f32 %v128, %v637
  %v639 = vpop.f32.mrb[0].mxu0
  %v640 = vpop.f32.mrb[0].mxu0
  %v641 = vadd.f32 %v128, %v640
  %v642 = vpop.f32.mrb[0].mxu0
  %643 = vmatprep.mubr.bf16.mxu0 0
  %644 = vmatmul.mubr.bf16.gmra.mrb[0].mxu0 %v427
  %v645 = vpop.f32.mrb[0].mxu0
  %v646 = vadd.f32 %v128, %v645
  %v647 = vpop.f32.mrb[0].mxu0
  %v648 = vpop.f32.mrb[0].mxu0
  %v649 = vadd.f32 %v128, %v648
  %v650 = vpop.f32.mrb[0].mxu0
  %651 = vmatprep.mubr.bf16.mxu0 0
  %652 = vmatmul.mubr.bf16.gmra.mrb[0].mxu0 %v430
  %v653 = vpop.f32.mrb[0].mxu0
  %v654 = vadd.f32 %v128, %v653
  %v655 = vpop.f32.mrb[0].mxu0
  %v656 = vpop.f32.mrb[0].mxu0
  %v657 = vadd.f32 %v128, %v656
  %v658 = vpop.f32.mrb[0].mxu0
  %659 = vmatprep.mubr.bf16.mxu0 0
  %660 = vmatmul.mubr.bf16.gmra.mrb[0].mxu0 %v433
  %v661 = vpop.f32.mrb[0].mxu0
  %v662 = vadd.f32 %v128, %v661
  %v663 = vpop.f32.mrb[0].mxu0
  %v664 = vpop.f32.mrb[0].mxu0
  %v665 = vadd.f32 %v128, %v664
  %v666 = vpop.f32.mrb[0].mxu0
  %667 = vmatprep.mubr.bf16.mxu0 0
  %668 = vmatmul.mubr.bf16.gmra.mrb[0].mxu0 %v436
  %v669 = vpop.f32.mrb[0].mxu0
  %v670 = vadd.f32 %v128, %v669
  %v671 = vpop.f32.mrb[0].mxu0
  %v672 = vpop.f32.mrb[0].mxu0
  %v673 = vadd.f32 %v128, %v672
  %v674 = vpop.f32.mrb[0].mxu0
  %675 = vmatprep.mubr.bf16.mxu0 0
  %676 = vmatmul.mubr.bf16.gmra.mrb[0].mxu0 %v439
  %v677 = vpop.f32.mrb[0].mxu0
  %v678 = vadd.f32 %v128, %v677
  %v679 = vpop.f32.mrb[0].mxu0
  %v680 = vpop.f32.mrb[0].mxu0
  %v681 = vadd.f32 %v128, %v680
  %v682 = vpop.f32.mrb[0].mxu0
  %683 = vmatprep.mubr.bf16.mxu0 0
  %684 = vmatmul.mubr.bf16.gmra.mrb[0].mxu0 %v442
  %v685 = vpop.f32.mrb[0].mxu0
  %v686 = vadd.f32 %v128, %v685
  %v687 = vpop.f32.mrb[0].mxu0
  %v688 = vpop.f32.mrb[0].mxu0
  %v689 = vadd.f32 %v128, %v688
  %v690 = vpop.f32.mrb[0].mxu0
  %691 = vmatprep.mubr.bf16.mxu0 0
  %692 = vmatmul.mubr.bf16.gmra.mrb[0].mxu0 %v445
  %v693 = vpop.f32.mrb[0].mxu0
  %v694 = vadd.f32 %v128, %v693
  %v695 = vpop.f32.mrb[0].mxu0
  %v696 = vpop.f32.mrb[0].mxu0
  %v697 = vadd.f32 %v128, %v696
  %v698 = vpop.f32.mrb[0].mxu0
  %699 = vmatprep.mubr.bf16.mxu0 0
  %700 = vmatmul.mubr.bf16.gmra.mrb[0].mxu0 %v448
  %v701 = vpop.f32.mrb[0].mxu0
  %v702 = vadd.f32 %v128, %v701
  %v703 = vpop.f32.mrb[0].mxu0
  %v704 = vpop.f32.mrb[0].mxu0
  %v705 = vadd.f32 %v128, %v704
  %v706 = vpop.f32.mrb[0].mxu0
  %707 = vmatprep.mubr.bf16.mxu0 0
  %708 = vmatmul.mubr.bf16.gmra.mrb[0].mxu0 %v451
  %v709 = vpop.f32.mrb[0].mxu0
  %v710 = vadd.f32 %v128, %v709
  %v711 = vpop.f32.mrb[0].mxu0
  %v712 = vpop.f32.mrb[0].mxu0
  %v713 = vadd.f32 %v128, %v712
  %v714 = vpop.f32.mrb[0].mxu0
  %715 = vmatprep.mubr.bf16.mxu0 0
  %716 = vmatmul.mubr.bf16.gmra.mrb[0].mxu0 %v454
  %v717 = vpop.f32.mrb[0].mxu0
  %v718 = vadd.f32 %v128, %v717
  %v719 = vpop.f32.mrb[0].mxu0
  %v720 = vpop.f32.mrb[0].mxu0
  %v721 = vadd.f32 %v128, %v720
  %v722 = vpop.f32.mrb[0].mxu0
  %723 = vmatprep.mubr.bf16.mxu0 0
  %724 = vmatmul.mubr.bf16.gmra.mrb[0].mxu0 %v457
  %v725 = vpop.f32.mrb[0].mxu0
  %v726 = vadd.f32 %v128, %v725
  %v727 = vpop.f32.mrb[0].mxu0
  %v728 = vpop.f32.mrb[0].mxu0
  %v729 = vadd.f32 %v128, %v728
  %v730 = vpop.f32.mrb[0].mxu0
  %731 = vmatprep.mubr.bf16.mxu0 0
  %732 = vmatmul.mubr.bf16.gmra.mrb[0].mxu0 %v460
  %v733 = vpop.f32.mrb[0].mxu0
  %v734 = vadd.f32 %v128, %v733
  %v735 = vpop.f32.mrb[0].mxu0
  %v736 = vpop.f32.mrb[0].mxu0
  %v737 = vadd.f32 %v128, %v736
  %v738 = vpop.f32.mrb[0].mxu0
  %739 = vmatprep.mubr.bf16.mxu0 0
  %740 = vmatmul.mubr.bf16.gmra.mrb[0].mxu0 %v463
  %v741 = vpop.f32.mrb[0].mxu0
  %v742 = vadd.f32 %v128, %v741
  %v743 = vpop.f32.mrb[0].mxu0
  %v744 = vpop.f32.mrb[0].mxu0
  %v745 = vadd.f32 %v128, %v744
  %v746 = vpop.f32.mrb[0].mxu0
  %747 = vmatprep.mubr.bf16.mxu0 0
  %748 = vmatmul.mubr.bf16.gmra.mrb[0].mxu0 %v466
  %v749 = vpop.f32.mrb[0].mxu0
  %v750 = vadd.f32 %v128, %v749
  %v751 = vpop.f32.mrb[0].mxu0
  %v752 = vpop.f32.mrb[0].mxu0
  %v753 = vadd.f32 %v128, %v752
  %v754 = vpop.f32.mrb[0].mxu0
  %755 = vmatprep.mubr.bf16.mxu0 0
  %756 = vmatmul.mubr.bf16.gmra.mrb[0].mxu0 %v469
  %v757 = vpop.f32.mrb[0].mxu0
  %v758 = vadd.f32 %v128, %v757
  %v759 = vpop.f32.mrb[0].mxu0
  %v760 = vpop.f32.mrb[0].mxu0
  %v761 = vadd.f32 %v128, %v760
  %v762 = vpop.f32.mrb[0].mxu0
  %763 = vmatprep.mubr.bf16.mxu0 0
  %764 = vmatmul.mubr.bf16.gmra.mrb[0].mxu0 %v472
  %v765 = vpop.f32.mrb[0].mxu0
  %v766 = vadd.f32 %v128, %v765
  %v767 = vpop.f32.mrb[0].mxu0
  %v768 = vpop.f32.mrb[0].mxu0
  %v769 = vadd.f32 %v128, %v768
  %v770 = vpop.f32.mrb[0].mxu0
  %771 = vmatprep.mubr.bf16.mxu0 0
  %772 = vmatmul.mubr.bf16.gmra.mrb[0].mxu0 %v475
  %v773 = vpop.f32.mrb[0].mxu0
  %v774 = vadd.f32 %v128, %v773
  %v775 = vpop.f32.mrb[0].mxu0
  %v776 = vpop.f32.mrb[0].mxu0
  %v777 = vadd.f32 %v128, %v776
  %v778 = vpop.f32.mrb[0].mxu0
  %779 = vmatprep.mubr.bf16.mxu0 0
  %780 = vmatmul.mubr.bf16.gmra.mrb[0].mxu0 %v478
  %v781 = vpop.f32.mrb[0].mxu0
  %v782 = vadd.f32 %v128, %v781
  %v783 = vpop.f32.mrb[0].mxu0
  %v784 = vpop.f32.mrb[0].mxu0
  %v785 = vadd.f32 %v128, %v784
  %v786 = vpop.f32.mrb[0].mxu0
  %787 = vmatprep.mubr.bf16.mxu0 0
  %788 = vmatmul.mubr.bf16.gmra.mrb[0].mxu0 %v481
  %v789 = vpop.f32.mrb[0].mxu0
  %v790 = vadd.f32 %v128, %v789
  %v791 = vpop.f32.mrb[0].mxu0
  %v792 = vpop.f32.mrb[0].mxu0
  %v793 = vadd.f32 %v128, %v792
  %v794 = vpop.f32.mrb[0].mxu0
  %795 = vmatprep.mubr.bf16.mxu0 0
  %796 = vmatmul.mubr.bf16.gmra.mrb[0].mxu0 %v484
  %v797 = vpop.f32.mrb[0].mxu0
  %v798 = vadd.f32 %v128, %v797
  %v799 = vpop.f32.mrb[0].mxu0
  %v800 = vpop.f32.mrb[0].mxu0
  %v801 = vadd.f32 %v128, %v800
  %v802 = vpop.f32.mrb[0].mxu0
  %803 = vmatprep.mubr.bf16.mxu0 0
  %804 = vmatmul.mubr.bf16.gmra.mrb[0].mxu0 %v487
  %v805 = vpop.f32.mrb[0].mxu0
  %v806 = vadd.f32 %v128, %v805
  %v807 = vpop.f32.mrb[0].mxu0
  %v808 = vpop.f32.mrb[0].mxu0
  %v809 = vadd.f32 %v128, %v808
  %v810 = vpop.f32.mrb[0].mxu0
  %811 = vmatprep.mubr.bf16.mxu0 0
  %812 = vmatmul.mubr.bf16.gmra.mrb[0].mxu0 %v490
  %v813 = vpop.f32.mrb[0].mxu0
  %v814 = vadd.f32 %v128, %v813
  %v815 = vpop.f32.mrb[0].mxu0
  %v816 = vpop.f32.mrb[0].mxu0
  %v817 = vadd.f32 %v128, %v816
  %v818 = vpop.f32.mrb[0].mxu0
  %819 = vmatprep.mubr.bf16.mxu0 0
  %820 = vmatmul.mubr.bf16.gmra.mrb[0].mxu0 %v493
  %v821 = vpop.f32.mrb[0].mxu0
  %v822 = vadd.f32 %v128, %v821
  %v823 = vpop.f32.mrb[0].mxu0
  %v824 = vpop.f32.mrb[0].mxu0
  %v825 = vadd.f32 %v128, %v824
  %v826 = vpop.f32.mrb[0].mxu0
  %827 = vmatprep.mubr.bf16.mxu0 0
  %828 = vmatmul.mubr.bf16.gmra.mrb[0].mxu0 %v496
  %v829 = vpop.f32.mrb[0].mxu0
  %v830 = vadd.f32 %v128, %v829
  %v831 = vpop.f32.mrb[0].mxu0
  %v832 = vpop.f32.mrb[0].mxu0
  %v833 = vadd.f32 %v128, %v832
  %v834 = vpop.f32.mrb[0].mxu0
  %835 = vmatprep.mubr.bf16.mxu0 0
  %836 = vmatmul.mubr.bf16.gmra.mrb[0].mxu0 %v499
  %v837 = vpop.f32.mrb[0].mxu0
  %v838 = vadd.f32 %v128, %v837
  %v839 = vpop.f32.mrb[0].mxu0
  %v840 = vpop.f32.mrb[0].mxu0
  %v841 = vadd.f32 %v128, %v840
  %v842 = vpop.f32.mrb[0].mxu0
  %843 = vmatprep.mubr.bf16.mxu0 0
  %844 = vmatmul.mubr.bf16.gmra.mrb[0].mxu0 %v502
  %v845 = vpop.f32.mrb[0].mxu0
  %v846 = vadd.f32 %v128, %v845
  %v847 = vpop.f32.mrb[0].mxu0
  %v848 = vpop.f32.mrb[0].mxu0
  %v849 = vadd.f32 %v128, %v848
  %v850 = vpop.f32.mrb[0].mxu0
  %851 = vmatprep.mubr.bf16.mxu0 0
  %852 = vmatmul.mubr.bf16.gmra.mrb[0].mxu0 %v505
  %v853 = vpop.f32.mrb[0].mxu0
  %v854 = vadd.f32 %v128, %v853
  %v855 = vpop.f32.mrb[0].mxu0
  %v856 = vpop.f32.mrb[0].mxu0
  %v857 = vadd.f32 %v128, %v856
  %v858 = vpop.f32.mrb[0].mxu0
  %859 = vmatprep.mubr.bf16.mxu0 0
  %860 = vmatmul.mubr.bf16.gmra.mrb[0].mxu0 %v508
  %v861 = vpop.f32.mrb[0].mxu0
  %v862 = vadd.f32 %v128, %v861
  %v863 = vpop.f32.mrb[0].mxu0
  %v864 = vpop.f32.mrb[0].mxu0
  %v865 = vadd.f32 %v128, %v864
  %v866 = vpop.f32.mrb[0].mxu0
  %867 = vmatprep.mubr.bf16.mxu0 0
  %868 = vmatmul.mubr.bf16.gmra.mrb[0].mxu0 %v511
  %v869 = vpop.f32.mrb[0].mxu0
  %v870 = vadd.f32 %v128, %v869
  %v871 = vpop.f32.mrb[0].mxu0
  %v872 = vpop.f32.mrb[0].mxu0
  %v873 = vadd.f32 %v128, %v872
  %v874 = vpop.f32.mrb[0].mxu0
  %875 = vmatprep.mubr.bf16.mxu0 0
  %876 = vmatmul.mubr.bf16.gmra.mrb[0].mxu0 %v514
  %v877 = vpop.f32.mrb[0].mxu0
  %v878 = vadd.f32 %v128, %v877
  %v879 = vpop.f32.mrb[0].mxu0
  %v880 = vpop.f32.mrb[0].mxu0
  %v881 = vadd.f32 %v128, %v880
  %v882 = vpop.f32.mrb[0].mxu0
  %883 = vmatprep.mubr.bf16.mxu0 0
  %884 = vmatmul.mubr.bf16.gmra.mrb[0].mxu0 %v517
  %v885 = vpop.f32.mrb[0].mxu0
  %v886 = vadd.f32 %v128, %v885
  %v887 = vpop.f32.mrb[0].mxu0
  %v888 = vpop.f32.mrb[0].mxu0
  %v889 = vadd.f32 %v128, %v888
  %v890 = vpop.f32.mrb[0].mxu0
  %891 = vmatprep.mubr.bf16.mxu0 0
  %892 = vmatmul.mubr.bf16.gmra.mrb[0].mxu0 %v520
  %v893 = vpop.f32.mrb[0].mxu0
  %v894 = vadd.f32 %v128, %v893
  %v895 = vpop.f32.mrb[0].mxu0
  %v896 = vpop.f32.mrb[0].mxu0
  %v897 = vadd.f32 %v128, %v896
  %v898 = vpop.f32.mrb[0].mxu0
  %899 = vmatprep.mubr.bf16.mxu0 0
  %900 = vmatmul.mubr.bf16.gmra.mrb[0].mxu0 %v523
  %v901 = vpop.f32.mrb[0].mxu0
  %v902 = vadd.f32 %v128, %v901
  %v903 = vpop.f32.mrb[0].mxu0
  %v904 = vpop.f32.mrb[0].mxu0
  %v905 = vadd.f32 %v128, %v904
  %v906 = vpop.f32.mrb[0].mxu0
  %907 = vmatprep.mubr.bf16.mxu0 0
  %908 = vmatmul.mubr.bf16.gmra.mrb[0].mxu0 %v526
  %v909 = vpop.f32.mrb[0].mxu0
  %v910 = vadd.f32 %v128, %v909
  %v911 = vpop.f32.mrb[0].mxu0
  %v912 = vpop.f32.mrb[0].mxu0
  %v913 = vadd.f32 %v128, %v912
  %v914 = vpop.f32.mrb[0].mxu0
  %915 = vmatprep.mubr.bf16.mxu0 0
  %916 = vmatmul.mubr.bf16.gmra.mrb[0].mxu0 %v529
  %v917 = vpop.f32.mrb[0].mxu0
  %v918 = vadd.f32 %v128, %v917
  %v919 = vpop.f32.mrb[0].mxu0
  %v920 = vpop.f32.mrb[0].mxu0
  %v921 = vadd.f32 %v128, %v920
  %v922 = vpop.f32.mrb[0].mxu0
  %923 = vmatprep.mubr.bf16.mxu0 0
  %924 = vmatmul.mubr.bf16.gmra.mrb[0].mxu0 %v532
  %v925 = vpop.f32.mrb[0].mxu0
  %v926 = vadd.f32 %v128, %v925
  %v927 = vpop.f32.mrb[0].mxu0
  %v928 = vpop.f32.mrb[0].mxu0
  %v929 = vadd.f32 %v128, %v928
  %v930 = vpop.f32.mrb[0].mxu0
  %931 = vmatprep.mubr.bf16.mxu0 0
  %932 = vmatmul.mubr.bf16.gmra.mrb[0].mxu0 %v535
  %v933 = vpop.f32.mrb[0].mxu0
  %v934 = vadd.f32 %v128, %v933
  %v935 = vpop.f32.mrb[0].mxu0
  %v936 = vpop.f32.mrb[0].mxu0
  %v937 = vadd.f32 %v128, %v936
  %v938 = vpop.f32.mrb[0].mxu0
  %939 = vmatprep.mubr.bf16.mxu0 0
  %940 = vmatmul.mubr.bf16.gmra.mrb[0].mxu0 %v538
  %v941 = vpop.f32.mrb[0].mxu0
  %v942 = vadd.f32 %v128, %v941
  %v943 = vpop.f32.mrb[0].mxu0
  %v944 = vpop.f32.mrb[0].mxu0
  %v945 = vadd.f32 %v128, %v944
  %v946 = vpop.f32.mrb[0].mxu0
  %947 = vmatprep.mubr.bf16.mxu0 0
  %948 = vmatmul.mubr.bf16.gmra.mrb[0].mxu0 %v541
  %v949 = vpop.f32.mrb[0].mxu0
  %v950 = vadd.f32 %v128, %v949
  %v951 = vpop.f32.mrb[0].mxu0
  %v952 = vpop.f32.mrb[0].mxu0
  %v953 = vadd.f32 %v128, %v952
  %v954 = vpop.f32.mrb[0].mxu0
  %955 = vmatprep.mubr.bf16.mxu0 0
  %956 = vmatmul.mubr.bf16.gmra.mrb[0].mxu0 %v544
  %v957 = vpop.f32.mrb[0].mxu0
  %v958 = vadd.f32 %v128, %v957
  %v959 = vpop.f32.mrb[0].mxu0
  %v960 = vpop.f32.mrb[0].mxu0
  %v961 = vadd.f32 %v128, %v960
  %v962 = vpop.f32.mrb[0].mxu0
  %963 = vmatprep.mubr.bf16.mxu0 0
  %964 = vmatmul.mubr.bf16.gmra.mrb[0].mxu0 %v547
  %v965 = vpop.f32.mrb[0].mxu0
  %v966 = vadd.f32 %v128, %v965
  %v967 = vpop.f32.mrb[0].mxu0
  %v968 = vpop.f32.mrb[0].mxu0
  %v969 = vadd.f32 %v128, %v968
  %v970 = vpop.f32.mrb[0].mxu0
  %971 = vmatprep.mubr.bf16.mxu0 0
  %972 = vmatmul.mubr.bf16.gmra.mrb[0].mxu0 %v550
  %v973 = vpop.f32.mrb[0].mxu0
  %v974 = vadd.f32 %v128, %v973
  %v975 = vpop.f32.mrb[0].mxu0
  %v976 = vpop.f32.mrb[0].mxu0
  %v977 = vadd.f32 %v128, %v976
  %v978 = vpop.f32.mrb[0].mxu0
  %979 = vmatprep.mubr.bf16.mxu0 0
  %980 = vmatmul.mubr.bf16.gmra.mrb[0].mxu0 %v553
  %v981 = vpop.f32.mrb[0].mxu0
  %v982 = vadd.f32 %v128, %v981
  %v983 = vpop.f32.mrb[0].mxu0
  %v984 = vpop.f32.mrb[0].mxu0
  %v985 = vadd.f32 %v128, %v984
  %v986 = vpop.f32.mrb[0].mxu0
  %987 = vdwg.mxu0
  %v988 = vmax.f32 %v590, 0.0
  %v989 = vmax.f32 %v593, 0.0
  %v990 = vmax.f32 %v598, 0.0
  %v991 = vmax.f32 %v601, 0.0
  %v992 = vmax.f32 %v606, 0.0
  %v993 = vmax.f32 %v609, 0.0
  %v994 = vmax.f32 %v614, 0.0
  %v995 = vmax.f32 %v617, 0.0
  %v996 = vmax.f32 %v622, 0.0
  %v997 = vmax.f32 %v625, 0.0
  %v998 = vmax.f32 %v630, 0.0
  %v999 = vmax.f32 %v633, 0.0
  %v1000 = vmax.f32 %v638, 0.0
  %v1001 = vmax.f32 %v641, 0.0
  %v1002 = vmax.f32 %v646, 0.0
  %v1003 = vmax.f32 %v649, 0.0
  %v1004 = vmax.f32 %v654, 0.0
  %v1005 = vmax.f32 %v657, 0.0
  %v1006 = vmax.f32 %v662, 0.0
  %v1007 = vmax.f32 %v665, 0.0
  %v1008 = vmax.f32 %v670, 0.0
  %v1009 = vmax.f32 %v673, 0.0
  %v1010 = vmax.f32 %v678, 0.0
  %v1011 = vmax.f32 %v681, 0.0
  %v1012 = vmax.f32 %v686, 0.0
  %v1013 = vmax.f32 %v689, 0.0
  %v1014 = vmax.f32 %v694, 0.0
  %v1015 = vmax.f32 %v697, 0.0
  %v1016 = vmax.f32 %v702, 0.0
  %v1017 = vmax.f32 %v705, 0.0
  %v1018 = vmax.f32 %v710, 0.0
  %v1019 = vmax.f32 %v713, 0.0
  %v1020 = vmax.f32 %v718, 0.0
  %v1021 = vmax.f32 %v721, 0.0
  %v1022 = vmax.f32 %v726, 0.0
  %v1023 = vmax.f32 %v729, 0.0
  %v1024 = vmax.f32 %v734, 0.0
  %v1025 = vmax.f32 %v737, 0.0
  %v1026 = vmax.f32 %v742, 0.0
  %v1027 = vmax.f32 %v745, 0.0
  %v1028 = vmax.f32 %v750, 0.0
  %v1029 = vmax.f32 %v753, 0.0
  %v1030 = vmax.f32 %v758, 0.0
  %v1031 = vmax.f32 %v761, 0.0
  %v1032 = vmax.f32 %v766, 0.0
  %v1033 = vmax.f32 %v769, 0.0
  %v1034 = vmax.f32 %v774, 0.0
  %v1035 = vmax.f32 %v777, 0.0
  %v1036 = vmax.f32 %v782, 0.0
  %v1037 = vmax.f32 %v785, 0.0
  %v1038 = vmax.f32 %v790, 0.0
  %v1039 = vmax.f32 %v793, 0.0
  %v1040 = vmax.f32 %v798, 0.0
  %v1041 = vmax.f32 %v801, 0.0
  %v1042 = vmax.f32 %v806, 0.0
  %v1043 = vmax.f32 %v809, 0.0
  %v1044 = vmax.f32 %v814, 0.0
  %v1045 = vmax.f32 %v817, 0.0
  %v1046 = vmax.f32 %v822, 0.0
  %v1047 = vmax.f32 %v825, 0.0
  %v1048 = vmax.f32 %v830, 0.0
  %v1049 = vmax.f32 %v833, 0.0
  %v1050 = vmax.f32 %v838, 0.0
  %v1051 = vmax.f32 %v841, 0.0
  %v1052 = vmax.f32 %v846, 0.0
  %v1053 = vmax.f32 %v849, 0.0
  %v1054 = vmax.f32 %v854, 0.0
  %v1055 = vmax.f32 %v857, 0.0
  %v1056 = vmax.f32 %v862, 0.0
  %v1057 = vmax.f32 %v865, 0.0
  %v1058 = vmax.f32 %v870, 0.0
  %v1059 = vmax.f32 %v873, 0.0
  %v1060 = vmax.f32 %v878, 0.0
  %v1061 = vmax.f32 %v881, 0.0
  %v1062 = vmax.f32 %v886, 0.0
  %v1063 = vmax.f32 %v889, 0.0
  %v1064 = vmax.f32 %v894, 0.0
  %v1065 = vmax.f32 %v897, 0.0
  %v1066 = vmax.f32 %v902, 0.0
  %v1067 = vmax.f32 %v905, 0.0
  %v1068 = vmax.f32 %v910, 0.0
  %v1069 = vmax.f32 %v913, 0.0
  %v1070 = vmax.f32 %v918, 0.0
  %v1071 = vmax.f32 %v921, 0.0
  %v1072 = vmax.f32 %v926, 0.0
  %v1073 = vmax.f32 %v929, 0.0
  %v1074 = vmax.f32 %v934, 0.0
  %v1075 = vmax.f32 %v937, 0.0
  %v1076 = vmax.f32 %v942, 0.0
  %v1077 = vmax.f32 %v945, 0.0
  %v1078 = vmax.f32 %v950, 0.0
  %v1079 = vmax.f32 %v953, 0.0
  %v1080 = vmax.f32 %v958, 0.0
  %v1081 = vmax.f32 %v961, 0.0
  %v1082 = vmax.f32 %v966, 0.0
  %v1083 = vmax.f32 %v969, 0.0
  %v1084 = vmax.f32 %v974, 0.0
  %v1085 = vmax.f32 %v977, 0.0
  %v1086 = vmax.f32 %v982, 0.0
  %v1087 = vmax.f32 %v985, 0.0
  %v1088 = vpack.c.bf16 %v989, %v988
  %v1089 = vpack.c.bf16 %v991, %v990
  %v1090 = vpack.c.bf16 %v993, %v992
  %v1091 = vpack.c.bf16 %v995, %v994
  %v1092 = vpack.c.bf16 %v997, %v996
  %v1093 = vpack.c.bf16 %v999, %v998
  %v1094 = vpack.c.bf16 %v1001, %v1000
  %v1095 = vpack.c.bf16 %v1003, %v1002
  %v1096 = vpack.c.bf16 %v1005, %v1004
  %v1097 = vpack.c.bf16 %v1007, %v1006
  %v1098 = vpack.c.bf16 %v1009, %v1008
  %v1099 = vpack.c.bf16 %v1011, %v1010
  %v1100 = vpack.c.bf16 %v1013, %v1012
  %v1101 = vpack.c.bf16 %v1015, %v1014
  %v1102 = vpack.c.bf16 %v1017, %v1016
  %v1103 = vpack.c.bf16 %v1019, %v1018
  %v1104 = vpack.c.bf16 %v1021, %v1020
  %v1105 = vpack.c.bf16 %v1023, %v1022
  %v1106 = vpack.c.bf16 %v1025, %v1024
  %v1107 = vpack.c.bf16 %v1027, %v1026
  %v1108 = vpack.c.bf16 %v1029, %v1028
  %v1109 = vpack.c.bf16 %v1031, %v1030
  %v1110 = vpack.c.bf16 %v1033, %v1032
  %v1111 = vpack.c.bf16 %v1035, %v1034
  %v1112 = vpack.c.bf16 %v1037, %v1036
  %v1113 = vpack.c.bf16 %v1039, %v1038
  %v1114 = vpack.c.bf16 %v1041, %v1040
  %v1115 = vpack.c.bf16 %v1043, %v1042
  %v1116 = vpack.c.bf16 %v1045, %v1044
  %v1117 = vpack.c.bf16 %v1047, %v1046
  %v1118 = vpack.c.bf16 %v1049, %v1048
  %v1119 = vpack.c.bf16 %v1051, %v1050
  %v1120 = vpack.c.bf16 %v1053, %v1052
  %v1121 = vpack.c.bf16 %v1055, %v1054
  %v1122 = vpack.c.bf16 %v1057, %v1056
  %v1123 = vpack.c.bf16 %v1059, %v1058
  %v1124 = vpack.c.bf16 %v1061, %v1060
  %v1125 = vpack.c.bf16 %v1063, %v1062
  %v1126 = vpack.c.bf16 %v1065, %v1064
  %v1127 = vpack.c.bf16 %v1067, %v1066
  %v1128 = vpack.c.bf16 %v1069, %v1068
  %v1129 = vpack.c.bf16 %v1071, %v1070
  %v1130 = vpack.c.bf16 %v1073, %v1072
  %v1131 = vpack.c.bf16 %v1075, %v1074
  %v1132 = vpack.c.bf16 %v1077, %v1076
  %v1133 = vpack.c.bf16 %v1079, %v1078
  %v1134 = vpack.c.bf16 %v1081, %v1080
  %v1135 = vpack.c.bf16 %v1083, %v1082
  %v1136 = vpack.c.bf16 %v1085, %v1084
  %v1137 = vpack.c.bf16 %v1087, %v1086
  %v1188 = vunpack.c.l.b16 %v1088
  %v1189 = vunpack.c.h.b16 %v1088
  %v1190 = vunpack.c.l.b16 %v1089
  %v1191 = vunpack.c.h.b16 %v1089
  %v1192 = vunpack.c.l.b16 %v1090
  %v1193 = vunpack.c.h.b16 %v1090
  %v1194 = vunpack.c.l.b16 %v1091
  %v1195 = vunpack.c.h.b16 %v1091
  %v1196 = vunpack.c.l.b16 %v1092
  %v1197 = vunpack.c.h.b16 %v1092
  %v1198 = vunpack.c.l.b16 %v1093
  %v1199 = vunpack.c.h.b16 %v1093
  %v1200 = vunpack.c.l.b16 %v1094
  %v1201 = vunpack.c.h.b16 %v1094
  %v1202 = vunpack.c.l.b16 %v1095
  %v1203 = vunpack.c.h.b16 %v1095
  %v1204 = vunpack.c.l.b16 %v1096
  %v1205 = vunpack.c.h.b16 %v1096
  %v1206 = vunpack.c.l.b16 %v1097
  %v1207 = vunpack.c.h.b16 %v1097
  %v1208 = vunpack.c.l.b16 %v1098
  %v1209 = vunpack.c.h.b16 %v1098
  %v1210 = vunpack.c.l.b16 %v1099
  %v1211 = vunpack.c.h.b16 %v1099
  %v1212 = vunpack.c.l.b16 %v1100
  %v1213 = vunpack.c.h.b16 %v1100
  %v1214 = vunpack.c.l.b16 %v1101
  %v1215 = vunpack.c.h.b16 %v1101
  %v1216 = vunpack.c.l.b16 %v1102
  %v1217 = vunpack.c.h.b16 %v1102
  %v1218 = vunpack.c.l.b16 %v1103
  %v1219 = vunpack.c.h.b16 %v1103
  %v1220 = vunpack.c.l.b16 %v1104
  %v1221 = vunpack.c.h.b16 %v1104
  %v1222 = vunpack.c.l.b16 %v1105
  %v1223 = vunpack.c.h.b16 %v1105
  %v1224 = vunpack.c.l.b16 %v1106
  %v1225 = vunpack.c.h.b16 %v1106
  %v1226 = vunpack.c.l.b16 %v1107
  %v1227 = vunpack.c.h.b16 %v1107
  %v1228 = vunpack.c.l.b16 %v1108
  %v1229 = vunpack.c.h.b16 %v1108
  %v1230 = vunpack.c.l.b16 %v1109
  %v1231 = vunpack.c.h.b16 %v1109
  %v1232 = vunpack.c.l.b16 %v1110
  %v1233 = vunpack.c.h.b16 %v1110
  %v1234 = vunpack.c.l.b16 %v1111
  %v1235 = vunpack.c.h.b16 %v1111
  %v1236 = vunpack.c.l.b16 %v1112
  %v1237 = vunpack.c.h.b16 %v1112
  %v1238 = vunpack.c.l.b16 %v1113
  %v1239 = vunpack.c.h.b16 %v1113
  %v1240 = vunpack.c.l.b16 %v1114
  %v1241 = vunpack.c.h.b16 %v1114
  %v1242 = vunpack.c.l.b16 %v1115
  %v1243 = vunpack.c.h.b16 %v1115
  %v1244 = vunpack.c.l.b16 %v1116
  %v1245 = vunpack.c.h.b16 %v1116
  %v1246 = vunpack.c.l.b16 %v1117
  %v1247 = vunpack.c.h.b16 %v1117
  %v1248 = vunpack.c.l.b16 %v1118
  %v1249 = vunpack.c.h.b16 %v1118
  %v1250 = vunpack.c.l.b16 %v1119
  %v1251 = vunpack.c.h.b16 %v1119
  %v1252 = vunpack.c.l.b16 %v1120
  %v1253 = vunpack.c.h.b16 %v1120
  %v1254 = vunpack.c.l.b16 %v1121
  %v1255 = vunpack.c.h.b16 %v1121
  %v1256 = vunpack.c.l.b16 %v1122
  %v1257 = vunpack.c.h.b16 %v1122
  %v1258 = vunpack.c.l.b16 %v1123
  %v1259 = vunpack.c.h.b16 %v1123
  %v1260 = vunpack.c.l.b16 %v1124
  %v1261 = vunpack.c.h.b16 %v1124
  %v1262 = vunpack.c.l.b16 %v1125
  %v1263 = vunpack.c.h.b16 %v1125
  %v1264 = vunpack.c.l.b16 %v1126
  %v1265 = vunpack.c.h.b16 %v1126
  %v1266 = vunpack.c.l.b16 %v1127
  %v1267 = vunpack.c.h.b16 %v1127
  %v1268 = vunpack.c.l.b16 %v1128
  %v1269 = vunpack.c.h.b16 %v1128
  %v1270 = vunpack.c.l.b16 %v1129
  %v1271 = vunpack.c.h.b16 %v1129
  %v1272 = vunpack.c.l.b16 %v1130
  %v1273 = vunpack.c.h.b16 %v1130
  %v1274 = vunpack.c.l.b16 %v1131
  %v1275 = vunpack.c.h.b16 %v1131
  %v1276 = vunpack.c.l.b16 %v1132
  %v1277 = vunpack.c.h.b16 %v1132
  %v1278 = vunpack.c.l.b16 %v1133
  %v1279 = vunpack.c.h.b16 %v1133
  %v1280 = vunpack.c.l.b16 %v1134
  %v1281 = vunpack.c.h.b16 %v1134
  %v1282 = vunpack.c.l.b16 %v1135
  %v1283 = vunpack.c.h.b16 %v1135
  %v1284 = vunpack.c.l.b16 %v1136
  %v1285 = vunpack.c.h.b16 %v1136
  %v1286 = vunpack.c.l.b16 %v1137
  %v1287 = vunpack.c.h.b16 %v1137
  %v1288 = vpack.c.b16 %v1188, %v1188
  %v1289 = vpack.c.b16 %v1189, %v1189
  %v1290 = vpack.c.b16 %v1190, %v1190
  %v1291 = vpack.c.b16 %v1191, %v1191
  %v1292 = vpack.c.b16 %v1192, %v1192
  %v1293 = vpack.c.b16 %v1193, %v1193
  %v1294 = vpack.c.b16 %v1194, %v1194
  %v1295 = vpack.c.b16 %v1195, %v1195
  %v1296 = vpack.c.b16 %v1196, %v1196
  %v1297 = vpack.c.b16 %v1197, %v1197
  %v1298 = vpack.c.b16 %v1198, %v1198
  %v1299 = vpack.c.b16 %v1199, %v1199
  %v1300 = vpack.c.b16 %v1200, %v1200
  %v1301 = vpack.c.b16 %v1201, %v1201
  %v1302 = vpack.c.b16 %v1202, %v1202
  %v1303 = vpack.c.b16 %v1203, %v1203
  %v1304 = vpack.c.b16 %v1204, %v1204
  %v1305 = vpack.c.b16 %v1205, %v1205
  %v1306 = vpack.c.b16 %v1206, %v1206
  %v1307 = vpack.c.b16 %v1207, %v1207
  %v1308 = vpack.c.b16 %v1208, %v1208
  %v1309 = vpack.c.b16 %v1209, %v1209
  %v1310 = vpack.c.b16 %v1210, %v1210
  %v1311 = vpack.c.b16 %v1211, %v1211
  %v1312 = vpack.c.b16 %v1212, %v1212
  %v1313 = vpack.c.b16 %v1213, %v1213
  %v1314 = vpack.c.b16 %v1214, %v1214
  %v1315 = vpack.c.b16 %v1215, %v1215
  %v1316 = vpack.c.b16 %v1216, %v1216
  %v1317 = vpack.c.b16 %v1217, %v1217
  %v1318 = vpack.c.b16 %v1218, %v1218
  %v1319 = vpack.c.b16 %v1219, %v1219
  %v1320 = vpack.c.b16 %v1220, %v1220
  %v1321 = vpack.c.b16 %v1221, %v1221
  %v1322 = vpack.c.b16 %v1222, %v1222
  %v1323 = vpack.c.b16 %v1223, %v1223
  %v1324 = vpack.c.b16 %v1224, %v1224
  %v1325 = vpack.c.b16 %v1225, %v1225
  %v1326 = vpack.c.b16 %v1226, %v1226
  %v1327 = vpack.c.b16 %v1227, %v1227
  %v1328 = vpack.c.b16 %v1228, %v1228
  %v1329 = vpack.c.b16 %v1229, %v1229
  %v1330 = vpack.c.b16 %v1230, %v1230
  %v1331 = vpack.c.b16 %v1231, %v1231
  %v1332 = vpack.c.b16 %v1232, %v1232
  %v1333 = vpack.c.b16 %v1233, %v1233
  %v1334 = vpack.c.b16 %v1234, %v1234
  %v1335 = vpack.c.b16 %v1235, %v1235
  %v1336 = vpack.c.b16 %v1236, %v1236
  %v1337 = vpack.c.b16 %v1237, %v1237
  %v1338 = vpack.c.b16 %v1238, %v1238
  %v1339 = vpack.c.b16 %v1239, %v1239
  %v1340 = vpack.c.b16 %v1240, %v1240
  %v1341 = vpack.c.b16 %v1241, %v1241
  %v1342 = vpack.c.b16 %v1242, %v1242
  %v1343 = vpack.c.b16 %v1243, %v1243
  %v1344 = vpack.c.b16 %v1244, %v1244
  %v1345 = vpack.c.b16 %v1245, %v1245
  %v1346 = vpack.c.b16 %v1246, %v1246
  %v1347 = vpack.c.b16 %v1247, %v1247
  %v1348 = vpack.c.b16 %v1248, %v1248
  %v1349 = vpack.c.b16 %v1249, %v1249
  %v1350 = vpack.c.b16 %v1250, %v1250
  %v1351 = vpack.c.b16 %v1251, %v1251
  %v1352 = vpack.c.b16 %v1252, %v1252
  %v1353 = vpack.c.b16 %v1253, %v1253
  %v1354 = vpack.c.b16 %v1254, %v1254
  %v1355 = vpack.c.b16 %v1255, %v1255
  %v1356 = vpack.c.b16 %v1256, %v1256
  %v1357 = vpack.c.b16 %v1257, %v1257
  %v1358 = vpack.c.b16 %v1258, %v1258
  %v1359 = vpack.c.b16 %v1259, %v1259
  %v1360 = vpack.c.b16 %v1260, %v1260
  %v1361 = vpack.c.b16 %v1261, %v1261
  %v1362 = vpack.c.b16 %v1262, %v1262
  %v1363 = vpack.c.b16 %v1263, %v1263
  %v1364 = vpack.c.b16 %v1264, %v1264
  %v1365 = vpack.c.b16 %v1265, %v1265
  %v1366 = vpack.c.b16 %v1266, %v1266
  %v1367 = vpack.c.b16 %v1267, %v1267
  %v1368 = vpack.c.b16 %v1268, %v1268
  %v1369 = vpack.c.b16 %v1269, %v1269
  %v1370 = vpack.c.b16 %v1270, %v1270
  %v1371 = vpack.c.b16 %v1271, %v1271
  %v1372 = vpack.c.b16 %v1272, %v1272
  %v1373 = vpack.c.b16 %v1273, %v1273
  %v1374 = vpack.c.b16 %v1274, %v1274
  %v1375 = vpack.c.b16 %v1275, %v1275
  %v1376 = vpack.c.b16 %v1276, %v1276
  %v1377 = vpack.c.b16 %v1277, %v1277
  %v1378 = vpack.c.b16 %v1278, %v1278
  %v1379 = vpack.c.b16 %v1279, %v1279
  %v1380 = vpack.c.b16 %v1280, %v1280
  %v1381 = vpack.c.b16 %v1281, %v1281
  %v1382 = vpack.c.b16 %v1282, %v1282
  %v1383 = vpack.c.b16 %v1283, %v1283
  %v1384 = vpack.c.b16 %v1284, %v1284
  %v1385 = vpack.c.b16 %v1285, %v1285
  %v1386 = vpack.c.b16 %v1286, %v1286
  %v1387 = vpack.c.b16 %v1287, %v1287
  %vm1488 = vcmask 125952
  %1489 = vst.msk [vmem:[%s3] sm:$0xf] %vm1488, %v1288
  %1490 = vst.msk [vmem:[%s3 + $0x4] sm:$0xf] %vm1488, %v1289
  %1491 = vst.msk [vmem:[%s3 + $0x8] sm:$0xf] %vm1488, %v1290
  %1492 = vst.msk [vmem:[%s3 + $0xc] sm:$0xf] %vm1488, %v1291
  %1493 = vst.msk [vmem:[%s3 + $0x10] sm:$0xf] %vm1488, %v1292
  %1494 = vst.msk [vmem:[%s3 + $0x14] sm:$0xf] %vm1488, %v1293
  %1495 = vst.msk [vmem:[%s3 + $0x18] sm:$0xf] %vm1488, %v1294
  %1496 = vst.msk [vmem:[%s3 + $0x1c] sm:$0xf] %vm1488, %v1295
  %1497 = vst.msk [vmem:[%s3 + $0x20] sm:$0xf] %vm1488, %v1296
  %1498 = vst.msk [vmem:[%s3 + $0x24] sm:$0xf] %vm1488, %v1297
  %1499 = vst.msk [vmem:[%s3 + $0x28] sm:$0xf] %vm1488, %v1298
  %1500 = vst.msk [vmem:[%s3 + $0x2c] sm:$0xf] %vm1488, %v1299
  %1501 = vst.msk [vmem:[%s3 + $0x30] sm:$0xf] %vm1488, %v1300
  %1502 = vst.msk [vmem:[%s3 + $0x34] sm:$0xf] %vm1488, %v1301
  %1503 = vst.msk [vmem:[%s3 + $0x38] sm:$0xf] %vm1488, %v1302
  %1504 = vst.msk [vmem:[%s3 + $0x3c] sm:$0xf] %vm1488, %v1303
  %1505 = vst.msk [vmem:[%s3 + $0x40] sm:$0xf] %vm1488, %v1304
  %1506 = vst.msk [vmem:[%s3 + $0x44] sm:$0xf] %vm1488, %v1305
  %1507 = vst.msk [vmem:[%s3 + $0x48] sm:$0xf] %vm1488, %v1306
  %1508 = vst.msk [vmem:[%s3 + $0x4c] sm:$0xf] %vm1488, %v1307
  %1509 = vst.msk [vmem:[%s3 + $0x50] sm:$0xf] %vm1488, %v1308
  %1510 = vst.msk [vmem:[%s3 + $0x54] sm:$0xf] %vm1488, %v1309
  %1511 = vst.msk [vmem:[%s3 + $0x58] sm:$0xf] %vm1488, %v1310
  %1512 = vst.msk [vmem:[%s3 + $0x5c] sm:$0xf] %vm1488, %v1311
  %1513 = vst.msk [vmem:[%s3 + $0x60] sm:$0xf] %vm1488, %v1312
  %1514 = vst.msk [vmem:[%s3 + $0x64] sm:$0xf] %vm1488, %v1313
  %1515 = vst.msk [vmem:[%s3 + $0x68] sm:$0xf] %vm1488, %v1314
  %1516 = vst.msk [vmem:[%s3 + $0x6c] sm:$0xf] %vm1488, %v1315
  %1517 = vst.msk [vmem:[%s3 + $0x70] sm:$0xf] %vm1488, %v1316
  %1518 = vst.msk [vmem:[%s3 + $0x74] sm:$0xf] %vm1488, %v1317
  %1519 = vst.msk [vmem:[%s3 + $0x78] sm:$0xf] %vm1488, %v1318
  %1520 = vst.msk [vmem:[%s3 + $0x7c] sm:$0xf] %vm1488, %v1319
  %1521 = vst.msk [vmem:[%s3 + $0x80] sm:$0xf] %vm1488, %v1320
  %1522 = vst.msk [vmem:[%s3 + $0x84] sm:$0xf] %vm1488, %v1321
  %1523 = vst.msk [vmem:[%s3 + $0x88] sm:$0xf] %vm1488, %v1322
  %1524 = vst.msk [vmem:[%s3 + $0x8c] sm:$0xf] %vm1488, %v1323
  %1525 = vst.msk [vmem:[%s3 + $0x90] sm:$0xf] %vm1488, %v1324
  %1526 = vst.msk [vmem:[%s3 + $0x94] sm:$0xf] %vm1488, %v1325
  %1527 = vst.msk [vmem:[%s3 + $0x98] sm:$0xf] %vm1488, %v1326
  %1528 = vst.msk [vmem:[%s3 + $0x9c] sm:$0xf] %vm1488, %v1327
  %1529 = vst.msk [vmem:[%s3 + $0xa0] sm:$0xf] %vm1488, %v1328
  %1530 = vst.msk [vmem:[%s3 + $0xa4] sm:$0xf] %vm1488, %v1329
  %1531 = vst.msk [vmem:[%s3 + $0xa8] sm:$0xf] %vm1488, %v1330
  %1532 = vst.msk [vmem:[%s3 + $0xac] sm:$0xf] %vm1488, %v1331
  %1533 = vst.msk [vmem:[%s3 + $0xb0] sm:$0xf] %vm1488, %v1332
  %1534 = vst.msk [vmem:[%s3 + $0xb4] sm:$0xf] %vm1488, %v1333
  %1535 = vst.msk [vmem:[%s3 + $0xb8] sm:$0xf] %vm1488, %v1334
  %1536 = vst.msk [vmem:[%s3 + $0xbc] sm:$0xf] %vm1488, %v1335
  %1537 = vst.msk [vmem:[%s3 + $0xc0] sm:$0xf] %vm1488, %v1336
  %1538 = vst.msk [vmem:[%s3 + $0xc4] sm:$0xf] %vm1488, %v1337
  %1539 = vst.msk [vmem:[%s3 + $0xc8] sm:$0xf] %vm1488, %v1338
  %1540 = vst.msk [vmem:[%s3 + $0xcc] sm:$0xf] %vm1488, %v1339
  %1541 = vst.msk [vmem:[%s3 + $0xd0] sm:$0xf] %vm1488, %v1340
  %1542 = vst.msk [vmem:[%s3 + $0xd4] sm:$0xf] %vm1488, %v1341
  %1543 = vst.msk [vmem:[%s3 + $0xd8] sm:$0xf] %vm1488, %v1342
  %1544 = vst.msk [vmem:[%s3 + $0xdc] sm:$0xf] %vm1488, %v1343
  %1545 = vst.msk [vmem:[%s3 + $0xe0] sm:$0xf] %vm1488, %v1344
  %1546 = vst.msk [vmem:[%s3 + $0xe4] sm:$0xf] %vm1488, %v1345
  %1547 = vst.msk [vmem:[%s3 + $0xe8] sm:$0xf] %vm1488, %v1346
  %1548 = vst.msk [vmem:[%s3 + $0xec] sm:$0xf] %vm1488, %v1347
  %1549 = vst.msk [vmem:[%s3 + $0xf0] sm:$0xf] %vm1488, %v1348
  %1550 = vst.msk [vmem:[%s3 + $0xf4] sm:$0xf] %vm1488, %v1349
  %1551 = vst.msk [vmem:[%s3 + $0xf8] sm:$0xf] %vm1488, %v1350
  %1552 = vst.msk [vmem:[%s3 + $0xfc] sm:$0xf] %vm1488, %v1351
  %1553 = vst.msk [vmem:[%s3 + $0x100] sm:$0xf] %vm1488, %v1352
  %1554 = vst.msk [vmem:[%s3 + $0x104] sm:$0xf] %vm1488, %v1353
  %1555 = vst.msk [vmem:[%s3 + $0x108] sm:$0xf] %vm1488, %v1354
  %1556 = vst.msk [vmem:[%s3 + $0x10c] sm:$0xf] %vm1488, %v1355
  %1557 = vst.msk [vmem:[%s3 + $0x110] sm:$0xf] %vm1488, %v1356
  %1558 = vst.msk [vmem:[%s3 + $0x114] sm:$0xf] %vm1488, %v1357
  %1559 = vst.msk [vmem:[%s3 + $0x118] sm:$0xf] %vm1488, %v1358
  %1560 = vst.msk [vmem:[%s3 + $0x11c] sm:$0xf] %vm1488, %v1359
  %1561 = vst.msk [vmem:[%s3 + $0x120] sm:$0xf] %vm1488, %v1360
  %1562 = vst.msk [vmem:[%s3 + $0x124] sm:$0xf] %vm1488, %v1361
  %1563 = vst.msk [vmem:[%s3 + $0x128] sm:$0xf] %vm1488, %v1362
  %1564 = vst.msk [vmem:[%s3 + $0x12c] sm:$0xf] %vm1488, %v1363
  %1565 = vst.msk [vmem:[%s3 + $0x130] sm:$0xf] %vm1488, %v1364
  %1566 = vst.msk [vmem:[%s3 + $0x134] sm:$0xf] %vm1488, %v1365
  %1567 = vst.msk [vmem:[%s3 + $0x138] sm:$0xf] %vm1488, %v1366
  %1568 = vst.msk [vmem:[%s3 + $0x13c] sm:$0xf] %vm1488, %v1367
  %1569 = vst.msk [vmem:[%s3 + $0x140] sm:$0xf] %vm1488, %v1368
  %1570 = vst.msk [vmem:[%s3 + $0x144] sm:$0xf] %vm1488, %v1369
  %1571 = vst.msk [vmem:[%s3 + $0x148] sm:$0xf] %vm1488, %v1370
  %1572 = vst.msk [vmem:[%s3 + $0x14c] sm:$0xf] %vm1488, %v1371
  %1573 = vst.msk [vmem:[%s3 + $0x150] sm:$0xf] %vm1488, %v1372
  %1574 = vst.msk [vmem:[%s3 + $0x154] sm:$0xf] %vm1488, %v1373
  %1575 = vst.msk [vmem:[%s3 + $0x158] sm:$0xf] %vm1488, %v1374
  %1576 = vst.msk [vmem:[%s3 + $0x15c] sm:$0xf] %vm1488, %v1375
  %1577 = vst.msk [vmem:[%s3 + $0x160] sm:$0xf] %vm1488, %v1376
  %1578 = vst.msk [vmem:[%s3 + $0x164] sm:$0xf] %vm1488, %v1377
  %1579 = vst.msk [vmem:[%s3 + $0x168] sm:$0xf] %vm1488, %v1378
  %1580 = vst.msk [vmem:[%s3 + $0x16c] sm:$0xf] %vm1488, %v1379
  %1581 = vst.msk [vmem:[%s3 + $0x170] sm:$0xf] %vm1488, %v1380
  %1582 = vst.msk [vmem:[%s3 + $0x174] sm:$0xf] %vm1488, %v1381
  %1583 = vst.msk [vmem:[%s3 + $0x178] sm:$0xf] %vm1488, %v1382
  %1584 = vst.msk [vmem:[%s3 + $0x17c] sm:$0xf] %vm1488, %v1383
  %1585 = vst.msk [vmem:[%s3 + $0x180] sm:$0xf] %vm1488, %v1384
  %1586 = vst.msk [vmem:[%s3 + $0x184] sm:$0xf] %vm1488, %v1385
  %1587 = vst.msk [vmem:[%s3 + $0x188] sm:$0xf] %vm1488, %v1386
  %1588 = vst.msk [vmem:[%s3 + $0x18c] sm:$0xf] %vm1488, %v1387
  // Predicated region
  $region14: #{actor_critic_forward.2} parent=0 // pred_check
    _
  $region15: #{actor_critic_forward.2} parent=0 // pred_check_branch
    %1590 = sbr.rel (0) target = $region17
  $region16: #{actor_critic_forward.2} parent=0 // pred_region
    _
  $region17: #{actor_critic_forward.2} parent=0 // pred_fallthru
    _
  // Predicated region
  $region18: #{actor_critic_forward.2} parent=0 // pred_check
    _
  $region19: #{actor_critic_forward.2} parent=0 // pred_check_branch
    %1592 = sbr.rel (0) target = $region21
  $region20: #{actor_critic_forward.2} parent=0 // pred_region
    _
  $region21: #{actor_critic_forward.2} parent=0 // pred_fallthru
    _

// kernel: actor_critic_forward.3
$region0: #{actor_critic_forward.3}
  #allocation0 [shape = 'u32[]', space=smem, size = 0x4, offset = 0x4, fixed_abs, tag = 'smem constant byte address 0x4 - core index']
  #allocation1 [shape = 'u32[144,128]{1,0:T(1,128)}', space=vmem, size = 0x12000, scoped, tag = 'internal scratch']
  #allocation2 [shape = 'f32[16,256]{1,0:T(8,128)}', space=vmem, size = 0x4000, scoped, tag = 'scratch operand']
  %s0 = inlined_call_operand.vmem [shape: bf16[81,16,256], index: 0, kind: input, shape index: {}]
  %s1 = inlined_call_operand.vmem [shape: bf16[256,32], index: 1, kind: input, shape index: {}]
  %s2 = inlined_call_operand.vmem [shape: f32[1,32], index: 2, kind: input, shape index: {}]
  %s3 = inlined_call_operand.vmem [shape: bf16[81,32,256], index: 3, kind: input, shape index: {}]
  %s4 = inlined_call_operand.vmem [shape: f32[1,256], index: 4, kind: input, shape index: {}]
  %s5 = inlined_call_operand.vmem [shape: f32[16,128], index: 5, kind: input, shape index: {}, may-alias: {5,6}]
  %s6 = inlined_call_operand.vmem [shape: f32[16,128], index: 6, kind: input, shape index: {}, may-alias: {5,6}]
  %s7 = inlined_call_operand.vmem [shape: bf16[256,512], index: 7, kind: input, shape index: {}]
  %s8 = inlined_call_operand.vmem [shape: bf16[128,512], index: 8, kind: input, shape index: {}]
  %s9 = inlined_call_operand.vmem [shape: f32[1,512], index: 9, kind: input, shape index: {}]
  %s10 = inlined_call_operand.vmem [shape: f32[128,128], index: 10, kind: input, shape index: {}]
  %s11 = inlined_call_operand.vmem [shape: f32[1,128], index: 11, kind: input, shape index: {}]
  %s12 = inlined_call_operand.vmem [shape: f32[16,384], index: 12, kind: output, shape index: {}]
  %s13 = sld [smem:[#allocation0]]
  $region89: #{actor_critic_forward.3} parent=0
    _
  %s15 = ssub.s32 1, %s13
  %s16 = scalar_select 0, %s15, %s13
  loop: start=0, step=1, limit=5
  $region2: #{actor_critic_forward.3} parent=0 // loop_pre_header
    _
  $region3: #{actor_critic_forward.3} parent=0 // loop_header
    %s18 = sphi 0, %s22
    %p19 = scmp.ge.s32.totalorder %s18, 5
    %s25 = sphi 0, %s37
    %s26 = sphi 0, %s33
    %s27 = sphi 0, %s25
    %s28 = sphi 0, %s26
    %s29 = sphi 0, %s27
    %s30 = sphi 0, %s28
    %s42 = sphi 0, %s44
    %s45 = sphi 0, %s42
    %s46 = sphi 0, %s45
    %s62 = sphi 0, %s46
    %s66 = sphi 0, %s66
    %s68 = sphi 0, %s66
    %s69 = sphi 0, %s68
    %s83 = sphi 0, %s69
    %s87 = sphi 0, %s87
    %s89 = sphi 0, %s87
    %s90 = sphi 0, %s89
    %s104 = sphi 0, %s90
    %s110 = sphi 0, %s112
    %s113 = sphi 0, %s110
    %s114 = sphi 0, %s113
    %s130 = sphi 0, %s114
    %s134 = sphi 0, %s134
    %s136 = sphi 0, %s134
    %s137 = sphi 0, %s136
    %s151 = sphi 0, %s137
    %s157 = sphi 0, %s159
    %s160 = sphi 0, %s157
    %s161 = sphi 0, %s160
    %s177 = sphi 0, %s161
    %s183 = sphi 0, %s185
    %s186 = sphi 0, %s183
    %s187 = sphi 0, %s186
    %s203 = sphi 0, %s187
    %s207 = sphi 0, %s207
    %s209 = sphi 0, %s207
    %s210 = sphi 0, %s209
    %s224 = sphi 0, %s210
    %s228 = sphi 0, %s228
    %s230 = sphi 0, %s228
    %s231 = sphi 0, %s230
    %s245 = sphi 0, %s231
    %s249 = sphi 0, %s249
    %s251 = sphi 0, %s249
    %s252 = sphi 0, %s251
    %s266 = sphi 0, %s252
    %s270 = sphi 0, %s270
    %s272 = sphi 0, %s270
    %s273 = sphi 0, %s272
    %s287 = sphi 0, %s273
    %s291 = sphi 0, %s291
    %s293 = sphi 0, %s291
    %s294 = sphi 0, %s293
    %s308 = sphi 0, %s294
    %s314 = sphi 0, %s316
    %s317 = sphi 0, %s314
    %s318 = sphi 0, %s317
    %s334 = sphi 0, %s318
  $region4: #{actor_critic_forward.3} parent=0 // loop_header_branch
    %21 = sbr.rel (%p19) target = $region8
  $region5: #{actor_critic_forward.3} parent=0 // loop_body
    %s23 = ssub.s32 %s18, 1
    %s24 = ssub.s32 %s18, 2
    %s31 = sadd.s32 1, %s26
    %p32 = scmp.ge.s32.totalorder %s31, 3
    %s33 = scalar_select %p32, 0, %s31
    %s34 = sadd.s32 1, %s25
    %s35 = scalar_select %p32, %s34, %s25
    %p36 = scmp.ge.s32.totalorder %s35, 1
    %s37 = scalar_select %p36, 0, %s35
    %s38 = ssub.s32 %s26, %s33
    %s39 = ssub.s32 %s25, %s37
    %s40 = sor.u32 %s38, %s39
    %p41 = scmp.eq.s32.totalorder %s40, 0
    %s43 = sadd.s32 %s42, 1
    %s44 = scalar_select %p41, %s42, %s43
    %p47 = pneg %p41
    %p48 = scmp.eq.s32.totalorder %s18, 2
    %p49 = por %p47, %p48
    %p50 = scmp.ne.s32.totalorder %s42, %s45
    %p51 = scmp.eq.s32.totalorder %s18, 0
    %p52 = por %p50, %p51
    %p53 = scmp.ne.s32.totalorder %s42, %s45
    %p54 = scmp.eq.s32.totalorder %s23, 2
    %p55 = por %p53, %p54
    %p56 = scmp.ne.s32.totalorder %s45, %s46
    %p57 = scmp.eq.s32.totalorder %s23, 0
    %p58 = por %p56, %p57
    %p59 = scmp.ne.s32.totalorder %s45, %s46
    %p60 = scmp.eq.s32.totalorder %s24, 2
    %p61 = por %p59, %p60
    %p63 = scmp.ne.s32.totalorder %s46, %s62
    %p64 = scmp.eq.s32.totalorder %s24, 0
    %p65 = por %p63, %p64
    %s67 = sadd.s32 %s66, 1
    %p70 = scmp.eq.s32.totalorder %s18, 2
    %p71 = scmp.ne.s32.totalorder %s66, %s68
    %p72 = scmp.eq.s32.totalorder %s18, 0
    %p73 = por %p71, %p72
    %p74 = scmp.ne.s32.totalorder %s66, %s68
    %p75 = scmp.eq.s32.totalorder %s23, 2
    %p76 = por %p74, %p75
    %p77 = scmp.ne.s32.totalorder %s68, %s69
    %p78 = scmp.eq.s32.totalorder %s23, 0
    %p79 = por %p77, %p78
    %p80 = scmp.ne.s32.totalorder %s68, %s69
    %p81 = scmp.eq.s32.totalorder %s24, 2
    %p82 = por %p80, %p81
    %p84 = scmp.ne.s32.totalorder %s69, %s83
    %p85 = scmp.eq.s32.totalorder %s24, 0
    %p86 = por %p84, %p85
    %s88 = sadd.s32 %s87, 1
    %p91 = scmp.eq.s32.totalorder %s18, 2
    %p92 = scmp.ne.s32.totalorder %s87, %s89
    %p93 = scmp.eq.s32.totalorder %s18, 0
    %p94 = por %p92, %p93
    %p95 = scmp.ne.s32.totalorder %s87, %s89
    %p96 = scmp.eq.s32.totalorder %s23, 2
    %p97 = por %p95, %p96
    %p98 = scmp.ne.s32.totalorder %s89, %s90
    %p99 = scmp.eq.s32.totalorder %s23, 0
    %p100 = por %p98, %p99
    %p101 = scmp.ne.s32.totalorder %s89, %s90
    %p102 = scmp.eq.s32.totalorder %s24, 2
    %p103 = por %p101, %p102
    %p105 = scmp.ne.s32.totalorder %s90, %s104
    %p106 = scmp.eq.s32.totalorder %s24, 0
    %p107 = por %p105, %p106
    %s108 = ssub.s32 %s26, %s33
    %p109 = scmp.eq.s32.totalorder %s108, 0
    %s111 = sadd.s32 %s110, 1
    %s112 = scalar_select %p109, %s110, %s111
    %p115 = pneg %p109
    %p116 = scmp.eq.s32.totalorder %s18, 2
    %p117 = por %p115, %p116
    %p118 = scmp.ne.s32.totalorder %s110, %s113
    %p119 = scmp.eq.s32.totalorder %s18, 0
    %p120 = por %p118, %p119
    %p121 = scmp.ne.s32.totalorder %s110, %s113
    %p122 = scmp.eq.s32.totalorder %s23, 2
    %p123 = por %p121, %p122
    %p124 = scmp.ne.s32.totalorder %s113, %s114
    %p125 = scmp.eq.s32.totalorder %s23, 0
    %p126 = por %p124, %p125
    %p127 = scmp.ne.s32.totalorder %s113, %s114
    %p128 = scmp.eq.s32.totalorder %s24, 2
    %p129 = por %p127, %p128
    %p131 = scmp.ne.s32.totalorder %s114, %s130
    %p132 = scmp.eq.s32.totalorder %s24, 0
    %p133 = por %p131, %p132
    %s135 = sadd.s32 %s134, 1
    %p138 = scmp.eq.s32.totalorder %s18, 2
    %p139 = scmp.ne.s32.totalorder %s134, %s136
    %p140 = scmp.eq.s32.totalorder %s18, 0
    %p141 = por %p139, %p140
    %p142 = scmp.ne.s32.totalorder %s134, %s136
    %p143 = scmp.eq.s32.totalorder %s23, 2
    %p144 = por %p142, %p143
    %p145 = scmp.ne.s32.totalorder %s136, %s137
    %p146 = scmp.eq.s32.totalorder %s23, 0
    %p147 = por %p145, %p146
    %p148 = scmp.ne.s32.totalorder %s136, %s137
    %p149 = scmp.eq.s32.totalorder %s24, 2
    %p150 = por %p148, %p149
    %p152 = scmp.ne.s32.totalorder %s137, %s151
    %p153 = scmp.eq.s32.totalorder %s24, 0
    %p154 = por %p152, %p153
    %s155 = ssub.s32 %s25, %s37
    %p156 = scmp.eq.s32.totalorder %s155, 0
    %s158 = sadd.s32 %s157, 1
    %s159 = scalar_select %p156, %s157, %s158
    %p162 = pneg %p156
    %p163 = scmp.eq.s32.totalorder %s18, 2
    %p164 = por %p162, %p163
    %p165 = scmp.ne.s32.totalorder %s157, %s160
    %p166 = scmp.eq.s32.totalorder %s18, 0
    %p167 = por %p165, %p166
    %p168 = scmp.ne.s32.totalorder %s157, %s160
    %p169 = scmp.eq.s32.totalorder %s23, 2
    %p170 = por %p168, %p169
    %p171 = scmp.ne.s32.totalorder %s160, %s161
    %p172 = scmp.eq.s32.totalorder %s23, 0
    %p173 = por %p171, %p172
    %p174 = scmp.ne.s32.totalorder %s160, %s161
    %p175 = scmp.eq.s32.totalorder %s24, 2
    %p176 = por %p174, %p175
    %p178 = scmp.ne.s32.totalorder %s161, %s177
    %p179 = scmp.eq.s32.totalorder %s24, 0
    %p180 = por %p178, %p179
    %s181 = ssub.s32 %s25, %s37
    %p182 = scmp.eq.s32.totalorder %s181, 0
    %s184 = sadd.s32 %s183, 1
    %s185 = scalar_select %p182, %s183, %s184
    %p188 = pneg %p182
    %p189 = scmp.eq.s32.totalorder %s18, 2
    %p190 = por %p188, %p189
    %p191 = scmp.ne.s32.totalorder %s183, %s186
    %p192 = scmp.eq.s32.totalorder %s18, 0
    %p193 = por %p191, %p192
    %p194 = scmp.ne.s32.totalorder %s183, %s186
    %p195 = scmp.eq.s32.totalorder %s23, 2
    %p196 = por %p194, %p195
    %p197 = scmp.ne.s32.totalorder %s186, %s187
    %p198 = scmp.eq.s32.totalorder %s23, 0
    %p199 = por %p197, %p198
    %p200 = scmp.ne.s32.totalorder %s186, %s187
    %p201 = scmp.eq.s32.totalorder %s24, 2
    %p202 = por %p200, %p201
    %p204 = scmp.ne.s32.totalorder %s187, %s203
    %p205 = scmp.eq.s32.totalorder %s24, 0
    %p206 = por %p204, %p205
    %s208 = sadd.s32 %s207, 1
    %p211 = scmp.eq.s32.totalorder %s18, 2
    %p212 = scmp.ne.s32.totalorder %s207, %s209
    %p213 = scmp.eq.s32.totalorder %s18, 0
    %p214 = por %p212, %p213
    %p215 = scmp.ne.s32.totalorder %s207, %s209
    %p216 = scmp.eq.s32.totalorder %s23, 2
    %p217 = por %p215, %p216
    %p218 = scmp.ne.s32.totalorder %s209, %s210
    %p219 = scmp.eq.s32.totalorder %s23, 0
    %p220 = por %p218, %p219
    %p221 = scmp.ne.s32.totalorder %s209, %s210
    %p222 = scmp.eq.s32.totalorder %s24, 2
    %p223 = por %p221, %p222
    %p225 = scmp.ne.s32.totalorder %s210, %s224
    %p226 = scmp.eq.s32.totalorder %s24, 0
    %p227 = por %p225, %p226
    %s229 = sadd.s32 %s228, 1
    %p232 = scmp.eq.s32.totalorder %s18, 2
    %p233 = scmp.ne.s32.totalorder %s228, %s230
    %p234 = scmp.eq.s32.totalorder %s18, 0
    %p235 = por %p233, %p234
    %p236 = scmp.ne.s32.totalorder %s228, %s230
    %p237 = scmp.eq.s32.totalorder %s23, 2
    %p238 = por %p236, %p237
    %p239 = scmp.ne.s32.totalorder %s230, %s231
    %p240 = scmp.eq.s32.totalorder %s23, 0
    %p241 = por %p239, %p240
    %p242 = scmp.ne.s32.totalorder %s230, %s231
    %p243 = scmp.eq.s32.totalorder %s24, 2
    %p244 = por %p242, %p243
    %p246 = scmp.ne.s32.totalorder %s231, %s245
    %p247 = scmp.eq.s32.totalorder %s24, 0
    %p248 = por %p246, %p247
    %s250 = sadd.s32 %s249, 1
    %p253 = scmp.eq.s32.totalorder %s18, 2
    %p254 = scmp.ne.s32.totalorder %s249, %s251
    %p255 = scmp.eq.s32.totalorder %s18, 0
    %p256 = por %p254, %p255
    %p257 = scmp.ne.s32.totalorder %s249, %s251
    %p258 = scmp.eq.s32.totalorder %s23, 2
    %p259 = por %p257, %p258
    %p260 = scmp.ne.s32.totalorder %s251, %s252
    %p261 = scmp.eq.s32.totalorder %s23, 0
    %p262 = por %p260, %p261
    %p263 = scmp.ne.s32.totalorder %s251, %s252
    %p264 = scmp.eq.s32.totalorder %s24, 2
    %p265 = por %p263, %p264
    %p267 = scmp.ne.s32.totalorder %s252, %s266
    %p268 = scmp.eq.s32.totalorder %s24, 0
    %p269 = por %p267, %p268
    %s271 = sadd.s32 %s270, 1
    %p274 = scmp.eq.s32.totalorder %s18, 2
    %p275 = scmp.ne.s32.totalorder %s270, %s272
    %p276 = scmp.eq.s32.totalorder %s18, 0
    %p277 = por %p275, %p276
    %p278 = scmp.ne.s32.totalorder %s270, %s272
    %p279 = scmp.eq.s32.totalorder %s23, 2
    %p280 = por %p278, %p279
    %p281 = scmp.ne.s32.totalorder %s272, %s273
    %p282 = scmp.eq.s32.totalorder %s23, 0
    %p283 = por %p281, %p282
    %p284 = scmp.ne.s32.totalorder %s272, %s273
    %p285 = scmp.eq.s32.totalorder %s24, 2
    %p286 = por %p284, %p285
    %p288 = scmp.ne.s32.totalorder %s273, %s287
    %p289 = scmp.eq.s32.totalorder %s24, 0
    %p290 = por %p288, %p289
    %s292 = sadd.s32 %s291, 1
    %p295 = scmp.eq.s32.totalorder %s18, 2
    %p296 = scmp.ne.s32.totalorder %s291, %s293
    %p297 = scmp.eq.s32.totalorder %s18, 0
    %p298 = por %p296, %p297
    %p299 = scmp.ne.s32.totalorder %s291, %s293
    %p300 = scmp.eq.s32.totalorder %s23, 2
    %p301 = por %p299, %p300
    %p302 = scmp.ne.s32.totalorder %s293, %s294
    %p303 = scmp.eq.s32.totalorder %s23, 0
    %p304 = por %p302, %p303
    %p305 = scmp.ne.s32.totalorder %s293, %s294
    %p306 = scmp.eq.s32.totalorder %s24, 2
    %p307 = por %p305, %p306
    %p309 = scmp.ne.s32.totalorder %s294, %s308
    %p310 = scmp.eq.s32.totalorder %s24, 0
    %p311 = por %p309, %p310
    %s312 = ssub.s32 %s25, %s37
    %p313 = scmp.eq.s32.totalorder %s312, 0
    %s315 = sadd.s32 %s314, 1
    %s316 = scalar_select %p313, %s314, %s315
    %p319 = pneg %p313
    %p320 = scmp.eq.s32.totalorder %s18, 2
    %p321 = por %p319, %p320
    %p322 = scmp.ne.s32.totalorder %s314, %s317
    %p323 = scmp.eq.s32.totalorder %s18, 0
    %p324 = por %p322, %p323
    %p325 = scmp.ne.s32.totalorder %s314, %s317
    %p326 = scmp.eq.s32.totalorder %s23, 2
    %p327 = por %p325, %p326
    %p328 = scmp.ne.s32.totalorder %s317, %s318
    %p329 = scmp.eq.s32.totalorder %s23, 0
    %p330 = por %p328, %p329
    %p331 = scmp.ne.s32.totalorder %s317, %s318
    %p332 = scmp.eq.s32.totalorder %s24, 2
    %p333 = por %p331, %p332
    %p335 = scmp.ne.s32.totalorder %s318, %s334
    %p336 = scmp.eq.s32.totalorder %s24, 0
    %p337 = por %p335, %p336
    %p338 = scmp.le.s32.totalorder 1, %s18
    %p339 = scmp.lt.s32.totalorder %s18, 4
    %p340 = pnand %p338, %p339
    %p341 = pneg %p340
    // Predicated region
    $region9: #{actor_critic_forward.3} parent=5 // pred_check
      _
    $region10: #{actor_critic_forward.3} parent=5 // pred_check_branch
      %343 = sbr.rel (%p340) target = $region12
    $region11: #{actor_critic_forward.3} parent=5 // pred_region
      %s344 = ssub.s32 %s18, 1
      // Predicated region
      $region13: #{actor_critic_forward.3} parent=11 // pred_check
        %p345 = pneg %p79
      $region14: #{actor_critic_forward.3} parent=11 // pred_check_branch
        %347 = sbr.rel (%p345) target = $region16
      $region15: #{actor_critic_forward.3} parent=11 // pred_region
        _
      $region16: #{actor_critic_forward.3} parent=11 // pred_fallthru
        _
      // Predicated region
      $region17: #{actor_critic_forward.3} parent=11 // pred_check
        %p348 = pneg %p100
      $region18: #{actor_critic_forward.3} parent=11 // pred_check_branch
        %350 = sbr.rel (%p348) target = $region20
      $region19: #{actor_critic_forward.3} parent=11 // pred_region
        _
      $region20: #{actor_critic_forward.3} parent=11 // pred_fallthru
        _
      // Predicated region
      $region21: #{actor_critic_forward.3} parent=11 // pred_check
        %p351 = pneg %p147
      $region22: #{actor_critic_forward.3} parent=11 // pred_check_branch
        %353 = sbr.rel (%p351) target = $region24
      $region23: #{actor_critic_forward.3} parent=11 // pred_region
        _
      $region24: #{actor_critic_forward.3} parent=11 // pred_fallthru
        _
      // Predicated region
      $region25: #{actor_critic_forward.3} parent=11 // pred_check
        %p354 = pneg %p173
      $region26: #{actor_critic_forward.3} parent=11 // pred_check_branch
        %356 = sbr.rel (%p354) target = $region28
      $region27: #{actor_critic_forward.3} parent=11 // pred_region
        %s357 = smul.u32 2, %s27
        %p358 = scmp.lt.s32.totalorder %s357, 1
        %s359 = scalar_select %p358, %s357, 1
        %s360 = smul.addr %s359, 8
        %s361 = scalar_lea.vmem %s5, %s360
        %s362 = smul.u32 2, %s27
      $region28: #{actor_critic_forward.3} parent=11 // pred_fallthru
        _
      // Predicated region
      $region29: #{actor_critic_forward.3} parent=11 // pred_check
        %p363 = pneg %p199
      $region30: #{actor_critic_forward.3} parent=11 // pred_check_branch
        %365 = sbr.rel (%p363) target = $region32
      $region31: #{actor_critic_forward.3} parent=11 // pred_region
        %s366 = smul.u32 2, %s27
        %p367 = scmp.lt.s32.totalorder %s366, 1
        %s368 = scalar_select %p367, %s366, 1
        %s369 = smul.addr %s368, 8
        %s370 = scalar_lea.vmem %s6, %s369
        %s371 = smul.u32 2, %s27
      $region32: #{actor_critic_forward.3} parent=11 // pred_fallthru
        _
      // Predicated region
      $region33: #{actor_critic_forward.3} parent=11 // pred_check
        %p372 = pneg %p220
      $region34: #{actor_critic_forward.3} parent=11 // pred_check_branch
        %374 = sbr.rel (%p372) target = $region36
      $region35: #{actor_critic_forward.3} parent=11 // pred_region
        _
      $region36: #{actor_critic_forward.3} parent=11 // pred_fallthru
        _
      // Predicated region
      $region37: #{actor_critic_forward.3} parent=11 // pred_check
        %p375 = pneg %p241
      $region38: #{actor_critic_forward.3} parent=11 // pred_check_branch
        %377 = sbr.rel (%p375) target = $region40
      $region39: #{actor_critic_forward.3} parent=11 // pred_region
        _
      $region40: #{actor_critic_forward.3} parent=11 // pred_fallthru
        _
      // Predicated region
      $region41: #{actor_critic_forward.3} parent=11 // pred_check
        %p378 = pneg %p262
      $region42: #{actor_critic_forward.3} parent=11 // pred_check_branch
        %380 = sbr.rel (%p378) target = $region44
      $region43: #{actor_critic_forward.3} parent=11 // pred_region
        _
      $region44: #{actor_critic_forward.3} parent=11 // pred_fallthru
        _
      // Predicated region
      $region45: #{actor_critic_forward.3} parent=11 // pred_check
        %p381 = pneg %p283
      $region46: #{actor_critic_forward.3} parent=11 // pred_check_branch
        %383 = sbr.rel (%p381) target = $region48
      $region47: #{actor_critic_forward.3} parent=11 // pred_region
        _
      $region48: #{actor_critic_forward.3} parent=11 // pred_fallthru
        _
      // Predicated region
      $region49: #{actor_critic_forward.3} parent=11 // pred_check
        %p384 = pneg %p304
      $region50: #{actor_critic_forward.3} parent=11 // pred_check_branch
        %386 = sbr.rel (%p384) target = $region52
      $region51: #{actor_critic_forward.3} parent=11 // pred_region
        _
      $region52: #{actor_critic_forward.3} parent=11 // pred_fallthru
        _
    $region12: #{actor_critic_forward.3} parent=5 // pred_fallthru
      _
    %p387 = scmp.lt.s32.totalorder %s18, 3
    // Predicated region
    $region53: #{actor_critic_forward.3} parent=5 // pred_check
      %p388 = pneg %p387
    $region54: #{actor_critic_forward.3} parent=5 // pred_check_branch
      %390 = sbr.rel (%p388) target = $region56
    $region55: #{actor_critic_forward.3} parent=5 // pred_region
      // Predicated region
      $region57: #{actor_critic_forward.3} parent=55 // pred_check
        %p391 = pneg %p52
      $region58: #{actor_critic_forward.3} parent=55 // pred_check_branch
        %393 = sbr.rel (%p391) target = $region60
      $region59: #{actor_critic_forward.3} parent=55 // pred_region
        %s394 = smul.u32 27, %s26
        %s395 = smul.u32 2, %s25
        %p396 = scmp.lt.s32.totalorder %s394, 80
        %s397 = scalar_select %p396, %s394, 80
        %p398 = scmp.lt.s32.totalorder %s395, 1
        %s399 = scalar_select %p398, %s395, 1
        %s400 = smul.addr %s399, 2
        %s401 = smul.addr %s397, 4
        %s402 = sadd.s32 %s400, %s401
        %s403 = smul.addr %s402, 4
        %s404 = scalar_lea.vmem %s0, %s403
        %s405 = smul.u32 27, %s26
        %s406 = smul.u32 2, %s25
      $region60: #{actor_critic_forward.3} parent=55 // pred_fallthru
        _
      // Predicated region
      $region61: #{actor_critic_forward.3} parent=55 // pred_check
        %p407 = pneg %p120
      $region62: #{actor_critic_forward.3} parent=55 // pred_check_branch
        %409 = sbr.rel (%p407) target = $region64
      $region63: #{actor_critic_forward.3} parent=55 // pred_region
        %s410 = smul.u32 27, %s26
        %p411 = scmp.lt.s32.totalorder %s410, 80
        %s412 = scalar_select %p411, %s410, 80
        %s413 = smul.addr %s412, 8
        %s414 = smul.addr %s413, 4
        %s415 = scalar_lea.vmem %s3, %s414
        %s416 = smul.u32 27, %s26
      $region64: #{actor_critic_forward.3} parent=55 // pred_fallthru
        _
    $region56: #{actor_critic_forward.3} parent=5 // pred_fallthru
      _
    %p417 = scmp.le.s32.totalorder 1, %s18
    %p418 = scmp.lt.s32.totalorder %s18, 4
    %p419 = pnand %p417, %p418
    %p420 = pneg %p419
    // Predicated region
    $region65: #{actor_critic_forward.3} parent=5 // pred_check
      _
    $region66: #{actor_critic_forward.3} parent=5 // pred_check_branch
      %422 = sbr.rel (%p419) target = $region68
    $region67: #{actor_critic_forward.3} parent=5 // pred_region
      %s423 = ssub.s32 %s18, 1
      %s424 = smul.u32 27, %s28
      %s425 = smul.u32 2, %s27
      %p426 = scmp.lt.s32.totalorder %s424, 80
      %s427 = scalar_select %p426, %s424, 80
      %p428 = scmp.lt.s32.totalorder %s425, 1
      %s429 = scalar_select %p428, %s425, 1
      %s430 = smul.addr %s429, 2
      %s431 = smul.addr %s427, 4
      %s432 = sadd.s32 %s430, %s431
      %s433 = smul.addr %s432, 4
      %s434 = scalar_lea.vmem %s0, %s433
      %p435 = pneg %p58
      %p436 = pneg %p55
      %p437 = pneg %p79
      %p438 = pneg %p76
      %p439 = pneg %p100
      %p440 = pneg %p97
      %s441 = smul.u32 27, %s28
      %p442 = scmp.lt.s32.totalorder %s441, 80
      %s443 = scalar_select %p442, %s441, 80
      %s444 = smul.addr %s443, 8
      %s445 = smul.addr %s444, 4
      %s446 = scalar_lea.vmem %s3, %s445
      %p447 = pneg %p126
      %p448 = pneg %p123
      %p449 = pneg %p147
      %p450 = pneg %p144
      %s451 = smul.u32 2, %s27
      %p452 = scmp.lt.s32.totalorder %s451, 1
      %s453 = scalar_select %p452, %s451, 1
      %s454 = smul.addr %s453, 8
      %s455 = scalar_lea.vmem %s5, %s454
      %p456 = pneg %p173
      %p457 = pneg %p170
      %s458 = smul.u32 2, %s27
      %p459 = scmp.lt.s32.totalorder %s458, 1
      %s460 = scalar_select %p459, %s458, 1
      %s461 = smul.addr %s460, 8
      %s462 = scalar_lea.vmem %s6, %s461
      %p463 = pneg %p199
      %p464 = pneg %p196
      %p465 = pneg %p220
      %p466 = pneg %p217
      %p467 = pneg %p241
      %p468 = pneg %p238
      %p469 = pneg %p262
      %p470 = pneg %p259
      %p471 = pneg %p283
      %p472 = pneg %p280
      %p473 = pneg %p304
      %p474 = pneg %p301
      %p475 = pneg %p330
      %p476 = pneg %p327
      %s477 = smul.u32 2, %s27
      %p478 = scmp.lt.s32.totalorder %s477, 1
      %s479 = scalar_select %p478, %s477, 1
      %s480 = smul.addr %s479, 3
      %s481 = smul.addr %s480, 8
      %s482 = scalar_lea.vmem %s12, %s481
      %s483 = smul.u32 27, %s28
      %s484 = smul.u32 2, %s27
      %p485 = scmp.lt.s32.totalorder %s483, 80
      %s486 = scalar_select %p485, %s483, 80
      %p487 = scmp.lt.s32.totalorder %s484, 1
      %s488 = scalar_select %p487, %s484, 1
      %s489 = smul.addr %s488, 2
      %s490 = smul.addr %s486, 4
      %s491 = sadd.s32 %s489, %s490
      %s492 = smul.addr %s491, 4
      %s493 = scalar_lea.vmem %s0, %s492
      %s494 = smul.u32 27, %s28
      %s495 = smul.u32 2, %s27
      %s496 = smul.u32 27, %s28
      %p497 = scmp.lt.s32.totalorder %s496, 80
      %s498 = scalar_select %p497, %s496, 80
      %s499 = smul.addr %s498, 8
      %s500 = smul.addr %s499, 4
      %s501 = scalar_lea.vmem %s3, %s500
      %s502 = smul.u32 27, %s28
      %s503 = smul.u32 2, %s27
      %p504 = scmp.lt.s32.totalorder %s503, 1
      %s505 = scalar_select %p504, %s503, 1
      %s506 = smul.addr %s505, 8
      %s507 = scalar_lea.vmem %s5, %s506
      %s508 = smul.u32 2, %s27
      %s509 = smul.u32 2, %s27
      %p510 = scmp.lt.s32.totalorder %s509, 1
      %s511 = scalar_select %p510, %s509, 1
      %s512 = smul.addr %s511, 8
      %s513 = scalar_lea.vmem %s6, %s512
      %s514 = smul.u32 2, %s27
      %s515 = smul.u32 2, %s27
      %p516 = scmp.lt.s32.totalorder %s515, 1
      %s517 = scalar_select %p516, %s515, 1
      %s518 = smul.addr %s517, 3
      %s519 = smul.addr %s518, 8
      %s520 = scalar_lea.vmem %s12, %s519
      %s521 = smul.u32 2, %s27
      %p523 = scmp.eq.s32.totalorder %s28, 0
      // Predicated region
      $region69: #{actor_critic_forward.3} parent=67 // pred_check
        %p524 = pneg %p523
      $region70: #{actor_critic_forward.3} parent=67 // pred_check_branch
        %526 = sbr.rel (%p524) target = $region72
      $region71: #{actor_critic_forward.3} parent=67 // pred_region
        %527 = vst [vmem:[#allocation2] sm:$0xff] 0.0
        %528 = vst [vmem:[#allocation2 + $0x8] sm:$0xff] 0.0
        %529 = vst [vmem:[#allocation2 + $0x10] sm:$0xff] 0.0
        %530 = vst [vmem:[#allocation2 + $0x18] sm:$0xff] 0.0
      $region72: #{actor_critic_forward.3} parent=67 // pred_fallthru
        _
      %v531 = vld [vmem:[%s1] sm:$0xf]
      %v532 = vld [vmem:[%s1 + $0x4] sm:$0xf]
      %v533 = vld [vmem:[%s1 + $0x8] sm:$0xf]
      %v534 = vld [vmem:[%s1 + $0xc] sm:$0xf]
      %v535 = vld [vmem:[%s1 + $0x10] sm:$0xf]
      %v536 = vld [vmem:[%s1 + $0x14] sm:$0xf]
      %v537 = vld [vmem:[%s1 + $0x18] sm:$0xf]
      %v538 = vld [vmem:[%s1 + $0x1c] sm:$0xf]
      %v539 = vld [vmem:[%s1 + $0x20] sm:$0xf]
      %v540 = vld [vmem:[%s1 + $0x24] sm:$0xf]
      %v541 = vld [vmem:[%s1 + $0x28] sm:$0xf]
      %v542 = vld [vmem:[%s1 + $0x2c] sm:$0xf]
      %v543 = vld [vmem:[%s1 + $0x30] sm:$0xf]
      %v544 = vld [vmem:[%s1 + $0x34] sm:$0xf]
      %v545 = vld [vmem:[%s1 + $0x38] sm:$0xf]
      %v546 = vld [vmem:[%s1 + $0x3c] sm:$0xf]
      %v547 = vld [vmem:[%s1 + $0x40] sm:$0xf]
      %v548 = vld [vmem:[%s1 + $0x44] sm:$0xf]
      %v549 = vld [vmem:[%s1 + $0x48] sm:$0xf]
      %v550 = vld [vmem:[%s1 + $0x4c] sm:$0xf]
      %v551 = vld [vmem:[%s1 + $0x50] sm:$0xf]
      %v552 = vld [vmem:[%s1 + $0x54] sm:$0xf]
      %v553 = vld [vmem:[%s1 + $0x58] sm:$0xf]
      %v554 = vld [vmem:[%s1 + $0x5c] sm:$0xf]
      %v555 = vld [vmem:[%s1 + $0x60] sm:$0xf]
      %v556 = vld [vmem:[%s1 + $0x64] sm:$0xf]
      %v557 = vld [vmem:[%s1 + $0x68] sm:$0xf]
      %v558 = vld [vmem:[%s1 + $0x6c] sm:$0xf]
      %v559 = vld [vmem:[%s1 + $0x70] sm:$0xf]
      %v560 = vld [vmem:[%s1 + $0x74] sm:$0xf]
      %v561 = vld [vmem:[%s1 + $0x78] sm:$0xf]
      %v562 = vld [vmem:[%s1 + $0x7c] sm:$0xf]
      %v563 = vld [vmem:[%s2] sm:$0x1]
      %v564 = vld [vmem:[#allocation2] sm:$0xff]
      %v565 = vld [vmem:[#allocation2 + $0x8] sm:$0xff]
      %v566 = vld [vmem:[#allocation2 + $0x10] sm:$0xff]
      %v567 = vld [vmem:[#allocation2 + $0x18] sm:$0xff]
      %v568 = vld [vmem:[%s493] sm:$0xff]
      %v569 = vld [vmem:[%s493 + $0x8] sm:$0xff]
      %v571 = vlaneseq
      %v572 = vshrl.u32 %v571, 7
      %v573 = vsub.s32 0, %v572
      %v574 = vrot.slane %v563, %v573
      %v578 = vunpack.c.l.b16 %v568
      %v579 = vunpack.c.h.b16 %v568
      %v580 = vunpack.c.l.b16 %v569
      %v581 = vunpack.c.h.b16 %v569
      %v582 = vpack.c.b16 %v580, %v578
      %v583 = vpack.c.b16 %v581, %v579
      %v618 = vunpack.c.l.b16 %v531
      %v619 = vunpack.c.l.b16 %v532
      %v620 = vunpack.c.l.b16 %v533
      %v621 = vunpack.c.l.b16 %v534
      %v622 = vunpack.c.l.b16 %v535
      %v623 = vunpack.c.l.b16 %v536
      %v624 = vunpack.c.l.b16 %v537
      %v625 = vunpack.c.l.b16 %v538
      %v626 = vunpack.c.l.b16 %v539
      %v627 = vunpack.c.l.b16 %v540
      %v628 = vunpack.c.l.b16 %v541
      %v629 = vunpack.c.l.b16 %v542
      %v630 = vunpack.c.l.b16 %v543
      %v631 = vunpack.c.l.b16 %v544
      %v632 = vunpack.c.l.b16 %v545
      %v633 = vunpack.c.l.b16 %v546
      %v634 = vunpack.c.l.b16 %v547
      %v635 = vunpack.c.l.b16 %v548
      %v636 = vunpack.c.l.b16 %v549
      %v637 = vunpack.c.l.b16 %v550
      %v638 = vunpack.c.l.b16 %v551
      %v639 = vunpack.c.l.b16 %v552
      %v640 = vunpack.c.l.b16 %v553
      %v641 = vunpack.c.l.b16 %v554
      %v642 = vunpack.c.l.b16 %v555
      %v643 = vunpack.c.l.b16 %v556
      %v644 = vunpack.c.l.b16 %v557
      %v645 = vunpack.c.l.b16 %v558
      %v646 = vunpack.c.l.b16 %v559
      %v647 = vunpack.c.l.b16 %v560
      %v648 = vunpack.c.l.b16 %v561
      %v649 = vunpack.c.l.b16 %v562
      %v650 = vpack.c.b16 %v619, %v618
      %v651 = vpack.c.b16 %v621, %v620
      %v652 = vpack.c.b16 %v623, %v622
      %v653 = vpack.c.b16 %v625, %v624
      %v654 = vpack.c.b16 %v627, %v626
      %v655 = vpack.c.b16 %v629, %v628
      %v656 = vpack.c.b16 %v631, %v630
      %v657 = vpack.c.b16 %v633, %v632
      %v658 = vpack.c.b16 %v635, %v634
      %v659 = vpack.c.b16 %v637, %v636
      %v660 = vpack.c.b16 %v639, %v638
      %v661 = vpack.c.b16 %v641, %v640
      %v662 = vpack.c.b16 %v643, %v642
      %v663 = vpack.c.b16 %v645, %v644
      %v664 = vpack.c.b16 %v647, %v646
      %v665 = vpack.c.b16 %v649, %v648
      %682 = vmatprep.subr.bf16.mxu0 0
      %683 = vmatpush1.bf16.msra.mxu0 %v650
      %684 = vmatprep.subr.bf16.mxu0 0
      %685 = vmatpush1.bf16.msra.mxu0 %v651
      %686 = vmatprep.subr.bf16.mxu0 0
      %687 = vmatpush1.bf16.msra.mxu0 %v652
      %688 = vmatprep.subr.bf16.mxu0 0
      %689 = vmatpush1.bf16.msra.mxu0 %v653
      %690 = vmatprep.subr.bf16.mxu0 0
      %691 = vmatpush1.bf16.msra.mxu0 %v654
      %692 = vmatprep.subr.bf16.mxu0 0
      %693 = vmatpush1.bf16.msra.mxu0 %v655
      %694 = vmatprep.subr.bf16.mxu0 0
      %695 = vmatpush1.bf16.msra.mxu0 %v656
      %696 = vmatprep.subr.bf16.mxu0 0
      %697 = vmatpush1.bf16.msra.mxu0 %v657
      %698 = vmatprep.subr.bf16.mxu0 0
      %699 = vmatpush1.bf16.msra.mxu0 %v658
      %700 = vmatprep.subr.bf16.mxu0 0
      %701 = vmatpush1.bf16.msra.mxu0 %v659
      %702 = vmatprep.subr.bf16.mxu0 0
      %703 = vmatpush1.bf16.msra.mxu0 %v660
      %704 = vmatprep.subr.bf16.mxu0 0
      %705 = vmatpush1.bf16.msra.mxu0 %v661
      %706 = vmatprep.subr.bf16.mxu0 0
      %707 = vmatpush1.bf16.msra.mxu0 %v662
      %708 = vmatprep.subr.bf16.mxu0 0
      %709 = vmatpush1.bf16.msra.mxu0 %v663
      %710 = vmatprep.subr.bf16.mxu0 0
      %711 = vmatpush1.bf16.msra.mxu0 %v664
      %712 = vmatprep.subr.bf16.mxu0 0
      %713 = vmatpush1.bf16.msra.mxu0 %v665
      %714 = vmatprep.mubr.bf16.mxu0 %v583
      %715 = vmatmul.mubr.bf16.gmra.mrb[0].mxu0 %v582
      %v716 = vpop.f32.mrb[0].mxu0
      %v717 = vadd.f32 %v574, %v716
      %v718 = vpop.f32.mrb[0].mxu0
      %v719 = vpop.f32.mrb[0].mxu0
      %v720 = vadd.f32 %v574, %v719
      %v721 = vpop.f32.mrb[0].mxu0
      %722 = vdwg.mxu0
      %v723 = vmax.f32 %v717, 0.0
      %v724 = vmax.f32 %v720, 0.0
      %v725 = vpack.c.bf16 %v724, %v723
      %v726 = vld [vmem:[%s501] sm:$0xff]
      %v727 = vld [vmem:[%s501 + $0x8] sm:$0xff]
      %v728 = vld [vmem:[%s501 + $0x10] sm:$0xff]
      %v729 = vld [vmem:[%s501 + $0x18] sm:$0xff]
      %v734 = vunpack.c.l.b16 %v726
      %v735 = vunpack.c.h.b16 %v726
      %v736 = vunpack.c.l.b16 %v727
      %v737 = vunpack.c.h.b16 %v727
      %v738 = vunpack.c.l.b16 %v728
      %v739 = vunpack.c.h.b16 %v728
      %v740 = vunpack.c.l.b16 %v729
      %v741 = vunpack.c.h.b16 %v729
      %v742 = vpack.c.b16 %v736, %v734
      %v743 = vpack.c.b16 %v737, %v735
      %v744 = vpack.c.b16 %v740, %v738
      %v745 = vpack.c.b16 %v741, %v739
      %vm750 = vcmask 261120
      %v752 = vsel %vm750, %v725, 0
      %754 = vmatprep.subr.bf16.mxu0 %v743
      %755 = vmatpush1.bf16.msra.mxu0 %v742
      %756 = vmatprep.subr.bf16.mxu0 %v745
      %757 = vmatpush1.bf16.msra.mxu0 %v744
      %758 = vmatprep.subr.bf16.mxu0 0
      %759 = vmatpush1.bf16.msra.mxu0 0
      %760 = vmatprep.subr.bf16.mxu0 0
      %761 = vmatpush1.bf16.msra.mxu0 0
      %762 = vmatprep.subr.bf16.mxu0 0
      %763 = vmatpush1.bf16.msra.mxu0 0
      %764 = vmatprep.subr.bf16.mxu0 0
      %765 = vmatpush1.bf16.msra.mxu0 0
      %766 = vmatprep.subr.bf16.mxu0 0
      %767 = vmatpush1.bf16.msra.mxu0 0
      %768 = vmatprep.subr.bf16.mxu0 0
      %769 = vmatpush1.bf16.msra.mxu0 0
      %770 = vmatprep.subr.bf16.mxu0 0
      %771 = vmatpush1.bf16.msra.mxu0 0
      %772 = vmatprep.subr.bf16.mxu0 0
      %773 = vmatpush1.bf16.msra.mxu0 0
      %774 = vmatprep.subr.bf16.mxu0 0
      %775 = vmatpush1.bf16.msra.mxu0 0
      %776 = vmatprep.subr.bf16.mxu0 0
      %777 = vmatpush1.bf16.msra.mxu0 0
      %778 = vmatprep.subr.bf16.mxu0 0
      %779 = vmatpush1.bf16.msra.mxu0 0
      %780 = vmatprep.subr.bf16.mxu0 0
      %781 = vmatpush1.bf16.msra.mxu0 0
      %782 = vmatprep.subr.bf16.mxu0 0
      %783 = vmatpush1.bf16.msra.mxu0 0
      %784 = vmatprep.subr.bf16.mxu0 0
      %785 = vmatpush1.bf16.msra.mxu0 0
      %786 = vmatprep.mubr.bf16.mxu0 0
      %787 = vmatmul.mubr.bf16.gmra.mrb[0].mxu0 %v752
      %v788 = vpop.f32.mrb[0].mxu0
      %v789 = vadd.f32 0.0, %v788
      %v790 = vpop.f32.mrb[0].mxu0
      %v791 = vadd.f32 0.0, %v790
      %v792 = vpop.f32.mrb[0].mxu0
      %v793 = vadd.f32 0.0, %v792
      %v794 = vpop.f32.mrb[0].mxu0
      %v795 = vadd.f32 0.0, %v794
      %796 = vdwg.mxu0
      %v797 = vadd.f32 %v564, %v789
      %v798 = vadd.f32 %v565, %v791
      %v799 = vadd.f32 %v566, %v793
      %v800 = vadd.f32 %v567, %v795
      %s801 = scalar_lea.vmem %s493, 16
      %v802 = vld [vmem:[%s801] sm:$0xff]
      %v803 = vld [vmem:[%s801 + $0x8] sm:$0xff]
      %v806 = vunpack.c.l.b16 %v802
      %v807 = vunpack.c.h.b16 %v802
      %v808 = vunpack.c.l.b16 %v803
      %v809 = vunpack.c.h.b16 %v803
      %v810 = vpack.c.b16 %v808, %v806
      %v811 = vpack.c.b16 %v809, %v807
      %814 = vmatprep.subr.bf16.mxu0 0
      %815 = vmatpush1.bf16.msra.mxu0 %v650
      %816 = vmatprep.subr.bf16.mxu0 0
      %817 = vmatpush1.bf16.msra.mxu0 %v651
      %818 = vmatprep.subr.bf16.mxu0 0
      %819 = vmatpush1.bf16.msra.mxu0 %v652
      %820 = vmatprep.subr.bf16.mxu0 0
      %821 = vmatpush1.bf16.msra.mxu0 %v653
      %822 = vmatprep.subr.bf16.mxu0 0
      %823 = vmatpush1.bf16.msra.mxu0 %v654
      %824 = vmatprep.subr.bf16.mxu0 0
      %825 = vmatpush1.bf16.msra.mxu0 %v655
      %826 = vmatprep.subr.bf16.mxu0 0
      %827 = vmatpush1.bf16.msra.mxu0 %v656
      %828 = vmatprep.subr.bf16.mxu0 0
      %829 = vmatpush1.bf16.msra.mxu0 %v657
      %830 = vmatprep.subr.bf16.mxu0 0
      %831 = vmatpush1.bf16.msra.mxu0 %v658
      %832 = vmatprep.subr.bf16.mxu0 0
      %833 = vmatpush1.bf16.msra.mxu0 %v659
      %834 = vmatprep.subr.bf16.mxu0 0
      %835 = vmatpush1.bf16.msra.mxu0 %v660
      %836 = vmatprep.subr.bf16.mxu0 0
      %837 = vmatpush1.bf16.msra.mxu0 %v661
      %838 = vmatprep.subr.bf16.mxu0 0
      %839 = vmatpush1.bf16.msra.mxu0 %v662
      %840 = vmatprep.subr.bf16.mxu0 0
      %841 = vmatpush1.bf16.msra.mxu0 %v663
      %842 = vmatprep.subr.bf16.mxu0 0
      %843 = vmatpush1.bf16.msra.mxu0 %v664
      %844 = vmatprep.subr.bf16.mxu0 0
      %845 = vmatpush1.bf16.msra.mxu0 %v665
      %846 = vmatprep.mubr.bf16.mxu0 %v811
      %847 = vmatmul.mubr.bf16.gmra.mrb[0].mxu0 %v810
      %v848 = vpop.f32.mrb[0].mxu0
      %v849 = vadd.f32 %v574, %v848
      %v850 = vpop.f32.mrb[0].mxu0
      %v851 = vpop.f32.mrb[0].mxu0
      %v852 = vadd.f32 %v574, %v851
      %v853 = vpop.f32.mrb[0].mxu0
      %854 = vdwg.mxu0
      %v855 = vmax.f32 %v849, 0.0
      %v856 = vmax.f32 %v852, 0.0
      %v857 = vpack.c.bf16 %v856, %v855
      %s858 = scalar_lea.vmem %s501, 32
      %v859 = vld [vmem:[%s858] sm:$0xff]
      %v860 = vld [vmem:[%s858 + $0x8] sm:$0xff]
      %v861 = vld [vmem:[%s858 + $0x10] sm:$0xff]
      %v862 = vld [vmem:[%s858 + $0x18] sm:$0xff]
      %v867 = vunpack.c.l.b16 %v859
      %v868 = vunpack.c.h.b16 %v859
      %v869 = vunpack.c.l.b16 %v860
      %v870 = vunpack.c.h.b16 %v860
      %v871 = vunpack.c.l.b16 %v861
      %v872 = vunpack.c.h.b16 %v861
      %v873 = vunpack.c.l.b16 %v862
      %v874 = vunpack.c.h.b16 %v862
      %v875 = vpack.c.b16 %v869, %v867
      %v876 = vpack.c.b16 %v870, %v868
      %v877 = vpack.c.b16 %v873, %v871
      %v878 = vpack.c.b16 %v874, %v872
      %v884 = vsel %vm750, %v857, 0
      %886 = vmatprep.subr.bf16.mxu0 %v876
      %887 = vmatpush1.bf16.msra.mxu0 %v875
      %888 = vmatprep.subr.bf16.mxu0 %v878
      %889 = vmatpush1.bf16.msra.mxu0 %v877
      %890 = vmatprep.subr.bf16.mxu0 0
      %891 = vmatpush1.bf16.msra.mxu0 0
      %892 = vmatprep.subr.bf16.mxu0 0
      %893 = vmatpush1.bf16.msra.mxu0 0
      %894 = vmatprep.subr.bf16.mxu0 0
      %895 = vmatpush1.bf16.msra.mxu0 0
      %896 = vmatprep.subr.bf16.mxu0 0
      %897 = vmatpush1.bf16.msra.mxu0 0
      %898 = vmatprep.subr.bf16.mxu0 0
      %899 = vmatpush1.bf16.msra.mxu0 0
      %900 = vmatprep.subr.bf16.mxu0 0
      %901 = vmatpush1.bf16.msra.mxu0 0
      %902 = vmatprep.subr.bf16.mxu0 0
      %903 = vmatpush1.bf16.msra.mxu0 0
      %904 = vmatprep.subr.bf16.mxu0 0
      %905 = vmatpush1.bf16.msra.mxu0 0
      %906 = vmatprep.subr.bf16.mxu0 0
      %907 = vmatpush1.bf16.msra.mxu0 0
      %908 = vmatprep.subr.bf16.mxu0 0
      %909 = vmatpush1.bf16.msra.mxu0 0
      %910 = vmatprep.subr.bf16.mxu0 0
      %911 = vmatpush1.bf16.msra.mxu0 0
      %912 = vmatprep.subr.bf16.mxu0 0
      %913 = vmatpush1.bf16.msra.mxu0 0
      %914 = vmatprep.subr.bf16.mxu0 0
      %915 = vmatpush1.bf16.msra.mxu0 0
      %916 = vmatprep.subr.bf16.mxu0 0
      %917 = vmatpush1.bf16.msra.mxu0 0
      %918 = vmatprep.mubr.bf16.mxu0 0
      %919 = vmatmul.mubr.bf16.gmra.mrb[0].mxu0 %v884
      %v920 = vpop.f32.mrb[0].mxu0
      %v921 = vadd.f32 0.0, %v920
      %v922 = vpop.f32.mrb[0].mxu0
      %v923 = vadd.f32 0.0, %v922
      %v924 = vpop.f32.mrb[0].mxu0
      %v925 = vadd.f32 0.0, %v924
      %v926 = vpop.f32.mrb[0].mxu0
      %v927 = vadd.f32 0.0, %v926
      %928 = vdwg.mxu0
      %v929 = vadd.f32 %v797, %v921
      %v930 = vadd.f32 %v798, %v923
      %v931 = vadd.f32 %v799, %v925
      %v932 = vadd.f32 %v800, %v927
      %s933 = scalar_lea.vmem %s493, 32
      %v934 = vld [vmem:[%s933] sm:$0xff]
      %v935 = vld [vmem:[%s933 + $0x8] sm:$0xff]
      %v938 = vunpack.c.l.b16 %v934
      %v939 = vunpack.c.h.b16 %v934
      %v940 = vunpack.c.l.b16 %v935
      %v941 = vunpack.c.h.b16 %v935
      %v942 = vpack.c.b16 %v940, %v938
      %v943 = vpack.c.b16 %v941, %v939
      %946 = vmatprep.subr.bf16.mxu0 0
      %947 = vmatpush1.bf16.msra.mxu0 %v650
      %948 = vmatprep.subr.bf16.mxu0 0
      %949 = vmatpush1.bf16.msra.mxu0 %v651
      %950 = vmatprep.subr.bf16.mxu0 0
      %951 = vmatpush1.bf16.msra.mxu0 %v652
      %952 = vmatprep.subr.bf16.mxu0 0
      %953 = vmatpush1.bf16.msra.mxu0 %v653
      %954 = vmatprep.subr.bf16.mxu0 0
      %955 = vmatpush1.bf16.msra.mxu0 %v654
      %956 = vmatprep.subr.bf16.mxu0 0
      %957 = vmatpush1.bf16.msra.mxu0 %v655
      %958 = vmatprep.subr.bf16.mxu0 0
      %959 = vmatpush1.bf16.msra.mxu0 %v656
      %960 = vmatprep.subr.bf16.mxu0 0
      %961 = vmatpush1.bf16.msra.mxu0 %v657
      %962 = vmatprep.subr.bf16.mxu0 0
      %963 = vmatpush1.bf16.msra.mxu0 %v658
      %964 = vmatprep.subr.bf16.mxu0 0
      %965 = vmatpush1.bf16.msra.mxu0 %v659
      %966 = vmatprep.subr.bf16.mxu0 0
      %967 = vmatpush1.bf16.msra.mxu0 %v660
      %968 = vmatprep.subr.bf16.mxu0 0
      %969 = vmatpush1.bf16.msra.mxu0 %v661
      %970 = vmatprep.subr.bf16.mxu0 0
      %971 = vmatpush1.bf16.msra.mxu0 %v662
      %972 = vmatprep.subr.bf16.mxu0 0
      %973 = vmatpush1.bf16.msra.mxu0 %v663
      %974 = vmatprep.subr.bf16.mxu0 0
      %975 = vmatpush1.bf16.msra.mxu0 %v664
      %976 = vmatprep.subr.bf16.mxu0 0
      %977 = vmatpush1.bf16.msra.mxu0 %v665
      %978 = vmatprep.mubr.bf16.mxu0 %v943
      %979 = vmatmul.mubr.bf16.gmra.mrb[0].mxu0 %v942
      %v980 = vpop.f32.mrb[0].mxu0
      %v981 = vadd.f32 %v574, %v980
      %v982 = vpop.f32.mrb[0].mxu0
      %v983 = vpop.f32.mrb[0].mxu0
      %v984 = vadd.f32 %v574, %v983
      %v985 = vpop.f32.mrb[0].mxu0
      %986 = vdwg.mxu0
      %v987 = vmax.f32 %v981, 0.0
      %v988 = vmax.f32 %v984, 0.0
      %v989 = vpack.c.bf16 %v988, %v987
      %s990 = scalar_lea.vmem %s501, 64
      %v991 = vld [vmem:[%s990] sm:$0xff]
      %v992 = vld [vmem:[%s990 + $0x8] sm:$0xff]
      %v993 = vld [vmem:[%s990 + $0x10] sm:$0xff]
      %v994 = vld [vmem:[%s990 + $0x18] sm:$0xff]
      %v999 = vunpack.c.l.b16 %v991
      %v1000 = vunpack.c.h.b16 %v991
      %v1001 = vunpack.c.l.b16 %v992
      %v1002 = vunpack.c.h.b16 %v992
      %v1003 = vunpack.c.l.b16 %v993
      %v1004 = vunpack.c.h.b16 %v993
      %v1005 = vunpack.c.l.b16 %v994
      %v1006 = vunpack.c.h.b16 %v994
      %v1007 = vpack.c.b16 %v1001, %v999
      %v1008 = vpack.c.b16 %v1002, %v1000
      %v1009 = vpack.c.b16 %v1005, %v1003
      %v1010 = vpack.c.b16 %v1006, %v1004
      %v1016 = vsel %vm750, %v989, 0
      %1018 = vmatprep.subr.bf16.mxu0 %v1008
      %1019 = vmatpush1.bf16.msra.mxu0 %v1007
      %1020 = vmatprep.subr.bf16.mxu0 %v1010
      %1021 = vmatpush1.bf16.msra.mxu0 %v1009
      %1022 = vmatprep.subr.bf16.mxu0 0
      %1023 = vmatpush1.bf16.msra.mxu0 0
      %1024 = vmatprep.subr.bf16.mxu0 0
      %1025 = vmatpush1.bf16.msra.mxu0 0
      %1026 = vmatprep.subr.bf16.mxu0 0
      %1027 = vmatpush1.bf16.msra.mxu0 0
      %1028 = vmatprep.subr.bf16.mxu0 0
      %1029 = vmatpush1.bf16.msra.mxu0 0
      %1030 = vmatprep.subr.bf16.mxu0 0
      %1031 = vmatpush1.bf16.msra.mxu0 0
      %1032 = vmatprep.subr.bf16.mxu0 0
      %1033 = vmatpush1.bf16.msra.mxu0 0
      %1034 = vmatprep.subr.bf16.mxu0 0
      %1035 = vmatpush1.bf16.msra.mxu0 0
      %1036 = vmatprep.subr.bf16.mxu0 0
      %1037 = vmatpush1.bf16.msra.mxu0 0
      %1038 = vmatprep.subr.bf16.mxu0 0
      %1039 = vmatpush1.bf16.msra.mxu0 0
      %1040 = vmatprep.subr.bf16.mxu0 0
      %1041 = vmatpush1.bf16.msra.mxu0 0
      %1042 = vmatprep.subr.bf16.mxu0 0
      %1043 = vmatpush1.bf16.msra.mxu0 0
      %1044 = vmatprep.subr.bf16.mxu0 0
      %1045 = vmatpush1.bf16.msra.mxu0 0
      %1046 = vmatprep.subr.bf16.mxu0 0
      %1047 = vmatpush1.bf16.msra.mxu0 0
      %1048 = vmatprep.subr.bf16.mxu0 0
      %1049 = vmatpush1.bf16.msra.mxu0 0
      %1050 = vmatprep.mubr.bf16.mxu0 0
      %1051 = vmatmul.mubr.bf16.gmra.mrb[0].mxu0 %v1016
      %v1052 = vpop.f32.mrb[0].mxu0
      %v1053 = vadd.f32 0.0, %v1052
      %v1054 = vpop.f32.mrb[0].mxu0
      %v1055 = vadd.f32 0.0, %v1054
      %v1056 = vpop.f32.mrb[0].mxu0
      %v1057 = vadd.f32 0.0, %v1056
      %v1058 = vpop.f32.mrb[0].mxu0
      %v1059 = vadd.f32 0.0, %v1058
      %1060 = vdwg.mxu0
      %v1061 = vadd.f32 %v929, %v1053
      %v1062 = vadd.f32 %v930, %v1055
      %v1063 = vadd.f32 %v931, %v1057
      %v1064 = vadd.f32 %v932, %v1059
      %s1065 = scalar_lea.vmem %s493, 48
      %v1066 = vld [vmem:[%s1065] sm:$0xff]
      %v1067 = vld [vmem:[%s1065 + $0x8] sm:$0xff]
      %v1070 = vunpack.c.l.b16 %v1066
      %v1071 = vunpack.c.h.b16 %v1066
      %v1072 = vunpack.c.l.b16 %v1067
      %v1073 = vunpack.c.h.b16 %v1067
      %v1074 = vpack.c.b16 %v1072, %v1070
      %v1075 = vpack.c.b16 %v1073, %v1071
      %1078 = vmatprep.subr.bf16.mxu0 0
      %1079 = vmatpush1.bf16.msra.mxu0 %v650
      %1080 = vmatprep.subr.bf16.mxu0 0
      %1081 = vmatpush1.bf16.msra.mxu0 %v651
      %1082 = vmatprep.subr.bf16.mxu0 0
      %1083 = vmatpush1.bf16.msra.mxu0 %v652
      %1084 = vmatprep.subr.bf16.mxu0 0
      %1085 = vmatpush1.bf16.msra.mxu0 %v653
      %1086 = vmatprep.subr.bf16.mxu0 0
      %1087 = vmatpush1.bf16.msra.mxu0 %v654
      %1088 = vmatprep.subr.bf16.mxu0 0
      %1089 = vmatpush1.bf16.msra.mxu0 %v655
      %1090 = vmatprep.subr.bf16.mxu0 0
      %1091 = vmatpush1.bf16.msra.mxu0 %v656
      %1092 = vmatprep.subr.bf16.mxu0 0
      %1093 = vmatpush1.bf16.msra.mxu0 %v657
      %1094 = vmatprep.subr.bf16.mxu0 0
      %1095 = vmatpush1.bf16.msra.mxu0 %v658
      %1096 = vmatprep.subr.bf16.mxu0 0
      %1097 = vmatpush1.bf16.msra.mxu0 %v659
      %1098 = vmatprep.subr.bf16.mxu0 0
      %1099 = vmatpush1.bf16.msra.mxu0 %v660
      %1100 = vmatprep.subr.bf16.mxu0 0
      %1101 = vmatpush1.bf16.msra.mxu0 %v661
      %1102 = vmatprep.subr.bf16.mxu0 0
      %1103 = vmatpush1.bf16.msra.mxu0 %v662
      %1104 = vmatprep.subr.bf16.mxu0 0
      %1105 = vmatpush1.bf16.msra.mxu0 %v663
      %1106 = vmatprep.subr.bf16.mxu0 0
      %1107 = vmatpush1.bf16.msra.mxu0 %v664
      %1108 = vmatprep.subr.bf16.mxu0 0
      %1109 = vmatpush1.bf16.msra.mxu0 %v665
      %1110 = vmatprep.mubr.bf16.mxu0 %v1075
      %1111 = vmatmul.mubr.bf16.gmra.mrb[0].mxu0 %v1074
      %v1112 = vpop.f32.mrb[0].mxu0
      %v1113 = vadd.f32 %v574, %v1112
      %v1114 = vpop.f32.mrb[0].mxu0
      %v1115 = vpop.f32.mrb[0].mxu0
      %v1116 = vadd.f32 %v574, %v1115
      %v1117 = vpop.f32.mrb[0].mxu0
      %1118 = vdwg.mxu0
      %v1119 = vmax.f32 %v1113, 0.0
      %v1120 = vmax.f32 %v1116, 0.0
      %v1121 = vpack.c.bf16 %v1120, %v1119
      %s1122 = scalar_lea.vmem %s501, 96
      %v1123 = vld [vmem:[%s1122] sm:$0xff]
      %v1124 = vld [vmem:[%s1122 + $0x8] sm:$0xff]
      %v1125 = vld [vmem:[%s1122 + $0x10] sm:$0xff]
      %v1126 = vld [vmem:[%s1122 + $0x18] sm:$0xff]
      %v1131 = vunpack.c.l.b16 %v1123
      %v1132 = vunpack.c.h.b16 %v1123
      %v1133 = vunpack.c.l.b16 %v1124
      %v1134 = vunpack.c.h.b16 %v1124
      %v1135 = vunpack.c.l.b16 %v1125
      %v1136 = vunpack.c.h.b16 %v1125
      %v1137 = vunpack.c.l.b16 %v1126
      %v1138 = vunpack.c.h.b16 %v1126
      %v1139 = vpack.c.b16 %v1133, %v1131
      %v1140 = vpack.c.b16 %v1134, %v1132
      %v1141 = vpack.c.b16 %v1137, %v1135
      %v1142 = vpack.c.b16 %v1138, %v1136
      %v1148 = vsel %vm750, %v1121, 0
      %1150 = vmatprep.subr.bf16.mxu0 %v1140
      %1151 = vmatpush1.bf16.msra.mxu0 %v1139
      %1152 = vmatprep.subr.bf16.mxu0 %v1142
      %1153 = vmatpush1.bf16.msra.mxu0 %v1141
      %1154 = vmatprep.subr.bf16.mxu0 0
      %1155 = vmatpush1.bf16.msra.mxu0 0
      %1156 = vmatprep.subr.bf16.mxu0 0
      %1157 = vmatpush1.bf16.msra.mxu0 0
      %1158 = vmatprep.subr.bf16.mxu0 0
      %1159 = vmatpush1.bf16.msra.mxu0 0
      %1160 = vmatprep.subr.bf16.mxu0 0
      %1161 = vmatpush1.bf16.msra.mxu0 0
      %1162 = vmatprep.subr.bf16.mxu0 0
      %1163 = vmatpush1.bf16.msra.mxu0 0
      %1164 = vmatprep.subr.bf16.mxu0 0
      %1165 = vmatpush1.bf16.msra.mxu0 0
      %1166 = vmatprep.subr.bf16.mxu0 0
      %1167 = vmatpush1.bf16.msra.mxu0 0
      %1168 = vmatprep.subr.bf16.mxu0 0
      %1169 = vmatpush1.bf16.msra.mxu0 0
      %1170 = vmatprep.subr.bf16.mxu0 0
      %1171 = vmatpush1.bf16.msra.mxu0 0
      %1172 = vmatprep.subr.bf16.mxu0 0
      %1173 = vmatpush1.bf16.msra.mxu0 0
      %1174 = vmatprep.subr.bf16.mxu0 0
      %1175 = vmatpush1.bf16.msra.mxu0 0
      %1176 = vmatprep.subr.bf16.mxu0 0
      %1177 = vmatpush1.bf16.msra.mxu0 0
      %1178 = vmatprep.subr.bf16.mxu0 0
      %1179 = vmatpush1.bf16.msra.mxu0 0
      %1180 = vmatprep.subr.bf16.mxu0 0
      %1181 = vmatpush1.bf16.msra.mxu0 0
      %1182 = vmatprep.mubr.bf16.mxu0 0
      %1183 = vmatmul.mubr.bf16.gmra.mrb[0].mxu0 %v1148
      %v1184 = vpop.f32.mrb[0].mxu0
      %v1185 = vadd.f32 0.0, %v1184
      %v1186 = vpop.f32.mrb[0].mxu0
      %v1187 = vadd.f32 0.0, %v1186
      %v1188 = vpop.f32.mrb[0].mxu0
      %v1189 = vadd.f32 0.0, %v1188
      %v1190 = vpop.f32.mrb[0].mxu0
      %v1191 = vadd.f32 0.0, %v1190
      %1192 = vdwg.mxu0
      %v1193 = vadd.f32 %v1061, %v1185
      %v1194 = vadd.f32 %v1062, %v1187
      %v1195 = vadd.f32 %v1063, %v1189
      %v1196 = vadd.f32 %v1064, %v1191
      %s1197 = scalar_lea.vmem %s493, 64
      %v1198 = vld [vmem:[%s1197] sm:$0xff]
      %v1199 = vld [vmem:[%s1197 + $0x8] sm:$0xff]
      %v1202 = vunpack.c.l.b16 %v1198
      %v1203 = vunpack.c.h.b16 %v1198
      %v1204 = vunpack.c.l.b16 %v1199
      %v1205 = vunpack.c.h.b16 %v1199
      %v1206 = vpack.c.b16 %v1204, %v1202
      %v1207 = vpack.c.b16 %v1205, %v1203
      %1210 = vmatprep.subr.bf16.mxu0 0
      %1211 = vmatpush1.bf16.msra.mxu0 %v650
      %1212 = vmatprep.subr.bf16.mxu0 0
      %1213 = vmatpush1.bf16.msra.mxu0 %v651
      %1214 = vmatprep.subr.bf16.mxu0 0
      %1215 = vmatpush1.bf16.msra.mxu0 %v652
      %1216 = vmatprep.subr.bf16.mxu0 0
      %1217 = vmatpush1.bf16.msra.mxu0 %v653
      %1218 = vmatprep.subr.bf16.mxu0 0
      %1219 = vmatpush1.bf16.msra.mxu0 %v654
      %1220 = vmatprep.subr.bf16.mxu0 0
      %1221 = vmatpush1.bf16.msra.mxu0 %v655
      %1222 = vmatprep.subr.bf16.mxu0 0
      %1223 = vmatpush1.bf16.msra.mxu0 %v656
      %1224 = vmatprep.subr.bf16.mxu0 0
      %1225 = vmatpush1.bf16.msra.mxu0 %v657
      %1226 = vmatprep.subr.bf16.mxu0 0
      %1227 = vmatpush1.bf16.msra.mxu0 %v658
      %1228 = vmatprep.subr.bf16.mxu0 0
      %1229 = vmatpush1.bf16.msra.mxu0 %v659
      %1230 = vmatprep.subr.bf16.mxu0 0
      %1231 = vmatpush1.bf16.msra.mxu0 %v660
      %1232 = vmatprep.subr.bf16.mxu0 0
      %1233 = vmatpush1.bf16.msra.mxu0 %v661
      %1234 = vmatprep.subr.bf16.mxu0 0
      %1235 = vmatpush1.bf16.msra.mxu0 %v662
      %1236 = vmatprep.subr.bf16.mxu0 0
      %1237 = vmatpush1.bf16.msra.mxu0 %v663
      %1238 = vmatprep.subr.bf16.mxu0 0
      %1239 = vmatpush1.bf16.msra.mxu0 %v664
      %1240 = vmatprep.subr.bf16.mxu0 0
      %1241 = vmatpush1.bf16.msra.mxu0 %v665
      %1242 = vmatprep.mubr.bf16.mxu0 %v1207
      %1243 = vmatmul.mubr.bf16.gmra.mrb[0].mxu0 %v1206
      %v1244 = vpop.f32.mrb[0].mxu0
      %v1245 = vadd.f32 %v574, %v1244
      %v1246 = vpop.f32.mrb[0].mxu0
      %v1247 = vpop.f32.mrb[0].mxu0
      %v1248 = vadd.f32 %v574, %v1247
      %v1249 = vpop.f32.mrb[0].mxu0
      %1250 = vdwg.mxu0
      %v1251 = vmax.f32 %v1245, 0.0
      %v1252 = vmax.f32 %v1248, 0.0
      %v1253 = vpack.c.bf16 %v1252, %v1251
      %s1254 = scalar_lea.vmem %s501, 128
      %v1255 = vld [vmem:[%s1254] sm:$0xff]
      %v1256 = vld [vmem:[%s1254 + $0x8] sm:$0xff]
      %v1257 = vld [vmem:[%s1254 + $0x10] sm:$0xff]
      %v1258 = vld [vmem:[%s1254 + $0x18] sm:$0xff]
      %v1263 = vunpack.c.l.b16 %v1255
      %v1264 = vunpack.c.h.b16 %v1255
      %v1265 = vunpack.c.l.b16 %v1256
      %v1266 = vunpack.c.h.b16 %v1256
      %v1267 = vunpack.c.l.b16 %v1257
      %v1268 = vunpack.c.h.b16 %v1257
      %v1269 = vunpack.c.l.b16 %v1258
      %v1270 = vunpack.c.h.b16 %v1258
      %v1271 = vpack.c.b16 %v1265, %v1263
      %v1272 = vpack.c.b16 %v1266, %v1264
      %v1273 = vpack.c.b16 %v1269, %v1267
      %v1274 = vpack.c.b16 %v1270, %v1268
      %v1280 = vsel %vm750, %v1253, 0
      %1282 = vmatprep.subr.bf16.mxu0 %v1272
      %1283 = vmatpush1.bf16.msra.mxu0 %v1271
      %1284 = vmatprep.subr.bf16.mxu0 %v1274
      %1285 = vmatpush1.bf16.msra.mxu0 %v1273
      %1286 = vmatprep.subr.bf16.mxu0 0
      %1287 = vmatpush1.bf16.msra.mxu0 0
      %1288 = vmatprep.subr.bf16.mxu0 0
      %1289 = vmatpush1.bf16.msra.mxu0 0
      %1290 = vmatprep.subr.bf16.mxu0 0
      %1291 = vmatpush1.bf16.msra.mxu0 0
      %1292 = vmatprep.subr.bf16.mxu0 0
      %1293 = vmatpush1.bf16.msra.mxu0 0
      %1294 = vmatprep.subr.bf16.mxu0 0
      %1295 = vmatpush1.bf16.msra.mxu0 0
      %1296 = vmatprep.subr.bf16.mxu0 0
      %1297 = vmatpush1.bf16.msra.mxu0 0
      %1298 = vmatprep.subr.bf16.mxu0 0
      %1299 = vmatpush1.bf16.msra.mxu0 0
      %1300 = vmatprep.subr.bf16.mxu0 0
      %1301 = vmatpush1.bf16.msra.mxu0 0
      %1302 = vmatprep.subr.bf16.mxu0 0
      %1303 = vmatpush1.bf16.msra.mxu0 0
      %1304 = vmatprep.subr.bf16.mxu0 0
      %1305 = vmatpush1.bf16.msra.mxu0 0
      %1306 = vmatprep.subr.bf16.mxu0 0
      %1307 = vmatpush1.bf16.msra.mxu0 0
      %1308 = vmatprep.subr.bf16.mxu0 0
      %1309 = vmatpush1.bf16.msra.mxu0 0
      %1310 = vmatprep.subr.bf16.mxu0 0
      %1311 = vmatpush1.bf16.msra.mxu0 0
      %1312 = vmatprep.subr.bf16.mxu0 0
      %1313 = vmatpush1.bf16.msra.mxu0 0
      %1314 = vmatprep.mubr.bf16.mxu0 0
      %1315 = vmatmul.mubr.bf16.gmra.mrb[0].mxu0 %v1280
      %v1316 = vpop.f32.mrb[0].mxu0
      %v1317 = vadd.f32 0.0, %v1316
      %v1318 = vpop.f32.mrb[0].mxu0
      %v1319 = vadd.f32 0.0, %v1318
      %v1320 = vpop.f32.mrb[0].mxu0
      %v1321 = vadd.f32 0.0, %v1320
      %v1322 = vpop.f32.mrb[0].mxu0
      %v1323 = vadd.f32 0.0, %v1322
      %1324 = vdwg.mxu0
      %v1325 = vadd.f32 %v1193, %v1317
      %v1326 = vadd.f32 %v1194, %v1319
      %v1327 = vadd.f32 %v1195, %v1321
      %v1328 = vadd.f32 %v1196, %v1323
      %s1329 = scalar_lea.vmem %s493, 80
      %v1330 = vld [vmem:[%s1329] sm:$0xff]
      %v1331 = vld [vmem:[%s1329 + $0x8] sm:$0xff]
      %v1334 = vunpack.c.l.b16 %v1330
      %v1335 = vunpack.c.h.b16 %v1330
      %v1336 = vunpack.c.l.b16 %v1331
      %v1337 = vunpack.c.h.b16 %v1331
      %v1338 = vpack.c.b16 %v1336, %v1334
      %v1339 = vpack.c.b16 %v1337, %v1335
      %1342 = vmatprep.subr.bf16.mxu0 0
      %1343 = vmatpush1.bf16.msra.mxu0 %v650
      %1344 = vmatprep.subr.bf16.mxu0 0
      %1345 = vmatpush1.bf16.msra.mxu0 %v651
      %1346 = vmatprep.subr.bf16.mxu0 0
      %1347 = vmatpush1.bf16.msra.mxu0 %v652
      %1348 = vmatprep.subr.bf16.mxu0 0
      %1349 = vmatpush1.bf16.msra.mxu0 %v653
      %1350 = vmatprep.subr.bf16.mxu0 0
      %1351 = vmatpush1.bf16.msra.mxu0 %v654
      %1352 = vmatprep.subr.bf16.mxu0 0
      %1353 = vmatpush1.bf16.msra.mxu0 %v655
      %1354 = vmatprep.subr.bf16.mxu0 0
      %1355 = vmatpush1.bf16.msra.mxu0 %v656
      %1356 = vmatprep.subr.bf16.mxu0 0
      %1357 = vmatpush1.bf16.msra.mxu0 %v657
      %1358 = vmatprep.subr.bf16.mxu0 0
      %1359 = vmatpush1.bf16.msra.mxu0 %v658
      %1360 = vmatprep.subr.bf16.mxu0 0
      %1361 = vmatpush1.bf16.msra.mxu0 %v659
      %1362 = vmatprep.subr.bf16.mxu0 0
      %1363 = vmatpush1.bf16.msra.mxu0 %v660
      %1364 = vmatprep.subr.bf16.mxu0 0
      %1365 = vmatpush1.bf16.msra.mxu0 %v661
      %1366 = vmatprep.subr.bf16.mxu0 0
      %1367 = vmatpush1.bf16.msra.mxu0 %v662
      %1368 = vmatprep.subr.bf16.mxu0 0
      %1369 = vmatpush1.bf16.msra.mxu0 %v663
      %1370 = vmatprep.subr.bf16.mxu0 0
      %1371 = vmatpush1.bf16.msra.mxu0 %v664
      %1372 = vmatprep.subr.bf16.mxu0 0
      %1373 = vmatpush1.bf16.msra.mxu0 %v665
      %1374 = vmatprep.mubr.bf16.mxu0 %v1339
      %1375 = vmatmul.mubr.bf16.gmra.mrb[0].mxu0 %v1338
      %v1376 = vpop.f32.mrb[0].mxu0
      %v1377 = vadd.f32 %v574, %v1376
      %v1378 = vpop.f32.mrb[0].mxu0
      %v1379 = vpop.f32.mrb[0].mxu0
      %v1380 = vadd.f32 %v574, %v1379
      %v1381 = vpop.f32.mrb[0].mxu0
      %1382 = vdwg.mxu0
      %v1383 = vmax.f32 %v1377, 0.0
      %v1384 = vmax.f32 %v1380, 0.0
      %v1385 = vpack.c.bf16 %v1384, %v1383
      %s1386 = scalar_lea.vmem %s501, 160
      %v1387 = vld [vmem:[%s1386] sm:$0xff]
      %v1388 = vld [vmem:[%s1386 + $0x8] sm:$0xff]
      %v1389 = vld [vmem:[%s1386 + $0x10] sm:$0xff]
      %v1390 = vld [vmem:[%s1386 + $0x18] sm:$0xff]
      %v1395 = vunpack.c.l.b16 %v1387
      %v1396 = vunpack.c.h.b16 %v1387
      %v1397 = vunpack.c.l.b16 %v1388
      %v1398 = vunpack.c.h.b16 %v1388
      %v1399 = vunpack.c.l.b16 %v1389
      %v1400 = vunpack.c.h.b16 %v1389
      %v1401 = vunpack.c.l.b16 %v1390
      %v1402 = vunpack.c.h.b16 %v1390
      %v1403 = vpack.c.b16 %v1397, %v1395
      %v1404 = vpack.c.b16 %v1398, %v1396
      %v1405 = vpack.c.b16 %v1401, %v1399
      %v1406 = vpack.c.b16 %v1402, %v1400
      %v1412 = vsel %vm750, %v1385, 0
      %1414 = vmatprep.subr.bf16.mxu0 %v1404
      %1415 = vmatpush1.bf16.msra.mxu0 %v1403
      %1416 = vmatprep.subr.bf16.mxu0 %v1406
      %1417 = vmatpush1.bf16.msra.mxu0 %v1405
      %1418 = vmatprep.subr.bf16.mxu0 0
      %1419 = vmatpush1.bf16.msra.mxu0 0
      %1420 = vmatprep.subr.bf16.mxu0 0
      %1421 = vmatpush1.bf16.msra.mxu0 0
      %1422 = vmatprep.subr.bf16.mxu0 0
      %1423 = vmatpush1.bf16.msra.mxu0 0
      %1424 = vmatprep.subr.bf16.mxu0 0
      %1425 = vmatpush1.bf16.msra.mxu0 0
      %1426 = vmatprep.subr.bf16.mxu0 0
      %1427 = vmatpush1.bf16.msra.mxu0 0
      %1428 = vmatprep.subr.bf16.mxu0 0
      %1429 = vmatpush1.bf16.msra.mxu0 0
      %1430 = vmatprep.subr.bf16.mxu0 0
      %1431 = vmatpush1.bf16.msra.mxu0 0
      %1432 = vmatprep.subr.bf16.mxu0 0
      %1433 = vmatpush1.bf16.msra.mxu0 0
      %1434 = vmatprep.subr.bf16.mxu0 0
      %1435 = vmatpush1.bf16.msra.mxu0 0
      %1436 = vmatprep.subr.bf16.mxu0 0
      %1437 = vmatpush1.bf16.msra.mxu0 0
      %1438 = vmatprep.subr.bf16.mxu0 0
      %1439 = vmatpush1.bf16.msra.mxu0 0
      %1440 = vmatprep.subr.bf16.mxu0 0
      %1441 = vmatpush1.bf16.msra.mxu0 0
      %1442 = vmatprep.subr.bf16.mxu0 0
      %1443 = vmatpush1.bf16.msra.mxu0 0
      %1444 = vmatprep.subr.bf16.mxu0 0
      %1445 = vmatpush1.bf16.msra.mxu0 0
      %1446 = vmatprep.mubr.bf16.mxu0 0
      %1447 = vmatmul.mubr.bf16.gmra.mrb[0].mxu0 %v1412
      %v1448 = vpop.f32.mrb[0].mxu0
      %v1449 = vadd.f32 0.0, %v1448
      %v1450 = vpop.f32.mrb[0].mxu0
      %v1451 = vadd.f32 0.0, %v1450
      %v1452 = vpop.f32.mrb[0].mxu0
      %v1453 = vadd.f32 0.0, %v1452
      %v1454 = vpop.f32.mrb[0].mxu0
      %v1455 = vadd.f32 0.0, %v1454
      %1456 = vdwg.mxu0
      %v1457 = vadd.f32 %v1325, %v1449
      %v1458 = vadd.f32 %v1326, %v1451
      %v1459 = vadd.f32 %v1327, %v1453
      %v1460 = vadd.f32 %v1328, %v1455
      %s1461 = scalar_lea.vmem %s493, 96
      %v1462 = vld [vmem:[%s1461] sm:$0xff]
      %v1463 = vld [vmem:[%s1461 + $0x8] sm:$0xff]
      %v1466 = vunpack.c.l.b16 %v1462
      %v1467 = vunpack.c.h.b16 %v1462
      %v1468 = vunpack.c.l.b16 %v1463
      %v1469 = vunpack.c.h.b16 %v1463
      %v1470 = vpack.c.b16 %v1468, %v1466
      %v1471 = vpack.c.b16 %v1469, %v1467
      %1474 = vmatprep.subr.bf16.mxu0 0
      %1475 = vmatpush1.bf16.msra.mxu0 %v650
      %1476 = vmatprep.subr.bf16.mxu0 0
      %1477 = vmatpush1.bf16.msra.mxu0 %v651
      %1478 = vmatprep.subr.bf16.mxu0 0
      %1479 = vmatpush1.bf16.msra.mxu0 %v652
      %1480 = vmatprep.subr.bf16.mxu0 0
      %1481 = vmatpush1.bf16.msra.mxu0 %v653
      %1482 = vmatprep.subr.bf16.mxu0 0
      %1483 = vmatpush1.bf16.msra.mxu0 %v654
      %1484 = vmatprep.subr.bf16.mxu0 0
      %1485 = vmatpush1.bf16.msra.mxu0 %v655
      %1486 = vmatprep.subr.bf16.mxu0 0
      %1487 = vmatpush1.bf16.msra.mxu0 %v656
      %1488 = vmatprep.subr.bf16.mxu0 0
      %1489 = vmatpush1.bf16.msra.mxu0 %v657
      %1490 = vmatprep.subr.bf16.mxu0 0
      %1491 = vmatpush1.bf16.msra.mxu0 %v658
      %1492 = vmatprep.subr.bf16.mxu0 0
      %1493 = vmatpush1.bf16.msra.mxu0 %v659
      %1494 = vmatprep.subr.bf16.mxu0 0
      %1495 = vmatpush1.bf16.msra.mxu0 %v660
      %1496 = vmatprep.subr.bf16.mxu0 0
      %1497 = vmatpush1.bf16.msra.mxu0 %v661
      %1498 = vmatprep.subr.bf16.mxu0 0
      %1499 = vmatpush1.bf16.msra.mxu0 %v662
      %1500 = vmatprep.subr.bf16.mxu0 0
      %1501 = vmatpush1.bf16.msra.mxu0 %v663
      %1502 = vmatprep.subr.bf16.mxu0 0
      %1503 = vmatpush1.bf16.msra.mxu0 %v664
      %1504 = vmatprep.subr.bf16.mxu0 0
      %1505 = vmatpush1.bf16.msra.mxu0 %v665
      %1506 = vmatprep.mubr.bf16.mxu0 %v1471
      %1507 = vmatmul.mubr.bf16.gmra.mrb[0].mxu0 %v1470
      %v1508 = vpop.f32.mrb[0].mxu0
      %v1509 = vadd.f32 %v574, %v1508
      %v1510 = vpop.f32.mrb[0].mxu0
      %v1511 = vpop.f32.mrb[0].mxu0
      %v1512 = vadd.f32 %v574, %v1511
      %v1513 = vpop.f32.mrb[0].mxu0
      %1514 = vdwg.mxu0
      %v1515 = vmax.f32 %v1509, 0.0
      %v1516 = vmax.f32 %v1512, 0.0
      %v1517 = vpack.c.bf16 %v1516, %v1515
      %s1518 = scalar_lea.vmem %s501, 192
      %v1519 = vld [vmem:[%s1518] sm:$0xff]
      %v1520 = vld [vmem:[%s1518 + $0x8] sm:$0xff]
      %v1521 = vld [vmem:[%s1518 + $0x10] sm:$0xff]
      %v1522 = vld [vmem:[%s1518 + $0x18] sm:$0xff]
      %v1527 = vunpack.c.l.b16 %v1519
      %v1528 = vunpack.c.h.b16 %v1519
      %v1529 = vunpack.c.l.b16 %v1520
      %v1530 = vunpack.c.h.b16 %v1520
      %v1531 = vunpack.c.l.b16 %v1521
      %v1532 = vunpack.c.h.b16 %v1521
      %v1533 = vunpack.c.l.b16 %v1522
      %v1534 = vunpack.c.h.b16 %v1522
      %v1535 = vpack.c.b16 %v1529, %v1527
      %v1536 = vpack.c.b16 %v1530, %v1528
      %v1537 = vpack.c.b16 %v1533, %v1531
      %v1538 = vpack.c.b16 %v1534, %v1532
      %v1544 = vsel %vm750, %v1517, 0
      %1546 = vmatprep.subr.bf16.mxu0 %v1536
      %1547 = vmatpush1.bf16.msra.mxu0 %v1535
      %1548 = vmatprep.subr.bf16.mxu0 %v1538
      %1549 = vmatpush1.bf16.msra.mxu0 %v1537
      %1550 = vmatprep.subr.bf16.mxu0 0
      %1551 = vmatpush1.bf16.msra.mxu0 0
      %1552 = vmatprep.subr.bf16.mxu0 0
      %1553 = vmatpush1.bf16.msra.mxu0 0
      %1554 = vmatprep.subr.bf16.mxu0 0
      %1555 = vmatpush1.bf16.msra.mxu0 0
      %1556 = vmatprep.subr.bf16.mxu0 0
      %1557 = vmatpush1.bf16.msra.mxu0 0
      %1558 = vmatprep.subr.bf16.mxu0 0
      %1559 = vmatpush1.bf16.msra.mxu0 0
      %1560 = vmatprep.subr.bf16.mxu0 0
      %1561 = vmatpush1.bf16.msra.mxu0 0
      %1562 = vmatprep.subr.bf16.mxu0 0
      %1563 = vmatpush1.bf16.msra.mxu0 0
      %1564 = vmatprep.subr.bf16.mxu0 0
      %1565 = vmatpush1.bf16.msra.mxu0 0
      %1566 = vmatprep.subr.bf16.mxu0 0
      %1567 = vmatpush1.bf16.msra.mxu0 0
      %1568 = vmatprep.subr.bf16.mxu0 0
      %1569 = vmatpush1.bf16.msra.mxu0 0
      %1570 = vmatprep.subr.bf16.mxu0 0
      %1571 = vmatpush1.bf16.msra.mxu0 0
      %1572 = vmatprep.subr.bf16.mxu0 0
      %1573 = vmatpush1.bf16.msra.mxu0 0
      %1574 = vmatprep.subr.bf16.mxu0 0
      %1575 = vmatpush1.bf16.msra.mxu0 0
      %1576 = vmatprep.subr.bf16.mxu0 0
      %1577 = vmatpush1.bf16.msra.mxu0 0
      %1578 = vmatprep.mubr.bf16.mxu0 0
      %1579 = vmatmul.mubr.bf16.gmra.mrb[0].mxu0 %v1544
      %v1580 = vpop.f32.mrb[0].mxu0
      %v1581 = vadd.f32 0.0, %v1580
      %v1582 = vpop.f32.mrb[0].mxu0
      %v1583 = vadd.f32 0.0, %v1582
      %v1584 = vpop.f32.mrb[0].mxu0
      %v1585 = vadd.f32 0.0, %v1584
      %v1586 = vpop.f32.mrb[0].mxu0
      %v1587 = vadd.f32 0.0, %v1586
      %1588 = vdwg.mxu0
      %v1589 = vadd.f32 %v1457, %v1581
      %v1590 = vadd.f32 %v1458, %v1583
      %v1591 = vadd.f32 %v1459, %v1585
      %v1592 = vadd.f32 %v1460, %v1587
      %s1593 = scalar_lea.vmem %s493, 112
      %v1594 = vld [vmem:[%s1593] sm:$0xff]
      %v1595 = vld [vmem:[%s1593 + $0x8] sm:$0xff]
      %v1598 = vunpack.c.l.b16 %v1594
      %v1599 = vunpack.c.h.b16 %v1594
      %v1600 = vunpack.c.l.b16 %v1595
      %v1601 = vunpack.c.h.b16 %v1595
      %v1602 = vpack.c.b16 %v1600, %v1598
      %v1603 = vpack.c.b16 %v1601, %v1599
      %1606 = vmatprep.subr.bf16.mxu0 0
      %1607 = vmatpush1.bf16.msra.mxu0 %v650
      %1608 = vmatprep.subr.bf16.mxu0 0
      %1609 = vmatpush1.bf16.msra.mxu0 %v651
      %1610 = vmatprep.subr.bf16.mxu0 0
      %1611 = vmatpush1.bf16.msra.mxu0 %v652
      %1612 = vmatprep.subr.bf16.mxu0 0
      %1613 = vmatpush1.bf16.msra.mxu0 %v653
      %1614 = vmatprep.subr.bf16.mxu0 0
      %1615 = vmatpush1.bf16.msra.mxu0 %v654
      %1616 = vmatprep.subr.bf16.mxu0 0
      %1617 = vmatpush1.bf16.msra.mxu0 %v655
      %1618 = vmatprep.subr.bf16.mxu0 0
      %1619 = vmatpush1.bf16.msra.mxu0 %v656
      %1620 = vmatprep.subr.bf16.mxu0 0
      %1621 = vmatpush1.bf16.msra.mxu0 %v657
      %1622 = vmatprep.subr.bf16.mxu0 0
      %1623 = vmatpush1.bf16.msra.mxu0 %v658
      %1624 = vmatprep.subr.bf16.mxu0 0
      %1625 = vmatpush1.bf16.msra.mxu0 %v659
      %1626 = vmatprep.subr.bf16.mxu0 0
      %1627 = vmatpush1.bf16.msra.mxu0 %v660
      %1628 = vmatprep.subr.bf16.mxu0 0
      %1629 = vmatpush1.bf16.msra.mxu0 %v661
      %1630 = vmatprep.subr.bf16.mxu0 0
      %1631 = vmatpush1.bf16.msra.mxu0 %v662
      %1632 = vmatprep.subr.bf16.mxu0 0
      %1633 = vmatpush1.bf16.msra.mxu0 %v663
      %1634 = vmatprep.subr.bf16.mxu0 0
      %1635 = vmatpush1.bf16.msra.mxu0 %v664
      %1636 = vmatprep.subr.bf16.mxu0 0
      %1637 = vmatpush1.bf16.msra.mxu0 %v665
      %1638 = vmatprep.mubr.bf16.mxu0 %v1603
      %1639 = vmatmul.mubr.bf16.gmra.mrb[0].mxu0 %v1602
      %v1640 = vpop.f32.mrb[0].mxu0
      %v1641 = vadd.f32 %v574, %v1640
      %v1642 = vpop.f32.mrb[0].mxu0
      %v1643 = vpop.f32.mrb[0].mxu0
      %v1644 = vadd.f32 %v574, %v1643
      %v1645 = vpop.f32.mrb[0].mxu0
      %1646 = vdwg.mxu0
      %v1647 = vmax.f32 %v1641, 0.0
      %v1648 = vmax.f32 %v1644, 0.0
      %v1649 = vpack.c.bf16 %v1648, %v1647
      %s1650 = scalar_lea.vmem %s501, 224
      %v1651 = vld [vmem:[%s1650] sm:$0xff]
      %v1652 = vld [vmem:[%s1650 + $0x8] sm:$0xff]
      %v1653 = vld [vmem:[%s1650 + $0x10] sm:$0xff]
      %v1654 = vld [vmem:[%s1650 + $0x18] sm:$0xff]
      %v1659 = vunpack.c.l.b16 %v1651
      %v1660 = vunpack.c.h.b16 %v1651
      %v1661 = vunpack.c.l.b16 %v1652
      %v1662 = vunpack.c.h.b16 %v1652
      %v1663 = vunpack.c.l.b16 %v1653
      %v1664 = vunpack.c.h.b16 %v1653
      %v1665 = vunpack.c.l.b16 %v1654
      %v1666 = vunpack.c.h.b16 %v1654
      %v1667 = vpack.c.b16 %v1661, %v1659
      %v1668 = vpack.c.b16 %v1662, %v1660
      %v1669 = vpack.c.b16 %v1665, %v1663
      %v1670 = vpack.c.b16 %v1666, %v1664
      %v1676 = vsel %vm750, %v1649, 0
      %1678 = vmatprep.subr.bf16.mxu0 %v1668
      %1679 = vmatpush1.bf16.msra.mxu0 %v1667
      %1680 = vmatprep.subr.bf16.mxu0 %v1670
      %1681 = vmatpush1.bf16.msra.mxu0 %v1669
      %1682 = vmatprep.subr.bf16.mxu0 0
      %1683 = vmatpush1.bf16.msra.mxu0 0
      %1684 = vmatprep.subr.bf16.mxu0 0
      %1685 = vmatpush1.bf16.msra.mxu0 0
      %1686 = vmatprep.subr.bf16.mxu0 0
      %1687 = vmatpush1.bf16.msra.mxu0 0
      %1688 = vmatprep.subr.bf16.mxu0 0
      %1689 = vmatpush1.bf16.msra.mxu0 0
      %1690 = vmatprep.subr.bf16.mxu0 0
      %1691 = vmatpush1.bf16.msra.mxu0 0
      %1692 = vmatprep.subr.bf16.mxu0 0
      %1693 = vmatpush1.bf16.msra.mxu0 0
      %1694 = vmatprep.subr.bf16.mxu0 0
      %1695 = vmatpush1.bf16.msra.mxu0 0
      %1696 = vmatprep.subr.bf16.mxu0 0
      %1697 = vmatpush1.bf16.msra.mxu0 0
      %1698 = vmatprep.subr.bf16.mxu0 0
      %1699 = vmatpush1.bf16.msra.mxu0 0
      %1700 = vmatprep.subr.bf16.mxu0 0
      %1701 = vmatpush1.bf16.msra.mxu0 0
      %1702 = vmatprep.subr.bf16.mxu0 0
      %1703 = vmatpush1.bf16.msra.mxu0 0
      %1704 = vmatprep.subr.bf16.mxu0 0
      %1705 = vmatpush1.bf16.msra.mxu0 0
      %1706 = vmatprep.subr.bf16.mxu0 0
      %1707 = vmatpush1.bf16.msra.mxu0 0
      %1708 = vmatprep.subr.bf16.mxu0 0
      %1709 = vmatpush1.bf16.msra.mxu0 0
      %1710 = vmatprep.mubr.bf16.mxu0 0
      %1711 = vmatmul.mubr.bf16.gmra.mrb[0].mxu0 %v1676
      %v1712 = vpop.f32.mrb[0].mxu0
      %v1713 = vadd.f32 0.0, %v1712
      %v1714 = vpop.f32.mrb[0].mxu0
      %v1715 = vadd.f32 0.0, %v1714
      %v1716 = vpop.f32.mrb[0].mxu0
      %v1717 = vadd.f32 0.0, %v1716
      %v1718 = vpop.f32.mrb[0].mxu0
      %v1719 = vadd.f32 0.0, %v1718
      %1720 = vdwg.mxu0
      %v1721 = vadd.f32 %v1589, %v1713
      %v1722 = vadd.f32 %v1590, %v1715
      %v1723 = vadd.f32 %v1591, %v1717
      %v1724 = vadd.f32 %v1592, %v1719
      %s1725 = scalar_lea.vmem %s493, 128
      %v1726 = vld [vmem:[%s1725] sm:$0xff]
      %v1727 = vld [vmem:[%s1725 + $0x8] sm:$0xff]
      %v1730 = vunpack.c.l.b16 %v1726
      %v1731 = vunpack.c.h.b16 %v1726
      %v1732 = vunpack.c.l.b16 %v1727
      %v1733 = vunpack.c.h.b16 %v1727
      %v1734 = vpack.c.b16 %v1732, %v1730
      %v1735 = vpack.c.b16 %v1733, %v1731
      %1738 = vmatprep.subr.bf16.mxu0 0
      %1739 = vmatpush1.bf16.msra.mxu0 %v650
      %1740 = vmatprep.subr.bf16.mxu0 0
      %1741 = vmatpush1.bf16.msra.mxu0 %v651
      %1742 = vmatprep.subr.bf16.mxu0 0
      %1743 = vmatpush1.bf16.msra.mxu0 %v652
      %1744 = vmatprep.subr.bf16.mxu0 0
      %1745 = vmatpush1.bf16.msra.mxu0 %v653
      %1746 = vmatprep.subr.bf16.mxu0 0
      %1747 = vmatpush1.bf16.msra.mxu0 %v654
      %1748 = vmatprep.subr.bf16.mxu0 0
      %1749 = vmatpush1.bf16.msra.mxu0 %v655
      %1750 = vmatprep.subr.bf16.mxu0 0
      %1751 = vmatpush1.bf16.msra.mxu0 %v656
      %1752 = vmatprep.subr.bf16.mxu0 0
      %1753 = vmatpush1.bf16.msra.mxu0 %v657
      %1754 = vmatprep.subr.bf16.mxu0 0
      %1755 = vmatpush1.bf16.msra.mxu0 %v658
      %1756 = vmatprep.subr.bf16.mxu0 0
      %1757 = vmatpush1.bf16.msra.mxu0 %v659
      %1758 = vmatprep.subr.bf16.mxu0 0
      %1759 = vmatpush1.bf16.msra.mxu0 %v660
      %1760 = vmatprep.subr.bf16.mxu0 0
      %1761 = vmatpush1.bf16.msra.mxu0 %v661
      %1762 = vmatprep.subr.bf16.mxu0 0
      %1763 = vmatpush1.bf16.msra.mxu0 %v662
      %1764 = vmatprep.subr.bf16.mxu0 0
      %1765 = vmatpush1.bf16.msra.mxu0 %v663
      %1766 = vmatprep.subr.bf16.mxu0 0
      %1767 = vmatpush1.bf16.msra.mxu0 %v664
      %1768 = vmatprep.subr.bf16.mxu0 0
      %1769 = vmatpush1.bf16.msra.mxu0 %v665
      %1770 = vmatprep.mubr.bf16.mxu0 %v1735
      %1771 = vmatmul.mubr.bf16.gmra.mrb[0].mxu0 %v1734
      %v1772 = vpop.f32.mrb[0].mxu0
      %v1773 = vadd.f32 %v574, %v1772
      %v1774 = vpop.f32.mrb[0].mxu0
      %v1775 = vpop.f32.mrb[0].mxu0
      %v1776 = vadd.f32 %v574, %v1775
      %v1777 = vpop.f32.mrb[0].mxu0
      %1778 = vdwg.mxu0
      %v1779 = vmax.f32 %v1773, 0.0
      %v1780 = vmax.f32 %v1776, 0.0
      %v1781 = vpack.c.bf16 %v1780, %v1779
      %s1782 = scalar_lea.vmem %s501, 256
      %v1783 = vld [vmem:[%s1782] sm:$0xff]
      %v1784 = vld [vmem:[%s1782 + $0x8] sm:$0xff]
      %v1785 = vld [vmem:[%s1782 + $0x10] sm:$0xff]
      %v1786 = vld [vmem:[%s1782 + $0x18] sm:$0xff]
      %v1791 = vunpack.c.l.b16 %v1783
      %v1792 = vunpack.c.h.b16 %v1783
      %v1793 = vunpack.c.l.b16 %v1784
      %v1794 = vunpack.c.h.b16 %v1784
      %v1795 = vunpack.c.l.b16 %v1785
      %v1796 = vunpack.c.h.b16 %v1785
      %v1797 = vunpack.c.l.b16 %v1786
      %v1798 = vunpack.c.h.b16 %v1786
      %v1799 = vpack.c.b16 %v1793, %v1791
      %v1800 = vpack.c.b16 %v1794, %v1792
      %v1801 = vpack.c.b16 %v1797, %v1795
      %v1802 = vpack.c.b16 %v1798, %v1796
      %v1808 = vsel %vm750, %v1781, 0
      %1810 = vmatprep.subr.bf16.mxu0 %v1800
      %1811 = vmatpush1.bf16.msra.mxu0 %v1799
      %1812 = vmatprep.subr.bf16.mxu0 %v1802
      %1813 = vmatpush1.bf16.msra.mxu0 %v1801
      %1814 = vmatprep.subr.bf16.mxu0 0
      %1815 = vmatpush1.bf16.msra.mxu0 0
      %1816 = vmatprep.subr.bf16.mxu0 0
      %1817 = vmatpush1.bf16.msra.mxu0 0
      %1818 = vmatprep.subr.bf16.mxu0 0
      %1819 = vmatpush1.bf16.msra.mxu0 0
      %1820 = vmatprep.subr.bf16.mxu0 0
      %1821 = vmatpush1.bf16.msra.mxu0 0
      %1822 = vmatprep.subr.bf16.mxu0 0
      %1823 = vmatpush1.bf16.msra.mxu0 0
      %1824 = vmatprep.subr.bf16.mxu0 0
      %1825 = vmatpush1.bf16.msra.mxu0 0
      %1826 = vmatprep.subr.bf16.mxu0 0
      %1827 = vmatpush1.bf16.msra.mxu0 0
      %1828 = vmatprep.subr.bf16.mxu0 0
      %1829 = vmatpush1.bf16.msra.mxu0 0
      %1830 = vmatprep.subr.bf16.mxu0 0
      %1831 = vmatpush1.bf16.msra.mxu0 0
      %1832 = vmatprep.subr.bf16.mxu0 0
      %1833 = vmatpush1.bf16.msra.mxu0 0
      %1834 = vmatprep.subr.bf16.mxu0 0
      %1835 = vmatpush1.bf16.msra.mxu0 0
      %1836 = vmatprep.subr.bf16.mxu0 0
      %1837 = vmatpush1.bf16.msra.mxu0 0
      %1838 = vmatprep.subr.bf16.mxu0 0
      %1839 = vmatpush1.bf16.msra.mxu0 0
      %1840 = vmatprep.subr.bf16.mxu0 0
      %1841 = vmatpush1.bf16.msra.mxu0 0
      %1842 = vmatprep.mubr.bf16.mxu0 0
      %1843 = vmatmul.mubr.bf16.gmra.mrb[0].mxu0 %v1808
      %v1844 = vpop.f32.mrb[0].mxu0
      %v1845 = vadd.f32 0.0, %v1844
      %v1846 = vpop.f32.mrb[0].mxu0
      %v1847 = vadd.f32 0.0, %v1846
      %v1848 = vpop.f32.mrb[0].mxu0
      %v1849 = vadd.f32 0.0, %v1848
      %v1850 = vpop.f32.mrb[0].mxu0
      %v1851 = vadd.f32 0.0, %v1850
      %1852 = vdwg.mxu0
      %v1853 = vadd.f32 %v1721, %v1845
      %v1854 = vadd.f32 %v1722, %v1847
      %v1855 = vadd.f32 %v1723, %v1849
      %v1856 = vadd.f32 %v1724, %v1851
      %s1857 = scalar_lea.vmem %s493, 144
      %v1858 = vld [vmem:[%s1857] sm:$0xff]
      %v1859 = vld [vmem:[%s1857 + $0x8] sm:$0xff]
      %v1862 = vunpack.c.l.b16 %v1858
      %v1863 = vunpack.c.h.b16 %v1858
      %v1864 = vunpack.c.l.b16 %v1859
      %v1865 = vunpack.c.h.b16 %v1859
      %v1866 = vpack.c.b16 %v1864, %v1862
      %v1867 = vpack.c.b16 %v1865, %v1863
      %1870 = vmatprep.subr.bf16.mxu0 0
      %1871 = vmatpush1.bf16.msra.mxu0 %v650
      %1872 = vmatprep.subr.bf16.mxu0 0
      %1873 = vmatpush1.bf16.msra.mxu0 %v651
      %1874 = vmatprep.subr.bf16.mxu0 0
      %1875 = vmatpush1.bf16.msra.mxu0 %v652
      %1876 = vmatprep.subr.bf16.mxu0 0
      %1877 = vmatpush1.bf16.msra.mxu0 %v653
      %1878 = vmatprep.subr.bf16.mxu0 0
      %1879 = vmatpush1.bf16.msra.mxu0 %v654
      %1880 = vmatprep.subr.bf16.mxu0 0
      %1881 = vmatpush1.bf16.msra.mxu0 %v655
      %1882 = vmatprep.subr.bf16.mxu0 0
      %1883 = vmatpush1.bf16.msra.mxu0 %v656
      %1884 = vmatprep.subr.bf16.mxu0 0
      %1885 = vmatpush1.bf16.msra.mxu0 %v657
      %1886 = vmatprep.subr.bf16.mxu0 0
      %1887 = vmatpush1.bf16.msra.mxu0 %v658
      %1888 = vmatprep.subr.bf16.mxu0 0
      %1889 = vmatpush1.bf16.msra.mxu0 %v659
      %1890 = vmatprep.subr.bf16.mxu0 0
      %1891 = vmatpush1.bf16.msra.mxu0 %v660
      %1892 = vmatprep.subr.bf16.mxu0 0
      %1893 = vmatpush1.bf16.msra.mxu0 %v661
      %1894 = vmatprep.subr.bf16.mxu0 0
      %1895 = vmatpush1.bf16.msra.mxu0 %v662
      %1896 = vmatprep.subr.bf16.mxu0 0
      %1897 = vmatpush1.bf16.msra.mxu0 %v663
      %1898 = vmatprep.subr.bf16.mxu0 0
      %1899 = vmatpush1.bf16.msra.mxu0 %v664
      %1900 = vmatprep.subr.bf16.mxu0 0
      %1901 = vmatpush1.bf16.msra.mxu0 %v665
      %1902 = vmatprep.mubr.bf16.mxu0 %v1867
      %1903 = vmatmul.mubr.bf16.gmra.mrb[0].mxu0 %v1866
      %v1904 = vpop.f32.mrb[0].mxu0
      %v1905 = vadd.f32 %v574, %v1904
      %v1906 = vpop.f32.mrb[0].mxu0
      %v1907 = vpop.f32.mrb[0].mxu0
      %v1908 = vadd.f32 %v574, %v1907
      %v1909 = vpop.f32.mrb[0].mxu0
      %1910 = vdwg.mxu0
      %v1911 = vmax.f32 %v1905, 0.0
      %v1912 = vmax.f32 %v1908, 0.0
      %v1913 = vpack.c.bf16 %v1912, %v1911
      %s1914 = scalar_lea.vmem %s501, 288
      %v1915 = vld [vmem:[%s1914] sm:$0xff]
      %v1916 = vld [vmem:[%s1914 + $0x8] sm:$0xff]
      %v1917 = vld [vmem:[%s1914 + $0x10] sm:$0xff]
      %v1918 = vld [vmem:[%s1914 + $0x18] sm:$0xff]
      %v1923 = vunpack.c.l.b16 %v1915
      %v1924 = vunpack.c.h.b16 %v1915
      %v1925 = vunpack.c.l.b16 %v1916
      %v1926 = vunpack.c.h.b16 %v1916
      %v1927 = vunpack.c.l.b16 %v1917
      %v1928 = vunpack.c.h.b16 %v1917
      %v1929 = vunpack.c.l.b16 %v1918
      %v1930 = vunpack.c.h.b16 %v1918
      %v1931 = vpack.c.b16 %v1925, %v1923
      %v1932 = vpack.c.b16 %v1926, %v1924
      %v1933 = vpack.c.b16 %v1929, %v1927
      %v1934 = vpack.c.b16 %v1930, %v1928
      %v1940 = vsel %vm750, %v1913, 0
      %1942 = vmatprep.subr.bf16.mxu0 %v1932
      %1943 = vmatpush1.bf16.msra.mxu0 %v1931
      %1944 = vmatprep.subr.bf16.mxu0 %v1934
      %1945 = vmatpush1.bf16.msra.mxu0 %v1933
      %1946 = vmatprep.subr.bf16.mxu0 0
      %1947 = vmatpush1.bf16.msra.mxu0 0
      %1948 = vmatprep.subr.bf16.mxu0 0
      %1949 = vmatpush1.bf16.msra.mxu0 0
      %1950 = vmatprep.subr.bf16.mxu0 0
      %1951 = vmatpush1.bf16.msra.mxu0 0
      %1952 = vmatprep.subr.bf16.mxu0 0
      %1953 = vmatpush1.bf16.msra.mxu0 0
      %1954 = vmatprep.subr.bf16.mxu0 0
      %1955 = vmatpush1.bf16.msra.mxu0 0
      %1956 = vmatprep.subr.bf16.mxu0 0
      %1957 = vmatpush1.bf16.msra.mxu0 0
      %1958 = vmatprep.subr.bf16.mxu0 0
      %1959 = vmatpush1.bf16.msra.mxu0 0
      %1960 = vmatprep.subr.bf16.mxu0 0
      %1961 = vmatpush1.bf16.msra.mxu0 0
      %1962 = vmatprep.subr.bf16.mxu0 0
      %1963 = vmatpush1.bf16.msra.mxu0 0
      %1964 = vmatprep.subr.bf16.mxu0 0
      %1965 = vmatpush1.bf16.msra.mxu0 0
      %1966 = vmatprep.subr.bf16.mxu0 0
      %1967 = vmatpush1.bf16.msra.mxu0 0
      %1968 = vmatprep.subr.bf16.mxu0 0
      %1969 = vmatpush1.bf16.msra.mxu0 0
      %1970 = vmatprep.subr.bf16.mxu0 0
      %1971 = vmatpush1.bf16.msra.mxu0 0
      %1972 = vmatprep.subr.bf16.mxu0 0
      %1973 = vmatpush1.bf16.msra.mxu0 0
      %1974 = vmatprep.mubr.bf16.mxu0 0
      %1975 = vmatmul.mubr.bf16.gmra.mrb[0].mxu0 %v1940
      %v1976 = vpop.f32.mrb[0].mxu0
      %v1977 = vadd.f32 0.0, %v1976
      %v1978 = vpop.f32.mrb[0].mxu0
      %v1979 = vadd.f32 0.0, %v1978
      %v1980 = vpop.f32.mrb[0].mxu0
      %v1981 = vadd.f32 0.0, %v1980
      %v1982 = vpop.f32.mrb[0].mxu0
      %v1983 = vadd.f32 0.0, %v1982
      %1984 = vdwg.mxu0
      %v1985 = vadd.f32 %v1853, %v1977
      %v1986 = vadd.f32 %v1854, %v1979
      %v1987 = vadd.f32 %v1855, %v1981
      %v1988 = vadd.f32 %v1856, %v1983
      %s1989 = scalar_lea.vmem %s493, 160
      %v1990 = vld [vmem:[%s1989] sm:$0xff]
      %v1991 = vld [vmem:[%s1989 + $0x8] sm:$0xff]
      %v1994 = vunpack.c.l.b16 %v1990
      %v1995 = vunpack.c.h.b16 %v1990
      %v1996 = vunpack.c.l.b16 %v1991
      %v1997 = vunpack.c.h.b16 %v1991
      %v1998 = vpack.c.b16 %v1996, %v1994
      %v1999 = vpack.c.b16 %v1997, %v1995
      %2002 = vmatprep.subr.bf16.mxu0 0
      %2003 = vmatpush1.bf16.msra.mxu0 %v650
      %2004 = vmatprep.subr.bf16.mxu0 0
      %2005 = vmatpush1.bf16.msra.mxu0 %v651
      %2006 = vmatprep.subr.bf16.mxu0 0
      %2007 = vmatpush1.bf16.msra.mxu0 %v652
      %2008 = vmatprep.subr.bf16.mxu0 0
      %2009 = vmatpush1.bf16.msra.mxu0 %v653
      %2010 = vmatprep.subr.bf16.mxu0 0
      %2011 = vmatpush1.bf16.msra.mxu0 %v654
      %2012 = vmatprep.subr.bf16.mxu0 0
      %2013 = vmatpush1.bf16.msra.mxu0 %v655
      %2014 = vmatprep.subr.bf16.mxu0 0
      %2015 = vmatpush1.bf16.msra.mxu0 %v656
      %2016 = vmatprep.subr.bf16.mxu0 0
      %2017 = vmatpush1.bf16.msra.mxu0 %v657
      %2018 = vmatprep.subr.bf16.mxu0 0
      %2019 = vmatpush1.bf16.msra.mxu0 %v658
      %2020 = vmatprep.subr.bf16.mxu0 0
      %2021 = vmatpush1.bf16.msra.mxu0 %v659
      %2022 = vmatprep.subr.bf16.mxu0 0
      %2023 = vmatpush1.bf16.msra.mxu0 %v660
      %2024 = vmatprep.subr.bf16.mxu0 0
      %2025 = vmatpush1.bf16.msra.mxu0 %v661
      %2026 = vmatprep.subr.bf16.mxu0 0
      %2027 = vmatpush1.bf16.msra.mxu0 %v662
      %2028 = vmatprep.subr.bf16.mxu0 0
      %2029 = vmatpush1.bf16.msra.mxu0 %v663
      %2030 = vmatprep.subr.bf16.mxu0 0
      %2031 = vmatpush1.bf16.msra.mxu0 %v664
      %2032 = vmatprep.subr.bf16.mxu0 0
      %2033 = vmatpush1.bf16.msra.mxu0 %v665
      %2034 = vmatprep.mubr.bf16.mxu0 %v1999
      %2035 = vmatmul.mubr.bf16.gmra.mrb[0].mxu0 %v1998
      %v2036 = vpop.f32.mrb[0].mxu0
      %v2037 = vadd.f32 %v574, %v2036
      %v2038 = vpop.f32.mrb[0].mxu0
      %v2039 = vpop.f32.mrb[0].mxu0
      %v2040 = vadd.f32 %v574, %v2039
      %v2041 = vpop.f32.mrb[0].mxu0
      %2042 = vdwg.mxu0
      %v2043 = vmax.f32 %v2037, 0.0
      %v2044 = vmax.f32 %v2040, 0.0
      %v2045 = vpack.c.bf16 %v2044, %v2043
      %s2046 = scalar_lea.vmem %s501, 320
      %v2047 = vld [vmem:[%s2046] sm:$0xff]
      %v2048 = vld [vmem:[%s2046 + $0x8] sm:$0xff]
      %v2049 = vld [vmem:[%s2046 + $0x10] sm:$0xff]
      %v2050 = vld [vmem:[%s2046 + $0x18] sm:$0xff]
      %v2055 = vunpack.c.l.b16 %v2047
      %v2056 = vunpack.c.h.b16 %v2047
      %v2057 = vunpack.c.l.b16 %v2048
      %v2058 = vunpack.c.h.b16 %v2048
      %v2059 = vunpack.c.l.b16 %v2049
      %v2060 = vunpack.c.h.b16 %v2049
      %v2061 = vunpack.c.l.b16 %v2050
      %v2062 = vunpack.c.h.b16 %v2050
      %v2063 = vpack.c.b16 %v2057, %v2055
      %v2064 = vpack.c.b16 %v2058, %v2056
      %v2065 = vpack.c.b16 %v2061, %v2059
      %v2066 = vpack.c.b16 %v2062, %v2060
      %v2072 = vsel %vm750, %v2045, 0
      %2074 = vmatprep.subr.bf16.mxu0 %v2064
      %2075 = vmatpush1.bf16.msra.mxu0 %v2063
      %2076 = vmatprep.subr.bf16.mxu0 %v2066
      %2077 = vmatpush1.bf16.msra.mxu0 %v2065
      %2078 = vmatprep.subr.bf16.mxu0 0
      %2079 = vmatpush1.bf16.msra.mxu0 0
      %2080 = vmatprep.subr.bf16.mxu0 0
      %2081 = vmatpush1.bf16.msra.mxu0 0
      %2082 = vmatprep.subr.bf16.mxu0 0
      %2083 = vmatpush1.bf16.msra.mxu0 0
      %2084 = vmatprep.subr.bf16.mxu0 0
      %2085 = vmatpush1.bf16.msra.mxu0 0
      %2086 = vmatprep.subr.bf16.mxu0 0
      %2087 = vmatpush1.bf16.msra.mxu0 0
      %2088 = vmatprep.subr.bf16.mxu0 0
      %2089 = vmatpush1.bf16.msra.mxu0 0
      %2090 = vmatprep.subr.bf16.mxu0 0
      %2091 = vmatpush1.bf16.msra.mxu0 0
      %2092 = vmatprep.subr.bf16.mxu0 0
      %2093 = vmatpush1.bf16.msra.mxu0 0
      %2094 = vmatprep.subr.bf16.mxu0 0
      %2095 = vmatpush1.bf16.msra.mxu0 0
      %2096 = vmatprep.subr.bf16.mxu0 0
      %2097 = vmatpush1.bf16.msra.mxu0 0
      %2098 = vmatprep.subr.bf16.mxu0 0
      %2099 = vmatpush1.bf16.msra.mxu0 0
      %2100 = vmatprep.subr.bf16.mxu0 0
      %2101 = vmatpush1.bf16.msra.mxu0 0
      %2102 = vmatprep.subr.bf16.mxu0 0
      %2103 = vmatpush1.bf16.msra.mxu0 0
      %2104 = vmatprep.subr.bf16.mxu0 0
      %2105 = vmatpush1.bf16.msra.mxu0 0
      %2106 = vmatprep.mubr.bf16.mxu0 0
      %2107 = vmatmul.mubr.bf16.gmra.mrb[0].mxu0 %v2072
      %v2108 = vpop.f32.mrb[0].mxu0
      %v2109 = vadd.f32 0.0, %v2108
      %v2110 = vpop.f32.mrb[0].mxu0
      %v2111 = vadd.f32 0.0, %v2110
      %v2112 = vpop.f32.mrb[0].mxu0
      %v2113 = vadd.f32 0.0, %v2112
      %v2114 = vpop.f32.mrb[0].mxu0
      %v2115 = vadd.f32 0.0, %v2114
      %2116 = vdwg.mxu0
      %v2117 = vadd.f32 %v1985, %v2109
      %v2118 = vadd.f32 %v1986, %v2111
      %v2119 = vadd.f32 %v1987, %v2113
      %v2120 = vadd.f32 %v1988, %v2115
      %s2121 = scalar_lea.vmem %s493, 176
      %v2122 = vld [vmem:[%s2121] sm:$0xff]
      %v2123 = vld [vmem:[%s2121 + $0x8] sm:$0xff]
      %v2126 = vunpack.c.l.b16 %v2122
      %v2127 = vunpack.c.h.b16 %v2122
      %v2128 = vunpack.c.l.b16 %v2123
      %v2129 = vunpack.c.h.b16 %v2123
      %v2130 = vpack.c.b16 %v2128, %v2126
      %v2131 = vpack.c.b16 %v2129, %v2127
      %2134 = vmatprep.subr.bf16.mxu0 0
      %2135 = vmatpush1.bf16.msra.mxu0 %v650
      %2136 = vmatprep.subr.bf16.mxu0 0
      %2137 = vmatpush1.bf16.msra.mxu0 %v651
      %2138 = vmatprep.subr.bf16.mxu0 0
      %2139 = vmatpush1.bf16.msra.mxu0 %v652
      %2140 = vmatprep.subr.bf16.mxu0 0
      %2141 = vmatpush1.bf16.msra.mxu0 %v653
      %2142 = vmatprep.subr.bf16.mxu0 0
      %2143 = vmatpush1.bf16.msra.mxu0 %v654
      %2144 = vmatprep.subr.bf16.mxu0 0
      %2145 = vmatpush1.bf16.msra.mxu0 %v655
      %2146 = vmatprep.subr.bf16.mxu0 0
      %2147 = vmatpush1.bf16.msra.mxu0 %v656
      %2148 = vmatprep.subr.bf16.mxu0 0
      %2149 = vmatpush1.bf16.msra.mxu0 %v657
      %2150 = vmatprep.subr.bf16.mxu0 0
      %2151 = vmatpush1.bf16.msra.mxu0 %v658
      %2152 = vmatprep.subr.bf16.mxu0 0
      %2153 = vmatpush1.bf16.msra.mxu0 %v659
      %2154 = vmatprep.subr.bf16.mxu0 0
      %2155 = vmatpush1.bf16.msra.mxu0 %v660
      %2156 = vmatprep.subr.bf16.mxu0 0
      %2157 = vmatpush1.bf16.msra.mxu0 %v661
      %2158 = vmatprep.subr.bf16.mxu0 0
      %2159 = vmatpush1.bf16.msra.mxu0 %v662
      %2160 = vmatprep.subr.bf16.mxu0 0
      %2161 = vmatpush1.bf16.msra.mxu0 %v663
      %2162 = vmatprep.subr.bf16.mxu0 0
      %2163 = vmatpush1.bf16.msra.mxu0 %v664
      %2164 = vmatprep.subr.bf16.mxu0 0
      %2165 = vmatpush1.bf16.msra.mxu0 %v665
      %2166 = vmatprep.mubr.bf16.mxu0 %v2131
      %2167 = vmatmul.mubr.bf16.gmra.mrb[0].mxu0 %v2130
      %v2168 = vpop.f32.mrb[0].mxu0
      %v2169 = vadd.f32 %v574, %v2168
      %v2170 = vpop.f32.mrb[0].mxu0
      %v2171 = vpop.f32.mrb[0].mxu0
      %v2172 = vadd.f32 %v574, %v2171
      %v2173 = vpop.f32.mrb[0].mxu0
      %2174 = vdwg.mxu0
      %v2175 = vmax.f32 %v2169, 0.0
      %v2176 = vmax.f32 %v2172, 0.0
      %v2177 = vpack.c.bf16 %v2176, %v2175
      %s2178 = scalar_lea.vmem %s501, 352
      %v2179 = vld [vmem:[%s2178] sm:$0xff]
      %v2180 = vld [vmem:[%s2178 + $0x8] sm:$0xff]
      %v2181 = vld [vmem:[%s2178 + $0x10] sm:$0xff]
      %v2182 = vld [vmem:[%s2178 + $0x18] sm:$0xff]
      %v2187 = vunpack.c.l.b16 %v2179
      %v2188 = vunpack.c.h.b16 %v2179
      %v2189 = vunpack.c.l.b16 %v2180
      %v2190 = vunpack.c.h.b16 %v2180
      %v2191 = vunpack.c.l.b16 %v2181
      %v2192 = vunpack.c.h.b16 %v2181
      %v2193 = vunpack.c.l.b16 %v2182
      %v2194 = vunpack.c.h.b16 %v2182
      %v2195 = vpack.c.b16 %v2189, %v2187
      %v2196 = vpack.c.b16 %v2190, %v2188
      %v2197 = vpack.c.b16 %v2193, %v2191
      %v2198 = vpack.c.b16 %v2194, %v2192
      %v2204 = vsel %vm750, %v2177, 0
      %2206 = vmatprep.subr.bf16.mxu0 %v2196
      %2207 = vmatpush1.bf16.msra.mxu0 %v2195
      %2208 = vmatprep.subr.bf16.mxu0 %v2198
      %2209 = vmatpush1.bf16.msra.mxu0 %v2197
      %2210 = vmatprep.subr.bf16.mxu0 0
      %2211 = vmatpush1.bf16.msra.mxu0 0
      %2212 = vmatprep.subr.bf16.mxu0 0
      %2213 = vmatpush1.bf16.msra.mxu0 0
      %2214 = vmatprep.subr.bf16.mxu0 0
      %2215 = vmatpush1.bf16.msra.mxu0 0
      %2216 = vmatprep.subr.bf16.mxu0 0
      %2217 = vmatpush1.bf16.msra.mxu0 0
      %2218 = vmatprep.subr.bf16.mxu0 0
      %2219 = vmatpush1.bf16.msra.mxu0 0
      %2220 = vmatprep.subr.bf16.mxu0 0
      %2221 = vmatpush1.bf16.msra.mxu0 0
      %2222 = vmatprep.subr.bf16.mxu0 0
      %2223 = vmatpush1.bf16.msra.mxu0 0
      %2224 = vmatprep.subr.bf16.mxu0 0
      %2225 = vmatpush1.bf16.msra.mxu0 0
      %2226 = vmatprep.subr.bf16.mxu0 0
      %2227 = vmatpush1.bf16.msra.mxu0 0
      %2228 = vmatprep.subr.bf16.mxu0 0
      %2229 = vmatpush1.bf16.msra.mxu0 0
      %2230 = vmatprep.subr.bf16.mxu0 0
      %2231 = vmatpush1.bf16.msra.mxu0 0
      %2232 = vmatprep.subr.bf16.mxu0 0
      %2233 = vmatpush1.bf16.msra.mxu0 0
      %2234 = vmatprep.subr.bf16.mxu0 0
      %2235 = vmatpush1.bf16.msra.mxu0 0
      %2236 = vmatprep.subr.bf16.mxu0 0
      %2237 = vmatpush1.bf16.msra.mxu0 0
      %2238 = vmatprep.mubr.bf16.mxu0 0
      %2239 = vmatmul.mubr.bf16.gmra.mrb[0].mxu0 %v2204
      %v2240 = vpop.f32.mrb[0].mxu0
      %v2241 = vadd.f32 0.0, %v2240
      %v2242 = vpop.f32.mrb[0].mxu0
      %v2243 = vadd.f32 0.0, %v2242
      %v2244 = vpop.f32.mrb[0].mxu0
      %v2245 = vadd.f32 0.0, %v2244
      %v2246 = vpop.f32.mrb[0].mxu0
      %v2247 = vadd.f32 0.0, %v2246
      %2248 = vdwg.mxu0
      %v2249 = vadd.f32 %v2117, %v2241
      %v2250 = vadd.f32 %v2118, %v2243
      %v2251 = vadd.f32 %v2119, %v2245
      %v2252 = vadd.f32 %v2120, %v2247
      %s2253 = scalar_lea.vmem %s493, 192
      %v2254 = vld [vmem:[%s2253] sm:$0xff]
      %v2255 = vld [vmem:[%s2253 + $0x8] sm:$0xff]
      %v2258 = vunpack.c.l.b16 %v2254
      %v2259 = vunpack.c.h.b16 %v2254
      %v2260 = vunpack.c.l.b16 %v2255
      %v2261 = vunpack.c.h.b16 %v2255
      %v2262 = vpack.c.b16 %v2260, %v2258
      %v2263 = vpack.c.b16 %v2261, %v2259
      %2266 = vmatprep.subr.bf16.mxu0 0
      %2267 = vmatpush1.bf16.msra.mxu0 %v650
      %2268 = vmatprep.subr.bf16.mxu0 0
      %2269 = vmatpush1.bf16.msra.mxu0 %v651
      %2270 = vmatprep.subr.bf16.mxu0 0
      %2271 = vmatpush1.bf16.msra.mxu0 %v652
      %2272 = vmatprep.subr.bf16.mxu0 0
      %2273 = vmatpush1.bf16.msra.mxu0 %v653
      %2274 = vmatprep.subr.bf16.mxu0 0
      %2275 = vmatpush1.bf16.msra.mxu0 %v654
      %2276 = vmatprep.subr.bf16.mxu0 0
      %2277 = vmatpush1.bf16.msra.mxu0 %v655
      %2278 = vmatprep.subr.bf16.mxu0 0
      %2279 = vmatpush1.bf16.msra.mxu0 %v656
      %2280 = vmatprep.subr.bf16.mxu0 0
      %2281 = vmatpush1.bf16.msra.mxu0 %v657
      %2282 = vmatprep.subr.bf16.mxu0 0
      %2283 = vmatpush1.bf16.msra.mxu0 %v658
      %2284 = vmatprep.subr.bf16.mxu0 0
      %2285 = vmatpush1.bf16.msra.mxu0 %v659
      %2286 = vmatprep.subr.bf16.mxu0 0
      %2287 = vmatpush1.bf16.msra.mxu0 %v660
      %2288 = vmatprep.subr.bf16.mxu0 0
      %2289 = vmatpush1.bf16.msra.mxu0 %v661
      %2290 = vmatprep.subr.bf16.mxu0 0
      %2291 = vmatpush1.bf16.msra.mxu0 %v662
      %2292 = vmatprep.subr.bf16.mxu0 0
      %2293 = vmatpush1.bf16.msra.mxu0 %v663
      %2294 = vmatprep.subr.bf16.mxu0 0
      %2295 = vmatpush1.bf16.msra.mxu0 %v664
      %2296 = vmatprep.subr.bf16.mxu0 0
      %2297 = vmatpush1.bf16.msra.mxu0 %v665
      %2298 = vmatprep.mubr.bf16.mxu0 %v2263
      %2299 = vmatmul.mubr.bf16.gmra.mrb[0].mxu0 %v2262
      %v2300 = vpop.f32.mrb[0].mxu0
      %v2301 = vadd.f32 %v574, %v2300
      %v2302 = vpop.f32.mrb[0].mxu0
      %v2303 = vpop.f32.mrb[0].mxu0
      %v2304 = vadd.f32 %v574, %v2303
      %v2305 = vpop.f32.mrb[0].mxu0
      %2306 = vdwg.mxu0
      %v2307 = vmax.f32 %v2301, 0.0
      %v2308 = vmax.f32 %v2304, 0.0
      %v2309 = vpack.c.bf16 %v2308, %v2307
      %s2310 = scalar_lea.vmem %s501, 384
      %v2311 = vld [vmem:[%s2310] sm:$0xff]
      %v2312 = vld [vmem:[%s2310 + $0x8] sm:$0xff]
      %v2313 = vld [vmem:[%s2310 + $0x10] sm:$0xff]
      %v2314 = vld [vmem:[%s2310 + $0x18] sm:$0xff]
      %v2319 = vunpack.c.l.b16 %v2311
      %v2320 = vunpack.c.h.b16 %v2311
      %v2321 = vunpack.c.l.b16 %v2312
      %v2322 = vunpack.c.h.b16 %v2312
      %v2323 = vunpack.c.l.b16 %v2313
      %v2324 = vunpack.c.h.b16 %v2313
      %v2325 = vunpack.c.l.b16 %v2314
      %v2326 = vunpack.c.h.b16 %v2314
      %v2327 = vpack.c.b16 %v2321, %v2319
      %v2328 = vpack.c.b16 %v2322, %v2320
      %v2329 = vpack.c.b16 %v2325, %v2323
      %v2330 = vpack.c.b16 %v2326, %v2324
      %v2336 = vsel %vm750, %v2309, 0
      %2338 = vmatprep.subr.bf16.mxu0 %v2328
      %2339 = vmatpush1.bf16.msra.mxu0 %v2327
      %2340 = vmatprep.subr.bf16.mxu0 %v2330
      %2341 = vmatpush1.bf16.msra.mxu0 %v2329
      %2342 = vmatprep.subr.bf16.mxu0 0
      %2343 = vmatpush1.bf16.msra.mxu0 0
      %2344 = vmatprep.subr.bf16.mxu0 0
      %2345 = vmatpush1.bf16.msra.mxu0 0
      %2346 = vmatprep.subr.bf16.mxu0 0
      %2347 = vmatpush1.bf16.msra.mxu0 0
      %2348 = vmatprep.subr.bf16.mxu0 0
      %2349 = vmatpush1.bf16.msra.mxu0 0
      %2350 = vmatprep.subr.bf16.mxu0 0
      %2351 = vmatpush1.bf16.msra.mxu0 0
      %2352 = vmatprep.subr.bf16.mxu0 0
      %2353 = vmatpush1.bf16.msra.mxu0 0
      %2354 = vmatprep.subr.bf16.mxu0 0
      %2355 = vmatpush1.bf16.msra.mxu0 0
      %2356 = vmatprep.subr.bf16.mxu0 0
      %2357 = vmatpush1.bf16.msra.mxu0 0
      %2358 = vmatprep.subr.bf16.mxu0 0
      %2359 = vmatpush1.bf16.msra.mxu0 0
      %2360 = vmatprep.subr.bf16.mxu0 0
      %2361 = vmatpush1.bf16.msra.mxu0 0
      %2362 = vmatprep.subr.bf16.mxu0 0
      %2363 = vmatpush1.bf16.msra.mxu0 0
      %2364 = vmatprep.subr.bf16.mxu0 0
      %2365 = vmatpush1.bf16.msra.mxu0 0
      %2366 = vmatprep.subr.bf16.mxu0 0
      %2367 = vmatpush1.bf16.msra.mxu0 0
      %2368 = vmatprep.subr.bf16.mxu0 0
      %2369 = vmatpush1.bf16.msra.mxu0 0
      %2370 = vmatprep.mubr.bf16.mxu0 0
      %2371 = vmatmul.mubr.bf16.gmra.mrb[0].mxu0 %v2336
      %v2372 = vpop.f32.mrb[0].mxu0
      %v2373 = vadd.f32 0.0, %v2372
      %v2374 = vpop.f32.mrb[0].mxu0
      %v2375 = vadd.f32 0.0, %v2374
      %v2376 = vpop.f32.mrb[0].mxu0
      %v2377 = vadd.f32 0.0, %v2376
      %v2378 = vpop.f32.mrb[0].mxu0
      %v2379 = vadd.f32 0.0, %v2378
      %2380 = vdwg.mxu0
      %v2381 = vadd.f32 %v2249, %v2373
      %v2382 = vadd.f32 %v2250, %v2375
      %v2383 = vadd.f32 %v2251, %v2377
      %v2384 = vadd.f32 %v2252, %v2379
      %s2385 = scalar_lea.vmem %s493, 208
      %v2386 = vld [vmem:[%s2385] sm:$0xff]
      %v2387 = vld [vmem:[%s2385 + $0x8] sm:$0xff]
      %v2390 = vunpack.c.l.b16 %v2386
      %v2391 = vunpack.c.h.b16 %v2386
      %v2392 = vunpack.c.l.b16 %v2387
      %v2393 = vunpack.c.h.b16 %v2387
      %v2394 = vpack.c.b16 %v2392, %v2390
      %v2395 = vpack.c.b16 %v2393, %v2391
      %2398 = vmatprep.subr.bf16.mxu0 0
      %2399 = vmatpush1.bf16.msra.mxu0 %v650
      %2400 = vmatprep.subr.bf16.mxu0 0
      %2401 = vmatpush1.bf16.msra.mxu0 %v651
      %2402 = vmatprep.subr.bf16.mxu0 0
      %2403 = vmatpush1.bf16.msra.mxu0 %v652
      %2404 = vmatprep.subr.bf16.mxu0 0
      %2405 = vmatpush1.bf16.msra.mxu0 %v653
      %2406 = vmatprep.subr.bf16.mxu0 0
      %2407 = vmatpush1.bf16.msra.mxu0 %v654
      %2408 = vmatprep.subr.bf16.mxu0 0
      %2409 = vmatpush1.bf16.msra.mxu0 %v655
      %2410 = vmatprep.subr.bf16.mxu0 0
      %2411 = vmatpush1.bf16.msra.mxu0 %v656
      %2412 = vmatprep.subr.bf16.mxu0 0
      %2413 = vmatpush1.bf16.msra.mxu0 %v657
      %2414 = vmatprep.subr.bf16.mxu0 0
      %2415 = vmatpush1.bf16.msra.mxu0 %v658
      %2416 = vmatprep.subr.bf16.mxu0 0
      %2417 = vmatpush1.bf16.msra.mxu0 %v659
      %2418 = vmatprep.subr.bf16.mxu0 0
      %2419 = vmatpush1.bf16.msra.mxu0 %v660
      %2420 = vmatprep.subr.bf16.mxu0 0
      %2421 = vmatpush1.bf16.msra.mxu0 %v661
      %2422 = vmatprep.subr.bf16.mxu0 0
      %2423 = vmatpush1.bf16.msra.mxu0 %v662
      %2424 = vmatprep.subr.bf16.mxu0 0
      %2425 = vmatpush1.bf16.msra.mxu0 %v663
      %2426 = vmatprep.subr.bf16.mxu0 0
      %2427 = vmatpush1.bf16.msra.mxu0 %v664
      %2428 = vmatprep.subr.bf16.mxu0 0
      %2429 = vmatpush1.bf16.msra.mxu0 %v665
      %2430 = vmatprep.mubr.bf16.mxu0 %v2395
      %2431 = vmatmul.mubr.bf16.gmra.mrb[0].mxu0 %v2394
      %v2432 = vpop.f32.mrb[0].mxu0
      %v2433 = vadd.f32 %v574, %v2432
      %v2434 = vpop.f32.mrb[0].mxu0
      %v2435 = vpop.f32.mrb[0].mxu0
      %v2436 = vadd.f32 %v574, %v2435
      %v2437 = vpop.f32.mrb[0].mxu0
      %2438 = vdwg.mxu0
      %v2439 = vmax.f32 %v2433, 0.0
      %v2440 = vmax.f32 %v2436, 0.0
      %v2441 = vpack.c.bf16 %v2440, %v2439
      %s2442 = scalar_lea.vmem %s501, 416
      %v2443 = vld [vmem:[%s2442] sm:$0xff]
      %v2444 = vld [vmem:[%s2442 + $0x8] sm:$0xff]
      %v2445 = vld [vmem:[%s2442 + $0x10] sm:$0xff]
      %v2446 = vld [vmem:[%s2442 + $0x18] sm:$0xff]
      %v2451 = vunpack.c.l.b16 %v2443
      %v2452 = vunpack.c.h.b16 %v2443
      %v2453 = vunpack.c.l.b16 %v2444
      %v2454 = vunpack.c.h.b16 %v2444
      %v2455 = vunpack.c.l.b16 %v2445
      %v2456 = vunpack.c.h.b16 %v2445
      %v2457 = vunpack.c.l.b16 %v2446
      %v2458 = vunpack.c.h.b16 %v2446
      %v2459 = vpack.c.b16 %v2453, %v2451
      %v2460 = vpack.c.b16 %v2454, %v2452
      %v2461 = vpack.c.b16 %v2457, %v2455
      %v2462 = vpack.c.b16 %v2458, %v2456
      %v2468 = vsel %vm750, %v2441, 0
      %2470 = vmatprep.subr.bf16.mxu0 %v2460
      %2471 = vmatpush1.bf16.msra.mxu0 %v2459
      %2472 = vmatprep.subr.bf16.mxu0 %v2462
      %2473 = vmatpush1.bf16.msra.mxu0 %v2461
      %2474 = vmatprep.subr.bf16.mxu0 0
      %2475 = vmatpush1.bf16.msra.mxu0 0
      %2476 = vmatprep.subr.bf16.mxu0 0
      %2477 = vmatpush1.bf16.msra.mxu0 0
      %2478 = vmatprep.subr.bf16.mxu0 0
      %2479 = vmatpush1.bf16.msra.mxu0 0
      %2480 = vmatprep.subr.bf16.mxu0 0
      %2481 = vmatpush1.bf16.msra.mxu0 0
      %2482 = vmatprep.subr.bf16.mxu0 0
      %2483 = vmatpush1.bf16.msra.mxu0 0
      %2484 = vmatprep.subr.bf16.mxu0 0
      %2485 = vmatpush1.bf16.msra.mxu0 0
      %2486 = vmatprep.subr.bf16.mxu0 0
      %2487 = vmatpush1.bf16.msra.mxu0 0
      %2488 = vmatprep.subr.bf16.mxu0 0
      %2489 = vmatpush1.bf16.msra.mxu0 0
      %2490 = vmatprep.subr.bf16.mxu0 0
      %2491 = vmatpush1.bf16.msra.mxu0 0
      %2492 = vmatprep.subr.bf16.mxu0 0
      %2493 = vmatpush1.bf16.msra.mxu0 0
      %2494 = vmatprep.subr.bf16.mxu0 0
      %2495 = vmatpush1.bf16.msra.mxu0 0
      %2496 = vmatprep.subr.bf16.mxu0 0
      %2497 = vmatpush1.bf16.msra.mxu0 0
      %2498 = vmatprep.subr.bf16.mxu0 0
      %2499 = vmatpush1.bf16.msra.mxu0 0
      %2500 = vmatprep.subr.bf16.mxu0 0
      %2501 = vmatpush1.bf16.msra.mxu0 0
      %2502 = vmatprep.mubr.bf16.mxu0 0
      %2503 = vmatmul.mubr.bf16.gmra.mrb[0].mxu0 %v2468
      %v2504 = vpop.f32.mrb[0].mxu0
      %v2505 = vadd.f32 0.0, %v2504
      %v2506 = vpop.f32.mrb[0].mxu0
      %v2507 = vadd.f32 0.0, %v2506
      %v2508 = vpop.f32.mrb[0].mxu0
      %v2509 = vadd.f32 0.0, %v2508
      %v2510 = vpop.f32.mrb[0].mxu0
      %v2511 = vadd.f32 0.0, %v2510
      %2512 = vdwg.mxu0
      %v2513 = vadd.f32 %v2381, %v2505
      %v2514 = vadd.f32 %v2382, %v2507
      %v2515 = vadd.f32 %v2383, %v2509
      %v2516 = vadd.f32 %v2384, %v2511
      %s2517 = scalar_lea.vmem %s493, 224
      %v2518 = vld [vmem:[%s2517] sm:$0xff]
      %v2519 = vld [vmem:[%s2517 + $0x8] sm:$0xff]
      %v2522 = vunpack.c.l.b16 %v2518
      %v2523 = vunpack.c.h.b16 %v2518
      %v2524 = vunpack.c.l.b16 %v2519
      %v2525 = vunpack.c.h.b16 %v2519
      %v2526 = vpack.c.b16 %v2524, %v2522
      %v2527 = vpack.c.b16 %v2525, %v2523
      %2530 = vmatprep.subr.bf16.mxu0 0
      %2531 = vmatpush1.bf16.msra.mxu0 %v650
      %2532 = vmatprep.subr.bf16.mxu0 0
      %2533 = vmatpush1.bf16.msra.mxu0 %v651
      %2534 = vmatprep.subr.bf16.mxu0 0
      %2535 = vmatpush1.bf16.msra.mxu0 %v652
      %2536 = vmatprep.subr.bf16.mxu0 0
      %2537 = vmatpush1.bf16.msra.mxu0 %v653
      %2538 = vmatprep.subr.bf16.mxu0 0
      %2539 = vmatpush1.bf16.msra.mxu0 %v654
      %2540 = vmatprep.subr.bf16.mxu0 0
      %2541 = vmatpush1.bf16.msra.mxu0 %v655
      %2542 = vmatprep.subr.bf16.mxu0 0
      %2543 = vmatpush1.bf16.msra.mxu0 %v656
      %2544 = vmatprep.subr.bf16.mxu0 0
      %2545 = vmatpush1.bf16.msra.mxu0 %v657
      %2546 = vmatprep.subr.bf16.mxu0 0
      %2547 = vmatpush1.bf16.msra.mxu0 %v658
      %2548 = vmatprep.subr.bf16.mxu0 0
      %2549 = vmatpush1.bf16.msra.mxu0 %v659
      %2550 = vmatprep.subr.bf16.mxu0 0
      %2551 = vmatpush1.bf16.msra.mxu0 %v660
      %2552 = vmatprep.subr.bf16.mxu0 0
      %2553 = vmatpush1.bf16.msra.mxu0 %v661
      %2554 = vmatprep.subr.bf16.mxu0 0
      %2555 = vmatpush1.bf16.msra.mxu0 %v662
      %2556 = vmatprep.subr.bf16.mxu0 0
      %2557 = vmatpush1.bf16.msra.mxu0 %v663
      %2558 = vmatprep.subr.bf16.mxu0 0
      %2559 = vmatpush1.bf16.msra.mxu0 %v664
      %2560 = vmatprep.subr.bf16.mxu0 0
      %2561 = vmatpush1.bf16.msra.mxu0 %v665
      %2562 = vmatprep.mubr.bf16.mxu0 %v2527
      %2563 = vmatmul.mubr.bf16.gmra.mrb[0].mxu0 %v2526
      %v2564 = vpop.f32.mrb[0].mxu0
      %v2565 = vadd.f32 %v574, %v2564
      %v2566 = vpop.f32.mrb[0].mxu0
      %v2567 = vpop.f32.mrb[0].mxu0
      %v2568 = vadd.f32 %v574, %v2567
      %v2569 = vpop.f32.mrb[0].mxu0
      %2570 = vdwg.mxu0
      %v2571 = vmax.f32 %v2565, 0.0
      %v2572 = vmax.f32 %v2568, 0.0
      %v2573 = vpack.c.bf16 %v2572, %v2571
      %s2574 = scalar_lea.vmem %s501, 448
      %v2575 = vld [vmem:[%s2574] sm:$0xff]
      %v2576 = vld [vmem:[%s2574 + $0x8] sm:$0xff]
      %v2577 = vld [vmem:[%s2574 + $0x10] sm:$0xff]
      %v2578 = vld [vmem:[%s2574 + $0x18] sm:$0xff]
      %v2583 = vunpack.c.l.b16 %v2575
      %v2584 = vunpack.c.h.b16 %v2575
      %v2585 = vunpack.c.l.b16 %v2576
      %v2586 = vunpack.c.h.b16 %v2576
      %v2587 = vunpack.c.l.b16 %v2577
      %v2588 = vunpack.c.h.b16 %v2577
      %v2589 = vunpack.c.l.b16 %v2578
      %v2590 = vunpack.c.h.b16 %v2578
      %v2591 = vpack.c.b16 %v2585, %v2583
      %v2592 = vpack.c.b16 %v2586, %v2584
      %v2593 = vpack.c.b16 %v2589, %v2587
      %v2594 = vpack.c.b16 %v2590, %v2588
      %v2600 = vsel %vm750, %v2573, 0
      %2602 = vmatprep.subr.bf16.mxu0 %v2592
      %2603 = vmatpush1.bf16.msra.mxu0 %v2591
      %2604 = vmatprep.subr.bf16.mxu0 %v2594
      %2605 = vmatpush1.bf16.msra.mxu0 %v2593
      %2606 = vmatprep.subr.bf16.mxu0 0
      %2607 = vmatpush1.bf16.msra.mxu0 0
      %2608 = vmatprep.subr.bf16.mxu0 0
      %2609 = vmatpush1.bf16.msra.mxu0 0
      %2610 = vmatprep.subr.bf16.mxu0 0
      %2611 = vmatpush1.bf16.msra.mxu0 0
      %2612 = vmatprep.subr.bf16.mxu0 0
      %2613 = vmatpush1.bf16.msra.mxu0 0
      %2614 = vmatprep.subr.bf16.mxu0 0
      %2615 = vmatpush1.bf16.msra.mxu0 0
      %2616 = vmatprep.subr.bf16.mxu0 0
      %2617 = vmatpush1.bf16.msra.mxu0 0
      %2618 = vmatprep.subr.bf16.mxu0 0
      %2619 = vmatpush1.bf16.msra.mxu0 0
      %2620 = vmatprep.subr.bf16.mxu0 0
      %2621 = vmatpush1.bf16.msra.mxu0 0
      %2622 = vmatprep.subr.bf16.mxu0 0
      %2623 = vmatpush1.bf16.msra.mxu0 0
      %2624 = vmatprep.subr.bf16.mxu0 0
      %2625 = vmatpush1.bf16.msra.mxu0 0
      %2626 = vmatprep.subr.bf16.mxu0 0
      %2627 = vmatpush1.bf16.msra.mxu0 0
      %2628 = vmatprep.subr.bf16.mxu0 0
      %2629 = vmatpush1.bf16.msra.mxu0 0
      %2630 = vmatprep.subr.bf16.mxu0 0
      %2631 = vmatpush1.bf16.msra.mxu0 0
      %2632 = vmatprep.subr.bf16.mxu0 0
      %2633 = vmatpush1.bf16.msra.mxu0 0
      %2634 = vmatprep.mubr.bf16.mxu0 0
      %2635 = vmatmul.mubr.bf16.gmra.mrb[0].mxu0 %v2600
      %v2636 = vpop.f32.mrb[0].mxu0
      %v2637 = vadd.f32 0.0, %v2636
      %v2638 = vpop.f32.mrb[0].mxu0
      %v2639 = vadd.f32 0.0, %v2638
      %v2640 = vpop.f32.mrb[0].mxu0
      %v2641 = vadd.f32 0.0, %v2640
      %v2642 = vpop.f32.mrb[0].mxu0
      %v2643 = vadd.f32 0.0, %v2642
      %2644 = vdwg.mxu0
      %v2645 = vadd.f32 %v2513, %v2637
      %v2646 = vadd.f32 %v2514, %v2639
      %v2647 = vadd.f32 %v2515, %v2641
      %v2648 = vadd.f32 %v2516, %v2643
      %s2649 = scalar_lea.vmem %s493, 240
      %v2650 = vld [vmem:[%s2649] sm:$0xff]
      %v2651 = vld [vmem:[%s2649 + $0x8] sm:$0xff]
      %v2654 = vunpack.c.l.b16 %v2650
      %v2655 = vunpack.c.h.b16 %v2650
      %v2656 = vunpack.c.l.b16 %v2651
      %v2657 = vunpack.c.h.b16 %v2651
      %v2658 = vpack.c.b16 %v2656, %v2654
      %v2659 = vpack.c.b16 %v2657, %v2655
      %2662 = vmatprep.subr.bf16.mxu0 0
      %2663 = vmatpush1.bf16.msra.mxu0 %v650
      %2664 = vmatprep.subr.bf16.mxu0 0
      %2665 = vmatpush1.bf16.msra.mxu0 %v651
      %2666 = vmatprep.subr.bf16.mxu0 0
      %2667 = vmatpush1.bf16.msra.mxu0 %v652
      %2668 = vmatprep.subr.bf16.mxu0 0
      %2669 = vmatpush1.bf16.msra.mxu0 %v653
      %2670 = vmatprep.subr.bf16.mxu0 0
      %2671 = vmatpush1.bf16.msra.mxu0 %v654
      %2672 = vmatprep.subr.bf16.mxu0 0
      %2673 = vmatpush1.bf16.msra.mxu0 %v655
      %2674 = vmatprep.subr.bf16.mxu0 0
      %2675 = vmatpush1.bf16.msra.mxu0 %v656
      %2676 = vmatprep.subr.bf16.mxu0 0
      %2677 = vmatpush1.bf16.msra.mxu0 %v657
      %2678 = vmatprep.subr.bf16.mxu0 0
      %2679 = vmatpush1.bf16.msra.mxu0 %v658
      %2680 = vmatprep.subr.bf16.mxu0 0
      %2681 = vmatpush1.bf16.msra.mxu0 %v659
      %2682 = vmatprep.subr.bf16.mxu0 0
      %2683 = vmatpush1.bf16.msra.mxu0 %v660
      %2684 = vmatprep.subr.bf16.mxu0 0
      %2685 = vmatpush1.bf16.msra.mxu0 %v661
      %2686 = vmatprep.subr.bf16.mxu0 0
      %2687 = vmatpush1.bf16.msra.mxu0 %v662
      %2688 = vmatprep.subr.bf16.mxu0 0
      %2689 = vmatpush1.bf16.msra.mxu0 %v663
      %2690 = vmatprep.subr.bf16.mxu0 0
      %2691 = vmatpush1.bf16.msra.mxu0 %v664
      %2692 = vmatprep.subr.bf16.mxu0 0
      %2693 = vmatpush1.bf16.msra.mxu0 %v665
      %2694 = vmatprep.mubr.bf16.mxu0 %v2659
      %2695 = vmatmul.mubr.bf16.gmra.mrb[0].mxu0 %v2658
      %v2696 = vpop.f32.mrb[0].mxu0
      %v2697 = vadd.f32 %v574, %v2696
      %v2698 = vpop.f32.mrb[0].mxu0
      %v2699 = vpop.f32.mrb[0].mxu0
      %v2700 = vadd.f32 %v574, %v2699
      %v2701 = vpop.f32.mrb[0].mxu0
      %2702 = vdwg.mxu0
      %v2703 = vmax.f32 %v2697, 0.0
      %v2704 = vmax.f32 %v2700, 0.0
      %v2705 = vpack.c.bf16 %v2704, %v2703
      %s2706 = scalar_lea.vmem %s501, 480
      %v2707 = vld [vmem:[%s2706] sm:$0xff]
      %v2708 = vld [vmem:[%s2706 + $0x8] sm:$0xff]
      %v2709 = vld [vmem:[%s2706 + $0x10] sm:$0xff]
      %v2710 = vld [vmem:[%s2706 + $0x18] sm:$0xff]
      %v2715 = vunpack.c.l.b16 %v2707
      %v2716 = vunpack.c.h.b16 %v2707
      %v2717 = vunpack.c.l.b16 %v2708
      %v2718 = vunpack.c.h.b16 %v2708
      %v2719 = vunpack.c.l.b16 %v2709
      %v2720 = vunpack.c.h.b16 %v2709
      %v2721 = vunpack.c.l.b16 %v2710
      %v2722 = vunpack.c.h.b16 %v2710
      %v2723 = vpack.c.b16 %v2717, %v2715
      %v2724 = vpack.c.b16 %v2718, %v2716
      %v2725 = vpack.c.b16 %v2721, %v2719
      %v2726 = vpack.c.b16 %v2722, %v2720
      %v2732 = vsel %vm750, %v2705, 0
      %2734 = vmatprep.subr.bf16.mxu0 %v2724
      %2735 = vmatpush1.bf16.msra.mxu0 %v2723
      %2736 = vmatprep.subr.bf16.mxu0 %v2726
      %2737 = vmatpush1.bf16.msra.mxu0 %v2725
      %2738 = vmatprep.subr.bf16.mxu0 0
      %2739 = vmatpush1.bf16.msra.mxu0 0
      %2740 = vmatprep.subr.bf16.mxu0 0
      %2741 = vmatpush1.bf16.msra.mxu0 0
      %2742 = vmatprep.subr.bf16.mxu0 0
      %2743 = vmatpush1.bf16.msra.mxu0 0
      %2744 = vmatprep.subr.bf16.mxu0 0
      %2745 = vmatpush1.bf16.msra.mxu0 0
      %2746 = vmatprep.subr.bf16.mxu0 0
      %2747 = vmatpush1.bf16.msra.mxu0 0
      %2748 = vmatprep.subr.bf16.mxu0 0
      %2749 = vmatpush1.bf16.msra.mxu0 0
      %2750 = vmatprep.subr.bf16.mxu0 0
      %2751 = vmatpush1.bf16.msra.mxu0 0
      %2752 = vmatprep.subr.bf16.mxu0 0
      %2753 = vmatpush1.bf16.msra.mxu0 0
      %2754 = vmatprep.subr.bf16.mxu0 0
      %2755 = vmatpush1.bf16.msra.mxu0 0
      %2756 = vmatprep.subr.bf16.mxu0 0
      %2757 = vmatpush1.bf16.msra.mxu0 0
      %2758 = vmatprep.subr.bf16.mxu0 0
      %2759 = vmatpush1.bf16.msra.mxu0 0
      %2760 = vmatprep.subr.bf16.mxu0 0
      %2761 = vmatpush1.bf16.msra.mxu0 0
      %2762 = vmatprep.subr.bf16.mxu0 0
      %2763 = vmatpush1.bf16.msra.mxu0 0
      %2764 = vmatprep.subr.bf16.mxu0 0
      %2765 = vmatpush1.bf16.msra.mxu0 0
      %2766 = vmatprep.mubr.bf16.mxu0 0
      %2767 = vmatmul.mubr.bf16.gmra.mrb[0].mxu0 %v2732
      %v2768 = vpop.f32.mrb[0].mxu0
      %v2769 = vadd.f32 0.0, %v2768
      %v2770 = vpop.f32.mrb[0].mxu0
      %v2771 = vadd.f32 0.0, %v2770
      %v2772 = vpop.f32.mrb[0].mxu0
      %v2773 = vadd.f32 0.0, %v2772
      %v2774 = vpop.f32.mrb[0].mxu0
      %v2775 = vadd.f32 0.0, %v2774
      %2776 = vdwg.mxu0
      %v2777 = vadd.f32 %v2645, %v2769
      %v2778 = vadd.f32 %v2646, %v2771
      %v2779 = vadd.f32 %v2647, %v2773
      %v2780 = vadd.f32 %v2648, %v2775
      %s2781 = scalar_lea.vmem %s493, 256
      %v2782 = vld [vmem:[%s2781] sm:$0xff]
      %v2783 = vld [vmem:[%s2781 + $0x8] sm:$0xff]
      %v2786 = vunpack.c.l.b16 %v2782
      %v2787 = vunpack.c.h.b16 %v2782
      %v2788 = vunpack.c.l.b16 %v2783
      %v2789 = vunpack.c.h.b16 %v2783
      %v2790 = vpack.c.b16 %v2788, %v2786
      %v2791 = vpack.c.b16 %v2789, %v2787
      %2794 = vmatprep.subr.bf16.mxu0 0
      %2795 = vmatpush1.bf16.msra.mxu0 %v650
      %2796 = vmatprep.subr.bf16.mxu0 0
      %2797 = vmatpush1.bf16.msra.mxu0 %v651
      %2798 = vmatprep.subr.bf16.mxu0 0
      %2799 = vmatpush1.bf16.msra.mxu0 %v652
      %2800 = vmatprep.subr.bf16.mxu0 0
      %2801 = vmatpush1.bf16.msra.mxu0 %v653
      %2802 = vmatprep.subr.bf16.mxu0 0
      %2803 = vmatpush1.bf16.msra.mxu0 %v654
      %2804 = vmatprep.subr.bf16.mxu0 0
      %2805 = vmatpush1.bf16.msra.mxu0 %v655
      %2806 = vmatprep.subr.bf16.mxu0 0
      %2807 = vmatpush1.bf16.msra.mxu0 %v656
      %2808 = vmatprep.subr.bf16.mxu0 0
      %2809 = vmatpush1.bf16.msra.mxu0 %v657
      %2810 = vmatprep.subr.bf16.mxu0 0
      %2811 = vmatpush1.bf16.msra.mxu0 %v658
      %2812 = vmatprep.subr.bf16.mxu0 0
      %2813 = vmatpush1.bf16.msra.mxu0 %v659
      %2814 = vmatprep.subr.bf16.mxu0 0
      %2815 = vmatpush1.bf16.msra.mxu0 %v660
      %2816 = vmatprep.subr.bf16.mxu0 0
      %2817 = vmatpush1.bf16.msra.mxu0 %v661
      %2818 = vmatprep.subr.bf16.mxu0 0
      %2819 = vmatpush1.bf16.msra.mxu0 %v662
      %2820 = vmatprep.subr.bf16.mxu0 0
      %2821 = vmatpush1.bf16.msra.mxu0 %v663
      %2822 = vmatprep.subr.bf16.mxu0 0
      %2823 = vmatpush1.bf16.msra.mxu0 %v664
      %2824 = vmatprep.subr.bf16.mxu0 0
      %2825 = vmatpush1.bf16.msra.mxu0 %v665
      %2826 = vmatprep.mubr.bf16.mxu0 %v2791
      %2827 = vmatmul.mubr.bf16.gmra.mrb[0].mxu0 %v2790
      %v2828 = vpop.f32.mrb[0].mxu0
      %v2829 = vadd.f32 %v574, %v2828
      %v2830 = vpop.f32.mrb[0].mxu0
      %v2831 = vpop.f32.mrb[0].mxu0
      %v2832 = vadd.f32 %v574, %v2831
      %v2833 = vpop.f32.mrb[0].mxu0
      %2834 = vdwg.mxu0
      %v2835 = vmax.f32 %v2829, 0.0
      %v2836 = vmax.f32 %v2832, 0.0
      %v2837 = vpack.c.bf16 %v2836, %v2835
      %s2838 = scalar_lea.vmem %s501, 512
      %v2839 = vld [vmem:[%s2838] sm:$0xff]
      %v2840 = vld [vmem:[%s2838 + $0x8] sm:$0xff]
      %v2841 = vld [vmem:[%s2838 + $0x10] sm:$0xff]
      %v2842 = vld [vmem:[%s2838 + $0x18] sm:$0xff]
      %v2847 = vunpack.c.l.b16 %v2839
      %v2848 = vunpack.c.h.b16 %v2839
      %v2849 = vunpack.c.l.b16 %v2840
      %v2850 = vunpack.c.h.b16 %v2840
      %v2851 = vunpack.c.l.b16 %v2841
      %v2852 = vunpack.c.h.b16 %v2841
      %v2853 = vunpack.c.l.b16 %v2842
      %v2854 = vunpack.c.h.b16 %v2842
      %v2855 = vpack.c.b16 %v2849, %v2847
      %v2856 = vpack.c.b16 %v2850, %v2848
      %v2857 = vpack.c.b16 %v2853, %v2851
      %v2858 = vpack.c.b16 %v2854, %v2852
      %v2864 = vsel %vm750, %v2837, 0
      %2866 = vmatprep.subr.bf16.mxu0 %v2856
      %2867 = vmatpush1.bf16.msra.mxu0 %v2855
      %2868 = vmatprep.subr.bf16.mxu0 %v2858
      %2869 = vmatpush1.bf16.msra.mxu0 %v2857
      %2870 = vmatprep.subr.bf16.mxu0 0
      %2871 = vmatpush1.bf16.msra.mxu0 0
      %2872 = vmatprep.subr.bf16.mxu0 0
      %2873 = vmatpush1.bf16.msra.mxu0 0
      %2874 = vmatprep.subr.bf16.mxu0 0
      %2875 = vmatpush1.bf16.msra.mxu0 0
      %2876 = vmatprep.subr.bf16.mxu0 0
      %2877 = vmatpush1.bf16.msra.mxu0 0
      %2878 = vmatprep.subr.bf16.mxu0 0
      %2879 = vmatpush1.bf16.msra.mxu0 0
      %2880 = vmatprep.subr.bf16.mxu0 0
      %2881 = vmatpush1.bf16.msra.mxu0 0
      %2882 = vmatprep.subr.bf16.mxu0 0
      %2883 = vmatpush1.bf16.msra.mxu0 0
      %2884 = vmatprep.subr.bf16.mxu0 0
      %2885 = vmatpush1.bf16.msra.mxu0 0
      %2886 = vmatprep.subr.bf16.mxu0 0
      %2887 = vmatpush1.bf16.msra.mxu0 0
      %2888 = vmatprep.subr.bf16.mxu0 0
      %2889 = vmatpush1.bf16.msra.mxu0 0
      %2890 = vmatprep.subr.bf16.mxu0 0
      %2891 = vmatpush1.bf16.msra.mxu0 0
      %2892 = vmatprep.subr.bf16.mxu0 0
      %2893 = vmatpush1.bf16.msra.mxu0 0
      %2894 = vmatprep.subr.bf16.mxu0 0
      %2895 = vmatpush1.bf16.msra.mxu0 0
      %2896 = vmatprep.subr.bf16.mxu0 0
      %2897 = vmatpush1.bf16.msra.mxu0 0
      %2898 = vmatprep.mubr.bf16.mxu0 0
      %2899 = vmatmul.mubr.bf16.gmra.mrb[0].mxu0 %v2864
      %v2900 = vpop.f32.mrb[0].mxu0
      %v2901 = vadd.f32 0.0, %v2900
      %v2902 = vpop.f32.mrb[0].mxu0
      %v2903 = vadd.f32 0.0, %v2902
      %v2904 = vpop.f32.mrb[0].mxu0
      %v2905 = vadd.f32 0.0, %v2904
      %v2906 = vpop.f32.mrb[0].mxu0
      %v2907 = vadd.f32 0.0, %v2906
      %2908 = vdwg.mxu0
      %v2909 = vadd.f32 %v2777, %v2901
      %v2910 = vadd.f32 %v2778, %v2903
      %v2911 = vadd.f32 %v2779, %v2905
      %v2912 = vadd.f32 %v2780, %v2907
      %s2913 = scalar_lea.vmem %s493, 272
      %v2914 = vld [vmem:[%s2913] sm:$0xff]
      %v2915 = vld [vmem:[%s2913 + $0x8] sm:$0xff]
      %v2918 = vunpack.c.l.b16 %v2914
      %v2919 = vunpack.c.h.b16 %v2914
      %v2920 = vunpack.c.l.b16 %v2915
      %v2921 = vunpack.c.h.b16 %v2915
      %v2922 = vpack.c.b16 %v2920, %v2918
      %v2923 = vpack.c.b16 %v2921, %v2919
      %2926 = vmatprep.subr.bf16.mxu0 0
      %2927 = vmatpush1.bf16.msra.mxu0 %v650
      %2928 = vmatprep.subr.bf16.mxu0 0
      %2929 = vmatpush1.bf16.msra.mxu0 %v651
      %2930 = vmatprep.subr.bf16.mxu0 0
      %2931 = vmatpush1.bf16.msra.mxu0 %v652
      %2932 = vmatprep.subr.bf16.mxu0 0
      %2933 = vmatpush1.bf16.msra.mxu0 %v653
      %2934 = vmatprep.subr.bf16.mxu0 0
      %2935 = vmatpush1.bf16.msra.mxu0 %v654
      %2936 = vmatprep.subr.bf16.mxu0 0
      %2937 = vmatpush1.bf16.msra.mxu0 %v655
      %2938 = vmatprep.subr.bf16.mxu0 0
      %2939 = vmatpush1.bf16.msra.mxu0 %v656
      %2940 = vmatprep.subr.bf16.mxu0 0
      %2941 = vmatpush1.bf16.msra.mxu0 %v657
      %2942 = vmatprep.subr.bf16.mxu0 0
      %2943 = vmatpush1.bf16.msra.mxu0 %v658
      %2944 = vmatprep.subr.bf16.mxu0 0
      %2945 = vmatpush1.bf16.msra.mxu0 %v659
      %2946 = vmatprep.subr.bf16.mxu0 0
      %2947 = vmatpush1.bf16.msra.mxu0 %v660
      %2948 = vmatprep.subr.bf16.mxu0 0
      %2949 = vmatpush1.bf16.msra.mxu0 %v661
      %2950 = vmatprep.subr.bf16.mxu0 0
      %2951 = vmatpush1.bf16.msra.mxu0 %v662
      %2952 = vmatprep.subr.bf16.mxu0 0
      %2953 = vmatpush1.bf16.msra.mxu0 %v663
      %2954 = vmatprep.subr.bf16.mxu0 0
      %2955 = vmatpush1.bf16.msra.mxu0 %v664
      %2956 = vmatprep.subr.bf16.mxu0 0
      %2957 = vmatpush1.bf16.msra.mxu0 %v665
      %2958 = vmatprep.mubr.bf16.mxu0 %v2923
      %2959 = vmatmul.mubr.bf16.gmra.mrb[0].mxu0 %v2922
      %v2960 = vpop.f32.mrb[0].mxu0
      %v2961 = vadd.f32 %v574, %v2960
      %v2962 = vpop.f32.mrb[0].mxu0
      %v2963 = vpop.f32.mrb[0].mxu0
      %v2964 = vadd.f32 %v574, %v2963
      %v2965 = vpop.f32.mrb[0].mxu0
      %2966 = vdwg.mxu0
      %v2967 = vmax.f32 %v2961, 0.0
      %v2968 = vmax.f32 %v2964, 0.0
      %v2969 = vpack.c.bf16 %v2968, %v2967
      %s2970 = scalar_lea.vmem %s501, 544
      %v2971 = vld [vmem:[%s2970] sm:$0xff]
      %v2972 = vld [vmem:[%s2970 + $0x8] sm:$0xff]
      %v2973 = vld [vmem:[%s2970 + $0x10] sm:$0xff]
      %v2974 = vld [vmem:[%s2970 + $0x18] sm:$0xff]
      %v2979 = vunpack.c.l.b16 %v2971
      %v2980 = vunpack.c.h.b16 %v2971
      %v2981 = vunpack.c.l.b16 %v2972
      %v2982 = vunpack.c.h.b16 %v2972
      %v2983 = vunpack.c.l.b16 %v2973
      %v2984 = vunpack.c.h.b16 %v2973
      %v2985 = vunpack.c.l.b16 %v2974
      %v2986 = vunpack.c.h.b16 %v2974
      %v2987 = vpack.c.b16 %v2981, %v2979
      %v2988 = vpack.c.b16 %v2982, %v2980
      %v2989 = vpack.c.b16 %v2985, %v2983
      %v2990 = vpack.c.b16 %v2986, %v2984
      %v2996 = vsel %vm750, %v2969, 0
      %2998 = vmatprep.subr.bf16.mxu0 %v2988
      %2999 = vmatpush1.bf16.msra.mxu0 %v2987
      %3000 = vmatprep.subr.bf16.mxu0 %v2990
      %3001 = vmatpush1.bf16.msra.mxu0 %v2989
      %3002 = vmatprep.subr.bf16.mxu0 0
      %3003 = vmatpush1.bf16.msra.mxu0 0
      %3004 = vmatprep.subr.bf16.mxu0 0
      %3005 = vmatpush1.bf16.msra.mxu0 0
      %3006 = vmatprep.subr.bf16.mxu0 0
      %3007 = vmatpush1.bf16.msra.mxu0 0
      %3008 = vmatprep.subr.bf16.mxu0 0
      %3009 = vmatpush1.bf16.msra.mxu0 0
      %3010 = vmatprep.subr.bf16.mxu0 0
      %3011 = vmatpush1.bf16.msra.mxu0 0
      %3012 = vmatprep.subr.bf16.mxu0 0
      %3013 = vmatpush1.bf16.msra.mxu0 0
      %3014 = vmatprep.subr.bf16.mxu0 0
      %3015 = vmatpush1.bf16.msra.mxu0 0
      %3016 = vmatprep.subr.bf16.mxu0 0
      %3017 = vmatpush1.bf16.msra.mxu0 0
      %3018 = vmatprep.subr.bf16.mxu0 0
      %3019 = vmatpush1.bf16.msra.mxu0 0
      %3020 = vmatprep.subr.bf16.mxu0 0
      %3021 = vmatpush1.bf16.msra.mxu0 0
      %3022 = vmatprep.subr.bf16.mxu0 0
      %3023 = vmatpush1.bf16.msra.mxu0 0
      %3024 = vmatprep.subr.bf16.mxu0 0
      %3025 = vmatpush1.bf16.msra.mxu0 0
      %3026 = vmatprep.subr.bf16.mxu0 0
      %3027 = vmatpush1.bf16.msra.mxu0 0
      %3028 = vmatprep.subr.bf16.mxu0 0
      %3029 = vmatpush1.bf16.msra.mxu0 0
      %3030 = vmatprep.mubr.bf16.mxu0 0
      %3031 = vmatmul.mubr.bf16.gmra.mrb[0].mxu0 %v2996
      %v3032 = vpop.f32.mrb[0].mxu0
      %v3033 = vadd.f32 0.0, %v3032
      %v3034 = vpop.f32.mrb[0].mxu0
      %v3035 = vadd.f32 0.0, %v3034
      %v3036 = vpop.f32.mrb[0].mxu0
      %v3037 = vadd.f32 0.0, %v3036
      %v3038 = vpop.f32.mrb[0].mxu0
      %v3039 = vadd.f32 0.0, %v3038
      %3040 = vdwg.mxu0
      %v3041 = vadd.f32 %v2909, %v3033
      %v3042 = vadd.f32 %v2910, %v3035
      %v3043 = vadd.f32 %v2911, %v3037
      %v3044 = vadd.f32 %v2912, %v3039
      %s3045 = scalar_lea.vmem %s493, 288
      %v3046 = vld [vmem:[%s3045] sm:$0xff]
      %v3047 = vld [vmem:[%s3045 + $0x8] sm:$0xff]
      %v3050 = vunpack.c.l.b16 %v3046
      %v3051 = vunpack.c.h.b16 %v3046
      %v3052 = vunpack.c.l.b16 %v3047
      %v3053 = vunpack.c.h.b16 %v3047
      %v3054 = vpack.c.b16 %v3052, %v3050
      %v3055 = vpack.c.b16 %v3053, %v3051
      %3058 = vmatprep.subr.bf16.mxu0 0
      %3059 = vmatpush1.bf16.msra.mxu0 %v650
      %3060 = vmatprep.subr.bf16.mxu0 0
      %3061 = vmatpush1.bf16.msra.mxu0 %v651
      %3062 = vmatprep.subr.bf16.mxu0 0
      %3063 = vmatpush1.bf16.msra.mxu0 %v652
      %3064 = vmatprep.subr.bf16.mxu0 0
      %3065 = vmatpush1.bf16.msra.mxu0 %v653
      %3066 = vmatprep.subr.bf16.mxu0 0
      %3067 = vmatpush1.bf16.msra.mxu0 %v654
      %3068 = vmatprep.subr.bf16.mxu0 0
      %3069 = vmatpush1.bf16.msra.mxu0 %v655
      %3070 = vmatprep.subr.bf16.mxu0 0
      %3071 = vmatpush1.bf16.msra.mxu0 %v656
      %3072 = vmatprep.subr.bf16.mxu0 0
      %3073 = vmatpush1.bf16.msra.mxu0 %v657
      %3074 = vmatprep.subr.bf16.mxu0 0
      %3075 = vmatpush1.bf16.msra.mxu0 %v658
      %3076 = vmatprep.subr.bf16.mxu0 0
      %3077 = vmatpush1.bf16.msra.mxu0 %v659
      %3078 = vmatprep.subr.bf16.mxu0 0
      %3079 = vmatpush1.bf16.msra.mxu0 %v660
      %3080 = vmatprep.subr.bf16.mxu0 0
      %3081 = vmatpush1.bf16.msra.mxu0 %v661
      %3082 = vmatprep.subr.bf16.mxu0 0
      %3083 = vmatpush1.bf16.msra.mxu0 %v662
      %3084 = vmatprep.subr.bf16.mxu0 0
      %3085 = vmatpush1.bf16.msra.mxu0 %v663
      %3086 = vmatprep.subr.bf16.mxu0 0
      %3087 = vmatpush1.bf16.msra.mxu0 %v664
      %3088 = vmatprep.subr.bf16.mxu0 0
      %3089 = vmatpush1.bf16.msra.mxu0 %v665
      %3090 = vmatprep.mubr.bf16.mxu0 %v3055
      %3091 = vmatmul.mubr.bf16.gmra.mrb[0].mxu0 %v3054
      %v3092 = vpop.f32.mrb[0].mxu0
      %v3093 = vadd.f32 %v574, %v3092
      %v3094 = vpop.f32.mrb[0].mxu0
      %v3095 = vpop.f32.mrb[0].mxu0
      %v3096 = vadd.f32 %v574, %v3095
      %v3097 = vpop.f32.mrb[0].mxu0
      %3098 = vdwg.mxu0
      %v3099 = vmax.f32 %v3093, 0.0
      %v3100 = vmax.f32 %v3096, 0.0
      %v3101 = vpack.c.bf16 %v3100, %v3099
      %s3102 = scalar_lea.vmem %s501, 576
      %v3103 = vld [vmem:[%s3102] sm:$0xff]
      %v3104 = vld [vmem:[%s3102 + $0x8] sm:$0xff]
      %v3105 = vld [vmem:[%s3102 + $0x10] sm:$0xff]
      %v3106 = vld [vmem:[%s3102 + $0x18] sm:$0xff]
      %v3111 = vunpack.c.l.b16 %v3103
      %v3112 = vunpack.c.h.b16 %v3103
      %v3113 = vunpack.c.l.b16 %v3104
      %v3114 = vunpack.c.h.b16 %v3104
      %v3115 = vunpack.c.l.b16 %v3105
      %v3116 = vunpack.c.h.b16 %v3105
      %v3117 = vunpack.c.l.b16 %v3106
      %v3118 = vunpack.c.h.b16 %v3106
      %v3119 = vpack.c.b16 %v3113, %v3111
      %v3120 = vpack.c.b16 %v3114, %v3112
      %v3121 = vpack.c.b16 %v3117, %v3115
      %v3122 = vpack.c.b16 %v3118, %v3116
      %v3128 = vsel %vm750, %v3101, 0
      %3130 = vmatprep.subr.bf16.mxu0 %v3120
      %3131 = vmatpush1.bf16.msra.mxu0 %v3119
      %3132 = vmatprep.subr.bf16.mxu0 %v3122
      %3133 = vmatpush1.bf16.msra.mxu0 %v3121
      %3134 = vmatprep.subr.bf16.mxu0 0
      %3135 = vmatpush1.bf16.msra.mxu0 0
      %3136 = vmatprep.subr.bf16.mxu0 0
      %3137 = vmatpush1.bf16.msra.mxu0 0
      %3138 = vmatprep.subr.bf16.mxu0 0
      %3139 = vmatpush1.bf16.msra.mxu0 0
      %3140 = vmatprep.subr.bf16.mxu0 0
      %3141 = vmatpush1.bf16.msra.mxu0 0
      %3142 = vmatprep.subr.bf16.mxu0 0
      %3143 = vmatpush1.bf16.msra.mxu0 0
      %3144 = vmatprep.subr.bf16.mxu0 0
      %3145 = vmatpush1.bf16.msra.mxu0 0
      %3146 = vmatprep.subr.bf16.mxu0 0
      %3147 = vmatpush1.bf16.msra.mxu0 0
      %3148 = vmatprep.subr.bf16.mxu0 0
      %3149 = vmatpush1.bf16.msra.mxu0 0
      %3150 = vmatprep.subr.bf16.mxu0 0
      %3151 = vmatpush1.bf16.msra.mxu0 0
      %3152 = vmatprep.subr.bf16.mxu0 0
      %3153 = vmatpush1.bf16.msra.mxu0 0
      %3154 = vmatprep.subr.bf16.mxu0 0
      %3155 = vmatpush1.bf16.msra.mxu0 0
      %3156 = vmatprep.subr.bf16.mxu0 0
      %3157 = vmatpush1.bf16.msra.mxu0 0
      %3158 = vmatprep.subr.bf16.mxu0 0
      %3159 = vmatpush1.bf16.msra.mxu0 0
      %3160 = vmatprep.subr.bf16.mxu0 0
      %3161 = vmatpush1.bf16.msra.mxu0 0
      %3162 = vmatprep.mubr.bf16.mxu0 0
      %3163 = vmatmul.mubr.bf16.gmra.mrb[0].mxu0 %v3128
      %v3164 = vpop.f32.mrb[0].mxu0
      %v3165 = vadd.f32 0.0, %v3164
      %v3166 = vpop.f32.mrb[0].mxu0
      %v3167 = vadd.f32 0.0, %v3166
      %v3168 = vpop.f32.mrb[0].mxu0
      %v3169 = vadd.f32 0.0, %v3168
      %v3170 = vpop.f32.mrb[0].mxu0
      %v3171 = vadd.f32 0.0, %v3170
      %3172 = vdwg.mxu0
      %v3173 = vadd.f32 %v3041, %v3165
      %v3174 = vadd.f32 %v3042, %v3167
      %v3175 = vadd.f32 %v3043, %v3169
      %v3176 = vadd.f32 %v3044, %v3171
      %s3177 = scalar_lea.vmem %s493, 304
      %v3178 = vld [vmem:[%s3177] sm:$0xff]
      %v3179 = vld [vmem:[%s3177 + $0x8] sm:$0xff]
      %v3182 = vunpack.c.l.b16 %v3178
      %v3183 = vunpack.c.h.b16 %v3178
      %v3184 = vunpack.c.l.b16 %v3179
      %v3185 = vunpack.c.h.b16 %v3179
      %v3186 = vpack.c.b16 %v3184, %v3182
      %v3187 = vpack.c.b16 %v3185, %v3183
      %3190 = vmatprep.subr.bf16.mxu0 0
      %3191 = vmatpush1.bf16.msra.mxu0 %v650
      %3192 = vmatprep.subr.bf16.mxu0 0
      %3193 = vmatpush1.bf16.msra.mxu0 %v651
      %3194 = vmatprep.subr.bf16.mxu0 0
      %3195 = vmatpush1.bf16.msra.mxu0 %v652
      %3196 = vmatprep.subr.bf16.mxu0 0
      %3197 = vmatpush1.bf16.msra.mxu0 %v653
      %3198 = vmatprep.subr.bf16.mxu0 0
      %3199 = vmatpush1.bf16.msra.mxu0 %v654
      %3200 = vmatprep.subr.bf16.mxu0 0
      %3201 = vmatpush1.bf16.msra.mxu0 %v655
      %3202 = vmatprep.subr.bf16.mxu0 0
      %3203 = vmatpush1.bf16.msra.mxu0 %v656
      %3204 = vmatprep.subr.bf16.mxu0 0
      %3205 = vmatpush1.bf16.msra.mxu0 %v657
      %3206 = vmatprep.subr.bf16.mxu0 0
      %3207 = vmatpush1.bf16.msra.mxu0 %v658
      %3208 = vmatprep.subr.bf16.mxu0 0
      %3209 = vmatpush1.bf16.msra.mxu0 %v659
      %3210 = vmatprep.subr.bf16.mxu0 0
      %3211 = vmatpush1.bf16.msra.mxu0 %v660
      %3212 = vmatprep.subr.bf16.mxu0 0
      %3213 = vmatpush1.bf16.msra.mxu0 %v661
      %3214 = vmatprep.subr.bf16.mxu0 0
      %3215 = vmatpush1.bf16.msra.mxu0 %v662
      %3216 = vmatprep.subr.bf16.mxu0 0
      %3217 = vmatpush1.bf16.msra.mxu0 %v663
      %3218 = vmatprep.subr.bf16.mxu0 0
      %3219 = vmatpush1.bf16.msra.mxu0 %v664
      %3220 = vmatprep.subr.bf16.mxu0 0
      %3221 = vmatpush1.bf16.msra.mxu0 %v665
      %3222 = vmatprep.mubr.bf16.mxu0 %v3187
      %3223 = vmatmul.mubr.bf16.gmra.mrb[0].mxu0 %v3186
      %v3224 = vpop.f32.mrb[0].mxu0
      %v3225 = vadd.f32 %v574, %v3224
      %v3226 = vpop.f32.mrb[0].mxu0
      %v3227 = vpop.f32.mrb[0].mxu0
      %v3228 = vadd.f32 %v574, %v3227
      %v3229 = vpop.f32.mrb[0].mxu0
      %3230 = vdwg.mxu0
      %v3231 = vmax.f32 %v3225, 0.0
      %v3232 = vmax.f32 %v3228, 0.0
      %v3233 = vpack.c.bf16 %v3232, %v3231
      %s3234 = scalar_lea.vmem %s501, 608
      %v3235 = vld [vmem:[%s3234] sm:$0xff]
      %v3236 = vld [vmem:[%s3234 + $0x8] sm:$0xff]
      %v3237 = vld [vmem:[%s3234 + $0x10] sm:$0xff]
      %v3238 = vld [vmem:[%s3234 + $0x18] sm:$0xff]
      %v3243 = vunpack.c.l.b16 %v3235
      %v3244 = vunpack.c.h.b16 %v3235
      %v3245 = vunpack.c.l.b16 %v3236
      %v3246 = vunpack.c.h.b16 %v3236
      %v3247 = vunpack.c.l.b16 %v3237
      %v3248 = vunpack.c.h.b16 %v3237
      %v3249 = vunpack.c.l.b16 %v3238
      %v3250 = vunpack.c.h.b16 %v3238
      %v3251 = vpack.c.b16 %v3245, %v3243
      %v3252 = vpack.c.b16 %v3246, %v3244
      %v3253 = vpack.c.b16 %v3249, %v3247
      %v3254 = vpack.c.b16 %v3250, %v3248
      %v3260 = vsel %vm750, %v3233, 0
      %3262 = vmatprep.subr.bf16.mxu0 %v3252
      %3263 = vmatpush1.bf16.msra.mxu0 %v3251
      %3264 = vmatprep.subr.bf16.mxu0 %v3254
      %3265 = vmatpush1.bf16.msra.mxu0 %v3253
      %3266 = vmatprep.subr.bf16.mxu0 0
      %3267 = vmatpush1.bf16.msra.mxu0 0
      %3268 = vmatprep.subr.bf16.mxu0 0
      %3269 = vmatpush1.bf16.msra.mxu0 0
      %3270 = vmatprep.subr.bf16.mxu0 0
      %3271 = vmatpush1.bf16.msra.mxu0 0
      %3272 = vmatprep.subr.bf16.mxu0 0
      %3273 = vmatpush1.bf16.msra.mxu0 0
      %3274 = vmatprep.subr.bf16.mxu0 0
      %3275 = vmatpush1.bf16.msra.mxu0 0
      %3276 = vmatprep.subr.bf16.mxu0 0
      %3277 = vmatpush1.bf16.msra.mxu0 0
      %3278 = vmatprep.subr.bf16.mxu0 0
      %3279 = vmatpush1.bf16.msra.mxu0 0
      %3280 = vmatprep.subr.bf16.mxu0 0
      %3281 = vmatpush1.bf16.msra.mxu0 0
      %3282 = vmatprep.subr.bf16.mxu0 0
      %3283 = vmatpush1.bf16.msra.mxu0 0
      %3284 = vmatprep.subr.bf16.mxu0 0
      %3285 = vmatpush1.bf16.msra.mxu0 0
      %3286 = vmatprep.subr.bf16.mxu0 0
      %3287 = vmatpush1.bf16.msra.mxu0 0
      %3288 = vmatprep.subr.bf16.mxu0 0
      %3289 = vmatpush1.bf16.msra.mxu0 0
      %3290 = vmatprep.subr.bf16.mxu0 0
      %3291 = vmatpush1.bf16.msra.mxu0 0
      %3292 = vmatprep.subr.bf16.mxu0 0
      %3293 = vmatpush1.bf16.msra.mxu0 0
      %3294 = vmatprep.mubr.bf16.mxu0 0
      %3295 = vmatmul.mubr.bf16.gmra.mrb[0].mxu0 %v3260
      %v3296 = vpop.f32.mrb[0].mxu0
      %v3297 = vadd.f32 0.0, %v3296
      %v3298 = vpop.f32.mrb[0].mxu0
      %v3299 = vadd.f32 0.0, %v3298
      %v3300 = vpop.f32.mrb[0].mxu0
      %v3301 = vadd.f32 0.0, %v3300
      %v3302 = vpop.f32.mrb[0].mxu0
      %v3303 = vadd.f32 0.0, %v3302
      %3304 = vdwg.mxu0
      %v3305 = vadd.f32 %v3173, %v3297
      %v3306 = vadd.f32 %v3174, %v3299
      %v3307 = vadd.f32 %v3175, %v3301
      %v3308 = vadd.f32 %v3176, %v3303
      %s3309 = scalar_lea.vmem %s493, 320
      %v3310 = vld [vmem:[%s3309] sm:$0xff]
      %v3311 = vld [vmem:[%s3309 + $0x8] sm:$0xff]
      %v3314 = vunpack.c.l.b16 %v3310
      %v3315 = vunpack.c.h.b16 %v3310
      %v3316 = vunpack.c.l.b16 %v3311
      %v3317 = vunpack.c.h.b16 %v3311
      %v3318 = vpack.c.b16 %v3316, %v3314
      %v3319 = vpack.c.b16 %v3317, %v3315
      %3322 = vmatprep.subr.bf16.mxu0 0
      %3323 = vmatpush1.bf16.msra.mxu0 %v650
      %3324 = vmatprep.subr.bf16.mxu0 0
      %3325 = vmatpush1.bf16.msra.mxu0 %v651
      %3326 = vmatprep.subr.bf16.mxu0 0
      %3327 = vmatpush1.bf16.msra.mxu0 %v652
      %3328 = vmatprep.subr.bf16.mxu0 0
      %3329 = vmatpush1.bf16.msra.mxu0 %v653
      %3330 = vmatprep.subr.bf16.mxu0 0
      %3331 = vmatpush1.bf16.msra.mxu0 %v654
      %3332 = vmatprep.subr.bf16.mxu0 0
      %3333 = vmatpush1.bf16.msra.mxu0 %v655
      %3334 = vmatprep.subr.bf16.mxu0 0
      %3335 = vmatpush1.bf16.msra.mxu0 %v656
      %3336 = vmatprep.subr.bf16.mxu0 0
      %3337 = vmatpush1.bf16.msra.mxu0 %v657
      %3338 = vmatprep.subr.bf16.mxu0 0
      %3339 = vmatpush1.bf16.msra.mxu0 %v658
      %3340 = vmatprep.subr.bf16.mxu0 0
      %3341 = vmatpush1.bf16.msra.mxu0 %v659
      %3342 = vmatprep.subr.bf16.mxu0 0
      %3343 = vmatpush1.bf16.msra.mxu0 %v660
      %3344 = vmatprep.subr.bf16.mxu0 0
      %3345 = vmatpush1.bf16.msra.mxu0 %v661
      %3346 = vmatprep.subr.bf16.mxu0 0
      %3347 = vmatpush1.bf16.msra.mxu0 %v662
      %3348 = vmatprep.subr.bf16.mxu0 0
      %3349 = vmatpush1.bf16.msra.mxu0 %v663
      %3350 = vmatprep.subr.bf16.mxu0 0
      %3351 = vmatpush1.bf16.msra.mxu0 %v664
      %3352 = vmatprep.subr.bf16.mxu0 0
      %3353 = vmatpush1.bf16.msra.mxu0 %v665
      %3354 = vmatprep.mubr.bf16.mxu0 %v3319
      %3355 = vmatmul.mubr.bf16.gmra.mrb[0].mxu0 %v3318
      %v3356 = vpop.f32.mrb[0].mxu0
      %v3357 = vadd.f32 %v574, %v3356
      %v3358 = vpop.f32.mrb[0].mxu0
      %v3359 = vpop.f32.mrb[0].mxu0
      %v3360 = vadd.f32 %v574, %v3359
      %v3361 = vpop.f32.mrb[0].mxu0
      %3362 = vdwg.mxu0
      %v3363 = vmax.f32 %v3357, 0.0
      %v3364 = vmax.f32 %v3360, 0.0
      %v3365 = vpack.c.bf16 %v3364, %v3363
      %s3366 = scalar_lea.vmem %s501, 640
      %v3367 = vld [vmem:[%s3366] sm:$0xff]
      %v3368 = vld [vmem:[%s3366 + $0x8] sm:$0xff]
      %v3369 = vld [vmem:[%s3366 + $0x10] sm:$0xff]
      %v3370 = vld [vmem:[%s3366 + $0x18] sm:$0xff]
      %v3375 = vunpack.c.l.b16 %v3367
      %v3376 = vunpack.c.h.b16 %v3367
      %v3377 = vunpack.c.l.b16 %v3368
      %v3378 = vunpack.c.h.b16 %v3368
      %v3379 = vunpack.c.l.b16 %v3369
      %v3380 = vunpack.c.h.b16 %v3369
      %v3381 = vunpack.c.l.b16 %v3370
      %v3382 = vunpack.c.h.b16 %v3370
      %v3383 = vpack.c.b16 %v3377, %v3375
      %v3384 = vpack.c.b16 %v3378, %v3376
      %v3385 = vpack.c.b16 %v3381, %v3379
      %v3386 = vpack.c.b16 %v3382, %v3380
      %v3392 = vsel %vm750, %v3365, 0
      %3394 = vmatprep.subr.bf16.mxu0 %v3384
      %3395 = vmatpush1.bf16.msra.mxu0 %v3383
      %3396 = vmatprep.subr.bf16.mxu0 %v3386
      %3397 = vmatpush1.bf16.msra.mxu0 %v3385
      %3398 = vmatprep.subr.bf16.mxu0 0
      %3399 = vmatpush1.bf16.msra.mxu0 0
      %3400 = vmatprep.subr.bf16.mxu0 0
      %3401 = vmatpush1.bf16.msra.mxu0 0
      %3402 = vmatprep.subr.bf16.mxu0 0
      %3403 = vmatpush1.bf16.msra.mxu0 0
      %3404 = vmatprep.subr.bf16.mxu0 0
      %3405 = vmatpush1.bf16.msra.mxu0 0
      %3406 = vmatprep.subr.bf16.mxu0 0
      %3407 = vmatpush1.bf16.msra.mxu0 0
      %3408 = vmatprep.subr.bf16.mxu0 0
      %3409 = vmatpush1.bf16.msra.mxu0 0
      %3410 = vmatprep.subr.bf16.mxu0 0
      %3411 = vmatpush1.bf16.msra.mxu0 0
      %3412 = vmatprep.subr.bf16.mxu0 0
      %3413 = vmatpush1.bf16.msra.mxu0 0
      %3414 = vmatprep.subr.bf16.mxu0 0
      %3415 = vmatpush1.bf16.msra.mxu0 0
      %3416 = vmatprep.subr.bf16.mxu0 0
      %3417 = vmatpush1.bf16.msra.mxu0 0
      %3418 = vmatprep.subr.bf16.mxu0 0
      %3419 = vmatpush1.bf16.msra.mxu0 0
      %3420 = vmatprep.subr.bf16.mxu0 0
      %3421 = vmatpush1.bf16.msra.mxu0 0
      %3422 = vmatprep.subr.bf16.mxu0 0
      %3423 = vmatpush1.bf16.msra.mxu0 0
      %3424 = vmatprep.subr.bf16.mxu0 0
      %3425 = vmatpush1.bf16.msra.mxu0 0
      %3426 = vmatprep.mubr.bf16.mxu0 0
      %3427 = vmatmul.mubr.bf16.gmra.mrb[0].mxu0 %v3392
      %v3428 = vpop.f32.mrb[0].mxu0
      %v3429 = vadd.f32 0.0, %v3428
      %v3430 = vpop.f32.mrb[0].mxu0
      %v3431 = vadd.f32 0.0, %v3430
      %v3432 = vpop.f32.mrb[0].mxu0
      %v3433 = vadd.f32 0.0, %v3432
      %v3434 = vpop.f32.mrb[0].mxu0
      %v3435 = vadd.f32 0.0, %v3434
      %3436 = vdwg.mxu0
      %v3437 = vadd.f32 %v3305, %v3429
      %v3438 = vadd.f32 %v3306, %v3431
      %v3439 = vadd.f32 %v3307, %v3433
      %v3440 = vadd.f32 %v3308, %v3435
      %s3441 = scalar_lea.vmem %s493, 336
      %v3442 = vld [vmem:[%s3441] sm:$0xff]
      %v3443 = vld [vmem:[%s3441 + $0x8] sm:$0xff]
      %v3446 = vunpack.c.l.b16 %v3442
      %v3447 = vunpack.c.h.b16 %v3442
      %v3448 = vunpack.c.l.b16 %v3443
      %v3449 = vunpack.c.h.b16 %v3443
      %v3450 = vpack.c.b16 %v3448, %v3446
      %v3451 = vpack.c.b16 %v3449, %v3447
      %3454 = vmatprep.subr.bf16.mxu0 0
      %3455 = vmatpush1.bf16.msra.mxu0 %v650
      %3456 = vmatprep.subr.bf16.mxu0 0
      %3457 = vmatpush1.bf16.msra.mxu0 %v651
      %3458 = vmatprep.subr.bf16.mxu0 0
      %3459 = vmatpush1.bf16.msra.mxu0 %v652
      %3460 = vmatprep.subr.bf16.mxu0 0
      %3461 = vmatpush1.bf16.msra.mxu0 %v653
      %3462 = vmatprep.subr.bf16.mxu0 0
      %3463 = vmatpush1.bf16.msra.mxu0 %v654
      %3464 = vmatprep.subr.bf16.mxu0 0
      %3465 = vmatpush1.bf16.msra.mxu0 %v655
      %3466 = vmatprep.subr.bf16.mxu0 0
      %3467 = vmatpush1.bf16.msra.mxu0 %v656
      %3468 = vmatprep.subr.bf16.mxu0 0
      %3469 = vmatpush1.bf16.msra.mxu0 %v657
      %3470 = vmatprep.subr.bf16.mxu0 0
      %3471 = vmatpush1.bf16.msra.mxu0 %v658
      %3472 = vmatprep.subr.bf16.mxu0 0
      %3473 = vmatpush1.bf16.msra.mxu0 %v659
      %3474 = vmatprep.subr.bf16.mxu0 0
      %3475 = vmatpush1.bf16.msra.mxu0 %v660
      %3476 = vmatprep.subr.bf16.mxu0 0
      %3477 = vmatpush1.bf16.msra.mxu0 %v661
      %3478 = vmatprep.subr.bf16.mxu0 0
      %3479 = vmatpush1.bf16.msra.mxu0 %v662
      %3480 = vmatprep.subr.bf16.mxu0 0
      %3481 = vmatpush1.bf16.msra.mxu0 %v663
      %3482 = vmatprep.subr.bf16.mxu0 0
      %3483 = vmatpush1.bf16.msra.mxu0 %v664
      %3484 = vmatprep.subr.bf16.mxu0 0
      %3485 = vmatpush1.bf16.msra.mxu0 %v665
      %3486 = vmatprep.mubr.bf16.mxu0 %v3451
      %3487 = vmatmul.mubr.bf16.gmra.mrb[0].mxu0 %v3450
      %v3488 = vpop.f32.mrb[0].mxu0
      %v3489 = vadd.f32 %v574, %v3488
      %v3490 = vpop.f32.mrb[0].mxu0
      %v3491 = vpop.f32.mrb[0].mxu0
      %v3492 = vadd.f32 %v574, %v3491
      %v3493 = vpop.f32.mrb[0].mxu0
      %3494 = vdwg.mxu0
      %v3495 = vmax.f32 %v3489, 0.0
      %v3496 = vmax.f32 %v3492, 0.0
      %v3497 = vpack.c.bf16 %v3496, %v3495
      %s3498 = scalar_lea.vmem %s501, 672
      %v3499 = vld [vmem:[%s3498] sm:$0xff]
      %v3500 = vld [vmem:[%s3498 + $0x8] sm:$0xff]
      %v3501 = vld [vmem:[%s3498 + $0x10] sm:$0xff]
      %v3502 = vld [vmem:[%s3498 + $0x18] sm:$0xff]
      %v3507 = vunpack.c.l.b16 %v3499
      %v3508 = vunpack.c.h.b16 %v3499
      %v3509 = vunpack.c.l.b16 %v3500
      %v3510 = vunpack.c.h.b16 %v3500
      %v3511 = vunpack.c.l.b16 %v3501
      %v3512 = vunpack.c.h.b16 %v3501
      %v3513 = vunpack.c.l.b16 %v3502
      %v3514 = vunpack.c.h.b16 %v3502
      %v3515 = vpack.c.b16 %v3509, %v3507
      %v3516 = vpack.c.b16 %v3510, %v3508
      %v3517 = vpack.c.b16 %v3513, %v3511
      %v3518 = vpack.c.b16 %v3514, %v3512
      %v3524 = vsel %vm750, %v3497, 0
      %3526 = vmatprep.subr.bf16.mxu0 %v3516
      %3527 = vmatpush1.bf16.msra.mxu0 %v3515
      %3528 = vmatprep.subr.bf16.mxu0 %v3518
      %3529 = vmatpush1.bf16.msra.mxu0 %v3517
      %3530 = vmatprep.subr.bf16.mxu0 0
      %3531 = vmatpush1.bf16.msra.mxu0 0
      %3532 = vmatprep.subr.bf16.mxu0 0
      %3533 = vmatpush1.bf16.msra.mxu0 0
      %3534 = vmatprep.subr.bf16.mxu0 0
      %3535 = vmatpush1.bf16.msra.mxu0 0
      %3536 = vmatprep.subr.bf16.mxu0 0
      %3537 = vmatpush1.bf16.msra.mxu0 0
      %3538 = vmatprep.subr.bf16.mxu0 0
      %3539 = vmatpush1.bf16.msra.mxu0 0
      %3540 = vmatprep.subr.bf16.mxu0 0
      %3541 = vmatpush1.bf16.msra.mxu0 0
      %3542 = vmatprep.subr.bf16.mxu0 0
      %3543 = vmatpush1.bf16.msra.mxu0 0
      %3544 = vmatprep.subr.bf16.mxu0 0
      %3545 = vmatpush1.bf16.msra.mxu0 0
      %3546 = vmatprep.subr.bf16.mxu0 0
      %3547 = vmatpush1.bf16.msra.mxu0 0
      %3548 = vmatprep.subr.bf16.mxu0 0
      %3549 = vmatpush1.bf16.msra.mxu0 0
      %3550 = vmatprep.subr.bf16.mxu0 0
      %3551 = vmatpush1.bf16.msra.mxu0 0
      %3552 = vmatprep.subr.bf16.mxu0 0
      %3553 = vmatpush1.bf16.msra.mxu0 0
      %3554 = vmatprep.subr.bf16.mxu0 0
      %3555 = vmatpush1.bf16.msra.mxu0 0
      %3556 = vmatprep.subr.bf16.mxu0 0
      %3557 = vmatpush1.bf16.msra.mxu0 0
      %3558 = vmatprep.mubr.bf16.mxu0 0
      %3559 = vmatmul.mubr.bf16.gmra.mrb[0].mxu0 %v3524
      %v3560 = vpop.f32.mrb[0].mxu0
      %v3561 = vadd.f32 0.0, %v3560
      %v3562 = vpop.f32.mrb[0].mxu0
      %v3563 = vadd.f32 0.0, %v3562
      %v3564 = vpop.f32.mrb[0].mxu0
      %v3565 = vadd.f32 0.0, %v3564
      %v3566 = vpop.f32.mrb[0].mxu0
      %v3567 = vadd.f32 0.0, %v3566
      %3568 = vdwg.mxu0
      %v3569 = vadd.f32 %v3437, %v3561
      %v3570 = vadd.f32 %v3438, %v3563
      %v3571 = vadd.f32 %v3439, %v3565
      %v3572 = vadd.f32 %v3440, %v3567
      %s3573 = scalar_lea.vmem %s493, 352
      %v3574 = vld [vmem:[%s3573] sm:$0xff]
      %v3575 = vld [vmem:[%s3573 + $0x8] sm:$0xff]
      %v3578 = vunpack.c.l.b16 %v3574
      %v3579 = vunpack.c.h.b16 %v3574
      %v3580 = vunpack.c.l.b16 %v3575
      %v3581 = vunpack.c.h.b16 %v3575
      %v3582 = vpack.c.b16 %v3580, %v3578
      %v3583 = vpack.c.b16 %v3581, %v3579
      %3586 = vmatprep.subr.bf16.mxu0 0
      %3587 = vmatpush1.bf16.msra.mxu0 %v650
      %3588 = vmatprep.subr.bf16.mxu0 0
      %3589 = vmatpush1.bf16.msra.mxu0 %v651
      %3590 = vmatprep.subr.bf16.mxu0 0
      %3591 = vmatpush1.bf16.msra.mxu0 %v652
      %3592 = vmatprep.subr.bf16.mxu0 0
      %3593 = vmatpush1.bf16.msra.mxu0 %v653
      %3594 = vmatprep.subr.bf16.mxu0 0
      %3595 = vmatpush1.bf16.msra.mxu0 %v654
      %3596 = vmatprep.subr.bf16.mxu0 0
      %3597 = vmatpush1.bf16.msra.mxu0 %v655
      %3598 = vmatprep.subr.bf16.mxu0 0
      %3599 = vmatpush1.bf16.msra.mxu0 %v656
      %3600 = vmatprep.subr.bf16.mxu0 0
      %3601 = vmatpush1.bf16.msra.mxu0 %v657
      %3602 = vmatprep.subr.bf16.mxu0 0
      %3603 = vmatpush1.bf16.msra.mxu0 %v658
      %3604 = vmatprep.subr.bf16.mxu0 0
      %3605 = vmatpush1.bf16.msra.mxu0 %v659
      %3606 = vmatprep.subr.bf16.mxu0 0
      %3607 = vmatpush1.bf16.msra.mxu0 %v660
      %3608 = vmatprep.subr.bf16.mxu0 0
      %3609 = vmatpush1.bf16.msra.mxu0 %v661
      %3610 = vmatprep.subr.bf16.mxu0 0
      %3611 = vmatpush1.bf16.msra.mxu0 %v662
      %3612 = vmatprep.subr.bf16.mxu0 0
      %3613 = vmatpush1.bf16.msra.mxu0 %v663
      %3614 = vmatprep.subr.bf16.mxu0 0
      %3615 = vmatpush1.bf16.msra.mxu0 %v664
      %3616 = vmatprep.subr.bf16.mxu0 0
      %3617 = vmatpush1.bf16.msra.mxu0 %v665
      %3618 = vmatprep.mubr.bf16.mxu0 %v3583
      %3619 = vmatmul.mubr.bf16.gmra.mrb[0].mxu0 %v3582
      %v3620 = vpop.f32.mrb[0].mxu0
      %v3621 = vadd.f32 %v574, %v3620
      %v3622 = vpop.f32.mrb[0].mxu0
      %v3623 = vpop.f32.mrb[0].mxu0
      %v3624 = vadd.f32 %v574, %v3623
      %v3625 = vpop.f32.mrb[0].mxu0
      %3626 = vdwg.mxu0
      %v3627 = vmax.f32 %v3621, 0.0
      %v3628 = vmax.f32 %v3624, 0.0
      %v3629 = vpack.c.bf16 %v3628, %v3627
      %s3630 = scalar_lea.vmem %s501, 704
      %v3631 = vld [vmem:[%s3630] sm:$0xff]
      %v3632 = vld [vmem:[%s3630 + $0x8] sm:$0xff]
      %v3633 = vld [vmem:[%s3630 + $0x10] sm:$0xff]
      %v3634 = vld [vmem:[%s3630 + $0x18] sm:$0xff]
      %v3639 = vunpack.c.l.b16 %v3631
      %v3640 = vunpack.c.h.b16 %v3631
      %v3641 = vunpack.c.l.b16 %v3632
      %v3642 = vunpack.c.h.b16 %v3632
      %v3643 = vunpack.c.l.b16 %v3633
      %v3644 = vunpack.c.h.b16 %v3633
      %v3645 = vunpack.c.l.b16 %v3634
      %v3646 = vunpack.c.h.b16 %v3634
      %v3647 = vpack.c.b16 %v3641, %v3639
      %v3648 = vpack.c.b16 %v3642, %v3640
      %v3649 = vpack.c.b16 %v3645, %v3643
      %v3650 = vpack.c.b16 %v3646, %v3644
      %v3656 = vsel %vm750, %v3629, 0
      %3658 = vmatprep.subr.bf16.mxu0 %v3648
      %3659 = vmatpush1.bf16.msra.mxu0 %v3647
      %3660 = vmatprep.subr.bf16.mxu0 %v3650
      %3661 = vmatpush1.bf16.msra.mxu0 %v3649
      %3662 = vmatprep.subr.bf16.mxu0 0
      %3663 = vmatpush1.bf16.msra.mxu0 0
      %3664 = vmatprep.subr.bf16.mxu0 0
      %3665 = vmatpush1.bf16.msra.mxu0 0
      %3666 = vmatprep.subr.bf16.mxu0 0
      %3667 = vmatpush1.bf16.msra.mxu0 0
      %3668 = vmatprep.subr.bf16.mxu0 0
      %3669 = vmatpush1.bf16.msra.mxu0 0
      %3670 = vmatprep.subr.bf16.mxu0 0
      %3671 = vmatpush1.bf16.msra.mxu0 0
      %3672 = vmatprep.subr.bf16.mxu0 0
      %3673 = vmatpush1.bf16.msra.mxu0 0
      %3674 = vmatprep.subr.bf16.mxu0 0
      %3675 = vmatpush1.bf16.msra.mxu0 0
      %3676 = vmatprep.subr.bf16.mxu0 0
      %3677 = vmatpush1.bf16.msra.mxu0 0
      %3678 = vmatprep.subr.bf16.mxu0 0
      %3679 = vmatpush1.bf16.msra.mxu0 0
      %3680 = vmatprep.subr.bf16.mxu0 0
      %3681 = vmatpush1.bf16.msra.mxu0 0
      %3682 = vmatprep.subr.bf16.mxu0 0
      %3683 = vmatpush1.bf16.msra.mxu0 0
      %3684 = vmatprep.subr.bf16.mxu0 0
      %3685 = vmatpush1.bf16.msra.mxu0 0
      %3686 = vmatprep.subr.bf16.mxu0 0
      %3687 = vmatpush1.bf16.msra.mxu0 0
      %3688 = vmatprep.subr.bf16.mxu0 0
      %3689 = vmatpush1.bf16.msra.mxu0 0
      %3690 = vmatprep.mubr.bf16.mxu0 0
      %3691 = vmatmul.mubr.bf16.gmra.mrb[0].mxu0 %v3656
      %v3692 = vpop.f32.mrb[0].mxu0
      %v3693 = vadd.f32 0.0, %v3692
      %v3694 = vpop.f32.mrb[0].mxu0
      %v3695 = vadd.f32 0.0, %v3694
      %v3696 = vpop.f32.mrb[0].mxu0
      %v3697 = vadd.f32 0.0, %v3696
      %v3698 = vpop.f32.mrb[0].mxu0
      %v3699 = vadd.f32 0.0, %v3698
      %3700 = vdwg.mxu0
      %v3701 = vadd.f32 %v3569, %v3693
      %v3702 = vadd.f32 %v3570, %v3695
      %v3703 = vadd.f32 %v3571, %v3697
      %v3704 = vadd.f32 %v3572, %v3699
      %s3705 = scalar_lea.vmem %s493, 368
      %v3706 = vld [vmem:[%s3705] sm:$0xff]
      %v3707 = vld [vmem:[%s3705 + $0x8] sm:$0xff]
      %v3710 = vunpack.c.l.b16 %v3706
      %v3711 = vunpack.c.h.b16 %v3706
      %v3712 = vunpack.c.l.b16 %v3707
      %v3713 = vunpack.c.h.b16 %v3707
      %v3714 = vpack.c.b16 %v3712, %v3710
      %v3715 = vpack.c.b16 %v3713, %v3711
      %3718 = vmatprep.subr.bf16.mxu0 0
      %3719 = vmatpush1.bf16.msra.mxu0 %v650
      %3720 = vmatprep.subr.bf16.mxu0 0
      %3721 = vmatpush1.bf16.msra.mxu0 %v651
      %3722 = vmatprep.subr.bf16.mxu0 0
      %3723 = vmatpush1.bf16.msra.mxu0 %v652
      %3724 = vmatprep.subr.bf16.mxu0 0
      %3725 = vmatpush1.bf16.msra.mxu0 %v653
      %3726 = vmatprep.subr.bf16.mxu0 0
      %3727 = vmatpush1.bf16.msra.mxu0 %v654
      %3728 = vmatprep.subr.bf16.mxu0 0
      %3729 = vmatpush1.bf16.msra.mxu0 %v655
      %3730 = vmatprep.subr.bf16.mxu0 0
      %3731 = vmatpush1.bf16.msra.mxu0 %v656
      %3732 = vmatprep.subr.bf16.mxu0 0
      %3733 = vmatpush1.bf16.msra.mxu0 %v657
      %3734 = vmatprep.subr.bf16.mxu0 0
      %3735 = vmatpush1.bf16.msra.mxu0 %v658
      %3736 = vmatprep.subr.bf16.mxu0 0
      %3737 = vmatpush1.bf16.msra.mxu0 %v659
      %3738 = vmatprep.subr.bf16.mxu0 0
      %3739 = vmatpush1.bf16.msra.mxu0 %v660
      %3740 = vmatprep.subr.bf16.mxu0 0
      %3741 = vmatpush1.bf16.msra.mxu0 %v661
      %3742 = vmatprep.subr.bf16.mxu0 0
      %3743 = vmatpush1.bf16.msra.mxu0 %v662
      %3744 = vmatprep.subr.bf16.mxu0 0
      %3745 = vmatpush1.bf16.msra.mxu0 %v663
      %3746 = vmatprep.subr.bf16.mxu0 0
      %3747 = vmatpush1.bf16.msra.mxu0 %v664
      %3748 = vmatprep.subr.bf16.mxu0 0
      %3749 = vmatpush1.bf16.msra.mxu0 %v665
      %3750 = vmatprep.mubr.bf16.mxu0 %v3715
      %3751 = vmatmul.mubr.bf16.gmra.mrb[0].mxu0 %v3714
      %v3752 = vpop.f32.mrb[0].mxu0
      %v3753 = vadd.f32 %v574, %v3752
      %v3754 = vpop.f32.mrb[0].mxu0
      %v3755 = vpop.f32.mrb[0].mxu0
      %v3756 = vadd.f32 %v574, %v3755
      %v3757 = vpop.f32.mrb[0].mxu0
      %3758 = vdwg.mxu0
      %v3759 = vmax.f32 %v3753, 0.0
      %v3760 = vmax.f32 %v3756, 0.0
      %v3761 = vpack.c.bf16 %v3760, %v3759
      %s3762 = scalar_lea.vmem %s501, 736
      %v3763 = vld [vmem:[%s3762] sm:$0xff]
      %v3764 = vld [vmem:[%s3762 + $0x8] sm:$0xff]
      %v3765 = vld [vmem:[%s3762 + $0x10] sm:$0xff]
      %v3766 = vld [vmem:[%s3762 + $0x18] sm:$0xff]
      %v3771 = vunpack.c.l.b16 %v3763
      %v3772 = vunpack.c.h.b16 %v3763
      %v3773 = vunpack.c.l.b16 %v3764
      %v3774 = vunpack.c.h.b16 %v3764
      %v3775 = vunpack.c.l.b16 %v3765
      %v3776 = vunpack.c.h.b16 %v3765
      %v3777 = vunpack.c.l.b16 %v3766
      %v3778 = vunpack.c.h.b16 %v3766
      %v3779 = vpack.c.b16 %v3773, %v3771
      %v3780 = vpack.c.b16 %v3774, %v3772
      %v3781 = vpack.c.b16 %v3777, %v3775
      %v3782 = vpack.c.b16 %v3778, %v3776
      %v3788 = vsel %vm750, %v3761, 0
      %3790 = vmatprep.subr.bf16.mxu0 %v3780
      %3791 = vmatpush1.bf16.msra.mxu0 %v3779
      %3792 = vmatprep.subr.bf16.mxu0 %v3782
      %3793 = vmatpush1.bf16.msra.mxu0 %v3781
      %3794 = vmatprep.subr.bf16.mxu0 0
      %3795 = vmatpush1.bf16.msra.mxu0 0
      %3796 = vmatprep.subr.bf16.mxu0 0
      %3797 = vmatpush1.bf16.msra.mxu0 0
      %3798 = vmatprep.subr.bf16.mxu0 0
      %3799 = vmatpush1.bf16.msra.mxu0 0
      %3800 = vmatprep.subr.bf16.mxu0 0
      %3801 = vmatpush1.bf16.msra.mxu0 0
      %3802 = vmatprep.subr.bf16.mxu0 0
      %3803 = vmatpush1.bf16.msra.mxu0 0
      %3804 = vmatprep.subr.bf16.mxu0 0
      %3805 = vmatpush1.bf16.msra.mxu0 0
      %3806 = vmatprep.subr.bf16.mxu0 0
      %3807 = vmatpush1.bf16.msra.mxu0 0
      %3808 = vmatprep.subr.bf16.mxu0 0
      %3809 = vmatpush1.bf16.msra.mxu0 0
      %3810 = vmatprep.subr.bf16.mxu0 0
      %3811 = vmatpush1.bf16.msra.mxu0 0
      %3812 = vmatprep.subr.bf16.mxu0 0
      %3813 = vmatpush1.bf16.msra.mxu0 0
      %3814 = vmatprep.subr.bf16.mxu0 0
      %3815 = vmatpush1.bf16.msra.mxu0 0
      %3816 = vmatprep.subr.bf16.mxu0 0
      %3817 = vmatpush1.bf16.msra.mxu0 0
      %3818 = vmatprep.subr.bf16.mxu0 0
      %3819 = vmatpush1.bf16.msra.mxu0 0
      %3820 = vmatprep.subr.bf16.mxu0 0
      %3821 = vmatpush1.bf16.msra.mxu0 0
      %3822 = vmatprep.mubr.bf16.mxu0 0
      %3823 = vmatmul.mubr.bf16.gmra.mrb[0].mxu0 %v3788
      %v3824 = vpop.f32.mrb[0].mxu0
      %v3825 = vadd.f32 0.0, %v3824
      %v3826 = vpop.f32.mrb[0].mxu0
      %v3827 = vadd.f32 0.0, %v3826
      %v3828 = vpop.f32.mrb[0].mxu0
      %v3829 = vadd.f32 0.0, %v3828
      %v3830 = vpop.f32.mrb[0].mxu0
      %v3831 = vadd.f32 0.0, %v3830
      %3832 = vdwg.mxu0
      %v3833 = vadd.f32 %v3701, %v3825
      %v3834 = vadd.f32 %v3702, %v3827
      %v3835 = vadd.f32 %v3703, %v3829
      %v3836 = vadd.f32 %v3704, %v3831
      %s3837 = scalar_lea.vmem %s493, 384
      %v3838 = vld [vmem:[%s3837] sm:$0xff]
      %v3839 = vld [vmem:[%s3837 + $0x8] sm:$0xff]
      %v3842 = vunpack.c.l.b16 %v3838
      %v3843 = vunpack.c.h.b16 %v3838
      %v3844 = vunpack.c.l.b16 %v3839
      %v3845 = vunpack.c.h.b16 %v3839
      %v3846 = vpack.c.b16 %v3844, %v3842
      %v3847 = vpack.c.b16 %v3845, %v3843
      %3850 = vmatprep.subr.bf16.mxu0 0
      %3851 = vmatpush1.bf16.msra.mxu0 %v650
      %3852 = vmatprep.subr.bf16.mxu0 0
      %3853 = vmatpush1.bf16.msra.mxu0 %v651
      %3854 = vmatprep.subr.bf16.mxu0 0
      %3855 = vmatpush1.bf16.msra.mxu0 %v652
      %3856 = vmatprep.subr.bf16.mxu0 0
      %3857 = vmatpush1.bf16.msra.mxu0 %v653
      %3858 = vmatprep.subr.bf16.mxu0 0
      %3859 = vmatpush1.bf16.msra.mxu0 %v654
      %3860 = vmatprep.subr.bf16.mxu0 0
      %3861 = vmatpush1.bf16.msra.mxu0 %v655
      %3862 = vmatprep.subr.bf16.mxu0 0
      %3863 = vmatpush1.bf16.msra.mxu0 %v656
      %3864 = vmatprep.subr.bf16.mxu0 0
      %3865 = vmatpush1.bf16.msra.mxu0 %v657
      %3866 = vmatprep.subr.bf16.mxu0 0
      %3867 = vmatpush1.bf16.msra.mxu0 %v658
      %3868 = vmatprep.subr.bf16.mxu0 0
      %3869 = vmatpush1.bf16.msra.mxu0 %v659
      %3870 = vmatprep.subr.bf16.mxu0 0
      %3871 = vmatpush1.bf16.msra.mxu0 %v660
      %3872 = vmatprep.subr.bf16.mxu0 0
      %3873 = vmatpush1.bf16.msra.mxu0 %v661
      %3874 = vmatprep.subr.bf16.mxu0 0
      %3875 = vmatpush1.bf16.msra.mxu0 %v662
      %3876 = vmatprep.subr.bf16.mxu0 0
      %3877 = vmatpush1.bf16.msra.mxu0 %v663
      %3878 = vmatprep.subr.bf16.mxu0 0
      %3879 = vmatpush1.bf16.msra.mxu0 %v664
      %3880 = vmatprep.subr.bf16.mxu0 0
      %3881 = vmatpush1.bf16.msra.mxu0 %v665
      %3882 = vmatprep.mubr.bf16.mxu0 %v3847
      %3883 = vmatmul.mubr.bf16.gmra.mrb[0].mxu0 %v3846
      %v3884 = vpop.f32.mrb[0].mxu0
      %v3885 = vadd.f32 %v574, %v3884
      %v3886 = vpop.f32.mrb[0].mxu0
      %v3887 = vpop.f32.mrb[0].mxu0
      %v3888 = vadd.f32 %v574, %v3887
      %v3889 = vpop.f32.mrb[0].mxu0
      %3890 = vdwg.mxu0
      %v3891 = vmax.f32 %v3885, 0.0
      %v3892 = vmax.f32 %v3888, 0.0
      %v3893 = vpack.c.bf16 %v3892, %v3891
      %s3894 = scalar_lea.vmem %s501, 768
      %v3895 = vld [vmem:[%s3894] sm:$0xff]
      %v3896 = vld [vmem:[%s3894 + $0x8] sm:$0xff]
      %v3897 = vld [vmem:[%s3894 + $0x10] sm:$0xff]
      %v3898 = vld [vmem:[%s3894 + $0x18] sm:$0xff]
      %v3903 = vunpack.c.l.b16 %v3895
      %v3904 = vunpack.c.h.b16 %v3895
      %v3905 = vunpack.c.l.b16 %v3896
      %v3906 = vunpack.c.h.b16 %v3896
      %v3907 = vunpack.c.l.b16 %v3897
      %v3908 = vunpack.c.h.b16 %v3897
      %v3909 = vunpack.c.l.b16 %v3898
      %v3910 = vunpack.c.h.b16 %v3898
      %v3911 = vpack.c.b16 %v3905, %v3903
      %v3912 = vpack.c.b16 %v3906, %v3904
      %v3913 = vpack.c.b16 %v3909, %v3907
      %v3914 = vpack.c.b16 %v3910, %v3908
      %v3920 = vsel %vm750, %v3893, 0
      %3922 = vmatprep.subr.bf16.mxu0 %v3912
      %3923 = vmatpush1.bf16.msra.mxu0 %v3911
      %3924 = vmatprep.subr.bf16.mxu0 %v3914
      %3925 = vmatpush1.bf16.msra.mxu0 %v3913
      %3926 = vmatprep.subr.bf16.mxu0 0
      %3927 = vmatpush1.bf16.msra.mxu0 0
      %3928 = vmatprep.subr.bf16.mxu0 0
      %3929 = vmatpush1.bf16.msra.mxu0 0
      %3930 = vmatprep.subr.bf16.mxu0 0
      %3931 = vmatpush1.bf16.msra.mxu0 0
      %3932 = vmatprep.subr.bf16.mxu0 0
      %3933 = vmatpush1.bf16.msra.mxu0 0
      %3934 = vmatprep.subr.bf16.mxu0 0
      %3935 = vmatpush1.bf16.msra.mxu0 0
      %3936 = vmatprep.subr.bf16.mxu0 0
      %3937 = vmatpush1.bf16.msra.mxu0 0
      %3938 = vmatprep.subr.bf16.mxu0 0
      %3939 = vmatpush1.bf16.msra.mxu0 0
      %3940 = vmatprep.subr.bf16.mxu0 0
      %3941 = vmatpush1.bf16.msra.mxu0 0
      %3942 = vmatprep.subr.bf16.mxu0 0
      %3943 = vmatpush1.bf16.msra.mxu0 0
      %3944 = vmatprep.subr.bf16.mxu0 0
      %3945 = vmatpush1.bf16.msra.mxu0 0
      %3946 = vmatprep.subr.bf16.mxu0 0
      %3947 = vmatpush1.bf16.msra.mxu0 0
      %3948 = vmatprep.subr.bf16.mxu0 0
      %3949 = vmatpush1.bf16.msra.mxu0 0
      %3950 = vmatprep.subr.bf16.mxu0 0
      %3951 = vmatpush1.bf16.msra.mxu0 0
      %3952 = vmatprep.subr.bf16.mxu0 0
      %3953 = vmatpush1.bf16.msra.mxu0 0
      %3954 = vmatprep.mubr.bf16.mxu0 0
      %3955 = vmatmul.mubr.bf16.gmra.mrb[0].mxu0 %v3920
      %v3956 = vpop.f32.mrb[0].mxu0
      %v3957 = vadd.f32 0.0, %v3956
      %v3958 = vpop.f32.mrb[0].mxu0
      %v3959 = vadd.f32 0.0, %v3958
      %v3960 = vpop.f32.mrb[0].mxu0
      %v3961 = vadd.f32 0.0, %v3960
      %v3962 = vpop.f32.mrb[0].mxu0
      %v3963 = vadd.f32 0.0, %v3962
      %3964 = vdwg.mxu0
      %v3965 = vadd.f32 %v3833, %v3957
      %v3966 = vadd.f32 %v3834, %v3959
      %v3967 = vadd.f32 %v3835, %v3961
      %v3968 = vadd.f32 %v3836, %v3963
      %s3969 = scalar_lea.vmem %s493, 400
      %v3970 = vld [vmem:[%s3969] sm:$0xff]
      %v3971 = vld [vmem:[%s3969 + $0x8] sm:$0xff]
      %v3974 = vunpack.c.l.b16 %v3970
      %v3975 = vunpack.c.h.b16 %v3970
      %v3976 = vunpack.c.l.b16 %v3971
      %v3977 = vunpack.c.h.b16 %v3971
      %v3978 = vpack.c.b16 %v3976, %v3974
      %v3979 = vpack.c.b16 %v3977, %v3975
      %3982 = vmatprep.subr.bf16.mxu0 0
      %3983 = vmatpush1.bf16.msra.mxu0 %v650
      %3984 = vmatprep.subr.bf16.mxu0 0
      %3985 = vmatpush1.bf16.msra.mxu0 %v651
      %3986 = vmatprep.subr.bf16.mxu0 0
      %3987 = vmatpush1.bf16.msra.mxu0 %v652
      %3988 = vmatprep.subr.bf16.mxu0 0
      %3989 = vmatpush1.bf16.msra.mxu0 %v653
      %3990 = vmatprep.subr.bf16.mxu0 0
      %3991 = vmatpush1.bf16.msra.mxu0 %v654
      %3992 = vmatprep.subr.bf16.mxu0 0
      %3993 = vmatpush1.bf16.msra.mxu0 %v655
      %3994 = vmatprep.subr.bf16.mxu0 0
      %3995 = vmatpush1.bf16.msra.mxu0 %v656
      %3996 = vmatprep.subr.bf16.mxu0 0
      %3997 = vmatpush1.bf16.msra.mxu0 %v657
      %3998 = vmatprep.subr.bf16.mxu0 0
      %3999 = vmatpush1.bf16.msra.mxu0 %v658
      %4000 = vmatprep.subr.bf16.mxu0 0
      %4001 = vmatpush1.bf16.msra.mxu0 %v659
      %4002 = vmatprep.subr.bf16.mxu0 0
      %4003 = vmatpush1.bf16.msra.mxu0 %v660
      %4004 = vmatprep.subr.bf16.mxu0 0
      %4005 = vmatpush1.bf16.msra.mxu0 %v661
      %4006 = vmatprep.subr.bf16.mxu0 0
      %4007 = vmatpush1.bf16.msra.mxu0 %v662
      %4008 = vmatprep.subr.bf16.mxu0 0
      %4009 = vmatpush1.bf16.msra.mxu0 %v663
      %4010 = vmatprep.subr.bf16.mxu0 0
      %4011 = vmatpush1.bf16.msra.mxu0 %v664
      %4012 = vmatprep.subr.bf16.mxu0 0
      %4013 = vmatpush1.bf16.msra.mxu0 %v665
      %4014 = vmatprep.mubr.bf16.mxu0 %v3979
      %4015 = vmatmul.mubr.bf16.gmra.mrb[0].mxu0 %v3978
      %v4016 = vpop.f32.mrb[0].mxu0
      %v4017 = vadd.f32 %v574, %v4016
      %v4018 = vpop.f32.mrb[0].mxu0
      %v4019 = vpop.f32.mrb[0].mxu0
      %v4020 = vadd.f32 %v574, %v4019
      %v4021 = vpop.f32.mrb[0].mxu0
      %4022 = vdwg.mxu0
      %v4023 = vmax.f32 %v4017, 0.0
      %v4024 = vmax.f32 %v4020, 0.0
      %v4025 = vpack.c.bf16 %v4024, %v4023
      %s4026 = scalar_lea.vmem %s501, 800
      %v4027 = vld [vmem:[%s4026] sm:$0xff]
      %v4028 = vld [vmem:[%s4026 + $0x8] sm:$0xff]
      %v4029 = vld [vmem:[%s4026 + $0x10] sm:$0xff]
      %v4030 = vld [vmem:[%s4026 + $0x18] sm:$0xff]
      %v4035 = vunpack.c.l.b16 %v4027
      %v4036 = vunpack.c.h.b16 %v4027
      %v4037 = vunpack.c.l.b16 %v4028
      %v4038 = vunpack.c.h.b16 %v4028
      %v4039 = vunpack.c.l.b16 %v4029
      %v4040 = vunpack.c.h.b16 %v4029
      %v4041 = vunpack.c.l.b16 %v4030
      %v4042 = vunpack.c.h.b16 %v4030
      %v4043 = vpack.c.b16 %v4037, %v4035
      %v4044 = vpack.c.b16 %v4038, %v4036
      %v4045 = vpack.c.b16 %v4041, %v4039
      %v4046 = vpack.c.b16 %v4042, %v4040
      %v4052 = vsel %vm750, %v4025, 0
      %4054 = vmatprep.subr.bf16.mxu0 %v4044
      %4055 = vmatpush1.bf16.msra.mxu0 %v4043
      %4056 = vmatprep.subr.bf16.mxu0 %v4046
      %4057 = vmatpush1.bf16.msra.mxu0 %v4045
      %4058 = vmatprep.subr.bf16.mxu0 0
      %4059 = vmatpush1.bf16.msra.mxu0 0
      %4060 = vmatprep.subr.bf16.mxu0 0
      %4061 = vmatpush1.bf16.msra.mxu0 0
      %4062 = vmatprep.subr.bf16.mxu0 0
      %4063 = vmatpush1.bf16.msra.mxu0 0
      %4064 = vmatprep.subr.bf16.mxu0 0
      %4065 = vmatpush1.bf16.msra.mxu0 0
      %4066 = vmatprep.subr.bf16.mxu0 0
      %4067 = vmatpush1.bf16.msra.mxu0 0
      %4068 = vmatprep.subr.bf16.mxu0 0
      %4069 = vmatpush1.bf16.msra.mxu0 0
      %4070 = vmatprep.subr.bf16.mxu0 0
      %4071 = vmatpush1.bf16.msra.mxu0 0
      %4072 = vmatprep.subr.bf16.mxu0 0
      %4073 = vmatpush1.bf16.msra.mxu0 0
      %4074 = vmatprep.subr.bf16.mxu0 0
      %4075 = vmatpush1.bf16.msra.mxu0 0
      %4076 = vmatprep.subr.bf16.mxu0 0
      %4077 = vmatpush1.bf16.msra.mxu0 0
      %4078 = vmatprep.subr.bf16.mxu0 0
      %4079 = vmatpush1.bf16.msra.mxu0 0
      %4080 = vmatprep.subr.bf16.mxu0 0
      %4081 = vmatpush1.bf16.msra.mxu0 0
      %4082 = vmatprep.subr.bf16.mxu0 0
      %4083 = vmatpush1.bf16.msra.mxu0 0
      %4084 = vmatprep.subr.bf16.mxu0 0
      %4085 = vmatpush1.bf16.msra.mxu0 0
      %4086 = vmatprep.mubr.bf16.mxu0 0
      %4087 = vmatmul.mubr.bf16.gmra.mrb[0].mxu0 %v4052
      %v4088 = vpop.f32.mrb[0].mxu0
      %v4089 = vadd.f32 0.0, %v4088
      %v4090 = vpop.f32.mrb[0].mxu0
      %v4091 = vadd.f32 0.0, %v4090
      %v4092 = vpop.f32.mrb[0].mxu0
      %v4093 = vadd.f32 0.0, %v4092
      %v4094 = vpop.f32.mrb[0].mxu0
      %v4095 = vadd.f32 0.0, %v4094
      %4096 = vdwg.mxu0
      %v4097 = vadd.f32 %v3965, %v4089
      %v4098 = vadd.f32 %v3966, %v4091
      %v4099 = vadd.f32 %v3967, %v4093
      %v4100 = vadd.f32 %v3968, %v4095
      %s4101 = scalar_lea.vmem %s493, 416
      %v4102 = vld [vmem:[%s4101] sm:$0xff]
      %v4103 = vld [vmem:[%s4101 + $0x8] sm:$0xff]
      %v4106 = vunpack.c.l.b16 %v4102
      %v4107 = vunpack.c.h.b16 %v4102
      %v4108 = vunpack.c.l.b16 %v4103
      %v4109 = vunpack.c.h.b16 %v4103
      %v4110 = vpack.c.b16 %v4108, %v4106
      %v4111 = vpack.c.b16 %v4109, %v4107
      %4114 = vmatprep.subr.bf16.mxu0 0
      %4115 = vmatpush1.bf16.msra.mxu0 %v650
      %4116 = vmatprep.subr.bf16.mxu0 0
      %4117 = vmatpush1.bf16.msra.mxu0 %v651
      %4118 = vmatprep.subr.bf16.mxu0 0
      %4119 = vmatpush1.bf16.msra.mxu0 %v652
      %4120 = vmatprep.subr.bf16.mxu0 0
      %4121 = vmatpush1.bf16.msra.mxu0 %v653
      %4122 = vmatprep.subr.bf16.mxu0 0
      %4123 = vmatpush1.bf16.msra.mxu0 %v654
      %4124 = vmatprep.subr.bf16.mxu0 0
      %4125 = vmatpush1.bf16.msra.mxu0 %v655
      %4126 = vmatprep.subr.bf16.mxu0 0
      %4127 = vmatpush1.bf16.msra.mxu0 %v656
      %4128 = vmatprep.subr.bf16.mxu0 0
      %4129 = vmatpush1.bf16.msra.mxu0 %v657
      %4130 = vmatprep.subr.bf16.mxu0 0
      %4131 = vmatpush1.bf16.msra.mxu0 %v658
      %4132 = vmatprep.subr.bf16.mxu0 0
      %4133 = vmatpush1.bf16.msra.mxu0 %v659
      %4134 = vmatprep.subr.bf16.mxu0 0
      %4135 = vmatpush1.bf16.msra.mxu0 %v660
      %4136 = vmatprep.subr.bf16.mxu0 0
      %4137 = vmatpush1.bf16.msra.mxu0 %v661
      %4138 = vmatprep.subr.bf16.mxu0 0
      %4139 = vmatpush1.bf16.msra.mxu0 %v662
      %4140 = vmatprep.subr.bf16.mxu0 0
      %4141 = vmatpush1.bf16.msra.mxu0 %v663
      %4142 = vmatprep.subr.bf16.mxu0 0
      %4143 = vmatpush1.bf16.msra.mxu0 %v664
      %4144 = vmatprep.subr.bf16.mxu0 0
      %4145 = vmatpush1.bf16.msra.mxu0 %v665
      %4146 = vmatprep.mubr.bf16.mxu0 %v4111
      %4147 = vmatmul.mubr.bf16.gmra.mrb[0].mxu0 %v4110
      %v4148 = vpop.f32.mrb[0].mxu0
      %v4149 = vadd.f32 %v574, %v4148
      %v4150 = vpop.f32.mrb[0].mxu0
      %v4151 = vpop.f32.mrb[0].mxu0
      %v4152 = vadd.f32 %v574, %v4151
      %v4153 = vpop.f32.mrb[0].mxu0
      %4154 = vdwg.mxu0
      %v4155 = vmax.f32 %v4149, 0.0
      %v4156 = vmax.f32 %v4152, 0.0
      %v4157 = vpack.c.bf16 %v4156, %v4155
      %s4158 = scalar_lea.vmem %s501, 832
      %v4159 = vld [vmem:[%s4158] sm:$0xff]
      %v4160 = vld [vmem:[%s4158 + $0x8] sm:$0xff]
      %v4161 = vld [vmem:[%s4158 + $0x10] sm:$0xff]
      %v4162 = vld [vmem:[%s4158 + $0x18] sm:$0xff]
      %v4167 = vunpack.c.l.b16 %v4159
      %v4168 = vunpack.c.h.b16 %v4159
      %v4169 = vunpack.c.l.b16 %v4160
      %v4170 = vunpack.c.h.b16 %v4160
      %v4171 = vunpack.c.l.b16 %v4161
      %v4172 = vunpack.c.h.b16 %v4161
      %v4173 = vunpack.c.l.b16 %v4162
      %v4174 = vunpack.c.h.b16 %v4162
      %v4175 = vpack.c.b16 %v4169, %v4167
      %v4176 = vpack.c.b16 %v4170, %v4168
      %v4177 = vpack.c.b16 %v4173, %v4171
      %v4178 = vpack.c.b16 %v4174, %v4172
      %v4184 = vsel %vm750, %v4157, 0
      %4186 = vmatprep.subr.bf16.mxu0 %v4176
      %4187 = vmatpush1.bf16.msra.mxu0 %v4175
      %4188 = vmatprep.subr.bf16.mxu0 %v4178
      %4189 = vmatpush1.bf16.msra.mxu0 %v4177
      %4190 = vmatprep.subr.bf16.mxu0 0
      %4191 = vmatpush1.bf16.msra.mxu0 0
      %4192 = vmatprep.subr.bf16.mxu0 0
      %4193 = vmatpush1.bf16.msra.mxu0 0
      %4194 = vmatprep.subr.bf16.mxu0 0
      %4195 = vmatpush1.bf16.msra.mxu0 0
      %4196 = vmatprep.subr.bf16.mxu0 0
      %4197 = vmatpush1.bf16.msra.mxu0 0
      %4198 = vmatprep.subr.bf16.mxu0 0
      %4199 = vmatpush1.bf16.msra.mxu0 0
      %4200 = vmatprep.subr.bf16.mxu0 0
      %4201 = vmatpush1.bf16.msra.mxu0 0
      %4202 = vmatprep.subr.bf16.mxu0 0
      %4203 = vmatpush1.bf16.msra.mxu0 0
      %4204 = vmatprep.subr.bf16.mxu0 0
      %4205 = vmatpush1.bf16.msra.mxu0 0
      %4206 = vmatprep.subr.bf16.mxu0 0
      %4207 = vmatpush1.bf16.msra.mxu0 0
      %4208 = vmatprep.subr.bf16.mxu0 0
      %4209 = vmatpush1.bf16.msra.mxu0 0
      %4210 = vmatprep.subr.bf16.mxu0 0
      %4211 = vmatpush1.bf16.msra.mxu0 0
      %4212 = vmatprep.subr.bf16.mxu0 0
      %4213 = vmatpush1.bf16.msra.mxu0 0
      %4214 = vmatprep.subr.bf16.mxu0 0
      %4215 = vmatpush1.bf16.msra.mxu0 0
      %4216 = vmatprep.subr.bf16.mxu0 0
      %4217 = vmatpush1.bf16.msra.mxu0 0
      %4218 = vmatprep.mubr.bf16.mxu0 0
      %4219 = vmatmul.mubr.bf16.gmra.mrb[0].mxu0 %v4184
      %v4220 = vpop.f32.mrb[0].mxu0
      %v4221 = vadd.f32 0.0, %v4220
      %v4222 = vpop.f32.mrb[0].mxu0
      %v4223 = vadd.f32 0.0, %v4222
      %v4224 = vpop.f32.mrb[0].mxu0
      %v4225 = vadd.f32 0.0, %v4224
      %v4226 = vpop.f32.mrb[0].mxu0
      %v4227 = vadd.f32 0.0, %v4226
      %4228 = vdwg.mxu0
      %v4229 = vadd.f32 %v4097, %v4221
      %v4230 = vadd.f32 %v4098, %v4223
      %v4231 = vadd.f32 %v4099, %v4225
      %v4232 = vadd.f32 %v4100, %v4227
      %4233 = vst [vmem:[#allocation2] sm:$0xff] %v4229
      %4234 = vst [vmem:[#allocation2 + $0x8] sm:$0xff] %v4230
      %4235 = vst [vmem:[#allocation2 + $0x10] sm:$0xff] %v4231
      %4236 = vst [vmem:[#allocation2 + $0x18] sm:$0xff] %v4232
      %p4237 = scmp.eq.s32.totalorder %s28, 2
      // Predicated region
      $region73: #{actor_critic_forward.3} parent=67 // pred_check
        %p4238 = pneg %p4237
      $region74: #{actor_critic_forward.3} parent=67 // pred_check_branch
        %4240 = sbr.rel (%p4238) target = $region76
      $region75: #{actor_critic_forward.3} parent=67 // pred_region
        %v4241 = vld [vmem:[#allocation2] sm:$0xff]
        %v4242 = vld [vmem:[#allocation2 + $0x8] sm:$0xff]
        %v4243 = vld [vmem:[#allocation2 + $0x10] sm:$0xff]
        %v4244 = vld [vmem:[#allocation2 + $0x18] sm:$0xff]
        %v4245 = vld [vmem:[%s4] sm:$0x3]
        %v4247 = vlaneseq
        %v4248 = vshrl.u32 %v4247, 7
        %v4249 = vsub.s32 0, %v4248
        %v4250 = vrot.slane %v4245, %v4249
        %v4251 = vlaneseq
        %v4252 = vshrl.u32 %v4251, 7
        %v4253 = vsub.s32 1, %v4252
        %v4254 = vrot.slane %v4245, %v4253
        %v4257 = vadd.f32 %v4241, %v4250
        %v4258 = vadd.f32 %v4242, %v4254
        %v4259 = vadd.f32 %v4243, %v4250
        %v4260 = vadd.f32 %v4244, %v4254
        %v4261 = vpack.c.bf16 %v4259, %v4257
        %v4262 = vpack.c.bf16 %v4260, %v4258
        %v4263 = vld [vmem:[%s7] sm:$0xff]
        %v4264 = vld [vmem:[%s7 + $0x8] sm:$0xff]
        %v4265 = vld [vmem:[%s7 + $0x10] sm:$0xff]
        %v4266 = vld [vmem:[%s7 + $0x18] sm:$0xff]
        %v4267 = vld [vmem:[%s7 + $0x20] sm:$0xff]
        %v4268 = vld [vmem:[%s7 + $0x28] sm:$0xff]
        %v4269 = vld [vmem:[%s7 + $0x30] sm:$0xff]
        %v4270 = vld [vmem:[%s7 + $0x38] sm:$0xff]
        %v4271 = vld [vmem:[%s7 + $0x40] sm:$0xff]
        %v4272 = vld [vmem:[%s7 + $0x48] sm:$0xff]
        %v4273 = vld [vmem:[%s7 + $0x50] sm:$0xff]
        %v4274 = vld [vmem:[%s7 + $0x58] sm:$0xff]
        %v4275 = vld [vmem:[%s7 + $0x60] sm:$0xff]
        %v4276 = vld [vmem:[%s7 + $0x68] sm:$0xff]
        %v4277 = vld [vmem:[%s7 + $0x70] sm:$0xff]
        %v4278 = vld [vmem:[%s7 + $0x78] sm:$0xff]
        %v4279 = vld [vmem:[%s7 + $0x80] sm:$0xff]
        %v4280 = vld [vmem:[%s7 + $0x88] sm:$0xff]
        %v4281 = vld [vmem:[%s7 + $0x90] sm:$0xff]
        %v4282 = vld [vmem:[%s7 + $0x98] sm:$0xff]
        %v4283 = vld [vmem:[%s7 + $0xa0] sm:$0xff]
        %v4284 = vld [vmem:[%s7 + $0xa8] sm:$0xff]
        %v4285 = vld [vmem:[%s7 + $0xb0] sm:$0xff]
        %v4286 = vld [vmem:[%s7 + $0xb8] sm:$0xff]
        %v4287 = vld [vmem:[%s7 + $0xc0] sm:$0xff]
        %v4288 = vld [vmem:[%s7 + $0xc8] sm:$0xff]
        %v4289 = vld [vmem:[%s7 + $0xd0] sm:$0xff]
        %v4290 = vld [vmem:[%s7 + $0xd8] sm:$0xff]
        %v4291 = vld [vmem:[%s7 + $0xe0] sm:$0xff]
        %v4292 = vld [vmem:[%s7 + $0xe8] sm:$0xff]
        %v4293 = vld [vmem:[%s7 + $0xf0] sm:$0xff]
        %v4294 = vld [vmem:[%s7 + $0xf8] sm:$0xff]
        %v4295 = vld [vmem:[%s7 + $0x100] sm:$0xff]
        %v4296 = vld [vmem:[%s7 + $0x108] sm:$0xff]
        %v4297 = vld [vmem:[%s7 + $0x110] sm:$0xff]
        %v4298 = vld [vmem:[%s7 + $0x118] sm:$0xff]
        %v4299 = vld [vmem:[%s7 + $0x120] sm:$0xff]
        %v4300 = vld [vmem:[%s7 + $0x128] sm:$0xff]
        %v4301 = vld [vmem:[%s7 + $0x130] sm:$0xff]
        %v4302 = vld [vmem:[%s7 + $0x138] sm:$0xff]
        %v4303 = vld [vmem:[%s7 + $0x140] sm:$0xff]
        %v4304 = vld [vmem:[%s7 + $0x148] sm:$0xff]
        %v4305 = vld [vmem:[%s7 + $0x150] sm:$0xff]
        %v4306 = vld [vmem:[%s7 + $0x158] sm:$0xff]
        %v4307 = vld [vmem:[%s7 + $0x160] sm:$0xff]
        %v4308 = vld [vmem:[%s7 + $0x168] sm:$0xff]
        %v4309 = vld [vmem:[%s7 + $0x170] sm:$0xff]
        %v4310 = vld [vmem:[%s7 + $0x178] sm:$0xff]
        %v4311 = vld [vmem:[%s7 + $0x180] sm:$0xff]
        %v4312 = vld [vmem:[%s7 + $0x188] sm:$0xff]
        %v4313 = vld [vmem:[%s7 + $0x190] sm:$0xff]
        %v4314 = vld [vmem:[%s7 + $0x198] sm:$0xff]
        %v4315 = vld [vmem:[%s7 + $0x1a0] sm:$0xff]
        %v4316 = vld [vmem:[%s7 + $0x1a8] sm:$0xff]
        %v4317 = vld [vmem:[%s7 + $0x1b0] sm:$0xff]
        %v4318 = vld [vmem:[%s7 + $0x1b8] sm:$0xff]
        %v4319 = vld [vmem:[%s7 + $0x1c0] sm:$0xff]
        %v4320 = vld [vmem:[%s7 + $0x1c8] sm:$0xff]
        %v4321 = vld [vmem:[%s7 + $0x1d0] sm:$0xff]
        %v4322 = vld [vmem:[%s7 + $0x1d8] sm:$0xff]
        %v4323 = vld [vmem:[%s7 + $0x1e0] sm:$0xff]
        %v4324 = vld [vmem:[%s7 + $0x1e8] sm:$0xff]
        %v4325 = vld [vmem:[%s7 + $0x1f0] sm:$0xff]
        %v4326 = vld [vmem:[%s7 + $0x1f8] sm:$0xff]
        %v4327 = vld [vmem:[%s507] sm:$0xff]
        %v4328 = vld [vmem:[%s507 + $0x8] sm:$0xff]
        %v4329 = vpack.c.bf16 %v4328, %v4327
        %v4330 = vld [vmem:[%s8] sm:$0xff]
        %v4331 = vld [vmem:[%s8 + $0x8] sm:$0xff]
        %v4332 = vld [vmem:[%s8 + $0x10] sm:$0xff]
        %v4333 = vld [vmem:[%s8 + $0x18] sm:$0xff]
        %v4334 = vld [vmem:[%s8 + $0x20] sm:$0xff]
        %v4335 = vld [vmem:[%s8 + $0x28] sm:$0xff]
        %v4336 = vld [vmem:[%s8 + $0x30] sm:$0xff]
        %v4337 = vld [vmem:[%s8 + $0x38] sm:$0xff]
        %v4338 = vld [vmem:[%s8 + $0x40] sm:$0xff]
        %v4339 = vld [vmem:[%s8 + $0x48] sm:$0xff]
        %v4340 = vld [vmem:[%s8 + $0x50] sm:$0xff]
        %v4341 = vld [vmem:[%s8 + $0x58] sm:$0xff]
        %v4342 = vld [vmem:[%s8 + $0x60] sm:$0xff]
        %v4343 = vld [vmem:[%s8 + $0x68] sm:$0xff]
        %v4344 = vld [vmem:[%s8 + $0x70] sm:$0xff]
        %v4345 = vld [vmem:[%s8 + $0x78] sm:$0xff]
        %v4346 = vld [vmem:[%s8 + $0x80] sm:$0xff]
        %v4347 = vld [vmem:[%s8 + $0x88] sm:$0xff]
        %v4348 = vld [vmem:[%s8 + $0x90] sm:$0xff]
        %v4349 = vld [vmem:[%s8 + $0x98] sm:$0xff]
        %v4350 = vld [vmem:[%s8 + $0xa0] sm:$0xff]
        %v4351 = vld [vmem:[%s8 + $0xa8] sm:$0xff]
        %v4352 = vld [vmem:[%s8 + $0xb0] sm:$0xff]
        %v4353 = vld [vmem:[%s8 + $0xb8] sm:$0xff]
        %v4354 = vld [vmem:[%s8 + $0xc0] sm:$0xff]
        %v4355 = vld [vmem:[%s8 + $0xc8] sm:$0xff]
        %v4356 = vld [vmem:[%s8 + $0xd0] sm:$0xff]
        %v4357 = vld [vmem:[%s8 + $0xd8] sm:$0xff]
        %v4358 = vld [vmem:[%s8 + $0xe0] sm:$0xff]
        %v4359 = vld [vmem:[%s8 + $0xe8] sm:$0xff]
        %v4360 = vld [vmem:[%s8 + $0xf0] sm:$0xff]
        %v4361 = vld [vmem:[%s8 + $0xf8] sm:$0xff]
        %v4394 = vunpack.c.l.b16 %v4330
        %v4395 = vunpack.c.h.b16 %v4330
        %v4396 = vunpack.c.l.b16 %v4331
        %v4397 = vunpack.c.h.b16 %v4331
        %v4398 = vunpack.c.l.b16 %v4332
        %v4399 = vunpack.c.h.b16 %v4332
        %v4400 = vunpack.c.l.b16 %v4333
        %v4401 = vunpack.c.h.b16 %v4333
        %v4402 = vunpack.c.l.b16 %v4334
        %v4403 = vunpack.c.h.b16 %v4334
        %v4404 = vunpack.c.l.b16 %v4335
        %v4405 = vunpack.c.h.b16 %v4335
        %v4406 = vunpack.c.l.b16 %v4336
        %v4407 = vunpack.c.h.b16 %v4336
        %v4408 = vunpack.c.l.b16 %v4337
        %v4409 = vunpack.c.h.b16 %v4337
        %v4410 = vunpack.c.l.b16 %v4338
        %v4411 = vunpack.c.h.b16 %v4338
        %v4412 = vunpack.c.l.b16 %v4339
        %v4413 = vunpack.c.h.b16 %v4339
        %v4414 = vunpack.c.l.b16 %v4340
        %v4415 = vunpack.c.h.b16 %v4340
        %v4416 = vunpack.c.l.b16 %v4341
        %v4417 = vunpack.c.h.b16 %v4341
        %v4418 = vunpack.c.l.b16 %v4342
        %v4419 = vunpack.c.h.b16 %v4342
        %v4420 = vunpack.c.l.b16 %v4343
        %v4421 = vunpack.c.h.b16 %v4343
        %v4422 = vunpack.c.l.b16 %v4344
        %v4423 = vunpack.c.h.b16 %v4344
        %v4424 = vunpack.c.l.b16 %v4345
        %v4425 = vunpack.c.h.b16 %v4345
        %v4426 = vunpack.c.l.b16 %v4346
        %v4427 = vunpack.c.h.b16 %v4346
        %v4428 = vunpack.c.l.b16 %v4347
        %v4429 = vunpack.c.h.b16 %v4347
        %v4430 = vunpack.c.l.b16 %v4348
        %v4431 = vunpack.c.h.b16 %v4348
        %v4432 = vunpack.c.l.b16 %v4349
        %v4433 = vunpack.c.h.b16 %v4349
        %v4434 = vunpack.c.l.b16 %v4350
        %v4435 = vunpack.c.h.b16 %v4350
        %v4436 = vunpack.c.l.b16 %v4351
        %v4437 = vunpack.c.h.b16 %v4351
        %v4438 = vunpack.c.l.b16 %v4352
        %v4439 = vunpack.c.h.b16 %v4352
        %v4440 = vunpack.c.l.b16 %v4353
        %v4441 = vunpack.c.h.b16 %v4353
        %v4442 = vunpack.c.l.b16 %v4354
        %v4443 = vunpack.c.h.b16 %v4354
        %v4444 = vunpack.c.l.b16 %v4355
        %v4445 = vunpack.c.h.b16 %v4355
        %v4446 = vunpack.c.l.b16 %v4356
        %v4447 = vunpack.c.h.b16 %v4356
        %v4448 = vunpack.c.l.b16 %v4357
        %v4449 = vunpack.c.h.b16 %v4357
        %v4450 = vunpack.c.l.b16 %v4358
        %v4451 = vunpack.c.h.b16 %v4358
        %v4452 = vunpack.c.l.b16 %v4359
        %v4453 = vunpack.c.h.b16 %v4359
        %v4454 = vunpack.c.l.b16 %v4360
        %v4455 = vunpack.c.h.b16 %v4360
        %v4456 = vunpack.c.l.b16 %v4361
        %v4457 = vunpack.c.h.b16 %v4361
        %v4458 = vpack.c.b16 %v4398, %v4394
        %v4459 = vpack.c.b16 %v4399, %v4395
        %v4460 = vpack.c.b16 %v4400, %v4396
        %v4461 = vpack.c.b16 %v4401, %v4397
        %v4462 = vpack.c.b16 %v4406, %v4402
        %v4463 = vpack.c.b16 %v4407, %v4403
        %v4464 = vpack.c.b16 %v4408, %v4404
        %v4465 = vpack.c.b16 %v4409, %v4405
        %v4466 = vpack.c.b16 %v4414, %v4410
        %v4467 = vpack.c.b16 %v4415, %v4411
        %v4468 = vpack.c.b16 %v4416, %v4412
        %v4469 = vpack.c.b16 %v4417, %v4413
        %v4470 = vpack.c.b16 %v4422, %v4418
        %v4471 = vpack.c.b16 %v4423, %v4419
        %v4472 = vpack.c.b16 %v4424, %v4420
        %v4473 = vpack.c.b16 %v4425, %v4421
        %v4474 = vpack.c.b16 %v4430, %v4426
        %v4475 = vpack.c.b16 %v4431, %v4427
        %v4476 = vpack.c.b16 %v4432, %v4428
        %v4477 = vpack.c.b16 %v4433, %v4429
        %v4478 = vpack.c.b16 %v4438, %v4434
        %v4479 = vpack.c.b16 %v4439, %v4435
        %v4480 = vpack.c.b16 %v4440, %v4436
        %v4481 = vpack.c.b16 %v4441, %v4437
        %v4482 = vpack.c.b16 %v4446, %v4442
        %v4483 = vpack.c.b16 %v4447, %v4443
        %v4484 = vpack.c.b16 %v4448, %v4444
        %v4485 = vpack.c.b16 %v4449, %v4445
        %v4486 = vpack.c.b16 %v4454, %v4450
        %v4487 = vpack.c.b16 %v4455, %v4451
        %v4488 = vpack.c.b16 %v4456, %v4452
        %v4489 = vpack.c.b16 %v4457, %v4453
        %4522 = vmatprep.subr.bf16.mxu0 %v4459
        %4523 = vmatpush1.bf16.msra.mxu0 %v4458
        %4524 = vmatprep.subr.bf16.mxu0 %v4463
        %4525 = vmatpush1.bf16.msra.mxu0 %v4462
        %4526 = vmatprep.subr.bf16.mxu0 %v4467
        %4527 = vmatpush1.bf16.msra.mxu0 %v4466
        %4528 = vmatprep.subr.bf16.mxu0 %v4471
        %4529 = vmatpush1.bf16.msra.mxu0 %v4470
        %4530 = vmatprep.subr.bf16.mxu0 %v4475
        %4531 = vmatpush1.bf16.msra.mxu0 %v4474
        %4532 = vmatprep.subr.bf16.mxu0 %v4479
        %4533 = vmatpush1.bf16.msra.mxu0 %v4478
        %4534 = vmatprep.subr.bf16.mxu0 %v4483
        %4535 = vmatpush1.bf16.msra.mxu0 %v4482
        %4536 = vmatprep.subr.bf16.mxu0 %v4487
        %4537 = vmatpush1.bf16.msra.mxu0 %v4486
        %4538 = vmatprep.subr.bf16.mxu0 0
        %4539 = vmatpush1.bf16.msra.mxu0 0
        %4540 = vmatprep.subr.bf16.mxu0 0
        %4541 = vmatpush1.bf16.msra.mxu0 0
        %4542 = vmatprep.subr.bf16.mxu0 0
        %4543 = vmatpush1.bf16.msra.mxu0 0
        %4544 = vmatprep.subr.bf16.mxu0 0
        %4545 = vmatpush1.bf16.msra.mxu0 0
        %4546 = vmatprep.subr.bf16.mxu0 0
        %4547 = vmatpush1.bf16.msra.mxu0 0
        %4548 = vmatprep.subr.bf16.mxu0 0
        %4549 = vmatpush1.bf16.msra.mxu0 0
        %4550 = vmatprep.subr.bf16.mxu0 0
        %4551 = vmatpush1.bf16.msra.mxu0 0
        %4552 = vmatprep.subr.bf16.mxu0 0
        %4553 = vmatpush1.bf16.msra.mxu0 0
        %4554 = vmatprep.mubr.bf16.mxu0 0
        %4555 = vmatmul.mubr.bf16.gmra.mrb[0].mxu0 %v4329
        %v4556 = vpop.f32.mrb[0].mxu0
        %v4557 = vadd.f32 0.0, %v4556
        %v4558 = vpop.f32.mrb[0].mxu0
        %v4559 = vadd.f32 0.0, %v4558
        %v4560 = vpop.f32.mrb[0].mxu0
        %v4561 = vadd.f32 0.0, %v4560
        %v4562 = vpop.f32.mrb[0].mxu0
        %v4563 = vadd.f32 0.0, %v4562
        %4564 = vdwg.mxu0
        %4565 = vmatprep.subr.bf16.mxu0 %v4461
        %4566 = vmatpush1.bf16.msra.mxu0 %v4460
        %4567 = vmatprep.subr.bf16.mxu0 %v4465
        %4568 = vmatpush1.bf16.msra.mxu0 %v4464
        %4569 = vmatprep.subr.bf16.mxu0 %v4469
        %4570 = vmatpush1.bf16.msra.mxu0 %v4468
        %4571 = vmatprep.subr.bf16.mxu0 %v4473
        %4572 = vmatpush1.bf16.msra.mxu0 %v4472
        %4573 = vmatprep.subr.bf16.mxu0 %v4477
        %4574 = vmatpush1.bf16.msra.mxu0 %v4476
        %4575 = vmatprep.subr.bf16.mxu0 %v4481
        %4576 = vmatpush1.bf16.msra.mxu0 %v4480
        %4577 = vmatprep.subr.bf16.mxu0 %v4485
        %4578 = vmatpush1.bf16.msra.mxu0 %v4484
        %4579 = vmatprep.subr.bf16.mxu0 %v4489
        %4580 = vmatpush1.bf16.msra.mxu0 %v4488
        %4581 = vmatprep.subr.bf16.mxu0 0
        %4582 = vmatpush1.bf16.msra.mxu0 0
        %4583 = vmatprep.subr.bf16.mxu0 0
        %4584 = vmatpush1.bf16.msra.mxu0 0
        %4585 = vmatprep.subr.bf16.mxu0 0
        %4586 = vmatpush1.bf16.msra.mxu0 0
        %4587 = vmatprep.subr.bf16.mxu0 0
        %4588 = vmatpush1.bf16.msra.mxu0 0
        %4589 = vmatprep.subr.bf16.mxu0 0
        %4590 = vmatpush1.bf16.msra.mxu0 0
        %4591 = vmatprep.subr.bf16.mxu0 0
        %4592 = vmatpush1.bf16.msra.mxu0 0
        %4593 = vmatprep.subr.bf16.mxu0 0
        %4594 = vmatpush1.bf16.msra.mxu0 0
        %4595 = vmatprep.subr.bf16.mxu0 0
        %4596 = vmatpush1.bf16.msra.mxu0 0
        %4597 = vmatprep.mubr.bf16.mxu0 0
        %4598 = vmatmul.mubr.bf16.gmra.mrb[0].mxu0 %v4329
        %v4599 = vpop.f32.mrb[0].mxu0
        %v4600 = vadd.f32 0.0, %v4599
        %v4601 = vpop.f32.mrb[0].mxu0
        %v4602 = vadd.f32 0.0, %v4601
        %v4603 = vpop.f32.mrb[0].mxu0
        %v4604 = vadd.f32 0.0, %v4603
        %v4605 = vpop.f32.mrb[0].mxu0
        %v4606 = vadd.f32 0.0, %v4605
        %4607 = vdwg.mxu0
        %v4672 = vunpack.c.l.b16 %v4263
        %v4673 = vunpack.c.h.b16 %v4263
        %v4674 = vunpack.c.l.b16 %v4264
        %v4675 = vunpack.c.h.b16 %v4264
        %v4676 = vunpack.c.l.b16 %v4265
        %v4677 = vunpack.c.h.b16 %v4265
        %v4678 = vunpack.c.l.b16 %v4266
        %v4679 = vunpack.c.h.b16 %v4266
        %v4680 = vunpack.c.l.b16 %v4267
        %v4681 = vunpack.c.h.b16 %v4267
        %v4682 = vunpack.c.l.b16 %v4268
        %v4683 = vunpack.c.h.b16 %v4268
        %v4684 = vunpack.c.l.b16 %v4269
        %v4685 = vunpack.c.h.b16 %v4269
        %v4686 = vunpack.c.l.b16 %v4270
        %v4687 = vunpack.c.h.b16 %v4270
        %v4688 = vunpack.c.l.b16 %v4271
        %v4689 = vunpack.c.h.b16 %v4271
        %v4690 = vunpack.c.l.b16 %v4272
        %v4691 = vunpack.c.h.b16 %v4272
        %v4692 = vunpack.c.l.b16 %v4273
        %v4693 = vunpack.c.h.b16 %v4273
        %v4694 = vunpack.c.l.b16 %v4274
        %v4695 = vunpack.c.h.b16 %v4274
        %v4696 = vunpack.c.l.b16 %v4275
        %v4697 = vunpack.c.h.b16 %v4275
        %v4698 = vunpack.c.l.b16 %v4276
        %v4699 = vunpack.c.h.b16 %v4276
        %v4700 = vunpack.c.l.b16 %v4277
        %v4701 = vunpack.c.h.b16 %v4277
        %v4702 = vunpack.c.l.b16 %v4278
        %v4703 = vunpack.c.h.b16 %v4278
        %v4704 = vunpack.c.l.b16 %v4279
        %v4705 = vunpack.c.h.b16 %v4279
        %v4706 = vunpack.c.l.b16 %v4280
        %v4707 = vunpack.c.h.b16 %v4280
        %v4708 = vunpack.c.l.b16 %v4281
        %v4709 = vunpack.c.h.b16 %v4281
        %v4710 = vunpack.c.l.b16 %v4282
        %v4711 = vunpack.c.h.b16 %v4282
        %v4712 = vunpack.c.l.b16 %v4283
        %v4713 = vunpack.c.h.b16 %v4283
        %v4714 = vunpack.c.l.b16 %v4284
        %v4715 = vunpack.c.h.b16 %v4284
        %v4716 = vunpack.c.l.b16 %v4285
        %v4717 = vunpack.c.h.b16 %v4285
        %v4718 = vunpack.c.l.b16 %v4286
        %v4719 = vunpack.c.h.b16 %v4286
        %v4720 = vunpack.c.l.b16 %v4287
        %v4721 = vunpack.c.h.b16 %v4287
        %v4722 = vunpack.c.l.b16 %v4288
        %v4723 = vunpack.c.h.b16 %v4288
        %v4724 = vunpack.c.l.b16 %v4289
        %v4725 = vunpack.c.h.b16 %v4289
        %v4726 = vunpack.c.l.b16 %v4290
        %v4727 = vunpack.c.h.b16 %v4290
        %v4728 = vunpack.c.l.b16 %v4291
        %v4729 = vunpack.c.h.b16 %v4291
        %v4730 = vunpack.c.l.b16 %v4292
        %v4731 = vunpack.c.h.b16 %v4292
        %v4732 = vunpack.c.l.b16 %v4293
        %v4733 = vunpack.c.h.b16 %v4293
        %v4734 = vunpack.c.l.b16 %v4294
        %v4735 = vunpack.c.h.b16 %v4294
        %v4736 = vunpack.c.l.b16 %v4295
        %v4737 = vunpack.c.h.b16 %v4295
        %v4738 = vunpack.c.l.b16 %v4296
        %v4739 = vunpack.c.h.b16 %v4296
        %v4740 = vunpack.c.l.b16 %v4297
        %v4741 = vunpack.c.h.b16 %v4297
        %v4742 = vunpack.c.l.b16 %v4298
        %v4743 = vunpack.c.h.b16 %v4298
        %v4744 = vunpack.c.l.b16 %v4299
        %v4745 = vunpack.c.h.b16 %v4299
        %v4746 = vunpack.c.l.b16 %v4300
        %v4747 = vunpack.c.h.b16 %v4300
        %v4748 = vunpack.c.l.b16 %v4301
        %v4749 = vunpack.c.h.b16 %v4301
        %v4750 = vunpack.c.l.b16 %v4302
        %v4751 = vunpack.c.h.b16 %v4302
        %v4752 = vunpack.c.l.b16 %v4303
        %v4753 = vunpack.c.h.b16 %v4303
        %v4754 = vunpack.c.l.b16 %v4304
        %v4755 = vunpack.c.h.b16 %v4304
        %v4756 = vunpack.c.l.b16 %v4305
        %v4757 = vunpack.c.h.b16 %v4305
        %v4758 = vunpack.c.l.b16 %v4306
        %v4759 = vunpack.c.h.b16 %v4306
        %v4760 = vunpack.c.l.b16 %v4307
        %v4761 = vunpack.c.h.b16 %v4307
        %v4762 = vunpack.c.l.b16 %v4308
        %v4763 = vunpack.c.h.b16 %v4308
        %v4764 = vunpack.c.l.b16 %v4309
        %v4765 = vunpack.c.h.b16 %v4309
        %v4766 = vunpack.c.l.b16 %v4310
        %v4767 = vunpack.c.h.b16 %v4310
        %v4768 = vunpack.c.l.b16 %v4311
        %v4769 = vunpack.c.h.b16 %v4311
        %v4770 = vunpack.c.l.b16 %v4312
        %v4771 = vunpack.c.h.b16 %v4312
        %v4772 = vunpack.c.l.b16 %v4313
        %v4773 = vunpack.c.h.b16 %v4313
        %v4774 = vunpack.c.l.b16 %v4314
        %v4775 = vunpack.c.h.b16 %v4314
        %v4776 = vunpack.c.l.b16 %v4315
        %v4777 = vunpack.c.h.b16 %v4315
        %v4778 = vunpack.c.l.b16 %v4316
        %v4779 = vunpack.c.h.b16 %v4316
        %v4780 = vunpack.c.l.b16 %v4317
        %v4781 = vunpack.c.h.b16 %v4317
        %v4782 = vunpack.c.l.b16 %v4318
        %v4783 = vunpack.c.h.b16 %v4318
        %v4784 = vunpack.c.l.b16 %v4319
        %v4785 = vunpack.c.h.b16 %v4319
        %v4786 = vunpack.c.l.b16 %v4320
        %v4787 = vunpack.c.h.b16 %v4320
        %v4788 = vunpack.c.l.b16 %v4321
        %v4789 = vunpack.c.h.b16 %v4321
        %v4790 = vunpack.c.l.b16 %v4322
        %v4791 = vunpack.c.h.b16 %v4322
        %v4792 = vunpack.c.l.b16 %v4323
        %v4793 = vunpack.c.h.b16 %v4323
        %v4794 = vunpack.c.l.b16 %v4324
        %v4795 = vunpack.c.h.b16 %v4324
        %v4796 = vunpack.c.l.b16 %v4325
        %v4797 = vunpack.c.h.b16 %v4325
        %v4798 = vunpack.c.l.b16 %v4326
        %v4799 = vunpack.c.h.b16 %v4326
        %v4800 = vpack.c.b16 %v4676, %v4672
        %v4801 = vpack.c.b16 %v4677, %v4673
        %v4802 = vpack.c.b16 %v4678, %v4674
        %v4803 = vpack.c.b16 %v4679, %v4675
        %v4804 = vpack.c.b16 %v4684, %v4680
        %v4805 = vpack.c.b16 %v4685, %v4681
        %v4806 = vpack.c.b16 %v4686, %v4682
        %v4807 = vpack.c.b16 %v4687, %v4683
        %v4808 = vpack.c.b16 %v4692, %v4688
        %v4809 = vpack.c.b16 %v4693, %v4689
        %v4810 = vpack.c.b16 %v4694, %v4690
        %v4811 = vpack.c.b16 %v4695, %v4691
        %v4812 = vpack.c.b16 %v4700, %v4696
        %v4813 = vpack.c.b16 %v4701, %v4697
        %v4814 = vpack.c.b16 %v4702, %v4698
        %v4815 = vpack.c.b16 %v4703, %v4699
        %v4816 = vpack.c.b16 %v4708, %v4704
        %v4817 = vpack.c.b16 %v4709, %v4705
        %v4818 = vpack.c.b16 %v4710, %v4706
        %v4819 = vpack.c.b16 %v4711, %v4707
        %v4820 = vpack.c.b16 %v4716, %v4712
        %v4821 = vpack.c.b16 %v4717, %v4713
        %v4822 = vpack.c.b16 %v4718, %v4714
        %v4823 = vpack.c.b16 %v4719, %v4715
        %v4824 = vpack.c.b16 %v4724, %v4720
        %v4825 = vpack.c.b16 %v4725, %v4721
        %v4826 = vpack.c.b16 %v4726, %v4722
        %v4827 = vpack.c.b16 %v4727, %v4723
        %v4828 = vpack.c.b16 %v4732, %v4728
        %v4829 = vpack.c.b16 %v4733, %v4729
        %v4830 = vpack.c.b16 %v4734, %v4730
        %v4831 = vpack.c.b16 %v4735, %v4731
        %v4832 = vpack.c.b16 %v4740, %v4736
        %v4833 = vpack.c.b16 %v4741, %v4737
        %v4834 = vpack.c.b16 %v4742, %v4738
        %v4835 = vpack.c.b16 %v4743, %v4739
        %v4836 = vpack.c.b16 %v4748, %v4744
        %v4837 = vpack.c.b16 %v4749, %v4745
        %v4838 = vpack.c.b16 %v4750, %v4746
        %v4839 = vpack.c.b16 %v4751, %v4747
        %v4840 = vpack.c.b16 %v4756, %v4752
        %v4841 = vpack.c.b16 %v4757, %v4753
        %v4842 = vpack.c.b16 %v4758, %v4754
        %v4843 = vpack.c.b16 %v4759, %v4755
        %v4844 = vpack.c.b16 %v4764, %v4760
        %v4845 = vpack.c.b16 %v4765, %v4761
        %v4846 = vpack.c.b16 %v4766, %v4762
        %v4847 = vpack.c.b16 %v4767, %v4763
        %v4848 = vpack.c.b16 %v4772, %v4768
        %v4849 = vpack.c.b16 %v4773, %v4769
        %v4850 = vpack.c.b16 %v4774, %v4770
        %v4851 = vpack.c.b16 %v4775, %v4771
        %v4852 = vpack.c.b16 %v4780, %v4776
        %v4853 = vpack.c.b16 %v4781, %v4777
        %v4854 = vpack.c.b16 %v4782, %v4778
        %v4855 = vpack.c.b16 %v4783, %v4779
        %v4856 = vpack.c.b16 %v4788, %v4784
        %v4857 = vpack.c.b16 %v4789, %v4785
        %v4858 = vpack.c.b16 %v4790, %v4786
        %v4859 = vpack.c.b16 %v4791, %v4787
        %v4860 = vpack.c.b16 %v4796, %v4792
        %v4861 = vpack.c.b16 %v4797, %v4793
        %v4862 = vpack.c.b16 %v4798, %v4794
        %v4863 = vpack.c.b16 %v4799, %v4795
        %4928 = vmatprep.subr.bf16.mxu0 %v4801
        %4929 = vmatpush1.bf16.msra.mxu0 %v4800
        %4930 = vmatprep.subr.bf16.mxu0 %v4805
        %4931 = vmatpush1.bf16.msra.mxu0 %v4804
        %4932 = vmatprep.subr.bf16.mxu0 %v4809
        %4933 = vmatpush1.bf16.msra.mxu0 %v4808
        %4934 = vmatprep.subr.bf16.mxu0 %v4813
        %4935 = vmatpush1.bf16.msra.mxu0 %v4812
        %4936 = vmatprep.subr.bf16.mxu0 %v4817
        %4937 = vmatpush1.bf16.msra.mxu0 %v4816
        %4938 = vmatprep.subr.bf16.mxu0 %v4821
        %4939 = vmatpush1.bf16.msra.mxu0 %v4820
        %4940 = vmatprep.subr.bf16.mxu0 %v4825
        %4941 = vmatpush1.bf16.msra.mxu0 %v4824
        %4942 = vmatprep.subr.bf16.mxu0 %v4829
        %4943 = vmatpush1.bf16.msra.mxu0 %v4828
        %4944 = vmatprep.subr.bf16.mxu0 %v4833
        %4945 = vmatpush1.bf16.msra.mxu0 %v4832
        %4946 = vmatprep.subr.bf16.mxu0 %v4837
        %4947 = vmatpush1.bf16.msra.mxu0 %v4836
        %4948 = vmatprep.subr.bf16.mxu0 %v4841
        %4949 = vmatpush1.bf16.msra.mxu0 %v4840
        %4950 = vmatprep.subr.bf16.mxu0 %v4845
        %4951 = vmatpush1.bf16.msra.mxu0 %v4844
        %4952 = vmatprep.subr.bf16.mxu0 %v4849
        %4953 = vmatpush1.bf16.msra.mxu0 %v4848
        %4954 = vmatprep.subr.bf16.mxu0 %v4853
        %4955 = vmatpush1.bf16.msra.mxu0 %v4852
        %4956 = vmatprep.subr.bf16.mxu0 %v4857
        %4957 = vmatpush1.bf16.msra.mxu0 %v4856
        %4958 = vmatprep.subr.bf16.mxu0 %v4861
        %4959 = vmatpush1.bf16.msra.mxu0 %v4860
        %4960 = vmatprep.mubr.bf16.mxu0 %v4262
        %4961 = vmatmul.mubr.bf16.gmra.mrb[0].mxu0 %v4261
        %v4962 = vpop.f32.mrb[0].mxu0
        %v4963 = vadd.f32 %v4557, %v4962
        %v4964 = vpop.f32.mrb[0].mxu0
        %v4965 = vadd.f32 %v4559, %v4964
        %v4966 = vpop.f32.mrb[0].mxu0
        %v4967 = vadd.f32 %v4561, %v4966
        %v4968 = vpop.f32.mrb[0].mxu0
        %v4969 = vadd.f32 %v4563, %v4968
        %4970 = vdwg.mxu0
        %4971 = vmatprep.subr.bf16.mxu0 %v4803
        %4972 = vmatpush1.bf16.msra.mxu0 %v4802
        %4973 = vmatprep.subr.bf16.mxu0 %v4807
        %4974 = vmatpush1.bf16.msra.mxu0 %v4806
        %4975 = vmatprep.subr.bf16.mxu0 %v4811
        %4976 = vmatpush1.bf16.msra.mxu0 %v4810
        %4977 = vmatprep.subr.bf16.mxu0 %v4815
        %4978 = vmatpush1.bf16.msra.mxu0 %v4814
        %4979 = vmatprep.subr.bf16.mxu0 %v4819
        %4980 = vmatpush1.bf16.msra.mxu0 %v4818
        %4981 = vmatprep.subr.bf16.mxu0 %v4823
        %4982 = vmatpush1.bf16.msra.mxu0 %v4822
        %4983 = vmatprep.subr.bf16.mxu0 %v4827
        %4984 = vmatpush1.bf16.msra.mxu0 %v4826
        %4985 = vmatprep.subr.bf16.mxu0 %v4831
        %4986 = vmatpush1.bf16.msra.mxu0 %v4830
        %4987 = vmatprep.subr.bf16.mxu0 %v4835
        %4988 = vmatpush1.bf16.msra.mxu0 %v4834
        %4989 = vmatprep.subr.bf16.mxu0 %v4839
        %4990 = vmatpush1.bf16.msra.mxu0 %v4838
        %4991 = vmatprep.subr.bf16.mxu0 %v4843
        %4992 = vmatpush1.bf16.msra.mxu0 %v4842
        %4993 = vmatprep.subr.bf16.mxu0 %v4847
        %4994 = vmatpush1.bf16.msra.mxu0 %v4846
        %4995 = vmatprep.subr.bf16.mxu0 %v4851
        %4996 = vmatpush1.bf16.msra.mxu0 %v4850
        %4997 = vmatprep.subr.bf16.mxu0 %v4855
        %4998 = vmatpush1.bf16.msra.mxu0 %v4854
        %4999 = vmatprep.subr.bf16.mxu0 %v4859
        %5000 = vmatpush1.bf16.msra.mxu0 %v4858
        %5001 = vmatprep.subr.bf16.mxu0 %v4863
        %5002 = vmatpush1.bf16.msra.mxu0 %v4862
        %5003 = vmatprep.mubr.bf16.mxu0 %v4262
        %5004 = vmatmul.mubr.bf16.gmra.mrb[0].mxu0 %v4261
        %v5005 = vpop.f32.mrb[0].mxu0
        %v5006 = vadd.f32 %v4600, %v5005
        %v5007 = vpop.f32.mrb[0].mxu0
        %v5008 = vadd.f32 %v4602, %v5007
        %v5009 = vpop.f32.mrb[0].mxu0
        %v5010 = vadd.f32 %v4604, %v5009
        %v5011 = vpop.f32.mrb[0].mxu0
        %v5012 = vadd.f32 %v4606, %v5011
        %5013 = vdwg.mxu0
        %v5014 = vld [vmem:[%s9] sm:$0xf]
        %v5016 = vlaneseq
        %v5017 = vshrl.u32 %v5016, 7
        %v5018 = vsub.s32 0, %v5017
        %v5019 = vrot.slane %v5014, %v5018
        %v5020 = vlaneseq
        %v5021 = vshrl.u32 %v5020, 7
        %v5022 = vsub.s32 1, %v5021
        %v5023 = vrot.slane %v5014, %v5022
        %v5024 = vlaneseq
        %v5025 = vshrl.u32 %v5024, 7
        %v5026 = vsub.s32 2, %v5025
        %v5027 = vrot.slane %v5014, %v5026
        %v5028 = vlaneseq
        %v5029 = vshrl.u32 %v5028, 7
        %v5030 = vsub.s32 3, %v5029
        %v5031 = vrot.slane %v5014, %v5030
        %v5036 = vadd.f32 %v4963, %v5019
        %v5037 = vadd.f32 %v4965, %v5023
        %v5038 = vadd.f32 %v5006, %v5027
        %v5039 = vadd.f32 %v5008, %v5031
        %v5040 = vadd.f32 %v4967, %v5019
        %v5041 = vadd.f32 %v4969, %v5023
        %v5042 = vadd.f32 %v5010, %v5027
        %v5043 = vadd.f32 %v5012, %v5031
        %v5044 = vxor.u32 %v5036, 2147483648
        %v5045 = vxor.u32 %v5040, 2147483648
        %v5046 = vmul.f32 %v5044, 1.442695
        %v5047 = vpow.pop %v5046
        %v5048 = vmul.f32 %v5045, 1.442695
        %v5049 = vpow.pop %v5048
        %v5050 = vadd.f32 %v5047, 1.0
        %v5051 = vadd.f32 %v5049, 1.0
        %v5052 = vrcp.pop %v5050
        %v5053 = vmul.f32 1.0, %v5052
        %v5054 = vrcp.pop %v5051
        %v5055 = vmul.f32 1.0, %v5054
        %v5056 = vxor.u32 %v5037, 2147483648
        %v5057 = vxor.u32 %v5041, 2147483648
        %v5058 = vmul.f32 %v5056, 1.442695
        %v5059 = vpow.pop %v5058
        %v5060 = vmul.f32 %v5057, 1.442695
        %v5061 = vpow.pop %v5060
        %v5062 = vadd.f32 %v5059, 1.0
        %v5063 = vadd.f32 %v5061, 1.0
        %v5064 = vrcp.pop %v5062
        %v5065 = vmul.f32 1.0, %v5064
        %v5066 = vrcp.pop %v5063
        %v5067 = vmul.f32 1.0, %v5066
        %v5068 = vxor.u32 %v5038, 2147483648
        %v5069 = vxor.u32 %v5042, 2147483648
        %v5070 = vmul.f32 %v5068, 1.442695
        %v5071 = vpow.pop %v5070
        %v5072 = vmul.f32 %v5069, 1.442695
        %v5073 = vpow.pop %v5072
        %v5074 = vadd.f32 %v5071, 1.0
        %v5075 = vadd.f32 %v5073, 1.0
        %v5076 = vrcp.pop %v5074
        %v5077 = vmul.f32 1.0, %v5076
        %v5078 = vrcp.pop %v5075
        %v5079 = vmul.f32 1.0, %v5078
        %v5080 = vtanh.pop %v5039
        %v5081 = vtanh.pop %v5043
        %v5082 = vld [vmem:[%s513] sm:$0xff]
        %v5083 = vld [vmem:[%s513 + $0x8] sm:$0xff]
        %v5084 = vmul.f32 %v5053, %v5082
        %v5085 = vmul.f32 %v5055, %v5083
        %v5086 = vmul.f32 %v5065, %v5080
        %v5087 = vmul.f32 %v5067, %v5081
        %v5088 = vadd.f32 %v5084, %v5086
        %v5089 = vadd.f32 %v5085, %v5087
        %v5090 = vtanh.pop %v5088
        %v5091 = vtanh.pop %v5089
        %v5092 = vmul.f32 %v5077, %v5090
        %v5093 = vmul.f32 %v5079, %v5091
        %v5094 = vld [vmem:[%s10] sm:$0xff]
        %v5095 = vld [vmem:[%s10 + $0x8] sm:$0xff]
        %v5096 = vld [vmem:[%s10 + $0x10] sm:$0xff]
        %v5097 = vld [vmem:[%s10 + $0x18] sm:$0xff]
        %v5098 = vld [vmem:[%s10 + $0x20] sm:$0xff]
        %v5099 = vld [vmem:[%s10 + $0x28] sm:$0xff]
        %v5100 = vld [vmem:[%s10 + $0x30] sm:$0xff]
        %v5101 = vld [vmem:[%s10 + $0x38] sm:$0xff]
        %v5102 = vld [vmem:[%s10 + $0x40] sm:$0xff]
        %v5103 = vld [vmem:[%s10 + $0x48] sm:$0xff]
        %v5104 = vld [vmem:[%s10 + $0x50] sm:$0xff]
        %v5105 = vld [vmem:[%s10 + $0x58] sm:$0xff]
        %v5106 = vld [vmem:[%s10 + $0x60] sm:$0xff]
        %v5107 = vld [vmem:[%s10 + $0x68] sm:$0xff]
        %v5108 = vld [vmem:[%s10 + $0x70] sm:$0xff]
        %v5109 = vld [vmem:[%s10 + $0x78] sm:$0xff]
        %v5110 = vld [vmem:[%s11] sm:$0x1]
        %v5112 = vlaneseq
        %v5113 = vshrl.u32 %v5112, 7
        %v5114 = vsub.s32 0, %v5113
        %v5115 = vrot.slane %v5110, %v5114
        %5117 = vmatprep.subr.mxu0 0.0
        %5118 = vmatpush1.msra.mxu0 %v5094
        %5119 = vmatprep.subr.mxu0 0.0
        %5120 = vmatpush1.msra.mxu0 %v5095
        %5121 = vmatprep.subr.mxu0 0.0
        %5122 = vmatpush1.msra.mxu0 %v5096
        %5123 = vmatprep.subr.mxu0 0.0
        %5124 = vmatpush1.msra.mxu0 %v5097
        %5125 = vmatprep.subr.mxu0 0.0
        %5126 = vmatpush1.msra.mxu0 %v5098
        %5127 = vmatprep.subr.mxu0 0.0
        %5128 = vmatpush1.msra.mxu0 %v5099
        %5129 = vmatprep.subr.mxu0 0.0
        %5130 = vmatpush1.msra.mxu0 %v5100
        %5131 = vmatprep.subr.mxu0 0.0
        %5132 = vmatpush1.msra.mxu0 %v5101
        %5133 = vmatprep.subr.mxu0 0.0
        %5134 = vmatpush1.msra.mxu0 %v5102
        %5135 = vmatprep.subr.mxu0 0.0
        %5136 = vmatpush1.msra.mxu0 %v5103
        %5137 = vmatprep.subr.mxu0 0.0
        %5138 = vmatpush1.msra.mxu0 %v5104
        %5139 = vmatprep.subr.mxu0 0.0
        %5140 = vmatpush1.msra.mxu0 %v5105
        %5141 = vmatprep.subr.mxu0 0.0
        %5142 = vmatpush1.msra.mxu0 %v5106
        %5143 = vmatprep.subr.mxu0 0.0
        %5144 = vmatpush1.msra.mxu0 %v5107
        %5145 = vmatprep.subr.mxu0 0.0
        %5146 = vmatpush1.msra.mxu0 %v5108
        %5147 = vmatprep.subr.mxu0 0.0
        %5148 = vmatpush1.msra.mxu0 %v5109
        %5149 = vmatprep.subr.mxu0 0.0
        %5150 = vmatpush1.msra.mxu0 0.0
        %5151 = vmatprep.subr.mxu0 0.0
        %5152 = vmatpush1.msra.mxu0 0.0
        %5153 = vmatprep.subr.mxu0 0.0
        %5154 = vmatpush1.msra.mxu0 0.0
        %5155 = vmatprep.subr.mxu0 0.0
        %5156 = vmatpush1.msra.mxu0 0.0
        %5157 = vmatprep.subr.mxu0 0.0
        %5158 = vmatpush1.msra.mxu0 0.0
        %5159 = vmatprep.subr.mxu0 0.0
        %5160 = vmatpush1.msra.mxu0 0.0
        %5161 = vmatprep.subr.mxu0 0.0
        %5162 = vmatpush1.msra.mxu0 0.0
        %5163 = vmatprep.subr.mxu0 0.0
        %5164 = vmatpush1.msra.mxu0 0.0
        %5165 = vmatprep.subr.mxu0 0.0
        %5166 = vmatpush1.msra.mxu0 0.0
        %5167 = vmatprep.subr.mxu0 0.0
        %5168 = vmatpush1.msra.mxu0 0.0
        %5169 = vmatprep.subr.mxu0 0.0
        %5170 = vmatpush1.msra.mxu0 0.0
        %5171 = vmatprep.subr.mxu0 0.0
        %5172 = vmatpush1.msra.mxu0 0.0
        %5173 = vmatprep.subr.mxu0 0.0
        %5174 = vmatpush1.msra.mxu0 0.0
        %5175 = vmatprep.subr.mxu0 0.0
        %5176 = vmatpush1.msra.mxu0 0.0
        %5177 = vmatprep.subr.mxu0 0.0
        %5178 = vmatpush1.msra.mxu0 0.0
        %5179 = vmatprep.subr.mxu0 0.0
        %5180 = vmatpush1.msra.mxu0 0.0
        %5181 = vmatprep.mubr.f32.mxu0 0.0
        %5182 = vmatmul.mubr.f32.gmra.mrb[0].mxu0 %v5092
        %v5183 = vpop.f32.mrb[0].mxu0
        %v5184 = vadd.f32 %v5115, %v5183
        %v5185 = vpop.f32.mrb[0].mxu0
        %5186 = vmatprep.mubr.f32.mxu0 0.0
        %5187 = vmatmul.mubr.f32.gmra.mrb[0].mxu0 %v5093
        %v5188 = vpop.f32.mrb[0].mxu0
        %v5189 = vadd.f32 %v5115, %v5188
        %v5190 = vpop.f32.mrb[0].mxu0
        %5191 = vdwg.mxu0
        %v5192 = vlaneseq
        %v5193 = vand.u32 %v5192, 127
        %vm5194 = vcmp.lt.s32.totalorder %v5193, 6
        %v5195 = vsel %vm5194, %v5184, -1e+30
        %v5196 = vsel %vm5194, %v5189, -1e+30
        %5197 = vmax.xlane.f32.xlu0 %v5195
        %v5198 = vpop.xlane.xlu0 %5197
        %5199 = vmax.xlane.f32.xlu0 %v5196
        %v5200 = vpop.xlane.xlu0 %5199
        %v5201 = vsub.f32 %v5195, %v5198
        %v5202 = vsub.f32 %v5196, %v5200
        %v5203 = vmul.f32 %v5201, 1.442695
        %v5204 = vpow.pop %v5203
        %v5205 = vmul.f32 %v5202, 1.442695
        %v5206 = vpow.pop %v5205
        %5207 = vadd.xlane.f32.xlu0 %v5204
        %v5208 = vpop.xlane.xlu0 %5207
        %5209 = vadd.xlane.f32.xlu0 %v5206
        %v5210 = vpop.xlane.xlu0 %5209
        %v5211 = vrcp.pop %v5208
        %v5212 = vmul.f32 %v5204, %v5211
        %v5213 = vrcp.pop %v5210
        %v5214 = vmul.f32 %v5206, %v5213
        %vm5215 = vcmp.eq.s32.totalorder %v5193, 6
        %v5216 = vsel %vm5215, %v5184, 0.0
        %v5217 = vsel %vm5215, %v5189, 0.0
        %v5218 = vsel %vm5194, %v5212, %v5216
        %v5219 = vsel %vm5194, %v5214, %v5217
        %5220 = vst [vmem:[%s520] sm:$0xff] %v5092
        %5221 = vst [vmem:[%s520 + $0x18] sm:$0xff] %v5093
        %5222 = vst [vmem:[%s520 + $0x8] sm:$0xff] %v5088
        %5223 = vst [vmem:[%s520 + $0x20] sm:$0xff] %v5089
        %5224 = vst [vmem:[%s520 + $0x10] sm:$0xff] %v5218
        %5225 = vst [vmem:[%s520 + $0x28] sm:$0xff] %v5219
      $region76: #{actor_critic_forward.3} parent=67 // pred_fallthru
        _
      %s5226 = smul.u32 2, %s27
      %p5227 = scmp.lt.s32.totalorder %s5226, 1
      %s5228 = scalar_select %p5227, %s5226, 1
      %s5229 = smul.addr %s5228, 3
      %s5230 = smul.addr %s5229, 8
      %s5231 = scalar_lea.vmem %s12, %s5230
      // Predicated region
      $region77: #{actor_critic_forward.3} parent=67 // pred_check
        %p5232 = pneg %p327
      $region78: #{actor_critic_forward.3} parent=67 // pred_check_branch
        %5234 = sbr.rel (%p5232) target = $region80
      $region79: #{actor_critic_forward.3} parent=67 // pred_region
        %s5235 = smul.u32 2, %s27
      $region80: #{actor_critic_forward.3} parent=67 // pred_fallthru
        _
      // Predicated region
      $region81: #{actor_critic_forward.3} parent=67 // pred_check
        %p5236 = pneg %p327
      $region82: #{actor_critic_forward.3} parent=67 // pred_check_branch
        %5238 = sbr.rel (%p5236) target = $region84
      $region83: #{actor_critic_forward.3} parent=67 // pred_region
        %s5239 = smul.u32 2, %s27
        %p5240 = scmp.lt.s32.totalorder %s5239, 1
        %s5241 = scalar_select %p5240, %s5239, 1
        %s5242 = smul.addr %s5241, 3
        %s5243 = smul.addr %s5242, 8
        %s5244 = scalar_lea.vmem %s12, %s5243
      $region84: #{actor_critic_forward.3} parent=67 // pred_fallthru
        _
    $region68: #{actor_critic_forward.3} parent=5 // pred_fallthru
      _
    %p5245 = scmp.le.s32.totalorder 2, %s18
    // Predicated region
    $region85: #{actor_critic_forward.3} parent=5 // pred_check
      %p5246 = pneg %p5245
    $region86: #{actor_critic_forward.3} parent=5 // pred_check_branch
      %5248 = sbr.rel (%p5246) target = $region88
    $region87: #{actor_critic_forward.3} parent=5 // pred_region
      %s5249 = ssub.s32 %s18, 2
    $region88: #{actor_critic_forward.3} parent=5 // pred_fallthru
      _
  $region6: #{actor_critic_forward.3} parent=0 // loop_footer
    %s22 = sadd.s32 1, %s18
  $region7: #{actor_critic_forward.3} parent=0 // loop_footer_branch
    %17 = sbr.rel target = $region3
  $region8: #{actor_critic_forward.3} parent=0 // loop_exit
    _

</llo_original>
